<compile_context>
chip_gen: v7x
topology: tpu7x:2x2x1
jax: 0.10.0
libtpu: 0.0.40
codegen_flags: <defaults>
</compile_context>

<pallas_src>
import numpy as np
import jax
import jax.numpy as jnp
from jax import lax
from jax.experimental import pallas as pl
from jax.experimental.pallas import tpu as pltpu

# Problem size (Unet(in_ch=4, out_ch=1), list_ch = [-1, 2, 4, 8, 16]).
N_BATCH, IN_CH, OUT_CH, HW = 2, 4, 1, 16
LIST_CH = [-1, 2, 4, 8, 16]
EPS_BN = 1e-5

OFFS9 = tuple((dh, dw) for dh in (-1, 0, 1) for dw in (-1, 0, 1))        # 3x3 taps
OFFS16 = tuple((di - 1, dj - 1) for di in range(4) for dj in range(4))   # 4x4 taps


# ----------------------------------------------------------------------------
# In-kernel building blocks (operate on [C, L] values, L = N*H*W flat, lane-dense)
# ----------------------------------------------------------------------------

def _pad_lanes(x, p):
    z = jnp.zeros((x.shape[0], p), x.dtype)
    return jnp.concatenate([z, x, z], axis=1)


def _bn_relu(y):
    # Training-mode BatchNorm2d (biased var, gamma=1, beta=0) + ReLU; stats are
    # a lane-axis reduction per channel.
    mean = jnp.mean(y, axis=1, keepdims=True)
    var = jnp.mean((y - mean) ** 2, axis=1, keepdims=True)
    return jnp.maximum((y - mean) * lax.rsqrt(var + EPS_BN), 0.0)


def _conv3x3_bn_relu(xs, w_ref, mask_ref, w_dim):
    """3x3 conv (pad=1, no bias) + BN + ReLU.

    xs:       list of [Ci, L] values (skip-connection concat = pass 2 inputs).
    w_ref:    [Cout, 9 * sum(Ci)] im2col weight (tap-major, in-ch minor).
    mask_ref: [9, 1, L] per-tap validity masks (zero padding at image edges).
    """
    L = xs[0].shape[1]
    p = w_dim + 1
    xps = [_pad_lanes(x, p) for x in xs]
    masks = mask_ref[...]                                  # [9, 1, L], loaded once
    pieces = []
    for t, (dh, dw) in enumerate(OFFS9):
        m = masks[t]                                       # [1, L]
        d = dh * w_dim + dw
        for xp in xps:
            pieces.append(xp[:, p + d:p + d + L] * m)
    patches = jnp.concatenate(pieces, axis=0)              # [9*sum(Ci), L] in VMEM
    y = jnp.dot(w_ref[...], patches, preferred_element_type=jnp.float32)
    return _bn_relu(y)


def _maxpool2x2(y, w_dim, s_ref):
    """MaxPool2d(2,2): 3 shifts + max, then compaction as a selection matmul."""
    L = y.shape[1]
    p = w_dim + 1
    yp = _pad_lanes(y, p)
    m = jnp.maximum(
        jnp.maximum(yp[:, p:p + L], yp[:, p + 1:p + 1 + L]),
        jnp.maximum(yp[:, p + w_dim:p + w_dim + L],
                    yp[:, p + w_dim + 1:p + w_dim + 1 + L]))
    return jnp.dot(m, s_ref[...], preferred_element_type=jnp.float32)  # [C, L/4]


def _upconv2x2(x, w_ref, b_ref, up_ref, w_hi):
    """ConvTranspose2d(k=2, s=2) + bias as zero-stuff + 2x2 conv.

    x:      [Cin, Llo]
    w_ref:  [Cout, 4*Cin] weight (tap-major di*2+dj, in-ch minor)
    b_ref:  [Cout, 1]
    up_ref: [Llo, Lhi] zero-stuffing matrix (S^T of the pool selection)
    w_hi:   high-resolution image width.
    Taps never cross image boundaries (odd rows/cols of the zero-stuffed array
    are zero), so no masks are needed.
    """
    xs = jnp.dot(x, up_ref[...], preferred_element_type=jnp.float32)   # [Cin, Lhi]
    L = xs.shape[1]
    p = w_hi + 1
    xp = _pad_lanes(xs, p)
    pieces = []
    for di in range(2):
        for dj in range(2):
            d = di * w_hi + dj
            pieces.append(xp[:, p - d:p - d + L])          # shift right by d lanes
    patches = jnp.concatenate(pieces, axis=0)              # [4*Cin, Lhi]
    y = jnp.dot(w_ref[...], patches, preferred_element_type=jnp.float32)
    return y + b_ref[...]


def _quantum_bn_relu(x, qmask_ref, qb_ref, qr_ref, w_dim):
    """Per-channel QuantumNNLayer (zero-weight circuit) + Encoder.lastlayer BN/ReLU.

    x: [C, L] (L = N*H*W); 4x4 regions with pad (top/left 1, bottom/right 2).
    qb_ref: [16L, 16L] block matrix applying the 16x16 circuit matrix M per tap
    block; qr_ref: [16L, L] folds the mean-<Z> sign vector and block-sums over k.
    """
    L = x.shape[1]
    p = 2 * w_dim + 2
    xp = _pad_lanes(x, p)
    masks = qmask_ref[...]                                  # [16, 1, L]
    taps = []
    nrm2 = jnp.zeros_like(x)
    for t, (dh, dw) in enumerate(OFFS16):
        d = dh * w_dim + dw
        vt = xp[:, p + d:p + d + L] * masks[t]
        taps.append(vt)
        nrm2 = nrm2 + vt * vt                               # ||region||^2
    vcat = jnp.concatenate(taps, axis=1)                    # [C, 16*L] lane-dense
    phi = jnp.dot(vcat, qb_ref[...], preferred_element_type=jnp.float32)
    z_un = jnp.dot(phi * phi, qr_ref[...], preferred_element_type=jnp.float32)
    # AmplitudeEmbedding(normalize=True): divide by ||r||^2 after the (linear)
    # circuit; all-zero region -> <Z>=0 -> output 0.5 (guard instead of raising).
    # TODO(synk): PennyLane would raise on an all-zero region; we return 0.5.
    inv = jnp.where(nrm2 > 0.0, 1.0 / nrm2, 0.0)
    q = 0.5 * (z_un * inv + 1.0)
    return _bn_relu(q)


# ----------------------------------------------------------------------------
# The fused Unet kernel
# ----------------------------------------------------------------------------

def unet_kernel(x_ref, m16_ref, m8_ref, m4_ref, m2_ref, mq_ref, qb_ref, qr_ref,
                enc1w_ref, enc2w_ref, enc3w_ref, enc4w_ref,
                s1_ref, s2_ref, s3_ref,
                up3w_ref, up3b_ref, u3_ref, dec3w_ref,
                up2w_ref, up2b_ref, u2_ref, dec2w_ref,
                up1w_ref, up1b_ref, u1_ref, dec1w_ref,
                outw_ref, outb_ref, o_ref):
    h1, h2, h3, h4 = HW, HW // 2, HW // 4, HW // 8
    x = x_ref[...]                                                    # [4, 512]
    # ---------------- Encoder ----------------
    e1 = _conv3x3_bn_relu([x], enc1w_ref, m16_ref, h1)                # [2, 512]
    e2 = _conv3x3_bn_relu([_maxpool2x2(e1, h1, s1_ref)],
                          enc2w_ref, m8_ref, h2)                      # [4, 128]
    e3 = _conv3x3_bn_relu([_maxpool2x2(e2, h2, s2_ref)],
                          enc3w_ref, m4_ref, h3)                      # [8, 32]
    e4 = _conv3x3_bn_relu([_maxpool2x2(e3, h3, s3_ref)],
                          enc4w_ref, m2_ref, h4)                      # [16, 8]
    e4q = _quantum_bn_relu(e4, mq_ref, qb_ref, qr_ref, h4)            # [16, 8]
    # ---------------- Decoder ----------------
    u3 = _upconv2x2(e4q, up3w_ref, up3b_ref, u3_ref, h3)              # [8, 32]
    d3 = _conv3x3_bn_relu([u3, e3], dec3w_ref, m4_ref, h3)            # [8, 32]
    u2 = _upconv2x2(d3, up2w_ref, up2b_ref, u2_ref, h2)               # [4, 128]
    d2 = _conv3x3_bn_relu([u2, e2], dec2w_ref, m8_ref, h2)            # [4, 128]
    u1 = _upconv2x2(d2, up1w_ref, up1b_ref, u1_ref, h1)               # [2, 512]
    d1 = _conv3x3_bn_relu([u1, e1], dec1w_ref, m16_ref, h1)           # [2, 512]
    # ------------- 1x1 conv + exact sigmoid -------------
    y = jnp.dot(outw_ref[...], d1, preferred_element_type=jnp.float32) + outb_ref[...]
    o_ref[...] = 1.0 / (1.0 + jnp.exp(-y))                            # [1, 512]


# ----------------------------------------------------------------------------
# Host-side constants (masks, pool/zero-stuff selection matrices, quantum matrices)
# ----------------------------------------------------------------------------

def build_conv_masks(nb, H, W, offsets):
    L = nb * H * W
    m = np.zeros((len(offsets), 1, L), np.float32)
    for t, (dh, dw) in enumerate(offsets):
        for n in range(nb):
            for h in range(H):
                for w in range(W):
                    if 0 <= h + dh < H and 0 <= w + dw < W:
                        m[t, 0, n * H * W + h * W + w] = 1.0
    return m


def build_pool_select(nb, H, W):
    Ho, Wo = H // 2, W // 2
    S = np.zeros((nb * H * W, nb * Ho * Wo), np.float32)
    for n in range(nb):
        for ho in range(Ho):
            for wo in range(Wo):
                S[n * H * W + 2 * ho * W + 2 * wo,
                  n * Ho * Wo + ho * Wo + wo] = 1.0
    return S


def build_quantum_mats(L):
    # Zero-weight circuit: RY(0)/RZ(0) are identities, so the state map is the
    # fixed real matrix M = CNOT(3,0) CNOT(2,3) CNOT(1,2) CNOT(0,1) H^{x4}
    # (wire 0 = MSB, matching AmplitudeEmbedding ordering).
    Hh = np.array([[1.0, 1.0], [1.0, -1.0]]) / np.sqrt(2.0)
    H4 = np.kron(np.kron(np.kron(Hh, Hh), Hh), Hh)

    def cnot(c, t):
        P = np.zeros((16, 16))
        for j in range(16):
            bits = [(j >> (3 - w)) & 1 for w in range(4)]
            if bits[c] == 1:
                bits[t] ^= 1
            k = sum(b << (3 - w) for w, b in enumerate(bits))
            P[k, j] = 1.0
        return P

    M = cnot(3, 0) @ cnot(2, 3) @ cnot(1, 2) @ cnot(0, 1) @ H4
    svec = np.array([np.mean([1.0 - 2.0 * ((j >> (3 - w)) & 1) for w in range(4)])
                     for j in range(16)])
    qb = np.zeros((16 * L, 16 * L), np.float32)   # applies M across tap blocks
    qr = np.zeros((16 * L, L), np.float32)        # folds mean-<Z> signs + k-sum
    for k in range(16):
        for t in range(16):
            for f in range(L):
                qb[t * L + f, k * L + f] = M[k, t]
        for f in range(L):
            qr[k * L + f, f] = svec[k]
    return qb, qr


def build_consts():
    c = {}
    c["m16"] = build_conv_masks(N_BATCH, HW, HW, OFFS9)
    c["m8"] = build_conv_masks(N_BATCH, HW // 2, HW // 2, OFFS9)
    c["m4"] = build_conv_masks(N_BATCH, HW // 4, HW // 4, OFFS9)
    c["m2"] = build_conv_masks(N_BATCH, HW // 8, HW // 8, OFFS9)
    c["mq"] = build_conv_masks(N_BATCH, HW // 8, HW // 8, OFFS16)
    s1 = build_pool_select(N_BATCH, HW, HW)
    s2 = build_pool_select(N_BATCH, HW // 2, HW // 2)
    s3 = build_pool_select(N_BATCH, HW // 4, HW // 4)
    c["s1"], c["s2"], c["s3"] = s1, s2, s3
    # Zero-stuffing matrices for ConvTranspose2d = transpose of pool selection.
    c["u1"] = np.ascontiguousarray(s1.T)          # [128, 512]
    c["u2"] = np.ascontiguousarray(s2.T)          # [32, 128]
    c["u3"] = np.ascontiguousarray(s3.T)          # [8, 32]
    qb, qr = build_quantum_mats(N_BATCH * (HW // 8) * (HW // 8))
    c["qb"], c["qr"] = qb, qr
    return {k: jnp.asarray(v, jnp.float32) for k, v in c.items()}


# ----------------------------------------------------------------------------
# Parameters (deterministic kaiming-uniform style; conv/deconv biases = 0)
# ----------------------------------------------------------------------------

def kaiming_uniform(key, shape):
    fan_in = int(np.prod(shape[1:]))
    bound = float(np.sqrt(6.0 / fan_in))
    return jax.random.uniform(key, shape, jnp.float32, -bound, bound)


def init_params(key, in_ch, out_ch):
    ks = jax.random.split(key, 11)
    r = {}
    r["enc1_w"] = kaiming_uniform(ks[0], (LIST_CH[1], in_ch, 3, 3))
    r["enc2_w"] = kaiming_uniform(ks[1], (LIST_CH[2], LIST_CH[1], 3, 3))
    r["enc3_w"] = kaiming_uniform(ks[2], (LIST_CH[3], LIST_CH[2], 3, 3))
    r["enc4_w"] = kaiming_uniform(ks[3], (LIST_CH[4], LIST_CH[3], 3, 3))
    r["up3_w"] = kaiming_uniform(ks[4], (LIST_CH[4], LIST_CH[3], 2, 2))
    r["up3_b"] = jnp.zeros((LIST_CH[3],), jnp.float32)
    r["dec3_w"] = kaiming_uniform(ks[5], (LIST_CH[3], 2 * LIST_CH[3], 3, 3))
    r["up2_w"] = kaiming_uniform(ks[6], (LIST_CH[3], LIST_CH[2], 2, 2))
    r["up2_b"] = jnp.zeros((LIST_CH[2],), jnp.float32)
    r["dec2_w"] = kaiming_uniform(ks[7], (LIST_CH[2], 2 * LIST_CH[2], 3, 3))
    r["up1_w"] = kaiming_uniform(ks[8], (LIST_CH[2], LIST_CH[1], 2, 2))
    r["up1_b"] = jnp.zeros((LIST_CH[1],), jnp.float32)
    r["dec1_w"] = kaiming_uniform(ks[9], (LIST_CH[1], 2 * LIST_CH[1], 3, 3))
    r["out_w"] = kaiming_uniform(ks[10], (out_ch, LIST_CH[1], 1, 1))
    r["out_b"] = jnp.zeros((out_ch,), jnp.float32)
    return r


def prep_conv_weight(w):
    # [Cout, Cin, 3, 3] -> [Cout, 9*Cin], columns ordered tap-major / in-ch minor,
    # matching the in-kernel patch stacking (incl. skip-concat channel order).
    cout, cin = w.shape[0], w.shape[1]
    return w.transpose(0, 2, 3, 1).reshape(cout, 9 * cin)


def prep_upconv_weight(w):
    # PyTorch ConvTranspose2d weight [Cin, Cout, 2, 2] -> [Cout, 4*Cin],
    # columns ordered tap-major (t = di*2 + dj) / in-ch minor.
    cin, cout = w.shape[0], w.shape[1]
    return w.transpose(1, 2, 3, 0).reshape(cout, 4 * cin)


def prep_params(r):
    p = {}
    for k in ("enc1", "enc2", "enc3", "enc4", "dec3", "dec2", "dec1"):
        p[k + "w"] = prep_conv_weight(r[k + "_w"])
    for k in ("up3", "up2", "up1"):
        p[k + "w"] = prep_upconv_weight(r[k + "_w"])
        p[k + "b"] = r[k + "_b"].reshape(-1, 1)
    p["outw"] = r["out_w"].reshape(r["out_w"].shape[0], -1)
    p["outb"] = r["out_b"].reshape(-1, 1)
    return p


# ----------------------------------------------------------------------------
# Forward (one fused pallas_call; only glue is the NCHW <-> [C, N*H*W] views)
# ----------------------------------------------------------------------------

def unet_forward(x, params, consts):
    n, cin, h, w = x.shape
    xf = x.transpose(1, 0, 2, 3).reshape(cin, n * h * w)
    inputs = (
        xf, consts["m16"], consts["m8"], consts["m4"], consts["m2"], consts["mq"],
        consts["qb"], consts["qr"],
        params["enc1w"], params["enc2w"], params["enc3w"], params["enc4w"],
        consts["s1"], consts["s2"], consts["s3"],
        params["up3w"], params["up3b"], consts["u3"], params["dec3w"],
        params["up2w"], params["up2b"], consts["u2"], params["dec2w"],
        params["up1w"], params["up1b"], consts["u1"], params["dec1w"],
        params["outw"], params["outb"],
    )
    out = pl.pallas_call(
        unet_kernel,
        out_shape=jax.ShapeDtypeStruct((OUT_CH, n * h * w), jnp.float32),
        in_specs=[pl.BlockSpec(memory_space=pltpu.MemorySpace.VMEM)] * len(inputs),
        out_specs=pl.BlockSpec(memory_space=pltpu.MemorySpace.VMEM),
    )(*inputs)
    return out.reshape(OUT_CH, n, h, w).transpose(1, 0, 2, 3)


if __name__ == "__main__":
    key = jax.random.PRNGKey(0)
    kx, kp = jax.random.split(key)
    x = jax.random.normal(kx, (N_BATCH, IN_CH, HW, HW), jnp.float32)
    params = prep_params(init_params(kp, IN_CH, OUT_CH))
    consts = build_consts()

    fwd = jax.jit(unet_forward)
    out = fwd(x, params, consts)
    jax.block_until_ready(out)

    assert out.shape == (N_BATCH, OUT_CH, HW, HW), out.shape
    assert bool(jnp.all(jnp.isfinite(out)))
    assert bool(jnp.all((out >= 0.0) & (out <= 1.0)))
    print("KERNEL_OK")
</pallas_src>

<mosaic_0001>
module attributes {stable_mosaic.version = 11 : i64} {
  func.func @unet_kernel(%arg0: memref<4x512xf32, #tpu.memory_space<vmem>>, %arg1: memref<9x1x512xf32, #tpu.memory_space<vmem>>, %arg2: memref<9x1x128xf32, #tpu.memory_space<vmem>>, %arg3: memref<9x1x32xf32, #tpu.memory_space<vmem>>, %arg4: memref<9x1x8xf32, #tpu.memory_space<vmem>>, %arg5: memref<16x1x8xf32, #tpu.memory_space<vmem>>, %arg6: memref<128x128xf32, #tpu.memory_space<vmem>>, %arg7: memref<128x8xf32, #tpu.memory_space<vmem>>, %arg8: memref<2x36xf32, #tpu.memory_space<vmem>>, %arg9: memref<4x18xf32, #tpu.memory_space<vmem>>, %arg10: memref<8x36xf32, #tpu.memory_space<vmem>>, %arg11: memref<16x72xf32, #tpu.memory_space<vmem>>, %arg12: memref<512x128xf32, #tpu.memory_space<vmem>>, %arg13: memref<128x32xf32, #tpu.memory_space<vmem>>, %arg14: memref<32x8xf32, #tpu.memory_space<vmem>>, %arg15: memref<8x64xf32, #tpu.memory_space<vmem>>, %arg16: memref<8x1xf32, #tpu.memory_space<vmem>>, %arg17: memref<8x32xf32, #tpu.memory_space<vmem>>, %arg18: memref<8x144xf32, #tpu.memory_space<vmem>>, %arg19: memref<4x32xf32, #tpu.memory_space<vmem>>, %arg20: memref<4x1xf32, #tpu.memory_space<vmem>>, %arg21: memref<32x128xf32, #tpu.memory_space<vmem>>, %arg22: memref<4x72xf32, #tpu.memory_space<vmem>>, %arg23: memref<2x16xf32, #tpu.memory_space<vmem>>, %arg24: memref<2x1xf32, #tpu.memory_space<vmem>>, %arg25: memref<128x512xf32, #tpu.memory_space<vmem>>, %arg26: memref<2x36xf32, #tpu.memory_space<vmem>>, %arg27: memref<1x2xf32, #tpu.memory_space<vmem>>, %arg28: memref<1x1xf32, #tpu.memory_space<vmem>>, %arg29: memref<1x512xf32, #tpu.memory_space<vmem>>) attributes {dimension_semantics = [], scalar_prefetch = 0 : i64, scratch_operands = 0 : i64, tpu.core_type = #tpu.core_type<tc>} {
    %c0 = arith.constant 0 : index
    %c0_0 = arith.constant 0 : index
    %0 = vector.load %arg0[%c0, %c0_0] : memref<4x512xf32, #tpu.memory_space<vmem>>, vector<4x512xf32>
    %cst = arith.constant 0.000000e+00 : f32
    %1 = vector.broadcast %cst : f32 to vector<4x17xf32>
    %2 = tpu.concatenate %1, %0, %1 in 1 : vector<4x17xf32>, vector<4x512xf32>, vector<4x17xf32> -> vector<4x546xf32>
    %c0_1 = arith.constant 0 : index
    %c0_2 = arith.constant 0 : index
    %c0_3 = arith.constant 0 : index
    %3 = vector.load %arg1[%c0_1, %c0_2, %c0_3] : memref<9x1x512xf32, #tpu.memory_space<vmem>>, vector<9x1x512xf32>
    %4 = vector.extract_strided_slice %3 {offsets = [0, 0, 0], sizes = [1, 1, 512], strides = [1, 1, 1]} : vector<9x1x512xf32> to vector<1x1x512xf32>
    %5 = vector.shape_cast %4 : vector<1x1x512xf32> to vector<1x512xf32>
    %6 = vector.extract_strided_slice %2 {offsets = [0, 0], sizes = [4, 512], strides = [1, 1]} : vector<4x546xf32> to vector<4x512xf32>
    %7 = vector.broadcast %5 : vector<1x512xf32> to vector<4x512xf32>
    %8 = arith.mulf %6, %7 : vector<4x512xf32>
    %9 = vector.extract_strided_slice %3 {offsets = [1, 0, 0], sizes = [1, 1, 512], strides = [1, 1, 1]} : vector<9x1x512xf32> to vector<1x1x512xf32>
    %10 = vector.shape_cast %9 : vector<1x1x512xf32> to vector<1x512xf32>
    %11 = vector.extract_strided_slice %2 {offsets = [0, 1], sizes = [4, 512], strides = [1, 1]} : vector<4x546xf32> to vector<4x512xf32>
    %12 = vector.broadcast %10 : vector<1x512xf32> to vector<4x512xf32>
    %13 = arith.mulf %11, %12 : vector<4x512xf32>
    %14 = vector.extract_strided_slice %3 {offsets = [2, 0, 0], sizes = [1, 1, 512], strides = [1, 1, 1]} : vector<9x1x512xf32> to vector<1x1x512xf32>
    %15 = vector.shape_cast %14 : vector<1x1x512xf32> to vector<1x512xf32>
    %16 = vector.extract_strided_slice %2 {offsets = [0, 2], sizes = [4, 512], strides = [1, 1]} : vector<4x546xf32> to vector<4x512xf32>
    %17 = vector.broadcast %15 : vector<1x512xf32> to vector<4x512xf32>
    %18 = arith.mulf %16, %17 : vector<4x512xf32>
    %19 = vector.extract_strided_slice %3 {offsets = [3, 0, 0], sizes = [1, 1, 512], strides = [1, 1, 1]} : vector<9x1x512xf32> to vector<1x1x512xf32>
    %20 = vector.shape_cast %19 : vector<1x1x512xf32> to vector<1x512xf32>
    %21 = vector.extract_strided_slice %2 {offsets = [0, 16], sizes = [4, 512], strides = [1, 1]} : vector<4x546xf32> to vector<4x512xf32>
    %22 = vector.broadcast %20 : vector<1x512xf32> to vector<4x512xf32>
    %23 = arith.mulf %21, %22 : vector<4x512xf32>
    %24 = vector.extract_strided_slice %3 {offsets = [4, 0, 0], sizes = [1, 1, 512], strides = [1, 1, 1]} : vector<9x1x512xf32> to vector<1x1x512xf32>
    %25 = vector.shape_cast %24 : vector<1x1x512xf32> to vector<1x512xf32>
    %26 = vector.extract_strided_slice %2 {offsets = [0, 17], sizes = [4, 512], strides = [1, 1]} : vector<4x546xf32> to vector<4x512xf32>
    %27 = vector.broadcast %25 : vector<1x512xf32> to vector<4x512xf32>
    %28 = arith.mulf %26, %27 : vector<4x512xf32>
    %29 = vector.extract_strided_slice %3 {offsets = [5, 0, 0], sizes = [1, 1, 512], strides = [1, 1, 1]} : vector<9x1x512xf32> to vector<1x1x512xf32>
    %30 = vector.shape_cast %29 : vector<1x1x512xf32> to vector<1x512xf32>
    %31 = vector.extract_strided_slice %2 {offsets = [0, 18], sizes = [4, 512], strides = [1, 1]} : vector<4x546xf32> to vector<4x512xf32>
    %32 = vector.broadcast %30 : vector<1x512xf32> to vector<4x512xf32>
    %33 = arith.mulf %31, %32 : vector<4x512xf32>
    %34 = vector.extract_strided_slice %3 {offsets = [6, 0, 0], sizes = [1, 1, 512], strides = [1, 1, 1]} : vector<9x1x512xf32> to vector<1x1x512xf32>
    %35 = vector.shape_cast %34 : vector<1x1x512xf32> to vector<1x512xf32>
    %36 = vector.extract_strided_slice %2 {offsets = [0, 32], sizes = [4, 512], strides = [1, 1]} : vector<4x546xf32> to vector<4x512xf32>
    %37 = vector.broadcast %35 : vector<1x512xf32> to vector<4x512xf32>
    %38 = arith.mulf %36, %37 : vector<4x512xf32>
    %39 = vector.extract_strided_slice %3 {offsets = [7, 0, 0], sizes = [1, 1, 512], strides = [1, 1, 1]} : vector<9x1x512xf32> to vector<1x1x512xf32>
    %40 = vector.shape_cast %39 : vector<1x1x512xf32> to vector<1x512xf32>
    %41 = vector.extract_strided_slice %2 {offsets = [0, 33], sizes = [4, 512], strides = [1, 1]} : vector<4x546xf32> to vector<4x512xf32>
    %42 = vector.broadcast %40 : vector<1x512xf32> to vector<4x512xf32>
    %43 = arith.mulf %41, %42 : vector<4x512xf32>
    %44 = vector.extract_strided_slice %3 {offsets = [8, 0, 0], sizes = [1, 1, 512], strides = [1, 1, 1]} : vector<9x1x512xf32> to vector<1x1x512xf32>
    %45 = vector.shape_cast %44 : vector<1x1x512xf32> to vector<1x512xf32>
    %46 = vector.extract_strided_slice %2 {offsets = [0, 34], sizes = [4, 512], strides = [1, 1]} : vector<4x546xf32> to vector<4x512xf32>
    %47 = vector.broadcast %45 : vector<1x512xf32> to vector<4x512xf32>
    %48 = arith.mulf %46, %47 : vector<4x512xf32>
    %49 = tpu.concatenate %8, %13, %18, %23, %28, %33, %38, %43, %48 in 0 : vector<4x512xf32>, vector<4x512xf32>, vector<4x512xf32>, vector<4x512xf32>, vector<4x512xf32>, vector<4x512xf32>, vector<4x512xf32>, vector<4x512xf32>, vector<4x512xf32> -> vector<36x512xf32>
    %c0_4 = arith.constant 0 : index
    %c0_5 = arith.constant 0 : index
    %50 = vector.load %arg8[%c0_4, %c0_5] : memref<2x36xf32, #tpu.memory_space<vmem>>, vector<2x36xf32>
    %cst_6 = arith.constant dense<0.000000e+00> : vector<2x512xf32>
    %51 = tpu.matmul %50, %49, %cst_6 {dimension_numbers = #tpu.dot_dimension_numbers<[1], [0], [0], [1], [0, 0, 1, 1], [], []>} : vector<2x36xf32>, vector<36x512xf32>, vector<2x512xf32> -> vector<2x512xf32>
    %cst_7 = arith.constant dense<0.000000e+00> : vector<2xf32>
    %52 = vector.multi_reduction <add>, %51, %cst_7 [1] : vector<2x512xf32> to vector<2xf32>
    %53 = vector.shape_cast %52 : vector<2xf32> to vector<2x1xf32>
    %cst_8 = arith.constant 5.120000e+02 : f32
    %54 = vector.broadcast %cst_8 : f32 to vector<2x1xf32>
    %55 = arith.divf %53, %54 : vector<2x1xf32>
    %56 = vector.broadcast %55 : vector<2x1xf32> to vector<2x512xf32>
    %57 = arith.subf %51, %56 : vector<2x512xf32>
    %58 = arith.mulf %57, %57 : vector<2x512xf32>
    %cst_9 = arith.constant dense<0.000000e+00> : vector<2xf32>
    %59 = vector.multi_reduction <add>, %58, %cst_9 [1] : vector<2x512xf32> to vector<2xf32>
    %60 = vector.shape_cast %59 : vector<2xf32> to vector<2x1xf32>
    %cst_10 = arith.constant 5.120000e+02 : f32
    %61 = vector.broadcast %cst_10 : f32 to vector<2x1xf32>
    %62 = arith.divf %60, %61 : vector<2x1xf32>
    %63 = vector.broadcast %55 : vector<2x1xf32> to vector<2x512xf32>
    %64 = arith.subf %51, %63 : vector<2x512xf32>
    %cst_11 = arith.constant 9.99999974E-6 : f32
    %65 = vector.broadcast %cst_11 : f32 to vector<2x1xf32>
    %66 = arith.addf %62, %65 : vector<2x1xf32>
    %67 = math.rsqrt %66 : vector<2x1xf32>
    %68 = vector.broadcast %67 : vector<2x1xf32> to vector<2x512xf32>
    %69 = arith.mulf %64, %68 : vector<2x512xf32>
    %cst_12 = arith.constant 0.000000e+00 : f32
    %70 = vector.broadcast %cst_12 : f32 to vector<2x512xf32>
    %71 = arith.maximumf %69, %70 : vector<2x512xf32>
    %cst_13 = arith.constant 0.000000e+00 : f32
    %72 = vector.broadcast %cst_13 : f32 to vector<2x17xf32>
    %73 = tpu.concatenate %72, %71, %72 in 1 : vector<2x17xf32>, vector<2x512xf32>, vector<2x17xf32> -> vector<2x546xf32>
    %74 = vector.extract_strided_slice %73 {offsets = [0, 17], sizes = [2, 512], strides = [1, 1]} : vector<2x546xf32> to vector<2x512xf32>
    %75 = vector.extract_strided_slice %73 {offsets = [0, 18], sizes = [2, 512], strides = [1, 1]} : vector<2x546xf32> to vector<2x512xf32>
    %76 = arith.maximumf %74, %75 : vector<2x512xf32>
    %77 = vector.extract_strided_slice %73 {offsets = [0, 33], sizes = [2, 512], strides = [1, 1]} : vector<2x546xf32> to vector<2x512xf32>
    %78 = vector.extract_strided_slice %73 {offsets = [0, 34], sizes = [2, 512], strides = [1, 1]} : vector<2x546xf32> to vector<2x512xf32>
    %79 = arith.maximumf %77, %78 : vector<2x512xf32>
    %80 = arith.maximumf %76, %79 : vector<2x512xf32>
    %c0_14 = arith.constant 0 : index
    %c0_15 = arith.constant 0 : index
    %81 = vector.load %arg12[%c0_14, %c0_15] : memref<512x128xf32, #tpu.memory_space<vmem>>, vector<512x128xf32>
    %cst_16 = arith.constant dense<0.000000e+00> : vector<2x128xf32>
    %82 = tpu.matmul %80, %81, %cst_16 {dimension_numbers = #tpu.dot_dimension_numbers<[1], [0], [0], [1], [0, 0, 1, 1], [], []>} : vector<2x512xf32>, vector<512x128xf32>, vector<2x128xf32> -> vector<2x128xf32>
    %cst_17 = arith.constant 0.000000e+00 : f32
    %83 = vector.broadcast %cst_17 : f32 to vector<2x9xf32>
    %84 = tpu.concatenate %83, %82, %83 in 1 : vector<2x9xf32>, vector<2x128xf32>, vector<2x9xf32> -> vector<2x146xf32>
    %c0_18 = arith.constant 0 : index
    %c0_19 = arith.constant 0 : index
    %c0_20 = arith.constant 0 : index
    %85 = vector.load %arg2[%c0_18, %c0_19, %c0_20] : memref<9x1x128xf32, #tpu.memory_space<vmem>>, vector<9x1x128xf32>
    %86 = vector.extract_strided_slice %85 {offsets = [0, 0, 0], sizes = [1, 1, 128], strides = [1, 1, 1]} : vector<9x1x128xf32> to vector<1x1x128xf32>
    %87 = vector.shape_cast %86 : vector<1x1x128xf32> to vector<1x128xf32>
    %88 = vector.extract_strided_slice %84 {offsets = [0, 0], sizes = [2, 128], strides = [1, 1]} : vector<2x146xf32> to vector<2x128xf32>
    %89 = vector.broadcast %87 : vector<1x128xf32> to vector<2x128xf32>
    %90 = arith.mulf %88, %89 : vector<2x128xf32>
    %91 = vector.extract_strided_slice %85 {offsets = [1, 0, 0], sizes = [1, 1, 128], strides = [1, 1, 1]} : vector<9x1x128xf32> to vector<1x1x128xf32>
    %92 = vector.shape_cast %91 : vector<1x1x128xf32> to vector<1x128xf32>
    %93 = vector.extract_strided_slice %84 {offsets = [0, 1], sizes = [2, 128], strides = [1, 1]} : vector<2x146xf32> to vector<2x128xf32>
    %94 = vector.broadcast %92 : vector<1x128xf32> to vector<2x128xf32>
    %95 = arith.mulf %93, %94 : vector<2x128xf32>
    %96 = vector.extract_strided_slice %85 {offsets = [2, 0, 0], sizes = [1, 1, 128], strides = [1, 1, 1]} : vector<9x1x128xf32> to vector<1x1x128xf32>
    %97 = vector.shape_cast %96 : vector<1x1x128xf32> to vector<1x128xf32>
    %98 = vector.extract_strided_slice %84 {offsets = [0, 2], sizes = [2, 128], strides = [1, 1]} : vector<2x146xf32> to vector<2x128xf32>
    %99 = vector.broadcast %97 : vector<1x128xf32> to vector<2x128xf32>
    %100 = arith.mulf %98, %99 : vector<2x128xf32>
    %101 = vector.extract_strided_slice %85 {offsets = [3, 0, 0], sizes = [1, 1, 128], strides = [1, 1, 1]} : vector<9x1x128xf32> to vector<1x1x128xf32>
    %102 = vector.shape_cast %101 : vector<1x1x128xf32> to vector<1x128xf32>
    %103 = vector.extract_strided_slice %84 {offsets = [0, 8], sizes = [2, 128], strides = [1, 1]} : vector<2x146xf32> to vector<2x128xf32>
    %104 = vector.broadcast %102 : vector<1x128xf32> to vector<2x128xf32>
    %105 = arith.mulf %103, %104 : vector<2x128xf32>
    %106 = vector.extract_strided_slice %85 {offsets = [4, 0, 0], sizes = [1, 1, 128], strides = [1, 1, 1]} : vector<9x1x128xf32> to vector<1x1x128xf32>
    %107 = vector.shape_cast %106 : vector<1x1x128xf32> to vector<1x128xf32>
    %108 = vector.extract_strided_slice %84 {offsets = [0, 9], sizes = [2, 128], strides = [1, 1]} : vector<2x146xf32> to vector<2x128xf32>
    %109 = vector.broadcast %107 : vector<1x128xf32> to vector<2x128xf32>
    %110 = arith.mulf %108, %109 : vector<2x128xf32>
    %111 = vector.extract_strided_slice %85 {offsets = [5, 0, 0], sizes = [1, 1, 128], strides = [1, 1, 1]} : vector<9x1x128xf32> to vector<1x1x128xf32>
    %112 = vector.shape_cast %111 : vector<1x1x128xf32> to vector<1x128xf32>
    %113 = vector.extract_strided_slice %84 {offsets = [0, 10], sizes = [2, 128], strides = [1, 1]} : vector<2x146xf32> to vector<2x128xf32>
    %114 = vector.broadcast %112 : vector<1x128xf32> to vector<2x128xf32>
    %115 = arith.mulf %113, %114 : vector<2x128xf32>
    %116 = vector.extract_strided_slice %85 {offsets = [6, 0, 0], sizes = [1, 1, 128], strides = [1, 1, 1]} : vector<9x1x128xf32> to vector<1x1x128xf32>
    %117 = vector.shape_cast %116 : vector<1x1x128xf32> to vector<1x128xf32>
    %118 = vector.extract_strided_slice %84 {offsets = [0, 16], sizes = [2, 128], strides = [1, 1]} : vector<2x146xf32> to vector<2x128xf32>
    %119 = vector.broadcast %117 : vector<1x128xf32> to vector<2x128xf32>
    %120 = arith.mulf %118, %119 : vector<2x128xf32>
    %121 = vector.extract_strided_slice %85 {offsets = [7, 0, 0], sizes = [1, 1, 128], strides = [1, 1, 1]} : vector<9x1x128xf32> to vector<1x1x128xf32>
    %122 = vector.shape_cast %121 : vector<1x1x128xf32> to vector<1x128xf32>
    %123 = vector.extract_strided_slice %84 {offsets = [0, 17], sizes = [2, 128], strides = [1, 1]} : vector<2x146xf32> to vector<2x128xf32>
    %124 = vector.broadcast %122 : vector<1x128xf32> to vector<2x128xf32>
    %125 = arith.mulf %123, %124 : vector<2x128xf32>
    %126 = vector.extract_strided_slice %85 {offsets = [8, 0, 0], sizes = [1, 1, 128], strides = [1, 1, 1]} : vector<9x1x128xf32> to vector<1x1x128xf32>
    %127 = vector.shape_cast %126 : vector<1x1x128xf32> to vector<1x128xf32>
    %128 = vector.extract_strided_slice %84 {offsets = [0, 18], sizes = [2, 128], strides = [1, 1]} : vector<2x146xf32> to vector<2x128xf32>
    %129 = vector.broadcast %127 : vector<1x128xf32> to vector<2x128xf32>
    %130 = arith.mulf %128, %129 : vector<2x128xf32>
    %131 = tpu.concatenate %90, %95, %100, %105, %110, %115, %120, %125, %130 in 0 : vector<2x128xf32>, vector<2x128xf32>, vector<2x128xf32>, vector<2x128xf32>, vector<2x128xf32>, vector<2x128xf32>, vector<2x128xf32>, vector<2x128xf32>, vector<2x128xf32> -> vector<18x128xf32>
    %c0_21 = arith.constant 0 : index
    %c0_22 = arith.constant 0 : index
    %132 = vector.load %arg9[%c0_21, %c0_22] : memref<4x18xf32, #tpu.memory_space<vmem>>, vector<4x18xf32>
    %cst_23 = arith.constant dense<0.000000e+00> : vector<4x128xf32>
    %133 = tpu.matmul %132, %131, %cst_23 {dimension_numbers = #tpu.dot_dimension_numbers<[1], [0], [0], [1], [0, 0, 1, 1], [], []>} : vector<4x18xf32>, vector<18x128xf32>, vector<4x128xf32> -> vector<4x128xf32>
    %cst_24 = arith.constant dense<0.000000e+00> : vector<4xf32>
    %134 = vector.multi_reduction <add>, %133, %cst_24 [1] : vector<4x128xf32> to vector<4xf32>
    %135 = vector.shape_cast %134 : vector<4xf32> to vector<4x1xf32>
    %cst_25 = arith.constant 1.280000e+02 : f32
    %136 = vector.broadcast %cst_25 : f32 to vector<4x1xf32>
    %137 = arith.divf %135, %136 : vector<4x1xf32>
    %138 = vector.broadcast %137 : vector<4x1xf32> to vector<4x128xf32>
    %139 = arith.subf %133, %138 : vector<4x128xf32>
    %140 = arith.mulf %139, %139 : vector<4x128xf32>
    %cst_26 = arith.constant dense<0.000000e+00> : vector<4xf32>
    %141 = vector.multi_reduction <add>, %140, %cst_26 [1] : vector<4x128xf32> to vector<4xf32>
    %142 = vector.shape_cast %141 : vector<4xf32> to vector<4x1xf32>
    %cst_27 = arith.constant 1.280000e+02 : f32
    %143 = vector.broadcast %cst_27 : f32 to vector<4x1xf32>
    %144 = arith.divf %142, %143 : vector<4x1xf32>
    %145 = vector.broadcast %137 : vector<4x1xf32> to vector<4x128xf32>
    %146 = arith.subf %133, %145 : vector<4x128xf32>
    %cst_28 = arith.constant 9.99999974E-6 : f32
    %147 = vector.broadcast %cst_28 : f32 to vector<4x1xf32>
    %148 = arith.addf %144, %147 : vector<4x1xf32>
    %149 = math.rsqrt %148 : vector<4x1xf32>
    %150 = vector.broadcast %149 : vector<4x1xf32> to vector<4x128xf32>
    %151 = arith.mulf %146, %150 : vector<4x128xf32>
    %cst_29 = arith.constant 0.000000e+00 : f32
    %152 = vector.broadcast %cst_29 : f32 to vector<4x128xf32>
    %153 = arith.maximumf %151, %152 : vector<4x128xf32>
    %cst_30 = arith.constant 0.000000e+00 : f32
    %154 = vector.broadcast %cst_30 : f32 to vector<4x9xf32>
    %155 = tpu.concatenate %154, %153, %154 in 1 : vector<4x9xf32>, vector<4x128xf32>, vector<4x9xf32> -> vector<4x146xf32>
    %156 = vector.extract_strided_slice %155 {offsets = [0, 9], sizes = [4, 128], strides = [1, 1]} : vector<4x146xf32> to vector<4x128xf32>
    %157 = vector.extract_strided_slice %155 {offsets = [0, 10], sizes = [4, 128], strides = [1, 1]} : vector<4x146xf32> to vector<4x128xf32>
    %158 = arith.maximumf %156, %157 : vector<4x128xf32>
    %159 = vector.extract_strided_slice %155 {offsets = [0, 17], sizes = [4, 128], strides = [1, 1]} : vector<4x146xf32> to vector<4x128xf32>
    %160 = vector.extract_strided_slice %155 {offsets = [0, 18], sizes = [4, 128], strides = [1, 1]} : vector<4x146xf32> to vector<4x128xf32>
    %161 = arith.maximumf %159, %160 : vector<4x128xf32>
    %162 = arith.maximumf %158, %161 : vector<4x128xf32>
    %c0_31 = arith.constant 0 : index
    %c0_32 = arith.constant 0 : index
    %163 = vector.load %arg13[%c0_31, %c0_32] : memref<128x32xf32, #tpu.memory_space<vmem>>, vector<128x32xf32>
    %cst_33 = arith.constant dense<0.000000e+00> : vector<4x32xf32>
    %164 = tpu.matmul %162, %163, %cst_33 {dimension_numbers = #tpu.dot_dimension_numbers<[1], [0], [0], [1], [0, 0, 1, 1], [], []>} : vector<4x128xf32>, vector<128x32xf32>, vector<4x32xf32> -> vector<4x32xf32>
    %cst_34 = arith.constant 0.000000e+00 : f32
    %165 = vector.broadcast %cst_34 : f32 to vector<4x5xf32>
    %166 = tpu.concatenate %165, %164, %165 in 1 : vector<4x5xf32>, vector<4x32xf32>, vector<4x5xf32> -> vector<4x42xf32>
    %c0_35 = arith.constant 0 : index
    %c0_36 = arith.constant 0 : index
    %c0_37 = arith.constant 0 : index
    %167 = vector.load %arg3[%c0_35, %c0_36, %c0_37] : memref<9x1x32xf32, #tpu.memory_space<vmem>>, vector<9x1x32xf32>
    %168 = vector.extract_strided_slice %167 {offsets = [0, 0, 0], sizes = [1, 1, 32], strides = [1, 1, 1]} : vector<9x1x32xf32> to vector<1x1x32xf32>
    %169 = vector.shape_cast %168 : vector<1x1x32xf32> to vector<1x32xf32>
    %170 = vector.extract_strided_slice %166 {offsets = [0, 0], sizes = [4, 32], strides = [1, 1]} : vector<4x42xf32> to vector<4x32xf32>
    %171 = vector.broadcast %169 : vector<1x32xf32> to vector<4x32xf32>
    %172 = arith.mulf %170, %171 : vector<4x32xf32>
    %173 = vector.extract_strided_slice %167 {offsets = [1, 0, 0], sizes = [1, 1, 32], strides = [1, 1, 1]} : vector<9x1x32xf32> to vector<1x1x32xf32>
    %174 = vector.shape_cast %173 : vector<1x1x32xf32> to vector<1x32xf32>
    %175 = vector.extract_strided_slice %166 {offsets = [0, 1], sizes = [4, 32], strides = [1, 1]} : vector<4x42xf32> to vector<4x32xf32>
    %176 = vector.broadcast %174 : vector<1x32xf32> to vector<4x32xf32>
    %177 = arith.mulf %175, %176 : vector<4x32xf32>
    %178 = vector.extract_strided_slice %167 {offsets = [2, 0, 0], sizes = [1, 1, 32], strides = [1, 1, 1]} : vector<9x1x32xf32> to vector<1x1x32xf32>
    %179 = vector.shape_cast %178 : vector<1x1x32xf32> to vector<1x32xf32>
    %180 = vector.extract_strided_slice %166 {offsets = [0, 2], sizes = [4, 32], strides = [1, 1]} : vector<4x42xf32> to vector<4x32xf32>
    %181 = vector.broadcast %179 : vector<1x32xf32> to vector<4x32xf32>
    %182 = arith.mulf %180, %181 : vector<4x32xf32>
    %183 = vector.extract_strided_slice %167 {offsets = [3, 0, 0], sizes = [1, 1, 32], strides = [1, 1, 1]} : vector<9x1x32xf32> to vector<1x1x32xf32>
    %184 = vector.shape_cast %183 : vector<1x1x32xf32> to vector<1x32xf32>
    %185 = vector.extract_strided_slice %166 {offsets = [0, 4], sizes = [4, 32], strides = [1, 1]} : vector<4x42xf32> to vector<4x32xf32>
    %186 = vector.broadcast %184 : vector<1x32xf32> to vector<4x32xf32>
    %187 = arith.mulf %185, %186 : vector<4x32xf32>
    %188 = vector.extract_strided_slice %167 {offsets = [4, 0, 0], sizes = [1, 1, 32], strides = [1, 1, 1]} : vector<9x1x32xf32> to vector<1x1x32xf32>
    %189 = vector.shape_cast %188 : vector<1x1x32xf32> to vector<1x32xf32>
    %190 = vector.extract_strided_slice %166 {offsets = [0, 5], sizes = [4, 32], strides = [1, 1]} : vector<4x42xf32> to vector<4x32xf32>
    %191 = vector.broadcast %189 : vector<1x32xf32> to vector<4x32xf32>
    %192 = arith.mulf %190, %191 : vector<4x32xf32>
    %193 = vector.extract_strided_slice %167 {offsets = [5, 0, 0], sizes = [1, 1, 32], strides = [1, 1, 1]} : vector<9x1x32xf32> to vector<1x1x32xf32>
    %194 = vector.shape_cast %193 : vector<1x1x32xf32> to vector<1x32xf32>
    %195 = vector.extract_strided_slice %166 {offsets = [0, 6], sizes = [4, 32], strides = [1, 1]} : vector<4x42xf32> to vector<4x32xf32>
    %196 = vector.broadcast %194 : vector<1x32xf32> to vector<4x32xf32>
    %197 = arith.mulf %195, %196 : vector<4x32xf32>
    %198 = vector.extract_strided_slice %167 {offsets = [6, 0, 0], sizes = [1, 1, 32], strides = [1, 1, 1]} : vector<9x1x32xf32> to vector<1x1x32xf32>
    %199 = vector.shape_cast %198 : vector<1x1x32xf32> to vector<1x32xf32>
    %200 = vector.extract_strided_slice %166 {offsets = [0, 8], sizes = [4, 32], strides = [1, 1]} : vector<4x42xf32> to vector<4x32xf32>
    %201 = vector.broadcast %199 : vector<1x32xf32> to vector<4x32xf32>
    %202 = arith.mulf %200, %201 : vector<4x32xf32>
    %203 = vector.extract_strided_slice %167 {offsets = [7, 0, 0], sizes = [1, 1, 32], strides = [1, 1, 1]} : vector<9x1x32xf32> to vector<1x1x32xf32>
    %204 = vector.shape_cast %203 : vector<1x1x32xf32> to vector<1x32xf32>
    %205 = vector.extract_strided_slice %166 {offsets = [0, 9], sizes = [4, 32], strides = [1, 1]} : vector<4x42xf32> to vector<4x32xf32>
    %206 = vector.broadcast %204 : vector<1x32xf32> to vector<4x32xf32>
    %207 = arith.mulf %205, %206 : vector<4x32xf32>
    %208 = vector.extract_strided_slice %167 {offsets = [8, 0, 0], sizes = [1, 1, 32], strides = [1, 1, 1]} : vector<9x1x32xf32> to vector<1x1x32xf32>
    %209 = vector.shape_cast %208 : vector<1x1x32xf32> to vector<1x32xf32>
    %210 = vector.extract_strided_slice %166 {offsets = [0, 10], sizes = [4, 32], strides = [1, 1]} : vector<4x42xf32> to vector<4x32xf32>
    %211 = vector.broadcast %209 : vector<1x32xf32> to vector<4x32xf32>
    %212 = arith.mulf %210, %211 : vector<4x32xf32>
    %213 = tpu.concatenate %172, %177, %182, %187, %192, %197, %202, %207, %212 in 0 : vector<4x32xf32>, vector<4x32xf32>, vector<4x32xf32>, vector<4x32xf32>, vector<4x32xf32>, vector<4x32xf32>, vector<4x32xf32>, vector<4x32xf32>, vector<4x32xf32> -> vector<36x32xf32>
    %c0_38 = arith.constant 0 : index
    %c0_39 = arith.constant 0 : index
    %214 = vector.load %arg10[%c0_38, %c0_39] : memref<8x36xf32, #tpu.memory_space<vmem>>, vector<8x36xf32>
    %cst_40 = arith.constant dense<0.000000e+00> : vector<8x32xf32>
    %215 = tpu.matmul %214, %213, %cst_40 {dimension_numbers = #tpu.dot_dimension_numbers<[1], [0], [0], [1], [0, 0, 1, 1], [], []>} : vector<8x36xf32>, vector<36x32xf32>, vector<8x32xf32> -> vector<8x32xf32>
    %cst_41 = arith.constant dense<0.000000e+00> : vector<8xf32>
    %216 = vector.multi_reduction <add>, %215, %cst_41 [1] : vector<8x32xf32> to vector<8xf32>
    %217 = vector.shape_cast %216 : vector<8xf32> to vector<8x1xf32>
    %cst_42 = arith.constant 3.200000e+01 : f32
    %218 = vector.broadcast %cst_42 : f32 to vector<8x1xf32>
    %219 = arith.divf %217, %218 : vector<8x1xf32>
    %220 = vector.broadcast %219 : vector<8x1xf32> to vector<8x32xf32>
    %221 = arith.subf %215, %220 : vector<8x32xf32>
    %222 = arith.mulf %221, %221 : vector<8x32xf32>
    %cst_43 = arith.constant dense<0.000000e+00> : vector<8xf32>
    %223 = vector.multi_reduction <add>, %222, %cst_43 [1] : vector<8x32xf32> to vector<8xf32>
    %224 = vector.shape_cast %223 : vector<8xf32> to vector<8x1xf32>
    %cst_44 = arith.constant 3.200000e+01 : f32
    %225 = vector.broadcast %cst_44 : f32 to vector<8x1xf32>
    %226 = arith.divf %224, %225 : vector<8x1xf32>
    %227 = vector.broadcast %219 : vector<8x1xf32> to vector<8x32xf32>
    %228 = arith.subf %215, %227 : vector<8x32xf32>
    %cst_45 = arith.constant 9.99999974E-6 : f32
    %229 = vector.broadcast %cst_45 : f32 to vector<8x1xf32>
    %230 = arith.addf %226, %229 : vector<8x1xf32>
    %231 = math.rsqrt %230 : vector<8x1xf32>
    %232 = vector.broadcast %231 : vector<8x1xf32> to vector<8x32xf32>
    %233 = arith.mulf %228, %232 : vector<8x32xf32>
    %cst_46 = arith.constant 0.000000e+00 : f32
    %234 = vector.broadcast %cst_46 : f32 to vector<8x32xf32>
    %235 = arith.maximumf %233, %234 : vector<8x32xf32>
    %cst_47 = arith.constant 0.000000e+00 : f32
    %236 = vector.broadcast %cst_47 : f32 to vector<8x5xf32>
    %237 = tpu.concatenate %236, %235, %236 in 1 : vector<8x5xf32>, vector<8x32xf32>, vector<8x5xf32> -> vector<8x42xf32>
    %238 = vector.extract_strided_slice %237 {offsets = [0, 5], sizes = [8, 32], strides = [1, 1]} : vector<8x42xf32> to vector<8x32xf32>
    %239 = vector.extract_strided_slice %237 {offsets = [0, 6], sizes = [8, 32], strides = [1, 1]} : vector<8x42xf32> to vector<8x32xf32>
    %240 = arith.maximumf %238, %239 : vector<8x32xf32>
    %241 = vector.extract_strided_slice %237 {offsets = [0, 9], sizes = [8, 32], strides = [1, 1]} : vector<8x42xf32> to vector<8x32xf32>
    %242 = vector.extract_strided_slice %237 {offsets = [0, 10], sizes = [8, 32], strides = [1, 1]} : vector<8x42xf32> to vector<8x32xf32>
    %243 = arith.maximumf %241, %242 : vector<8x32xf32>
    %244 = arith.maximumf %240, %243 : vector<8x32xf32>
    %c0_48 = arith.constant 0 : index
    %c0_49 = arith.constant 0 : index
    %245 = vector.load %arg14[%c0_48, %c0_49] : memref<32x8xf32, #tpu.memory_space<vmem>>, vector<32x8xf32>
    %cst_50 = arith.constant dense<0.000000e+00> : vector<8x8xf32>
    %246 = tpu.matmul %244, %245, %cst_50 {dimension_numbers = #tpu.dot_dimension_numbers<[1], [0], [0], [1], [0, 0, 1, 1], [], []>} : vector<8x32xf32>, vector<32x8xf32>, vector<8x8xf32> -> vector<8x8xf32>
    %cst_51 = arith.constant 0.000000e+00 : f32
    %247 = vector.broadcast %cst_51 : f32 to vector<8x3xf32>
    %248 = tpu.concatenate %247, %246, %247 in 1 : vector<8x3xf32>, vector<8x8xf32>, vector<8x3xf32> -> vector<8x14xf32>
    %c0_52 = arith.constant 0 : index
    %c0_53 = arith.constant 0 : index
    %c0_54 = arith.constant 0 : index
    %249 = vector.load %arg4[%c0_52, %c0_53, %c0_54] : memref<9x1x8xf32, #tpu.memory_space<vmem>>, vector<9x1x8xf32>
    %250 = vector.extract_strided_slice %249 {offsets = [0, 0, 0], sizes = [1, 1, 8], strides = [1, 1, 1]} : vector<9x1x8xf32> to vector<1x1x8xf32>
    %251 = vector.shape_cast %250 : vector<1x1x8xf32> to vector<1x8xf32>
    %252 = vector.extract_strided_slice %248 {offsets = [0, 0], sizes = [8, 8], strides = [1, 1]} : vector<8x14xf32> to vector<8x8xf32>
    %253 = vector.broadcast %251 : vector<1x8xf32> to vector<8x8xf32>
    %254 = arith.mulf %252, %253 : vector<8x8xf32>
    %255 = vector.extract_strided_slice %249 {offsets = [1, 0, 0], sizes = [1, 1, 8], strides = [1, 1, 1]} : vector<9x1x8xf32> to vector<1x1x8xf32>
    %256 = vector.shape_cast %255 : vector<1x1x8xf32> to vector<1x8xf32>
    %257 = vector.extract_strided_slice %248 {offsets = [0, 1], sizes = [8, 8], strides = [1, 1]} : vector<8x14xf32> to vector<8x8xf32>
    %258 = vector.broadcast %256 : vector<1x8xf32> to vector<8x8xf32>
    %259 = arith.mulf %257, %258 : vector<8x8xf32>
    %260 = vector.extract_strided_slice %249 {offsets = [2, 0, 0], sizes = [1, 1, 8], strides = [1, 1, 1]} : vector<9x1x8xf32> to vector<1x1x8xf32>
    %261 = vector.shape_cast %260 : vector<1x1x8xf32> to vector<1x8xf32>
    %262 = vector.extract_strided_slice %248 {offsets = [0, 2], sizes = [8, 8], strides = [1, 1]} : vector<8x14xf32> to vector<8x8xf32>
    %263 = vector.broadcast %261 : vector<1x8xf32> to vector<8x8xf32>
    %264 = arith.mulf %262, %263 : vector<8x8xf32>
    %265 = vector.extract_strided_slice %249 {offsets = [3, 0, 0], sizes = [1, 1, 8], strides = [1, 1, 1]} : vector<9x1x8xf32> to vector<1x1x8xf32>
    %266 = vector.shape_cast %265 : vector<1x1x8xf32> to vector<1x8xf32>
    %267 = vector.extract_strided_slice %248 {offsets = [0, 2], sizes = [8, 8], strides = [1, 1]} : vector<8x14xf32> to vector<8x8xf32>
    %268 = vector.broadcast %266 : vector<1x8xf32> to vector<8x8xf32>
    %269 = arith.mulf %267, %268 : vector<8x8xf32>
    %270 = vector.extract_strided_slice %249 {offsets = [4, 0, 0], sizes = [1, 1, 8], strides = [1, 1, 1]} : vector<9x1x8xf32> to vector<1x1x8xf32>
    %271 = vector.shape_cast %270 : vector<1x1x8xf32> to vector<1x8xf32>
    %272 = vector.extract_strided_slice %248 {offsets = [0, 3], sizes = [8, 8], strides = [1, 1]} : vector<8x14xf32> to vector<8x8xf32>
    %273 = vector.broadcast %271 : vector<1x8xf32> to vector<8x8xf32>
    %274 = arith.mulf %272, %273 : vector<8x8xf32>
    %275 = vector.extract_strided_slice %249 {offsets = [5, 0, 0], sizes = [1, 1, 8], strides = [1, 1, 1]} : vector<9x1x8xf32> to vector<1x1x8xf32>
    %276 = vector.shape_cast %275 : vector<1x1x8xf32> to vector<1x8xf32>
    %277 = vector.extract_strided_slice %248 {offsets = [0, 4], sizes = [8, 8], strides = [1, 1]} : vector<8x14xf32> to vector<8x8xf32>
    %278 = vector.broadcast %276 : vector<1x8xf32> to vector<8x8xf32>
    %279 = arith.mulf %277, %278 : vector<8x8xf32>
    %280 = vector.extract_strided_slice %249 {offsets = [6, 0, 0], sizes = [1, 1, 8], strides = [1, 1, 1]} : vector<9x1x8xf32> to vector<1x1x8xf32>
    %281 = vector.shape_cast %280 : vector<1x1x8xf32> to vector<1x8xf32>
    %282 = vector.extract_strided_slice %248 {offsets = [0, 4], sizes = [8, 8], strides = [1, 1]} : vector<8x14xf32> to vector<8x8xf32>
    %283 = vector.broadcast %281 : vector<1x8xf32> to vector<8x8xf32>
    %284 = arith.mulf %282, %283 : vector<8x8xf32>
    %285 = vector.extract_strided_slice %249 {offsets = [7, 0, 0], sizes = [1, 1, 8], strides = [1, 1, 1]} : vector<9x1x8xf32> to vector<1x1x8xf32>
    %286 = vector.shape_cast %285 : vector<1x1x8xf32> to vector<1x8xf32>
    %287 = vector.extract_strided_slice %248 {offsets = [0, 5], sizes = [8, 8], strides = [1, 1]} : vector<8x14xf32> to vector<8x8xf32>
    %288 = vector.broadcast %286 : vector<1x8xf32> to vector<8x8xf32>
    %289 = arith.mulf %287, %288 : vector<8x8xf32>
    %290 = vector.extract_strided_slice %249 {offsets = [8, 0, 0], sizes = [1, 1, 8], strides = [1, 1, 1]} : vector<9x1x8xf32> to vector<1x1x8xf32>
    %291 = vector.shape_cast %290 : vector<1x1x8xf32> to vector<1x8xf32>
    %292 = vector.extract_strided_slice %248 {offsets = [0, 6], sizes = [8, 8], strides = [1, 1]} : vector<8x14xf32> to vector<8x8xf32>
    %293 = vector.broadcast %291 : vector<1x8xf32> to vector<8x8xf32>
    %294 = arith.mulf %292, %293 : vector<8x8xf32>
    %295 = tpu.concatenate %254, %259, %264, %269, %274, %279, %284, %289, %294 in 0 : vector<8x8xf32>, vector<8x8xf32>, vector<8x8xf32>, vector<8x8xf32>, vector<8x8xf32>, vector<8x8xf32>, vector<8x8xf32>, vector<8x8xf32>, vector<8x8xf32> -> vector<72x8xf32>
    %c0_55 = arith.constant 0 : index
    %c0_56 = arith.constant 0 : index
    %296 = vector.load %arg11[%c0_55, %c0_56] : memref<16x72xf32, #tpu.memory_space<vmem>>, vector<16x72xf32>
    %cst_57 = arith.constant dense<0.000000e+00> : vector<16x8xf32>
    %297 = tpu.matmul %296, %295, %cst_57 {dimension_numbers = #tpu.dot_dimension_numbers<[1], [0], [0], [1], [0, 0, 1, 1], [], []>} : vector<16x72xf32>, vector<72x8xf32>, vector<16x8xf32> -> vector<16x8xf32>
    %cst_58 = arith.constant dense<0.000000e+00> : vector<16xf32>
    %298 = vector.multi_reduction <add>, %297, %cst_58 [1] : vector<16x8xf32> to vector<16xf32>
    %299 = vector.shape_cast %298 : vector<16xf32> to vector<16x1xf32>
    %cst_59 = arith.constant 8.000000e+00 : f32
    %300 = vector.broadcast %cst_59 : f32 to vector<16x1xf32>
    %301 = arith.divf %299, %300 : vector<16x1xf32>
    %302 = vector.broadcast %301 : vector<16x1xf32> to vector<16x8xf32>
    %303 = arith.subf %297, %302 : vector<16x8xf32>
    %304 = arith.mulf %303, %303 : vector<16x8xf32>
    %cst_60 = arith.constant dense<0.000000e+00> : vector<16xf32>
    %305 = vector.multi_reduction <add>, %304, %cst_60 [1] : vector<16x8xf32> to vector<16xf32>
    %306 = vector.shape_cast %305 : vector<16xf32> to vector<16x1xf32>
    %cst_61 = arith.constant 8.000000e+00 : f32
    %307 = vector.broadcast %cst_61 : f32 to vector<16x1xf32>
    %308 = arith.divf %306, %307 : vector<16x1xf32>
    %309 = vector.broadcast %301 : vector<16x1xf32> to vector<16x8xf32>
    %310 = arith.subf %297, %309 : vector<16x8xf32>
    %cst_62 = arith.constant 9.99999974E-6 : f32
    %311 = vector.broadcast %cst_62 : f32 to vector<16x1xf32>
    %312 = arith.addf %308, %311 : vector<16x1xf32>
    %313 = math.rsqrt %312 : vector<16x1xf32>
    %314 = vector.broadcast %313 : vector<16x1xf32> to vector<16x8xf32>
    %315 = arith.mulf %310, %314 : vector<16x8xf32>
    %cst_63 = arith.constant 0.000000e+00 : f32
    %316 = vector.broadcast %cst_63 : f32 to vector<16x8xf32>
    %317 = arith.maximumf %315, %316 : vector<16x8xf32>
    %cst_64 = arith.constant 0.000000e+00 : f32
    %318 = vector.broadcast %cst_64 : f32 to vector<16x6xf32>
    %319 = tpu.concatenate %318, %317, %318 in 1 : vector<16x6xf32>, vector<16x8xf32>, vector<16x6xf32> -> vector<16x20xf32>
    %c0_65 = arith.constant 0 : index
    %c0_66 = arith.constant 0 : index
    %c0_67 = arith.constant 0 : index
    %320 = vector.load %arg5[%c0_65, %c0_66, %c0_67] : memref<16x1x8xf32, #tpu.memory_space<vmem>>, vector<16x1x8xf32>
    %cst_68 = arith.constant 0.000000e+00 : f32
    %321 = vector.broadcast %cst_68 : f32 to vector<16x8xf32>
    %322 = vector.extract_strided_slice %319 {offsets = [0, 3], sizes = [16, 8], strides = [1, 1]} : vector<16x20xf32> to vector<16x8xf32>
    %323 = vector.extract_strided_slice %320 {offsets = [0, 0, 0], sizes = [1, 1, 8], strides = [1, 1, 1]} : vector<16x1x8xf32> to vector<1x1x8xf32>
    %324 = vector.shape_cast %323 : vector<1x1x8xf32> to vector<1x8xf32>
    %325 = vector.broadcast %324 : vector<1x8xf32> to vector<16x8xf32>
    %326 = arith.mulf %322, %325 : vector<16x8xf32>
    %327 = arith.mulf %326, %326 : vector<16x8xf32>
    %328 = arith.addf %321, %327 : vector<16x8xf32>
    %329 = vector.extract_strided_slice %319 {offsets = [0, 4], sizes = [16, 8], strides = [1, 1]} : vector<16x20xf32> to vector<16x8xf32>
    %330 = vector.extract_strided_slice %320 {offsets = [1, 0, 0], sizes = [1, 1, 8], strides = [1, 1, 1]} : vector<16x1x8xf32> to vector<1x1x8xf32>
    %331 = vector.shape_cast %330 : vector<1x1x8xf32> to vector<1x8xf32>
    %332 = vector.broadcast %331 : vector<1x8xf32> to vector<16x8xf32>
    %333 = arith.mulf %329, %332 : vector<16x8xf32>
    %334 = arith.mulf %333, %333 : vector<16x8xf32>
    %335 = arith.addf %328, %334 : vector<16x8xf32>
    %336 = vector.extract_strided_slice %319 {offsets = [0, 5], sizes = [16, 8], strides = [1, 1]} : vector<16x20xf32> to vector<16x8xf32>
    %337 = vector.extract_strided_slice %320 {offsets = [2, 0, 0], sizes = [1, 1, 8], strides = [1, 1, 1]} : vector<16x1x8xf32> to vector<1x1x8xf32>
    %338 = vector.shape_cast %337 : vector<1x1x8xf32> to vector<1x8xf32>
    %339 = vector.broadcast %338 : vector<1x8xf32> to vector<16x8xf32>
    %340 = arith.mulf %336, %339 : vector<16x8xf32>
    %341 = arith.mulf %340, %340 : vector<16x8xf32>
    %342 = arith.addf %335, %341 : vector<16x8xf32>
    %343 = vector.extract_strided_slice %319 {offsets = [0, 6], sizes = [16, 8], strides = [1, 1]} : vector<16x20xf32> to vector<16x8xf32>
    %344 = vector.extract_strided_slice %320 {offsets = [3, 0, 0], sizes = [1, 1, 8], strides = [1, 1, 1]} : vector<16x1x8xf32> to vector<1x1x8xf32>
    %345 = vector.shape_cast %344 : vector<1x1x8xf32> to vector<1x8xf32>
    %346 = vector.broadcast %345 : vector<1x8xf32> to vector<16x8xf32>
    %347 = arith.mulf %343, %346 : vector<16x8xf32>
    %348 = arith.mulf %347, %347 : vector<16x8xf32>
    %349 = arith.addf %342, %348 : vector<16x8xf32>
    %350 = vector.extract_strided_slice %319 {offsets = [0, 5], sizes = [16, 8], strides = [1, 1]} : vector<16x20xf32> to vector<16x8xf32>
    %351 = vector.extract_strided_slice %320 {offsets = [4, 0, 0], sizes = [1, 1, 8], strides = [1, 1, 1]} : vector<16x1x8xf32> to vector<1x1x8xf32>
    %352 = vector.shape_cast %351 : vector<1x1x8xf32> to vector<1x8xf32>
    %353 = vector.broadcast %352 : vector<1x8xf32> to vector<16x8xf32>
    %354 = arith.mulf %350, %353 : vector<16x8xf32>
    %355 = arith.mulf %354, %354 : vector<16x8xf32>
    %356 = arith.addf %349, %355 : vector<16x8xf32>
    %357 = vector.extract_strided_slice %319 {offsets = [0, 6], sizes = [16, 8], strides = [1, 1]} : vector<16x20xf32> to vector<16x8xf32>
    %358 = vector.extract_strided_slice %320 {offsets = [5, 0, 0], sizes = [1, 1, 8], strides = [1, 1, 1]} : vector<16x1x8xf32> to vector<1x1x8xf32>
    %359 = vector.shape_cast %358 : vector<1x1x8xf32> to vector<1x8xf32>
    %360 = vector.broadcast %359 : vector<1x8xf32> to vector<16x8xf32>
    %361 = arith.mulf %357, %360 : vector<16x8xf32>
    %362 = arith.mulf %361, %361 : vector<16x8xf32>
    %363 = arith.addf %356, %362 : vector<16x8xf32>
    %364 = vector.extract_strided_slice %319 {offsets = [0, 7], sizes = [16, 8], strides = [1, 1]} : vector<16x20xf32> to vector<16x8xf32>
    %365 = vector.extract_strided_slice %320 {offsets = [6, 0, 0], sizes = [1, 1, 8], strides = [1, 1, 1]} : vector<16x1x8xf32> to vector<1x1x8xf32>
    %366 = vector.shape_cast %365 : vector<1x1x8xf32> to vector<1x8xf32>
    %367 = vector.broadcast %366 : vector<1x8xf32> to vector<16x8xf32>
    %368 = arith.mulf %364, %367 : vector<16x8xf32>
    %369 = arith.mulf %368, %368 : vector<16x8xf32>
    %370 = arith.addf %363, %369 : vector<16x8xf32>
    %371 = vector.extract_strided_slice %319 {offsets = [0, 8], sizes = [16, 8], strides = [1, 1]} : vector<16x20xf32> to vector<16x8xf32>
    %372 = vector.extract_strided_slice %320 {offsets = [7, 0, 0], sizes = [1, 1, 8], strides = [1, 1, 1]} : vector<16x1x8xf32> to vector<1x1x8xf32>
    %373 = vector.shape_cast %372 : vector<1x1x8xf32> to vector<1x8xf32>
    %374 = vector.broadcast %373 : vector<1x8xf32> to vector<16x8xf32>
    %375 = arith.mulf %371, %374 : vector<16x8xf32>
    %376 = arith.mulf %375, %375 : vector<16x8xf32>
    %377 = arith.addf %370, %376 : vector<16x8xf32>
    %378 = vector.extract_strided_slice %319 {offsets = [0, 7], sizes = [16, 8], strides = [1, 1]} : vector<16x20xf32> to vector<16x8xf32>
    %379 = vector.extract_strided_slice %320 {offsets = [8, 0, 0], sizes = [1, 1, 8], strides = [1, 1, 1]} : vector<16x1x8xf32> to vector<1x1x8xf32>
    %380 = vector.shape_cast %379 : vector<1x1x8xf32> to vector<1x8xf32>
    %381 = vector.broadcast %380 : vector<1x8xf32> to vector<16x8xf32>
    %382 = arith.mulf %378, %381 : vector<16x8xf32>
    %383 = arith.mulf %382, %382 : vector<16x8xf32>
    %384 = arith.addf %377, %383 : vector<16x8xf32>
    %385 = vector.extract_strided_slice %319 {offsets = [0, 8], sizes = [16, 8], strides = [1, 1]} : vector<16x20xf32> to vector<16x8xf32>
    %386 = vector.extract_strided_slice %320 {offsets = [9, 0, 0], sizes = [1, 1, 8], strides = [1, 1, 1]} : vector<16x1x8xf32> to vector<1x1x8xf32>
    %387 = vector.shape_cast %386 : vector<1x1x8xf32> to vector<1x8xf32>
    %388 = vector.broadcast %387 : vector<1x8xf32> to vector<16x8xf32>
    %389 = arith.mulf %385, %388 : vector<16x8xf32>
    %390 = arith.mulf %389, %389 : vector<16x8xf32>
    %391 = arith.addf %384, %390 : vector<16x8xf32>
    %392 = vector.extract_strided_slice %319 {offsets = [0, 9], sizes = [16, 8], strides = [1, 1]} : vector<16x20xf32> to vector<16x8xf32>
    %393 = vector.extract_strided_slice %320 {offsets = [10, 0, 0], sizes = [1, 1, 8], strides = [1, 1, 1]} : vector<16x1x8xf32> to vector<1x1x8xf32>
    %394 = vector.shape_cast %393 : vector<1x1x8xf32> to vector<1x8xf32>
    %395 = vector.broadcast %394 : vector<1x8xf32> to vector<16x8xf32>
    %396 = arith.mulf %392, %395 : vector<16x8xf32>
    %397 = arith.mulf %396, %396 : vector<16x8xf32>
    %398 = arith.addf %391, %397 : vector<16x8xf32>
    %399 = vector.extract_strided_slice %319 {offsets = [0, 10], sizes = [16, 8], strides = [1, 1]} : vector<16x20xf32> to vector<16x8xf32>
    %400 = vector.extract_strided_slice %320 {offsets = [11, 0, 0], sizes = [1, 1, 8], strides = [1, 1, 1]} : vector<16x1x8xf32> to vector<1x1x8xf32>
    %401 = vector.shape_cast %400 : vector<1x1x8xf32> to vector<1x8xf32>
    %402 = vector.broadcast %401 : vector<1x8xf32> to vector<16x8xf32>
    %403 = arith.mulf %399, %402 : vector<16x8xf32>
    %404 = arith.mulf %403, %403 : vector<16x8xf32>
    %405 = arith.addf %398, %404 : vector<16x8xf32>
    %406 = vector.extract_strided_slice %319 {offsets = [0, 9], sizes = [16, 8], strides = [1, 1]} : vector<16x20xf32> to vector<16x8xf32>
    %407 = vector.extract_strided_slice %320 {offsets = [12, 0, 0], sizes = [1, 1, 8], strides = [1, 1, 1]} : vector<16x1x8xf32> to vector<1x1x8xf32>
    %408 = vector.shape_cast %407 : vector<1x1x8xf32> to vector<1x8xf32>
    %409 = vector.broadcast %408 : vector<1x8xf32> to vector<16x8xf32>
    %410 = arith.mulf %406, %409 : vector<16x8xf32>
    %411 = arith.mulf %410, %410 : vector<16x8xf32>
    %412 = arith.addf %405, %411 : vector<16x8xf32>
    %413 = vector.extract_strided_slice %319 {offsets = [0, 10], sizes = [16, 8], strides = [1, 1]} : vector<16x20xf32> to vector<16x8xf32>
    %414 = vector.extract_strided_slice %320 {offsets = [13, 0, 0], sizes = [1, 1, 8], strides = [1, 1, 1]} : vector<16x1x8xf32> to vector<1x1x8xf32>
    %415 = vector.shape_cast %414 : vector<1x1x8xf32> to vector<1x8xf32>
    %416 = vector.broadcast %415 : vector<1x8xf32> to vector<16x8xf32>
    %417 = arith.mulf %413, %416 : vector<16x8xf32>
    %418 = arith.mulf %417, %417 : vector<16x8xf32>
    %419 = arith.addf %412, %418 : vector<16x8xf32>
    %420 = vector.extract_strided_slice %319 {offsets = [0, 11], sizes = [16, 8], strides = [1, 1]} : vector<16x20xf32> to vector<16x8xf32>
    %421 = vector.extract_strided_slice %320 {offsets = [14, 0, 0], sizes = [1, 1, 8], strides = [1, 1, 1]} : vector<16x1x8xf32> to vector<1x1x8xf32>
    %422 = vector.shape_cast %421 : vector<1x1x8xf32> to vector<1x8xf32>
    %423 = vector.broadcast %422 : vector<1x8xf32> to vector<16x8xf32>
    %424 = arith.mulf %420, %423 : vector<16x8xf32>
    %425 = arith.mulf %424, %424 : vector<16x8xf32>
    %426 = arith.addf %419, %425 : vector<16x8xf32>
    %427 = vector.extract_strided_slice %319 {offsets = [0, 12], sizes = [16, 8], strides = [1, 1]} : vector<16x20xf32> to vector<16x8xf32>
    %428 = vector.extract_strided_slice %320 {offsets = [15, 0, 0], sizes = [1, 1, 8], strides = [1, 1, 1]} : vector<16x1x8xf32> to vector<1x1x8xf32>
    %429 = vector.shape_cast %428 : vector<1x1x8xf32> to vector<1x8xf32>
    %430 = vector.broadcast %429 : vector<1x8xf32> to vector<16x8xf32>
    %431 = arith.mulf %427, %430 : vector<16x8xf32>
    %432 = arith.mulf %431, %431 : vector<16x8xf32>
    %433 = arith.addf %426, %432 : vector<16x8xf32>
    %434 = tpu.concatenate %326, %333, %340, %347, %354, %361, %368, %375, %382, %389, %396, %403, %410, %417, %424, %431 in 1 : vector<16x8xf32>, vector<16x8xf32>, vector<16x8xf32>, vector<16x8xf32>, vector<16x8xf32>, vector<16x8xf32>, vector<16x8xf32>, vector<16x8xf32>, vector<16x8xf32>, vector<16x8xf32>, vector<16x8xf32>, vector<16x8xf32>, vector<16x8xf32>, vector<16x8xf32>, vector<16x8xf32>, vector<16x8xf32> -> vector<16x128xf32>
    %c0_69 = arith.constant 0 : index
    %c0_70 = arith.constant 0 : index
    %435 = vector.load %arg6[%c0_69, %c0_70] : memref<128x128xf32, #tpu.memory_space<vmem>>, vector<128x128xf32>
    %cst_71 = arith.constant dense<0.000000e+00> : vector<16x128xf32>
    %436 = tpu.matmul %434, %435, %cst_71 {dimension_numbers = #tpu.dot_dimension_numbers<[1], [0], [0], [1], [0, 0, 1, 1], [], []>} : vector<16x128xf32>, vector<128x128xf32>, vector<16x128xf32> -> vector<16x128xf32>
    %437 = arith.mulf %436, %436 : vector<16x128xf32>
    %c0_72 = arith.constant 0 : index
    %c0_73 = arith.constant 0 : index
    %438 = vector.load %arg7[%c0_72, %c0_73] : memref<128x8xf32, #tpu.memory_space<vmem>>, vector<128x8xf32>
    %cst_74 = arith.constant dense<0.000000e+00> : vector<16x8xf32>
    %439 = tpu.matmul %437, %438, %cst_74 {dimension_numbers = #tpu.dot_dimension_numbers<[1], [0], [0], [1], [0, 0, 1, 1], [], []>} : vector<16x128xf32>, vector<128x8xf32>, vector<16x8xf32> -> vector<16x8xf32>
    %cst_75 = arith.constant 0.000000e+00 : f32
    %440 = vector.broadcast %cst_75 : f32 to vector<16x8xf32>
    %441 = arith.cmpf ogt, %433, %440 : vector<16x8xf32>
    %cst_76 = arith.constant 1.000000e+00 : f32
    %442 = vector.broadcast %cst_76 : f32 to vector<16x8xf32>
    %443 = arith.divf %442, %433 : vector<16x8xf32>
    %cst_77 = arith.constant 0.000000e+00 : f32
    %444 = vector.broadcast %cst_77 : f32 to vector<16x8xf32>
    %445 = arith.select %441, %443, %444 : vector<16x8xi1>, vector<16x8xf32>
    %446 = arith.mulf %439, %445 : vector<16x8xf32>
    %cst_78 = arith.constant 1.000000e+00 : f32
    %447 = vector.broadcast %cst_78 : f32 to vector<16x8xf32>
    %448 = arith.addf %446, %447 : vector<16x8xf32>
    %cst_79 = arith.constant 5.000000e-01 : f32
    %449 = vector.broadcast %cst_79 : f32 to vector<16x8xf32>
    %450 = arith.mulf %449, %448 : vector<16x8xf32>
    %cst_80 = arith.constant dense<0.000000e+00> : vector<16xf32>
    %451 = vector.multi_reduction <add>, %450, %cst_80 [1] : vector<16x8xf32> to vector<16xf32>
    %452 = vector.shape_cast %451 : vector<16xf32> to vector<16x1xf32>
    %cst_81 = arith.constant 8.000000e+00 : f32
    %453 = vector.broadcast %cst_81 : f32 to vector<16x1xf32>
    %454 = arith.divf %452, %453 : vector<16x1xf32>
    %455 = vector.broadcast %454 : vector<16x1xf32> to vector<16x8xf32>
    %456 = arith.subf %450, %455 : vector<16x8xf32>
    %457 = arith.mulf %456, %456 : vector<16x8xf32>
    %cst_82 = arith.constant dense<0.000000e+00> : vector<16xf32>
    %458 = vector.multi_reduction <add>, %457, %cst_82 [1] : vector<16x8xf32> to vector<16xf32>
    %459 = vector.shape_cast %458 : vector<16xf32> to vector<16x1xf32>
    %cst_83 = arith.constant 8.000000e+00 : f32
    %460 = vector.broadcast %cst_83 : f32 to vector<16x1xf32>
    %461 = arith.divf %459, %460 : vector<16x1xf32>
    %462 = vector.broadcast %454 : vector<16x1xf32> to vector<16x8xf32>
    %463 = arith.subf %450, %462 : vector<16x8xf32>
    %cst_84 = arith.constant 9.99999974E-6 : f32
    %464 = vector.broadcast %cst_84 : f32 to vector<16x1xf32>
    %465 = arith.addf %461, %464 : vector<16x1xf32>
    %466 = math.rsqrt %465 : vector<16x1xf32>
    %467 = vector.broadcast %466 : vector<16x1xf32> to vector<16x8xf32>
    %468 = arith.mulf %463, %467 : vector<16x8xf32>
    %cst_85 = arith.constant 0.000000e+00 : f32
    %469 = vector.broadcast %cst_85 : f32 to vector<16x8xf32>
    %470 = arith.maximumf %468, %469 : vector<16x8xf32>
    %c0_86 = arith.constant 0 : index
    %c0_87 = arith.constant 0 : index
    %471 = vector.load %arg17[%c0_86, %c0_87] : memref<8x32xf32, #tpu.memory_space<vmem>>, vector<8x32xf32>
    %cst_88 = arith.constant dense<0.000000e+00> : vector<16x32xf32>
    %472 = tpu.matmul %470, %471, %cst_88 {dimension_numbers = #tpu.dot_dimension_numbers<[1], [0], [0], [1], [0, 0, 1, 1], [], []>} : vector<16x8xf32>, vector<8x32xf32>, vector<16x32xf32> -> vector<16x32xf32>
    %cst_89 = arith.constant 0.000000e+00 : f32
    %473 = vector.broadcast %cst_89 : f32 to vector<16x5xf32>
    %474 = tpu.concatenate %473, %472, %473 in 1 : vector<16x5xf32>, vector<16x32xf32>, vector<16x5xf32> -> vector<16x42xf32>
    %475 = vector.extract_strided_slice %474 {offsets = [0, 5], sizes = [16, 32], strides = [1, 1]} : vector<16x42xf32> to vector<16x32xf32>
    %476 = vector.extract_strided_slice %474 {offsets = [0, 4], sizes = [16, 32], strides = [1, 1]} : vector<16x42xf32> to vector<16x32xf32>
    %477 = vector.extract_strided_slice %474 {offsets = [0, 1], sizes = [16, 32], strides = [1, 1]} : vector<16x42xf32> to vector<16x32xf32>
    %478 = vector.extract_strided_slice %474 {offsets = [0, 0], sizes = [16, 32], strides = [1, 1]} : vector<16x42xf32> to vector<16x32xf32>
    %479 = tpu.concatenate %475, %476, %477, %478 in 0 : vector<16x32xf32>, vector<16x32xf32>, vector<16x32xf32>, vector<16x32xf32> -> vector<64x32xf32>
    %c0_90 = arith.constant 0 : index
    %c0_91 = arith.constant 0 : index
    %480 = vector.load %arg15[%c0_90, %c0_91] : memref<8x64xf32, #tpu.memory_space<vmem>>, vector<8x64xf32>
    %cst_92 = arith.constant dense<0.000000e+00> : vector<8x32xf32>
    %481 = tpu.matmul %480, %479, %cst_92 {dimension_numbers = #tpu.dot_dimension_numbers<[1], [0], [0], [1], [0, 0, 1, 1], [], []>} : vector<8x64xf32>, vector<64x32xf32>, vector<8x32xf32> -> vector<8x32xf32>
    %c0_93 = arith.constant 0 : index
    %c0_94 = arith.constant 0 : index
    %482 = vector.load %arg16[%c0_93, %c0_94] : memref<8x1xf32, #tpu.memory_space<vmem>>, vector<8x1xf32>
    %483 = vector.broadcast %482 : vector<8x1xf32> to vector<8x32xf32>
    %484 = arith.addf %481, %483 : vector<8x32xf32>
    %cst_95 = arith.constant 0.000000e+00 : f32
    %485 = vector.broadcast %cst_95 : f32 to vector<8x5xf32>
    %486 = tpu.concatenate %485, %484, %485 in 1 : vector<8x5xf32>, vector<8x32xf32>, vector<8x5xf32> -> vector<8x42xf32>
    %cst_96 = arith.constant 0.000000e+00 : f32
    %487 = vector.broadcast %cst_96 : f32 to vector<8x5xf32>
    %488 = tpu.concatenate %487, %235, %487 in 1 : vector<8x5xf32>, vector<8x32xf32>, vector<8x5xf32> -> vector<8x42xf32>
    %c0_97 = arith.constant 0 : index
    %c0_98 = arith.constant 0 : index
    %c0_99 = arith.constant 0 : index
    %489 = vector.load %arg3[%c0_97, %c0_98, %c0_99] : memref<9x1x32xf32, #tpu.memory_space<vmem>>, vector<9x1x32xf32>
    %490 = vector.extract_strided_slice %489 {offsets = [0, 0, 0], sizes = [1, 1, 32], strides = [1, 1, 1]} : vector<9x1x32xf32> to vector<1x1x32xf32>
    %491 = vector.shape_cast %490 : vector<1x1x32xf32> to vector<1x32xf32>
    %492 = vector.extract_strided_slice %486 {offsets = [0, 0], sizes = [8, 32], strides = [1, 1]} : vector<8x42xf32> to vector<8x32xf32>
    %493 = vector.broadcast %491 : vector<1x32xf32> to vector<8x32xf32>
    %494 = arith.mulf %492, %493 : vector<8x32xf32>
    %495 = vector.extract_strided_slice %488 {offsets = [0, 0], sizes = [8, 32], strides = [1, 1]} : vector<8x42xf32> to vector<8x32xf32>
    %496 = vector.broadcast %491 : vector<1x32xf32> to vector<8x32xf32>
    %497 = arith.mulf %495, %496 : vector<8x32xf32>
    %498 = vector.extract_strided_slice %489 {offsets = [1, 0, 0], sizes = [1, 1, 32], strides = [1, 1, 1]} : vector<9x1x32xf32> to vector<1x1x32xf32>
    %499 = vector.shape_cast %498 : vector<1x1x32xf32> to vector<1x32xf32>
    %500 = vector.extract_strided_slice %486 {offsets = [0, 1], sizes = [8, 32], strides = [1, 1]} : vector<8x42xf32> to vector<8x32xf32>
    %501 = vector.broadcast %499 : vector<1x32xf32> to vector<8x32xf32>
    %502 = arith.mulf %500, %501 : vector<8x32xf32>
    %503 = vector.extract_strided_slice %488 {offsets = [0, 1], sizes = [8, 32], strides = [1, 1]} : vector<8x42xf32> to vector<8x32xf32>
    %504 = vector.broadcast %499 : vector<1x32xf32> to vector<8x32xf32>
    %505 = arith.mulf %503, %504 : vector<8x32xf32>
    %506 = vector.extract_strided_slice %489 {offsets = [2, 0, 0], sizes = [1, 1, 32], strides = [1, 1, 1]} : vector<9x1x32xf32> to vector<1x1x32xf32>
    %507 = vector.shape_cast %506 : vector<1x1x32xf32> to vector<1x32xf32>
    %508 = vector.extract_strided_slice %486 {offsets = [0, 2], sizes = [8, 32], strides = [1, 1]} : vector<8x42xf32> to vector<8x32xf32>
    %509 = vector.broadcast %507 : vector<1x32xf32> to vector<8x32xf32>
    %510 = arith.mulf %508, %509 : vector<8x32xf32>
    %511 = vector.extract_strided_slice %488 {offsets = [0, 2], sizes = [8, 32], strides = [1, 1]} : vector<8x42xf32> to vector<8x32xf32>
    %512 = vector.broadcast %507 : vector<1x32xf32> to vector<8x32xf32>
    %513 = arith.mulf %511, %512 : vector<8x32xf32>
    %514 = vector.extract_strided_slice %489 {offsets = [3, 0, 0], sizes = [1, 1, 32], strides = [1, 1, 1]} : vector<9x1x32xf32> to vector<1x1x32xf32>
    %515 = vector.shape_cast %514 : vector<1x1x32xf32> to vector<1x32xf32>
    %516 = vector.extract_strided_slice %486 {offsets = [0, 4], sizes = [8, 32], strides = [1, 1]} : vector<8x42xf32> to vector<8x32xf32>
    %517 = vector.broadcast %515 : vector<1x32xf32> to vector<8x32xf32>
    %518 = arith.mulf %516, %517 : vector<8x32xf32>
    %519 = vector.extract_strided_slice %488 {offsets = [0, 4], sizes = [8, 32], strides = [1, 1]} : vector<8x42xf32> to vector<8x32xf32>
    %520 = vector.broadcast %515 : vector<1x32xf32> to vector<8x32xf32>
    %521 = arith.mulf %519, %520 : vector<8x32xf32>
    %522 = vector.extract_strided_slice %489 {offsets = [4, 0, 0], sizes = [1, 1, 32], strides = [1, 1, 1]} : vector<9x1x32xf32> to vector<1x1x32xf32>
    %523 = vector.shape_cast %522 : vector<1x1x32xf32> to vector<1x32xf32>
    %524 = vector.extract_strided_slice %486 {offsets = [0, 5], sizes = [8, 32], strides = [1, 1]} : vector<8x42xf32> to vector<8x32xf32>
    %525 = vector.broadcast %523 : vector<1x32xf32> to vector<8x32xf32>
    %526 = arith.mulf %524, %525 : vector<8x32xf32>
    %527 = vector.extract_strided_slice %488 {offsets = [0, 5], sizes = [8, 32], strides = [1, 1]} : vector<8x42xf32> to vector<8x32xf32>
    %528 = vector.broadcast %523 : vector<1x32xf32> to vector<8x32xf32>
    %529 = arith.mulf %527, %528 : vector<8x32xf32>
    %530 = vector.extract_strided_slice %489 {offsets = [5, 0, 0], sizes = [1, 1, 32], strides = [1, 1, 1]} : vector<9x1x32xf32> to vector<1x1x32xf32>
    %531 = vector.shape_cast %530 : vector<1x1x32xf32> to vector<1x32xf32>
    %532 = vector.extract_strided_slice %486 {offsets = [0, 6], sizes = [8, 32], strides = [1, 1]} : vector<8x42xf32> to vector<8x32xf32>
    %533 = vector.broadcast %531 : vector<1x32xf32> to vector<8x32xf32>
    %534 = arith.mulf %532, %533 : vector<8x32xf32>
    %535 = vector.extract_strided_slice %488 {offsets = [0, 6], sizes = [8, 32], strides = [1, 1]} : vector<8x42xf32> to vector<8x32xf32>
    %536 = vector.broadcast %531 : vector<1x32xf32> to vector<8x32xf32>
    %537 = arith.mulf %535, %536 : vector<8x32xf32>
    %538 = vector.extract_strided_slice %489 {offsets = [6, 0, 0], sizes = [1, 1, 32], strides = [1, 1, 1]} : vector<9x1x32xf32> to vector<1x1x32xf32>
    %539 = vector.shape_cast %538 : vector<1x1x32xf32> to vector<1x32xf32>
    %540 = vector.extract_strided_slice %486 {offsets = [0, 8], sizes = [8, 32], strides = [1, 1]} : vector<8x42xf32> to vector<8x32xf32>
    %541 = vector.broadcast %539 : vector<1x32xf32> to vector<8x32xf32>
    %542 = arith.mulf %540, %541 : vector<8x32xf32>
    %543 = vector.extract_strided_slice %488 {offsets = [0, 8], sizes = [8, 32], strides = [1, 1]} : vector<8x42xf32> to vector<8x32xf32>
    %544 = vector.broadcast %539 : vector<1x32xf32> to vector<8x32xf32>
    %545 = arith.mulf %543, %544 : vector<8x32xf32>
    %546 = vector.extract_strided_slice %489 {offsets = [7, 0, 0], sizes = [1, 1, 32], strides = [1, 1, 1]} : vector<9x1x32xf32> to vector<1x1x32xf32>
    %547 = vector.shape_cast %546 : vector<1x1x32xf32> to vector<1x32xf32>
    %548 = vector.extract_strided_slice %486 {offsets = [0, 9], sizes = [8, 32], strides = [1, 1]} : vector<8x42xf32> to vector<8x32xf32>
    %549 = vector.broadcast %547 : vector<1x32xf32> to vector<8x32xf32>
    %550 = arith.mulf %548, %549 : vector<8x32xf32>
    %551 = vector.extract_strided_slice %488 {offsets = [0, 9], sizes = [8, 32], strides = [1, 1]} : vector<8x42xf32> to vector<8x32xf32>
    %552 = vector.broadcast %547 : vector<1x32xf32> to vector<8x32xf32>
    %553 = arith.mulf %551, %552 : vector<8x32xf32>
    %554 = vector.extract_strided_slice %489 {offsets = [8, 0, 0], sizes = [1, 1, 32], strides = [1, 1, 1]} : vector<9x1x32xf32> to vector<1x1x32xf32>
    %555 = vector.shape_cast %554 : vector<1x1x32xf32> to vector<1x32xf32>
    %556 = vector.extract_strided_slice %486 {offsets = [0, 10], sizes = [8, 32], strides = [1, 1]} : vector<8x42xf32> to vector<8x32xf32>
    %557 = vector.broadcast %555 : vector<1x32xf32> to vector<8x32xf32>
    %558 = arith.mulf %556, %557 : vector<8x32xf32>
    %559 = vector.extract_strided_slice %488 {offsets = [0, 10], sizes = [8, 32], strides = [1, 1]} : vector<8x42xf32> to vector<8x32xf32>
    %560 = vector.broadcast %555 : vector<1x32xf32> to vector<8x32xf32>
    %561 = arith.mulf %559, %560 : vector<8x32xf32>
    %562 = tpu.concatenate %494, %497, %502, %505, %510, %513, %518, %521, %526, %529, %534, %537, %542, %545, %550, %553 in 0 : vector<8x32xf32>, vector<8x32xf32>, vector<8x32xf32>, vector<8x32xf32>, vector<8x32xf32>, vector<8x32xf32>, vector<8x32xf32>, vector<8x32xf32>, vector<8x32xf32>, vector<8x32xf32>, vector<8x32xf32>, vector<8x32xf32>, vector<8x32xf32>, vector<8x32xf32>, vector<8x32xf32>, vector<8x32xf32> -> vector<128x32xf32>
    %563 = tpu.concatenate %558, %561 in 0 : vector<8x32xf32>, vector<8x32xf32> -> vector<16x32xf32>
    %564 = tpu.concatenate %562, %563 in 0 : vector<128x32xf32>, vector<16x32xf32> -> vector<144x32xf32>
    %c0_100 = arith.constant 0 : index
    %c0_101 = arith.constant 0 : index
    %565 = vector.load %arg18[%c0_100, %c0_101] : memref<8x144xf32, #tpu.memory_space<vmem>>, vector<8x144xf32>
    %cst_102 = arith.constant dense<0.000000e+00> : vector<8x32xf32>
    %566 = tpu.matmul %565, %564, %cst_102 {dimension_numbers = #tpu.dot_dimension_numbers<[1], [0], [0], [1], [0, 0, 1, 1], [], []>} : vector<8x144xf32>, vector<144x32xf32>, vector<8x32xf32> -> vector<8x32xf32>
    %cst_103 = arith.constant dense<0.000000e+00> : vector<8xf32>
    %567 = vector.multi_reduction <add>, %566, %cst_103 [1] : vector<8x32xf32> to vector<8xf32>
    %568 = vector.shape_cast %567 : vector<8xf32> to vector<8x1xf32>
    %cst_104 = arith.constant 3.200000e+01 : f32
    %569 = vector.broadcast %cst_104 : f32 to vector<8x1xf32>
    %570 = arith.divf %568, %569 : vector<8x1xf32>
    %571 = vector.broadcast %570 : vector<8x1xf32> to vector<8x32xf32>
    %572 = arith.subf %566, %571 : vector<8x32xf32>
    %573 = arith.mulf %572, %572 : vector<8x32xf32>
    %cst_105 = arith.constant dense<0.000000e+00> : vector<8xf32>
    %574 = vector.multi_reduction <add>, %573, %cst_105 [1] : vector<8x32xf32> to vector<8xf32>
    %575 = vector.shape_cast %574 : vector<8xf32> to vector<8x1xf32>
    %cst_106 = arith.constant 3.200000e+01 : f32
    %576 = vector.broadcast %cst_106 : f32 to vector<8x1xf32>
    %577 = arith.divf %575, %576 : vector<8x1xf32>
    %578 = vector.broadcast %570 : vector<8x1xf32> to vector<8x32xf32>
    %579 = arith.subf %566, %578 : vector<8x32xf32>
    %cst_107 = arith.constant 9.99999974E-6 : f32
    %580 = vector.broadcast %cst_107 : f32 to vector<8x1xf32>
    %581 = arith.addf %577, %580 : vector<8x1xf32>
    %582 = math.rsqrt %581 : vector<8x1xf32>
    %583 = vector.broadcast %582 : vector<8x1xf32> to vector<8x32xf32>
    %584 = arith.mulf %579, %583 : vector<8x32xf32>
    %cst_108 = arith.constant 0.000000e+00 : f32
    %585 = vector.broadcast %cst_108 : f32 to vector<8x32xf32>
    %586 = arith.maximumf %584, %585 : vector<8x32xf32>
    %c0_109 = arith.constant 0 : index
    %c0_110 = arith.constant 0 : index
    %587 = vector.load %arg21[%c0_109, %c0_110] : memref<32x128xf32, #tpu.memory_space<vmem>>, vector<32x128xf32>
    %cst_111 = arith.constant dense<0.000000e+00> : vector<8x128xf32>
    %588 = tpu.matmul %586, %587, %cst_111 {dimension_numbers = #tpu.dot_dimension_numbers<[1], [0], [0], [1], [0, 0, 1, 1], [], []>} : vector<8x32xf32>, vector<32x128xf32>, vector<8x128xf32> -> vector<8x128xf32>
    %cst_112 = arith.constant 0.000000e+00 : f32
    %589 = vector.broadcast %cst_112 : f32 to vector<8x9xf32>
    %590 = tpu.concatenate %589, %588, %589 in 1 : vector<8x9xf32>, vector<8x128xf32>, vector<8x9xf32> -> vector<8x146xf32>
    %591 = vector.extract_strided_slice %590 {offsets = [0, 9], sizes = [8, 128], strides = [1, 1]} : vector<8x146xf32> to vector<8x128xf32>
    %592 = vector.extract_strided_slice %590 {offsets = [0, 8], sizes = [8, 128], strides = [1, 1]} : vector<8x146xf32> to vector<8x128xf32>
    %593 = vector.extract_strided_slice %590 {offsets = [0, 1], sizes = [8, 128], strides = [1, 1]} : vector<8x146xf32> to vector<8x128xf32>
    %594 = vector.extract_strided_slice %590 {offsets = [0, 0], sizes = [8, 128], strides = [1, 1]} : vector<8x146xf32> to vector<8x128xf32>
    %595 = tpu.concatenate %591, %592, %593, %594 in 0 : vector<8x128xf32>, vector<8x128xf32>, vector<8x128xf32>, vector<8x128xf32> -> vector<32x128xf32>
    %c0_113 = arith.constant 0 : index
    %c0_114 = arith.constant 0 : index
    %596 = vector.load %arg19[%c0_113, %c0_114] : memref<4x32xf32, #tpu.memory_space<vmem>>, vector<4x32xf32>
    %cst_115 = arith.constant dense<0.000000e+00> : vector<4x128xf32>
    %597 = tpu.matmul %596, %595, %cst_115 {dimension_numbers = #tpu.dot_dimension_numbers<[1], [0], [0], [1], [0, 0, 1, 1], [], []>} : vector<4x32xf32>, vector<32x128xf32>, vector<4x128xf32> -> vector<4x128xf32>
    %c0_116 = arith.constant 0 : index
    %c0_117 = arith.constant 0 : index
    %598 = vector.load %arg20[%c0_116, %c0_117] : memref<4x1xf32, #tpu.memory_space<vmem>>, vector<4x1xf32>
    %599 = vector.broadcast %598 : vector<4x1xf32> to vector<4x128xf32>
    %600 = arith.addf %597, %599 : vector<4x128xf32>
    %cst_118 = arith.constant 0.000000e+00 : f32
    %601 = vector.broadcast %cst_118 : f32 to vector<4x9xf32>
    %602 = tpu.concatenate %601, %600, %601 in 1 : vector<4x9xf32>, vector<4x128xf32>, vector<4x9xf32> -> vector<4x146xf32>
    %cst_119 = arith.constant 0.000000e+00 : f32
    %603 = vector.broadcast %cst_119 : f32 to vector<4x9xf32>
    %604 = tpu.concatenate %603, %153, %603 in 1 : vector<4x9xf32>, vector<4x128xf32>, vector<4x9xf32> -> vector<4x146xf32>
    %c0_120 = arith.constant 0 : index
    %c0_121 = arith.constant 0 : index
    %c0_122 = arith.constant 0 : index
    %605 = vector.load %arg2[%c0_120, %c0_121, %c0_122] : memref<9x1x128xf32, #tpu.memory_space<vmem>>, vector<9x1x128xf32>
    %606 = vector.extract_strided_slice %605 {offsets = [0, 0, 0], sizes = [1, 1, 128], strides = [1, 1, 1]} : vector<9x1x128xf32> to vector<1x1x128xf32>
    %607 = vector.shape_cast %606 : vector<1x1x128xf32> to vector<1x128xf32>
    %608 = vector.extract_strided_slice %602 {offsets = [0, 0], sizes = [4, 128], strides = [1, 1]} : vector<4x146xf32> to vector<4x128xf32>
    %609 = vector.broadcast %607 : vector<1x128xf32> to vector<4x128xf32>
    %610 = arith.mulf %608, %609 : vector<4x128xf32>
    %611 = vector.extract_strided_slice %604 {offsets = [0, 0], sizes = [4, 128], strides = [1, 1]} : vector<4x146xf32> to vector<4x128xf32>
    %612 = vector.broadcast %607 : vector<1x128xf32> to vector<4x128xf32>
    %613 = arith.mulf %611, %612 : vector<4x128xf32>
    %614 = vector.extract_strided_slice %605 {offsets = [1, 0, 0], sizes = [1, 1, 128], strides = [1, 1, 1]} : vector<9x1x128xf32> to vector<1x1x128xf32>
    %615 = vector.shape_cast %614 : vector<1x1x128xf32> to vector<1x128xf32>
    %616 = vector.extract_strided_slice %602 {offsets = [0, 1], sizes = [4, 128], strides = [1, 1]} : vector<4x146xf32> to vector<4x128xf32>
    %617 = vector.broadcast %615 : vector<1x128xf32> to vector<4x128xf32>
    %618 = arith.mulf %616, %617 : vector<4x128xf32>
    %619 = vector.extract_strided_slice %604 {offsets = [0, 1], sizes = [4, 128], strides = [1, 1]} : vector<4x146xf32> to vector<4x128xf32>
    %620 = vector.broadcast %615 : vector<1x128xf32> to vector<4x128xf32>
    %621 = arith.mulf %619, %620 : vector<4x128xf32>
    %622 = vector.extract_strided_slice %605 {offsets = [2, 0, 0], sizes = [1, 1, 128], strides = [1, 1, 1]} : vector<9x1x128xf32> to vector<1x1x128xf32>
    %623 = vector.shape_cast %622 : vector<1x1x128xf32> to vector<1x128xf32>
    %624 = vector.extract_strided_slice %602 {offsets = [0, 2], sizes = [4, 128], strides = [1, 1]} : vector<4x146xf32> to vector<4x128xf32>
    %625 = vector.broadcast %623 : vector<1x128xf32> to vector<4x128xf32>
    %626 = arith.mulf %624, %625 : vector<4x128xf32>
    %627 = vector.extract_strided_slice %604 {offsets = [0, 2], sizes = [4, 128], strides = [1, 1]} : vector<4x146xf32> to vector<4x128xf32>
    %628 = vector.broadcast %623 : vector<1x128xf32> to vector<4x128xf32>
    %629 = arith.mulf %627, %628 : vector<4x128xf32>
    %630 = vector.extract_strided_slice %605 {offsets = [3, 0, 0], sizes = [1, 1, 128], strides = [1, 1, 1]} : vector<9x1x128xf32> to vector<1x1x128xf32>
    %631 = vector.shape_cast %630 : vector<1x1x128xf32> to vector<1x128xf32>
    %632 = vector.extract_strided_slice %602 {offsets = [0, 8], sizes = [4, 128], strides = [1, 1]} : vector<4x146xf32> to vector<4x128xf32>
    %633 = vector.broadcast %631 : vector<1x128xf32> to vector<4x128xf32>
    %634 = arith.mulf %632, %633 : vector<4x128xf32>
    %635 = vector.extract_strided_slice %604 {offsets = [0, 8], sizes = [4, 128], strides = [1, 1]} : vector<4x146xf32> to vector<4x128xf32>
    %636 = vector.broadcast %631 : vector<1x128xf32> to vector<4x128xf32>
    %637 = arith.mulf %635, %636 : vector<4x128xf32>
    %638 = vector.extract_strided_slice %605 {offsets = [4, 0, 0], sizes = [1, 1, 128], strides = [1, 1, 1]} : vector<9x1x128xf32> to vector<1x1x128xf32>
    %639 = vector.shape_cast %638 : vector<1x1x128xf32> to vector<1x128xf32>
    %640 = vector.extract_strided_slice %602 {offsets = [0, 9], sizes = [4, 128], strides = [1, 1]} : vector<4x146xf32> to vector<4x128xf32>
    %641 = vector.broadcast %639 : vector<1x128xf32> to vector<4x128xf32>
    %642 = arith.mulf %640, %641 : vector<4x128xf32>
    %643 = vector.extract_strided_slice %604 {offsets = [0, 9], sizes = [4, 128], strides = [1, 1]} : vector<4x146xf32> to vector<4x128xf32>
    %644 = vector.broadcast %639 : vector<1x128xf32> to vector<4x128xf32>
    %645 = arith.mulf %643, %644 : vector<4x128xf32>
    %646 = vector.extract_strided_slice %605 {offsets = [5, 0, 0], sizes = [1, 1, 128], strides = [1, 1, 1]} : vector<9x1x128xf32> to vector<1x1x128xf32>
    %647 = vector.shape_cast %646 : vector<1x1x128xf32> to vector<1x128xf32>
    %648 = vector.extract_strided_slice %602 {offsets = [0, 10], sizes = [4, 128], strides = [1, 1]} : vector<4x146xf32> to vector<4x128xf32>
    %649 = vector.broadcast %647 : vector<1x128xf32> to vector<4x128xf32>
    %650 = arith.mulf %648, %649 : vector<4x128xf32>
    %651 = vector.extract_strided_slice %604 {offsets = [0, 10], sizes = [4, 128], strides = [1, 1]} : vector<4x146xf32> to vector<4x128xf32>
    %652 = vector.broadcast %647 : vector<1x128xf32> to vector<4x128xf32>
    %653 = arith.mulf %651, %652 : vector<4x128xf32>
    %654 = vector.extract_strided_slice %605 {offsets = [6, 0, 0], sizes = [1, 1, 128], strides = [1, 1, 1]} : vector<9x1x128xf32> to vector<1x1x128xf32>
    %655 = vector.shape_cast %654 : vector<1x1x128xf32> to vector<1x128xf32>
    %656 = vector.extract_strided_slice %602 {offsets = [0, 16], sizes = [4, 128], strides = [1, 1]} : vector<4x146xf32> to vector<4x128xf32>
    %657 = vector.broadcast %655 : vector<1x128xf32> to vector<4x128xf32>
    %658 = arith.mulf %656, %657 : vector<4x128xf32>
    %659 = vector.extract_strided_slice %604 {offsets = [0, 16], sizes = [4, 128], strides = [1, 1]} : vector<4x146xf32> to vector<4x128xf32>
    %660 = vector.broadcast %655 : vector<1x128xf32> to vector<4x128xf32>
    %661 = arith.mulf %659, %660 : vector<4x128xf32>
    %662 = vector.extract_strided_slice %605 {offsets = [7, 0, 0], sizes = [1, 1, 128], strides = [1, 1, 1]} : vector<9x1x128xf32> to vector<1x1x128xf32>
    %663 = vector.shape_cast %662 : vector<1x1x128xf32> to vector<1x128xf32>
    %664 = vector.extract_strided_slice %602 {offsets = [0, 17], sizes = [4, 128], strides = [1, 1]} : vector<4x146xf32> to vector<4x128xf32>
    %665 = vector.broadcast %663 : vector<1x128xf32> to vector<4x128xf32>
    %666 = arith.mulf %664, %665 : vector<4x128xf32>
    %667 = vector.extract_strided_slice %604 {offsets = [0, 17], sizes = [4, 128], strides = [1, 1]} : vector<4x146xf32> to vector<4x128xf32>
    %668 = vector.broadcast %663 : vector<1x128xf32> to vector<4x128xf32>
    %669 = arith.mulf %667, %668 : vector<4x128xf32>
    %670 = vector.extract_strided_slice %605 {offsets = [8, 0, 0], sizes = [1, 1, 128], strides = [1, 1, 1]} : vector<9x1x128xf32> to vector<1x1x128xf32>
    %671 = vector.shape_cast %670 : vector<1x1x128xf32> to vector<1x128xf32>
    %672 = vector.extract_strided_slice %602 {offsets = [0, 18], sizes = [4, 128], strides = [1, 1]} : vector<4x146xf32> to vector<4x128xf32>
    %673 = vector.broadcast %671 : vector<1x128xf32> to vector<4x128xf32>
    %674 = arith.mulf %672, %673 : vector<4x128xf32>
    %675 = vector.extract_strided_slice %604 {offsets = [0, 18], sizes = [4, 128], strides = [1, 1]} : vector<4x146xf32> to vector<4x128xf32>
    %676 = vector.broadcast %671 : vector<1x128xf32> to vector<4x128xf32>
    %677 = arith.mulf %675, %676 : vector<4x128xf32>
    %678 = tpu.concatenate %610, %613, %618, %621, %626, %629, %634, %637, %642, %645, %650, %653, %658, %661, %666, %669 in 0 : vector<4x128xf32>, vector<4x128xf32>, vector<4x128xf32>, vector<4x128xf32>, vector<4x128xf32>, vector<4x128xf32>, vector<4x128xf32>, vector<4x128xf32>, vector<4x128xf32>, vector<4x128xf32>, vector<4x128xf32>, vector<4x128xf32>, vector<4x128xf32>, vector<4x128xf32>, vector<4x128xf32>, vector<4x128xf32> -> vector<64x128xf32>
    %679 = tpu.concatenate %674, %677 in 0 : vector<4x128xf32>, vector<4x128xf32> -> vector<8x128xf32>
    %680 = tpu.concatenate %678, %679 in 0 : vector<64x128xf32>, vector<8x128xf32> -> vector<72x128xf32>
    %c0_123 = arith.constant 0 : index
    %c0_124 = arith.constant 0 : index
    %681 = vector.load %arg22[%c0_123, %c0_124] : memref<4x72xf32, #tpu.memory_space<vmem>>, vector<4x72xf32>
    %cst_125 = arith.constant dense<0.000000e+00> : vector<4x128xf32>
    %682 = tpu.matmul %681, %680, %cst_125 {dimension_numbers = #tpu.dot_dimension_numbers<[1], [0], [0], [1], [0, 0, 1, 1], [], []>} : vector<4x72xf32>, vector<72x128xf32>, vector<4x128xf32> -> vector<4x128xf32>
    %cst_126 = arith.constant dense<0.000000e+00> : vector<4xf32>
    %683 = vector.multi_reduction <add>, %682, %cst_126 [1] : vector<4x128xf32> to vector<4xf32>
    %684 = vector.shape_cast %683 : vector<4xf32> to vector<4x1xf32>
    %cst_127 = arith.constant 1.280000e+02 : f32
    %685 = vector.broadcast %cst_127 : f32 to vector<4x1xf32>
    %686 = arith.divf %684, %685 : vector<4x1xf32>
    %687 = vector.broadcast %686 : vector<4x1xf32> to vector<4x128xf32>
    %688 = arith.subf %682, %687 : vector<4x128xf32>
    %689 = arith.mulf %688, %688 : vector<4x128xf32>
    %cst_128 = arith.constant dense<0.000000e+00> : vector<4xf32>
    %690 = vector.multi_reduction <add>, %689, %cst_128 [1] : vector<4x128xf32> to vector<4xf32>
    %691 = vector.shape_cast %690 : vector<4xf32> to vector<4x1xf32>
    %cst_129 = arith.constant 1.280000e+02 : f32
    %692 = vector.broadcast %cst_129 : f32 to vector<4x1xf32>
    %693 = arith.divf %691, %692 : vector<4x1xf32>
    %694 = vector.broadcast %686 : vector<4x1xf32> to vector<4x128xf32>
    %695 = arith.subf %682, %694 : vector<4x128xf32>
    %cst_130 = arith.constant 9.99999974E-6 : f32
    %696 = vector.broadcast %cst_130 : f32 to vector<4x1xf32>
    %697 = arith.addf %693, %696 : vector<4x1xf32>
    %698 = math.rsqrt %697 : vector<4x1xf32>
    %699 = vector.broadcast %698 : vector<4x1xf32> to vector<4x128xf32>
    %700 = arith.mulf %695, %699 : vector<4x128xf32>
    %cst_131 = arith.constant 0.000000e+00 : f32
    %701 = vector.broadcast %cst_131 : f32 to vector<4x128xf32>
    %702 = arith.maximumf %700, %701 : vector<4x128xf32>
    %c0_132 = arith.constant 0 : index
    %c0_133 = arith.constant 0 : index
    %703 = vector.load %arg25[%c0_132, %c0_133] : memref<128x512xf32, #tpu.memory_space<vmem>>, vector<128x512xf32>
    %cst_134 = arith.constant dense<0.000000e+00> : vector<4x512xf32>
    %704 = tpu.matmul %702, %703, %cst_134 {dimension_numbers = #tpu.dot_dimension_numbers<[1], [0], [0], [1], [0, 0, 1, 1], [], []>} : vector<4x128xf32>, vector<128x512xf32>, vector<4x512xf32> -> vector<4x512xf32>
    %cst_135 = arith.constant 0.000000e+00 : f32
    %705 = vector.broadcast %cst_135 : f32 to vector<4x17xf32>
    %706 = tpu.concatenate %705, %704, %705 in 1 : vector<4x17xf32>, vector<4x512xf32>, vector<4x17xf32> -> vector<4x546xf32>
    %707 = vector.extract_strided_slice %706 {offsets = [0, 17], sizes = [4, 512], strides = [1, 1]} : vector<4x546xf32> to vector<4x512xf32>
    %708 = vector.extract_strided_slice %706 {offsets = [0, 16], sizes = [4, 512], strides = [1, 1]} : vector<4x546xf32> to vector<4x512xf32>
    %709 = vector.extract_strided_slice %706 {offsets = [0, 1], sizes = [4, 512], strides = [1, 1]} : vector<4x546xf32> to vector<4x512xf32>
    %710 = vector.extract_strided_slice %706 {offsets = [0, 0], sizes = [4, 512], strides = [1, 1]} : vector<4x546xf32> to vector<4x512xf32>
    %711 = tpu.concatenate %707, %708, %709, %710 in 0 : vector<4x512xf32>, vector<4x512xf32>, vector<4x512xf32>, vector<4x512xf32> -> vector<16x512xf32>
    %c0_136 = arith.constant 0 : index
    %c0_137 = arith.constant 0 : index
    %712 = vector.load %arg23[%c0_136, %c0_137] : memref<2x16xf32, #tpu.memory_space<vmem>>, vector<2x16xf32>
    %cst_138 = arith.constant dense<0.000000e+00> : vector<2x512xf32>
    %713 = tpu.matmul %712, %711, %cst_138 {dimension_numbers = #tpu.dot_dimension_numbers<[1], [0], [0], [1], [0, 0, 1, 1], [], []>} : vector<2x16xf32>, vector<16x512xf32>, vector<2x512xf32> -> vector<2x512xf32>
    %c0_139 = arith.constant 0 : index
    %c0_140 = arith.constant 0 : index
    %714 = vector.load %arg24[%c0_139, %c0_140] : memref<2x1xf32, #tpu.memory_space<vmem>>, vector<2x1xf32>
    %715 = vector.broadcast %714 : vector<2x1xf32> to vector<2x512xf32>
    %716 = arith.addf %713, %715 : vector<2x512xf32>
    %cst_141 = arith.constant 0.000000e+00 : f32
    %717 = vector.broadcast %cst_141 : f32 to vector<2x17xf32>
    %718 = tpu.concatenate %717, %716, %717 in 1 : vector<2x17xf32>, vector<2x512xf32>, vector<2x17xf32> -> vector<2x546xf32>
    %cst_142 = arith.constant 0.000000e+00 : f32
    %719 = vector.broadcast %cst_142 : f32 to vector<2x17xf32>
    %720 = tpu.concatenate %719, %71, %719 in 1 : vector<2x17xf32>, vector<2x512xf32>, vector<2x17xf32> -> vector<2x546xf32>
    %c0_143 = arith.constant 0 : index
    %c0_144 = arith.constant 0 : index
    %c0_145 = arith.constant 0 : index
    %721 = vector.load %arg1[%c0_143, %c0_144, %c0_145] : memref<9x1x512xf32, #tpu.memory_space<vmem>>, vector<9x1x512xf32>
    %722 = vector.extract_strided_slice %721 {offsets = [0, 0, 0], sizes = [1, 1, 512], strides = [1, 1, 1]} : vector<9x1x512xf32> to vector<1x1x512xf32>
    %723 = vector.shape_cast %722 : vector<1x1x512xf32> to vector<1x512xf32>
    %724 = vector.extract_strided_slice %718 {offsets = [0, 0], sizes = [2, 512], strides = [1, 1]} : vector<2x546xf32> to vector<2x512xf32>
    %725 = vector.broadcast %723 : vector<1x512xf32> to vector<2x512xf32>
    %726 = arith.mulf %724, %725 : vector<2x512xf32>
    %727 = vector.extract_strided_slice %720 {offsets = [0, 0], sizes = [2, 512], strides = [1, 1]} : vector<2x546xf32> to vector<2x512xf32>
    %728 = vector.broadcast %723 : vector<1x512xf32> to vector<2x512xf32>
    %729 = arith.mulf %727, %728 : vector<2x512xf32>
    %730 = vector.extract_strided_slice %721 {offsets = [1, 0, 0], sizes = [1, 1, 512], strides = [1, 1, 1]} : vector<9x1x512xf32> to vector<1x1x512xf32>
    %731 = vector.shape_cast %730 : vector<1x1x512xf32> to vector<1x512xf32>
    %732 = vector.extract_strided_slice %718 {offsets = [0, 1], sizes = [2, 512], strides = [1, 1]} : vector<2x546xf32> to vector<2x512xf32>
    %733 = vector.broadcast %731 : vector<1x512xf32> to vector<2x512xf32>
    %734 = arith.mulf %732, %733 : vector<2x512xf32>
    %735 = vector.extract_strided_slice %720 {offsets = [0, 1], sizes = [2, 512], strides = [1, 1]} : vector<2x546xf32> to vector<2x512xf32>
    %736 = vector.broadcast %731 : vector<1x512xf32> to vector<2x512xf32>
    %737 = arith.mulf %735, %736 : vector<2x512xf32>
    %738 = vector.extract_strided_slice %721 {offsets = [2, 0, 0], sizes = [1, 1, 512], strides = [1, 1, 1]} : vector<9x1x512xf32> to vector<1x1x512xf32>
    %739 = vector.shape_cast %738 : vector<1x1x512xf32> to vector<1x512xf32>
    %740 = vector.extract_strided_slice %718 {offsets = [0, 2], sizes = [2, 512], strides = [1, 1]} : vector<2x546xf32> to vector<2x512xf32>
    %741 = vector.broadcast %739 : vector<1x512xf32> to vector<2x512xf32>
    %742 = arith.mulf %740, %741 : vector<2x512xf32>
    %743 = vector.extract_strided_slice %720 {offsets = [0, 2], sizes = [2, 512], strides = [1, 1]} : vector<2x546xf32> to vector<2x512xf32>
    %744 = vector.broadcast %739 : vector<1x512xf32> to vector<2x512xf32>
    %745 = arith.mulf %743, %744 : vector<2x512xf32>
    %746 = vector.extract_strided_slice %721 {offsets = [3, 0, 0], sizes = [1, 1, 512], strides = [1, 1, 1]} : vector<9x1x512xf32> to vector<1x1x512xf32>
    %747 = vector.shape_cast %746 : vector<1x1x512xf32> to vector<1x512xf32>
    %748 = vector.extract_strided_slice %718 {offsets = [0, 16], sizes = [2, 512], strides = [1, 1]} : vector<2x546xf32> to vector<2x512xf32>
    %749 = vector.broadcast %747 : vector<1x512xf32> to vector<2x512xf32>
    %750 = arith.mulf %748, %749 : vector<2x512xf32>
    %751 = vector.extract_strided_slice %720 {offsets = [0, 16], sizes = [2, 512], strides = [1, 1]} : vector<2x546xf32> to vector<2x512xf32>
    %752 = vector.broadcast %747 : vector<1x512xf32> to vector<2x512xf32>
    %753 = arith.mulf %751, %752 : vector<2x512xf32>
    %754 = vector.extract_strided_slice %721 {offsets = [4, 0, 0], sizes = [1, 1, 512], strides = [1, 1, 1]} : vector<9x1x512xf32> to vector<1x1x512xf32>
    %755 = vector.shape_cast %754 : vector<1x1x512xf32> to vector<1x512xf32>
    %756 = vector.extract_strided_slice %718 {offsets = [0, 17], sizes = [2, 512], strides = [1, 1]} : vector<2x546xf32> to vector<2x512xf32>
    %757 = vector.broadcast %755 : vector<1x512xf32> to vector<2x512xf32>
    %758 = arith.mulf %756, %757 : vector<2x512xf32>
    %759 = vector.extract_strided_slice %720 {offsets = [0, 17], sizes = [2, 512], strides = [1, 1]} : vector<2x546xf32> to vector<2x512xf32>
    %760 = vector.broadcast %755 : vector<1x512xf32> to vector<2x512xf32>
    %761 = arith.mulf %759, %760 : vector<2x512xf32>
    %762 = vector.extract_strided_slice %721 {offsets = [5, 0, 0], sizes = [1, 1, 512], strides = [1, 1, 1]} : vector<9x1x512xf32> to vector<1x1x512xf32>
    %763 = vector.shape_cast %762 : vector<1x1x512xf32> to vector<1x512xf32>
    %764 = vector.extract_strided_slice %718 {offsets = [0, 18], sizes = [2, 512], strides = [1, 1]} : vector<2x546xf32> to vector<2x512xf32>
    %765 = vector.broadcast %763 : vector<1x512xf32> to vector<2x512xf32>
    %766 = arith.mulf %764, %765 : vector<2x512xf32>
    %767 = vector.extract_strided_slice %720 {offsets = [0, 18], sizes = [2, 512], strides = [1, 1]} : vector<2x546xf32> to vector<2x512xf32>
    %768 = vector.broadcast %763 : vector<1x512xf32> to vector<2x512xf32>
    %769 = arith.mulf %767, %768 : vector<2x512xf32>
    %770 = vector.extract_strided_slice %721 {offsets = [6, 0, 0], sizes = [1, 1, 512], strides = [1, 1, 1]} : vector<9x1x512xf32> to vector<1x1x512xf32>
    %771 = vector.shape_cast %770 : vector<1x1x512xf32> to vector<1x512xf32>
    %772 = vector.extract_strided_slice %718 {offsets = [0, 32], sizes = [2, 512], strides = [1, 1]} : vector<2x546xf32> to vector<2x512xf32>
    %773 = vector.broadcast %771 : vector<1x512xf32> to vector<2x512xf32>
    %774 = arith.mulf %772, %773 : vector<2x512xf32>
    %775 = vector.extract_strided_slice %720 {offsets = [0, 32], sizes = [2, 512], strides = [1, 1]} : vector<2x546xf32> to vector<2x512xf32>
    %776 = vector.broadcast %771 : vector<1x512xf32> to vector<2x512xf32>
    %777 = arith.mulf %775, %776 : vector<2x512xf32>
    %778 = vector.extract_strided_slice %721 {offsets = [7, 0, 0], sizes = [1, 1, 512], strides = [1, 1, 1]} : vector<9x1x512xf32> to vector<1x1x512xf32>
    %779 = vector.shape_cast %778 : vector<1x1x512xf32> to vector<1x512xf32>
    %780 = vector.extract_strided_slice %718 {offsets = [0, 33], sizes = [2, 512], strides = [1, 1]} : vector<2x546xf32> to vector<2x512xf32>
    %781 = vector.broadcast %779 : vector<1x512xf32> to vector<2x512xf32>
    %782 = arith.mulf %780, %781 : vector<2x512xf32>
    %783 = vector.extract_strided_slice %720 {offsets = [0, 33], sizes = [2, 512], strides = [1, 1]} : vector<2x546xf32> to vector<2x512xf32>
    %784 = vector.broadcast %779 : vector<1x512xf32> to vector<2x512xf32>
    %785 = arith.mulf %783, %784 : vector<2x512xf32>
    %786 = vector.extract_strided_slice %721 {offsets = [8, 0, 0], sizes = [1, 1, 512], strides = [1, 1, 1]} : vector<9x1x512xf32> to vector<1x1x512xf32>
    %787 = vector.shape_cast %786 : vector<1x1x512xf32> to vector<1x512xf32>
    %788 = vector.extract_strided_slice %718 {offsets = [0, 34], sizes = [2, 512], strides = [1, 1]} : vector<2x546xf32> to vector<2x512xf32>
    %789 = vector.broadcast %787 : vector<1x512xf32> to vector<2x512xf32>
    %790 = arith.mulf %788, %789 : vector<2x512xf32>
    %791 = vector.extract_strided_slice %720 {offsets = [0, 34], sizes = [2, 512], strides = [1, 1]} : vector<2x546xf32> to vector<2x512xf32>
    %792 = vector.broadcast %787 : vector<1x512xf32> to vector<2x512xf32>
    %793 = arith.mulf %791, %792 : vector<2x512xf32>
    %794 = tpu.concatenate %726, %729, %734, %737, %742, %745, %750, %753, %758, %761, %766, %769, %774, %777, %782, %785 in 0 : vector<2x512xf32>, vector<2x512xf32>, vector<2x512xf32>, vector<2x512xf32>, vector<2x512xf32>, vector<2x512xf32>, vector<2x512xf32>, vector<2x512xf32>, vector<2x512xf32>, vector<2x512xf32>, vector<2x512xf32>, vector<2x512xf32>, vector<2x512xf32>, vector<2x512xf32>, vector<2x512xf32>, vector<2x512xf32> -> vector<32x512xf32>
    %795 = tpu.concatenate %790, %793 in 0 : vector<2x512xf32>, vector<2x512xf32> -> vector<4x512xf32>
    %796 = tpu.concatenate %794, %795 in 0 : vector<32x512xf32>, vector<4x512xf32> -> vector<36x512xf32>
    %c0_146 = arith.constant 0 : index
    %c0_147 = arith.constant 0 : index
    %797 = vector.load %arg26[%c0_146, %c0_147] : memref<2x36xf32, #tpu.memory_space<vmem>>, vector<2x36xf32>
    %cst_148 = arith.constant dense<0.000000e+00> : vector<2x512xf32>
    %798 = tpu.matmul %797, %796, %cst_148 {dimension_numbers = #tpu.dot_dimension_numbers<[1], [0], [0], [1], [0, 0, 1, 1], [], []>} : vector<2x36xf32>, vector<36x512xf32>, vector<2x512xf32> -> vector<2x512xf32>
    %cst_149 = arith.constant dense<0.000000e+00> : vector<2xf32>
    %799 = vector.multi_reduction <add>, %798, %cst_149 [1] : vector<2x512xf32> to vector<2xf32>
    %800 = vector.shape_cast %799 : vector<2xf32> to vector<2x1xf32>
    %cst_150 = arith.constant 5.120000e+02 : f32
    %801 = vector.broadcast %cst_150 : f32 to vector<2x1xf32>
    %802 = arith.divf %800, %801 : vector<2x1xf32>
    %803 = vector.broadcast %802 : vector<2x1xf32> to vector<2x512xf32>
    %804 = arith.subf %798, %803 : vector<2x512xf32>
    %805 = arith.mulf %804, %804 : vector<2x512xf32>
    %cst_151 = arith.constant dense<0.000000e+00> : vector<2xf32>
    %806 = vector.multi_reduction <add>, %805, %cst_151 [1] : vector<2x512xf32> to vector<2xf32>
    %807 = vector.shape_cast %806 : vector<2xf32> to vector<2x1xf32>
    %cst_152 = arith.constant 5.120000e+02 : f32
    %808 = vector.broadcast %cst_152 : f32 to vector<2x1xf32>
    %809 = arith.divf %807, %808 : vector<2x1xf32>
    %810 = vector.broadcast %802 : vector<2x1xf32> to vector<2x512xf32>
    %811 = arith.subf %798, %810 : vector<2x512xf32>
    %cst_153 = arith.constant 9.99999974E-6 : f32
    %812 = vector.broadcast %cst_153 : f32 to vector<2x1xf32>
    %813 = arith.addf %809, %812 : vector<2x1xf32>
    %814 = math.rsqrt %813 : vector<2x1xf32>
    %815 = vector.broadcast %814 : vector<2x1xf32> to vector<2x512xf32>
    %816 = arith.mulf %811, %815 : vector<2x512xf32>
    %cst_154 = arith.constant 0.000000e+00 : f32
    %817 = vector.broadcast %cst_154 : f32 to vector<2x512xf32>
    %818 = arith.maximumf %816, %817 : vector<2x512xf32>
    %c0_155 = arith.constant 0 : index
    %c0_156 = arith.constant 0 : index
    %819 = vector.load %arg27[%c0_155, %c0_156] : memref<1x2xf32, #tpu.memory_space<vmem>>, vector<1x2xf32>
    %cst_157 = arith.constant dense<0.000000e+00> : vector<1x512xf32>
    %820 = tpu.matmul %819, %818, %cst_157 {dimension_numbers = #tpu.dot_dimension_numbers<[1], [0], [0], [1], [0, 0, 1, 1], [], []>} : vector<1x2xf32>, vector<2x512xf32>, vector<1x512xf32> -> vector<1x512xf32>
    %c0_158 = arith.constant 0 : index
    %c0_159 = arith.constant 0 : index
    %821 = vector.load %arg28[%c0_158, %c0_159] : memref<1x1xf32, #tpu.memory_space<vmem>>, vector<1x1xf32>
    %822 = vector.broadcast %821 : vector<1x1xf32> to vector<1x512xf32>
    %823 = arith.addf %820, %822 : vector<1x512xf32>
    %cst_160 = arith.constant 0.000000e+00 : f32
    %824 = vector.broadcast %cst_160 : f32 to vector<1x512xf32>
    %825 = arith.subf %824, %823 : vector<1x512xf32>
    %826 = math.exp %825 : vector<1x512xf32>
    %cst_161 = arith.constant 1.000000e+00 : f32
    %827 = vector.broadcast %cst_161 : f32 to vector<1x512xf32>
    %828 = arith.addf %827, %826 : vector<1x512xf32>
    %cst_162 = arith.constant 1.000000e+00 : f32
    %829 = vector.broadcast %cst_162 : f32 to vector<1x512xf32>
    %830 = arith.divf %829, %828 : vector<1x512xf32>
    %c0_163 = arith.constant 0 : index
    %c0_164 = arith.constant 0 : index
    %831 = vector.load %arg29[%c0_163, %c0_164] : memref<1x512xf32, #tpu.memory_space<vmem>>, vector<1x512xf32>
    tpu.vector_store %arg29[%c0_163, %c0_164], %830 {strides = array<i32>} : memref<1x512xf32, #tpu.memory_space<vmem>>, vector<1x512xf32>,
    return
  }
}

</mosaic_0001>

<llo_original>
// kernel: unet_forward.1
$region0: #{unet_forward.1}
  #allocation0 [shape = 'u32[]', space=smem, size = 0x4, offset = 0x4, fixed_abs, tag = 'smem constant byte address 0x4 - core index']
  #allocation1 [shape = 'u32[144,128]{1,0:T(1,128)}', space=vmem, size = 0x12000, scoped, tag = 'internal scratch']
  #allocation2 [shape = 'f32[1,1]{1,0:T(1,128)S(1)}', space=vmem, size = 0x200, scoped, tag = 'scoped memory for unet_forward.1']
  %s0 = inlined_call_operand.smem [shape: u32[30], index: -1, kind: input, shape index: {}]
  %s1 = sld [smem:[%s0]]
  %s2 = scalar_lea.smem %s0, 1
  %s3 = sld [smem:[%s2]]
  %s4 = scalar_lea.smem %s0, 2
  %s5 = sld [smem:[%s4]]
  %s6 = scalar_lea.smem %s0, 3
  %s7 = sld [smem:[%s6]]
  %s8 = scalar_lea.smem %s0, 4
  %s9 = sld [smem:[%s8]]
  %s10 = scalar_lea.smem %s0, 5
  %s11 = sld [smem:[%s10]]
  %s12 = scalar_lea.smem %s0, 6
  %s13 = sld [smem:[%s12]]
  %s14 = scalar_lea.smem %s0, 7
  %s15 = sld [smem:[%s14]]
  %s16 = scalar_lea.smem %s0, 8
  %s17 = sld [smem:[%s16]]
  %s18 = scalar_lea.smem %s0, 9
  %s19 = sld [smem:[%s18]]
  %s20 = scalar_lea.smem %s0, 10
  %s21 = sld [smem:[%s20]]
  %s22 = scalar_lea.smem %s0, 11
  %s23 = sld [smem:[%s22]]
  %s24 = scalar_lea.smem %s0, 12
  %s25 = sld [smem:[%s24]]
  %s26 = scalar_lea.smem %s0, 13
  %s27 = sld [smem:[%s26]]
  %s28 = scalar_lea.smem %s0, 14
  %s29 = sld [smem:[%s28]]
  %s30 = scalar_lea.smem %s0, 15
  %s31 = sld [smem:[%s30]]
  %s32 = scalar_lea.smem %s0, 16
  %s33 = sld [smem:[%s32]]
  %s34 = scalar_lea.smem %s0, 17
  %s35 = sld [smem:[%s34]]
  %s36 = scalar_lea.smem %s0, 18
  %s37 = sld [smem:[%s36]]
  %s38 = scalar_lea.smem %s0, 19
  %s39 = sld [smem:[%s38]]
  %s40 = scalar_lea.smem %s0, 20
  %s41 = sld [smem:[%s40]]
  %s42 = scalar_lea.smem %s0, 21
  %s43 = sld [smem:[%s42]]
  %s44 = scalar_lea.smem %s0, 22
  %s45 = sld [smem:[%s44]]
  %s46 = scalar_lea.smem %s0, 23
  %s47 = sld [smem:[%s46]]
  %s48 = scalar_lea.smem %s0, 24
  %s49 = sld [smem:[%s48]]
  %s50 = scalar_lea.smem %s0, 25
  %s51 = sld [smem:[%s50]]
  %s52 = scalar_lea.smem %s0, 26
  %s53 = sld [smem:[%s52]]
  %s54 = scalar_lea.smem %s0, 27
  %s55 = sld [smem:[%s54]]
  %s56 = scalar_lea.smem %s0, 28
  %s57 = sld [smem:[%s56]]
  %s58 = scalar_lea.smem %s0, 29
  %s59 = sld [smem:[%s58]]
  %s60 = sld [smem:[#allocation0]]
  $region146: #{unet_forward.1} parent=0
    _
  %s62 = ssub.s32 1, %s60
  %s63 = scalar_select 0, %s62, %s60
  %v64 = vstv %s57
  %65 = vst [vmem:[#allocation2] sm:$0x1] %v64
  $region1: #{unet_forward.1} parent=0
    #allocation3 [shape = 'u8[1024]{0}', space=vmem, size = 0x400, scoped, tag = 'input window, operand 8, single buffered']
    #allocation4 [shape = 's32[1]{0}', space=sflag, size = 0x4, scoped, tag = 'scoped memory for unet_forward.1']
    #allocation5 [shape = 'u8[1024]{0}', space=vmem, size = 0x400, scoped, tag = 'input window, operand 23, single buffered']
    #allocation6 [shape = 's32[1]{0}', space=sflag, size = 0x4, scoped, tag = 'scoped memory for unet_forward.1']
    #allocation7 [shape = 'u8[262144]{0}', space=vmem, size = 0x40000, scoped, tag = 'input window, operand 25, single buffered']
    #allocation8 [shape = 'u8[1024]{0}', space=vmem, size = 0x400, scoped, tag = 'input window, operand 26, single buffered']
    #allocation9 [shape = 's32[1]{0}', space=sflag, size = 0x4, scoped, tag = 'scoped memory for unet_forward.1']
    #allocation10 [shape = 'u8[512]{0}', space=vmem, size = 0x400, scoped, tag = 'input window, operand 27, single buffered']
    %66 = vsyncpa [#allocation4], 0
    %67 = vsyncpa [#allocation6], 0
    %68 = vsyncpa [#allocation9], 0
    // Predicated region
    $region2: #{unet_forward.1} parent=1 // pred_check
      _
    $region3: #{unet_forward.1} parent=1 // pred_check_branch
      %70 = sbr.rel (0) target = $region5
    $region4: #{unet_forward.1} parent=1 // pred_region
      _
    $region5: #{unet_forward.1} parent=1 // pred_fallthru
      _
    // Predicated region
    $region6: #{unet_forward.1} parent=1 // pred_check
      _
    $region7: #{unet_forward.1} parent=1 // pred_check_branch
      %72 = sbr.rel (0) target = $region9
    $region8: #{unet_forward.1} parent=1 // pred_region
      _
    $region9: #{unet_forward.1} parent=1 // pred_fallthru
      _
    // Predicated region
    $region10: #{unet_forward.1} parent=1 // pred_check
      _
    $region11: #{unet_forward.1} parent=1 // pred_check_branch
      %74 = sbr.rel (0) target = $region13
    $region12: #{unet_forward.1} parent=1 // pred_region
      _
    $region13: #{unet_forward.1} parent=1 // pred_fallthru
      _
    // Predicated region
    $region14: #{unet_forward.1} parent=1 // pred_check
      _
    $region15: #{unet_forward.1} parent=1 // pred_check_branch
      %76 = sbr.rel (0) target = $region17
    $region16: #{unet_forward.1} parent=1 // pred_region
      _
    $region17: #{unet_forward.1} parent=1 // pred_fallthru
      _
    // Predicated region
    $region18: #{unet_forward.1} parent=1 // pred_check
      _
    $region19: #{unet_forward.1} parent=1 // pred_check_branch
      %78 = sbr.rel (0) target = $region21
    $region20: #{unet_forward.1} parent=1 // pred_region
      _
    $region21: #{unet_forward.1} parent=1 // pred_fallthru
      _
    // Predicated region
    $region22: #{unet_forward.1} parent=1 // pred_check
      _
    $region23: #{unet_forward.1} parent=1 // pred_check_branch
      %80 = sbr.rel (0) target = $region25
    $region24: #{unet_forward.1} parent=1 // pred_region
      _
    $region25: #{unet_forward.1} parent=1 // pred_fallthru
      _
    // Predicated region
    $region26: #{unet_forward.1} parent=1 // pred_check
      _
    $region27: #{unet_forward.1} parent=1 // pred_check_branch
      %82 = sbr.rel (0) target = $region29
    $region28: #{unet_forward.1} parent=1 // pred_region
      _
    $region29: #{unet_forward.1} parent=1 // pred_fallthru
      _
    // Predicated region
    $region30: #{unet_forward.1} parent=1 // pred_check
      _
    $region31: #{unet_forward.1} parent=1 // pred_check_branch
      %84 = sbr.rel (0) target = $region33
    $region32: #{unet_forward.1} parent=1 // pred_region
      _
    $region33: #{unet_forward.1} parent=1 // pred_fallthru
      _
    // Predicated region
    $region34: #{unet_forward.1} parent=1 // pred_check
      _
    $region35: #{unet_forward.1} parent=1 // pred_check_branch
      %86 = sbr.rel (0) target = $region37
    $region36: #{unet_forward.1} parent=1 // pred_region
      %s88 = ssub.s32 32, 32
      %89 = vsyncadd [#allocation4], %s88
      %s91 = sshll.u32 [#allocation3], 4
      %s92 = int_to_ptr.vmem [resolvable:$true] %s91
      %94 = dma.hbm_to_vmem [thread:$0]  %s17, 32, %s92, [#allocation4]
    $region37: #{unet_forward.1} parent=1 // pred_fallthru
      _
    // Predicated region
    $region38: #{unet_forward.1} parent=1 // pred_check
      _
    $region39: #{unet_forward.1} parent=1 // pred_check_branch
      %96 = sbr.rel (0) target = $region41
    $region40: #{unet_forward.1} parent=1 // pred_region
      _
    $region41: #{unet_forward.1} parent=1 // pred_fallthru
      _
    // Predicated region
    $region42: #{unet_forward.1} parent=1 // pred_check
      _
    $region43: #{unet_forward.1} parent=1 // pred_check_branch
      %98 = sbr.rel (0) target = $region45
    $region44: #{unet_forward.1} parent=1 // pred_region
      _
    $region45: #{unet_forward.1} parent=1 // pred_fallthru
      _
    // Predicated region
    $region46: #{unet_forward.1} parent=1 // pred_check
      _
    $region47: #{unet_forward.1} parent=1 // pred_check_branch
      %100 = sbr.rel (0) target = $region49
    $region48: #{unet_forward.1} parent=1 // pred_region
      _
    $region49: #{unet_forward.1} parent=1 // pred_fallthru
      _
    // Predicated region
    $region50: #{unet_forward.1} parent=1 // pred_check
      _
    $region51: #{unet_forward.1} parent=1 // pred_check_branch
      %102 = sbr.rel (0) target = $region53
    $region52: #{unet_forward.1} parent=1 // pred_region
      _
    $region53: #{unet_forward.1} parent=1 // pred_fallthru
      _
    // Predicated region
    $region54: #{unet_forward.1} parent=1 // pred_check
      _
    $region55: #{unet_forward.1} parent=1 // pred_check_branch
      %104 = sbr.rel (0) target = $region57
    $region56: #{unet_forward.1} parent=1 // pred_region
      _
    $region57: #{unet_forward.1} parent=1 // pred_fallthru
      _
    // Predicated region
    $region58: #{unet_forward.1} parent=1 // pred_check
      _
    $region59: #{unet_forward.1} parent=1 // pred_check_branch
      %106 = sbr.rel (0) target = $region61
    $region60: #{unet_forward.1} parent=1 // pred_region
      _
    $region61: #{unet_forward.1} parent=1 // pred_fallthru
      _
    // Predicated region
    $region62: #{unet_forward.1} parent=1 // pred_check
      _
    $region63: #{unet_forward.1} parent=1 // pred_check_branch
      %108 = sbr.rel (0) target = $region65
    $region64: #{unet_forward.1} parent=1 // pred_region
      _
    $region65: #{unet_forward.1} parent=1 // pred_fallthru
      _
    // Predicated region
    $region66: #{unet_forward.1} parent=1 // pred_check
      _
    $region67: #{unet_forward.1} parent=1 // pred_check_branch
      %110 = sbr.rel (0) target = $region69
    $region68: #{unet_forward.1} parent=1 // pred_region
      _
    $region69: #{unet_forward.1} parent=1 // pred_fallthru
      _
    // Predicated region
    $region70: #{unet_forward.1} parent=1 // pred_check
      _
    $region71: #{unet_forward.1} parent=1 // pred_check_branch
      %112 = sbr.rel (0) target = $region73
    $region72: #{unet_forward.1} parent=1 // pred_region
      _
    $region73: #{unet_forward.1} parent=1 // pred_fallthru
      _
    // Predicated region
    $region74: #{unet_forward.1} parent=1 // pred_check
      _
    $region75: #{unet_forward.1} parent=1 // pred_check_branch
      %114 = sbr.rel (0) target = $region77
    $region76: #{unet_forward.1} parent=1 // pred_region
      _
    $region77: #{unet_forward.1} parent=1 // pred_fallthru
      _
    // Predicated region
    $region78: #{unet_forward.1} parent=1 // pred_check
      _
    $region79: #{unet_forward.1} parent=1 // pred_check_branch
      %116 = sbr.rel (0) target = $region81
    $region80: #{unet_forward.1} parent=1 // pred_region
      _
    $region81: #{unet_forward.1} parent=1 // pred_fallthru
      _
    // Predicated region
    $region82: #{unet_forward.1} parent=1 // pred_check
      _
    $region83: #{unet_forward.1} parent=1 // pred_check_branch
      %118 = sbr.rel (0) target = $region85
    $region84: #{unet_forward.1} parent=1 // pred_region
      _
    $region85: #{unet_forward.1} parent=1 // pred_fallthru
      _
    // Predicated region
    $region86: #{unet_forward.1} parent=1 // pred_check
      _
    $region87: #{unet_forward.1} parent=1 // pred_check_branch
      %120 = sbr.rel (0) target = $region89
    $region88: #{unet_forward.1} parent=1 // pred_region
      _
    $region89: #{unet_forward.1} parent=1 // pred_fallthru
      _
    // Predicated region
    $region90: #{unet_forward.1} parent=1 // pred_check
      _
    $region91: #{unet_forward.1} parent=1 // pred_check_branch
      %122 = sbr.rel (0) target = $region93
    $region92: #{unet_forward.1} parent=1 // pred_region
      _
    $region93: #{unet_forward.1} parent=1 // pred_fallthru
      _
    // Predicated region
    $region94: #{unet_forward.1} parent=1 // pred_check
      _
    $region95: #{unet_forward.1} parent=1 // pred_check_branch
      %124 = sbr.rel (0) target = $region97
    $region96: #{unet_forward.1} parent=1 // pred_region
      %s126 = ssub.s32 32, 32
      %127 = vsyncadd [#allocation6], %s126
      %s129 = sshll.u32 [#allocation5], 4
      %s130 = int_to_ptr.vmem [resolvable:$true] %s129
      %132 = dma.hbm_to_vmem [thread:$0]  %s47, 32, %s130, [#allocation6]
    $region97: #{unet_forward.1} parent=1 // pred_fallthru
      _
    // Predicated region
    $region98: #{unet_forward.1} parent=1 // pred_check
      _
    $region99: #{unet_forward.1} parent=1 // pred_check_branch
      %134 = sbr.rel (0) target = $region101
    $region100: #{unet_forward.1} parent=1 // pred_region
      _
    $region101: #{unet_forward.1} parent=1 // pred_fallthru
      _
    // Predicated region
    $region102: #{unet_forward.1} parent=1 // pred_check
      _
    $region103: #{unet_forward.1} parent=1 // pred_check_branch
      %136 = sbr.rel (0) target = $region105
    $region104: #{unet_forward.1} parent=1 // pred_region
      %s138 = ssub.s32 8192, 8192
      %139 = vsyncadd [#allocation6], %s138
      %s140 = sshll.u32 [#allocation7], 4
      %s141 = int_to_ptr.vmem [resolvable:$true] %s140
      %146 = dma.hbm_to_vmem [thread:$0]  %s51, 8192, %s141, [#allocation6], 512, 512, 32
    $region105: #{unet_forward.1} parent=1 // pred_fallthru
      _
    // Predicated region
    $region106: #{unet_forward.1} parent=1 // pred_check
      _
    $region107: #{unet_forward.1} parent=1 // pred_check_branch
      %148 = sbr.rel (0) target = $region109
    $region108: #{unet_forward.1} parent=1 // pred_region
      %s150 = ssub.s32 32, 32
      %151 = vsyncadd [#allocation9], %s150
      %s153 = sshll.u32 [#allocation8], 4
      %s154 = int_to_ptr.vmem [resolvable:$true] %s153
      %156 = dma.hbm_to_vmem [thread:$0]  %s53, 32, %s154, [#allocation9]
    $region109: #{unet_forward.1} parent=1 // pred_fallthru
      _
    // Predicated region
    $region110: #{unet_forward.1} parent=1 // pred_check
      _
    $region111: #{unet_forward.1} parent=1 // pred_check_branch
      %158 = sbr.rel (0) target = $region113
    $region112: #{unet_forward.1} parent=1 // pred_region
      %s160 = ssub.s32 16, 16
      %161 = vsyncadd [#allocation9], %s160
      %s163 = sshll.u32 [#allocation10], 4
      %s164 = int_to_ptr.vmem [resolvable:$true] %s163
      %166 = dma.hbm_to_vmem [thread:$0]  %s55, 16, %s164, [#allocation9]
    $region113: #{unet_forward.1} parent=1 // pred_fallthru
      _
    // Predicated region
    $region114: #{unet_forward.1} parent=1 // pred_check
      _
    $region115: #{unet_forward.1} parent=1 // pred_check_branch
      %168 = sbr.rel (0) target = $region117
    $region116: #{unet_forward.1} parent=1 // pred_region
      _
    $region117: #{unet_forward.1} parent=1 // pred_fallthru
      _
    // Predicated region
    $region118: #{unet_forward.1} parent=1 // pred_check
      _
    $region119: #{unet_forward.1} parent=1 // pred_check_branch
      %170 = sbr.rel (0) target = $region121
    $region120: #{unet_forward.1} parent=1 // pred_region
      %171 = dma.done [#allocation4], 32
    $region121: #{unet_forward.1} parent=1 // pred_fallthru
      _
    // Predicated region
    $region122: #{unet_forward.1} parent=1 // pred_check
      _
    $region123: #{unet_forward.1} parent=1 // pred_check_branch
      %173 = sbr.rel (0) target = $region125
    $region124: #{unet_forward.1} parent=1 // pred_region
      %174 = dma.done [#allocation6], 32
    $region125: #{unet_forward.1} parent=1 // pred_fallthru
      _
    // Predicated region
    $region126: #{unet_forward.1} parent=1 // pred_check
      _
    $region127: #{unet_forward.1} parent=1 // pred_check_branch
      %176 = sbr.rel (0) target = $region129
    $region128: #{unet_forward.1} parent=1 // pred_region
      %177 = dma.done [#allocation6], 8192
    $region129: #{unet_forward.1} parent=1 // pred_fallthru
      _
    // Predicated region
    $region130: #{unet_forward.1} parent=1 // pred_check
      _
    $region131: #{unet_forward.1} parent=1 // pred_check_branch
      %179 = sbr.rel (0) target = $region133
    $region132: #{unet_forward.1} parent=1 // pred_region
      %180 = dma.done [#allocation9], 32
    $region133: #{unet_forward.1} parent=1 // pred_fallthru
      _
    // Predicated region
    $region134: #{unet_forward.1} parent=1 // pred_check
      _
    $region135: #{unet_forward.1} parent=1 // pred_check_branch
      %182 = sbr.rel (0) target = $region137
    $region136: #{unet_forward.1} parent=1 // pred_region
      %183 = dma.done [#allocation9], 16
    $region137: #{unet_forward.1} parent=1 // pred_fallthru
      _
    %v184 = vld [vmem:[%s1] sm:$0xff]
    %v185 = vld [vmem:[%s1 + $0x8] sm:$0xff]
    %v188 = vcombine.high %v184, %v184
    %v189 = vcombine.high %v185, %v185
    %190 = vrot.lane.b32.xlu0 %v184, 17
    %v191 = vpop.permute.xlu0 %190
    %192 = vrot.lane.b32.xlu0 %v188, 17
    %v193 = vpop.permute.xlu0 %192
    %194 = vrot.lane.b32.xlu0 %v185, 17
    %v195 = vpop.permute.xlu0 %194
    %196 = vrot.lane.b32.xlu0 %v189, 17
    %v197 = vpop.permute.xlu0 %196
    %vm198 = vcmask 138240
    %v199 = vsel %vm198, %v191, %v193
    %v200 = vsel %vm198, %v193, %v195
    %v201 = vsel %vm198, %v195, %v197
    %v207 = vsel %vm198, 0.0, %v191
    %v208 = vsel %vm198, %v197, 0.0
    %v209 = vld [vmem:[%s3] sm:$0xf]
    %v210 = vld [vmem:[%s3 + $0x4] sm:$0xf]
    %v211 = vld [vmem:[%s3 + $0x8] sm:$0xf]
    %v212 = vld [vmem:[%s3 + $0xc] sm:$0xf]
    %v213 = vld [vmem:[%s3 + $0x10] sm:$0xf]
    %v214 = vld [vmem:[%s3 + $0x14] sm:$0xf]
    %v215 = vld [vmem:[%s3 + $0x18] sm:$0xf]
    %v216 = vld [vmem:[%s3 + $0x1c] sm:$0xf]
    %v217 = vld [vmem:[%s3 + $0x20] sm:$0xf]
    %v219 = vlaneseq
    %v220 = vshrl.u32 %v219, 7
    %v221 = vsub.s32 0, %v220
    %v222 = vrot.slane %v209, %v221
    %v223 = vlaneseq
    %v224 = vshrl.u32 %v223, 7
    %v225 = vsub.s32 1, %v224
    %v226 = vrot.slane %v209, %v225
    %v227 = vlaneseq
    %v228 = vshrl.u32 %v227, 7
    %v229 = vsub.s32 2, %v228
    %v230 = vrot.slane %v209, %v229
    %v231 = vlaneseq
    %v232 = vshrl.u32 %v231, 7
    %v233 = vsub.s32 3, %v232
    %v234 = vrot.slane %v209, %v233
    %v239 = vmul.f32 %v207, %v222
    %v240 = vmul.f32 %v199, %v226
    %v241 = vmul.f32 %v200, %v230
    %v242 = vmul.f32 %v201, %v234
    %v244 = vlaneseq
    %v245 = vshrl.u32 %v244, 7
    %v246 = vsub.s32 0, %v245
    %v247 = vrot.slane %v210, %v246
    %v248 = vlaneseq
    %v249 = vshrl.u32 %v248, 7
    %v250 = vsub.s32 1, %v249
    %v251 = vrot.slane %v210, %v250
    %v252 = vlaneseq
    %v253 = vshrl.u32 %v252, 7
    %v254 = vsub.s32 2, %v253
    %v255 = vrot.slane %v210, %v254
    %v256 = vlaneseq
    %v257 = vshrl.u32 %v256, 7
    %v258 = vsub.s32 3, %v257
    %v259 = vrot.slane %v210, %v258
    %260 = vrot.lane.b32.xlu0 %v247, 1
    %v261 = vpop.permute.xlu0 %260
    %262 = vrot.lane.b32.xlu0 %v251, 1
    %v263 = vpop.permute.xlu0 %262
    %264 = vrot.lane.b32.xlu0 %v255, 1
    %v265 = vpop.permute.xlu0 %264
    %266 = vrot.lane.b32.xlu0 %v259, 1
    %v267 = vpop.permute.xlu0 %266
    %vm268 = vcmask 7168
    %v269 = vsel %vm268, %v261, %v263
    %v270 = vsel %vm268, %v263, %v265
    %v271 = vsel %vm268, %v265, %v267
    %v277 = vmul.f32 %v207, %v261
    %v278 = vmul.f32 %v199, %v269
    %v279 = vmul.f32 %v200, %v270
    %v280 = vmul.f32 %v201, %v271
    %v281 = vmul.f32 %v208, %v267
    %v283 = vlaneseq
    %v284 = vshrl.u32 %v283, 7
    %v285 = vsub.s32 0, %v284
    %v286 = vrot.slane %v211, %v285
    %v287 = vlaneseq
    %v288 = vshrl.u32 %v287, 7
    %v289 = vsub.s32 1, %v288
    %v290 = vrot.slane %v211, %v289
    %v291 = vlaneseq
    %v292 = vshrl.u32 %v291, 7
    %v293 = vsub.s32 2, %v292
    %v294 = vrot.slane %v211, %v293
    %v295 = vlaneseq
    %v296 = vshrl.u32 %v295, 7
    %v297 = vsub.s32 3, %v296
    %v298 = vrot.slane %v211, %v297
    %299 = vrot.lane.b32.xlu0 %v286, 2
    %v300 = vpop.permute.xlu0 %299
    %301 = vrot.lane.b32.xlu0 %v290, 2
    %v302 = vpop.permute.xlu0 %301
    %303 = vrot.lane.b32.xlu0 %v294, 2
    %v304 = vpop.permute.xlu0 %303
    %305 = vrot.lane.b32.xlu0 %v298, 2
    %v306 = vpop.permute.xlu0 %305
    %vm307 = vcmask 15360
    %v308 = vsel %vm307, %v300, %v302
    %v309 = vsel %vm307, %v302, %v304
    %v310 = vsel %vm307, %v304, %v306
    %v316 = vmul.f32 %v207, %v300
    %v317 = vmul.f32 %v199, %v308
    %v318 = vmul.f32 %v200, %v309
    %v319 = vmul.f32 %v201, %v310
    %v320 = vmul.f32 %v208, %v306
    %v322 = vlaneseq
    %v323 = vshrl.u32 %v322, 7
    %v324 = vsub.s32 0, %v323
    %v325 = vrot.slane %v212, %v324
    %v326 = vlaneseq
    %v327 = vshrl.u32 %v326, 7
    %v328 = vsub.s32 1, %v327
    %v329 = vrot.slane %v212, %v328
    %v330 = vlaneseq
    %v331 = vshrl.u32 %v330, 7
    %v332 = vsub.s32 2, %v331
    %v333 = vrot.slane %v212, %v332
    %v334 = vlaneseq
    %v335 = vshrl.u32 %v334, 7
    %v336 = vsub.s32 3, %v335
    %v337 = vrot.slane %v212, %v336
    %338 = vrot.lane.b32.xlu0 %v325, 16
    %v339 = vpop.permute.xlu0 %338
    %340 = vrot.lane.b32.xlu0 %v329, 16
    %v341 = vpop.permute.xlu0 %340
    %342 = vrot.lane.b32.xlu0 %v333, 16
    %v343 = vpop.permute.xlu0 %342
    %344 = vrot.lane.b32.xlu0 %v337, 16
    %v345 = vpop.permute.xlu0 %344
    %vm346 = vcmask 130048
    %v347 = vsel %vm346, %v339, %v341
    %v348 = vsel %vm346, %v341, %v343
    %v349 = vsel %vm346, %v343, %v345
    %v355 = vmul.f32 %v207, %v339
    %v356 = vmul.f32 %v199, %v347
    %v357 = vmul.f32 %v200, %v348
    %v358 = vmul.f32 %v201, %v349
    %v359 = vmul.f32 %v208, %v345
    %v361 = vlaneseq
    %v362 = vshrl.u32 %v361, 7
    %v363 = vsub.s32 0, %v362
    %v364 = vrot.slane %v213, %v363
    %v365 = vlaneseq
    %v366 = vshrl.u32 %v365, 7
    %v367 = vsub.s32 1, %v366
    %v368 = vrot.slane %v213, %v367
    %v369 = vlaneseq
    %v370 = vshrl.u32 %v369, 7
    %v371 = vsub.s32 2, %v370
    %v372 = vrot.slane %v213, %v371
    %v373 = vlaneseq
    %v374 = vshrl.u32 %v373, 7
    %v375 = vsub.s32 3, %v374
    %v376 = vrot.slane %v213, %v375
    %377 = vrot.lane.b32.xlu0 %v364, 17
    %v378 = vpop.permute.xlu0 %377
    %379 = vrot.lane.b32.xlu0 %v368, 17
    %v380 = vpop.permute.xlu0 %379
    %381 = vrot.lane.b32.xlu0 %v372, 17
    %v382 = vpop.permute.xlu0 %381
    %383 = vrot.lane.b32.xlu0 %v376, 17
    %v384 = vpop.permute.xlu0 %383
    %v385 = vsel %vm198, %v378, %v380
    %v386 = vsel %vm198, %v380, %v382
    %v387 = vsel %vm198, %v382, %v384
    %v393 = vmul.f32 %v207, %v378
    %v394 = vmul.f32 %v199, %v385
    %v395 = vmul.f32 %v200, %v386
    %v396 = vmul.f32 %v201, %v387
    %v397 = vmul.f32 %v208, %v384
    %v399 = vlaneseq
    %v400 = vshrl.u32 %v399, 7
    %v401 = vsub.s32 0, %v400
    %v402 = vrot.slane %v214, %v401
    %v403 = vlaneseq
    %v404 = vshrl.u32 %v403, 7
    %v405 = vsub.s32 1, %v404
    %v406 = vrot.slane %v214, %v405
    %v407 = vlaneseq
    %v408 = vshrl.u32 %v407, 7
    %v409 = vsub.s32 2, %v408
    %v410 = vrot.slane %v214, %v409
    %v411 = vlaneseq
    %v412 = vshrl.u32 %v411, 7
    %v413 = vsub.s32 3, %v412
    %v414 = vrot.slane %v214, %v413
    %415 = vrot.lane.b32.xlu0 %v402, 18
    %v416 = vpop.permute.xlu0 %415
    %417 = vrot.lane.b32.xlu0 %v406, 18
    %v418 = vpop.permute.xlu0 %417
    %419 = vrot.lane.b32.xlu0 %v410, 18
    %v420 = vpop.permute.xlu0 %419
    %421 = vrot.lane.b32.xlu0 %v414, 18
    %v422 = vpop.permute.xlu0 %421
    %vm423 = vcmask 146432
    %v424 = vsel %vm423, %v416, %v418
    %v425 = vsel %vm423, %v418, %v420
    %v426 = vsel %vm423, %v420, %v422
    %v432 = vmul.f32 %v207, %v416
    %v433 = vmul.f32 %v199, %v424
    %v434 = vmul.f32 %v200, %v425
    %v435 = vmul.f32 %v201, %v426
    %v436 = vmul.f32 %v208, %v422
    %v438 = vlaneseq
    %v439 = vshrl.u32 %v438, 7
    %v440 = vsub.s32 0, %v439
    %v441 = vrot.slane %v215, %v440
    %v442 = vlaneseq
    %v443 = vshrl.u32 %v442, 7
    %v444 = vsub.s32 1, %v443
    %v445 = vrot.slane %v215, %v444
    %v446 = vlaneseq
    %v447 = vshrl.u32 %v446, 7
    %v448 = vsub.s32 2, %v447
    %v449 = vrot.slane %v215, %v448
    %v450 = vlaneseq
    %v451 = vshrl.u32 %v450, 7
    %v452 = vsub.s32 3, %v451
    %v453 = vrot.slane %v215, %v452
    %454 = vrot.lane.b32.xlu0 %v441, 32
    %v455 = vpop.permute.xlu0 %454
    %456 = vrot.lane.b32.xlu0 %v445, 32
    %v457 = vpop.permute.xlu0 %456
    %458 = vrot.lane.b32.xlu0 %v449, 32
    %v459 = vpop.permute.xlu0 %458
    %460 = vrot.lane.b32.xlu0 %v453, 32
    %v461 = vpop.permute.xlu0 %460
    %vm462 = vcmask 261120
    %v463 = vsel %vm462, %v455, %v457
    %v464 = vsel %vm462, %v457, %v459
    %v465 = vsel %vm462, %v459, %v461
    %v471 = vmul.f32 %v207, %v455
    %v472 = vmul.f32 %v199, %v463
    %v473 = vmul.f32 %v200, %v464
    %v474 = vmul.f32 %v201, %v465
    %v475 = vmul.f32 %v208, %v461
    %v477 = vlaneseq
    %v478 = vshrl.u32 %v477, 7
    %v479 = vsub.s32 0, %v478
    %v480 = vrot.slane %v216, %v479
    %v481 = vlaneseq
    %v482 = vshrl.u32 %v481, 7
    %v483 = vsub.s32 1, %v482
    %v484 = vrot.slane %v216, %v483
    %v485 = vlaneseq
    %v486 = vshrl.u32 %v485, 7
    %v487 = vsub.s32 2, %v486
    %v488 = vrot.slane %v216, %v487
    %v489 = vlaneseq
    %v490 = vshrl.u32 %v489, 7
    %v491 = vsub.s32 3, %v490
    %v492 = vrot.slane %v216, %v491
    %493 = vrot.lane.b32.xlu0 %v480, 33
    %v494 = vpop.permute.xlu0 %493
    %495 = vrot.lane.b32.xlu0 %v484, 33
    %v496 = vpop.permute.xlu0 %495
    %497 = vrot.lane.b32.xlu0 %v488, 33
    %v498 = vpop.permute.xlu0 %497
    %499 = vrot.lane.b32.xlu0 %v492, 33
    %v500 = vpop.permute.xlu0 %499
    %vm501 = vcmask 269312
    %v502 = vsel %vm501, %v494, %v496
    %v503 = vsel %vm501, %v496, %v498
    %v504 = vsel %vm501, %v498, %v500
    %v510 = vmul.f32 %v207, %v494
    %v511 = vmul.f32 %v199, %v502
    %v512 = vmul.f32 %v200, %v503
    %v513 = vmul.f32 %v201, %v504
    %v514 = vmul.f32 %v208, %v500
    %v516 = vlaneseq
    %v517 = vshrl.u32 %v516, 7
    %v518 = vsub.s32 0, %v517
    %v519 = vrot.slane %v217, %v518
    %v520 = vlaneseq
    %v521 = vshrl.u32 %v520, 7
    %v522 = vsub.s32 1, %v521
    %v523 = vrot.slane %v217, %v522
    %v524 = vlaneseq
    %v525 = vshrl.u32 %v524, 7
    %v526 = vsub.s32 2, %v525
    %v527 = vrot.slane %v217, %v526
    %v528 = vlaneseq
    %v529 = vshrl.u32 %v528, 7
    %v530 = vsub.s32 3, %v529
    %v531 = vrot.slane %v217, %v530
    %532 = vrot.lane.b32.xlu0 %v519, 34
    %v533 = vpop.permute.xlu0 %532
    %534 = vrot.lane.b32.xlu0 %v523, 34
    %v535 = vpop.permute.xlu0 %534
    %536 = vrot.lane.b32.xlu0 %v527, 34
    %v537 = vpop.permute.xlu0 %536
    %538 = vrot.lane.b32.xlu0 %v531, 34
    %v539 = vpop.permute.xlu0 %538
    %vm540 = vcmask 277504
    %v541 = vsel %vm540, %v533, %v535
    %v542 = vsel %vm540, %v535, %v537
    %v543 = vsel %vm540, %v537, %v539
    %v549 = vmul.f32 %v207, %v533
    %v550 = vmul.f32 %v199, %v541
    %v551 = vmul.f32 %v200, %v542
    %v552 = vmul.f32 %v201, %v543
    %v553 = vmul.f32 %v208, %v539
    %v559 = vrot.slane %v277, 4
    %v560 = vrot.slane %v278, 4
    %v561 = vrot.slane %v279, 4
    %v562 = vrot.slane %v280, 4
    %v563 = vrot.slane %v281, 4
    %564 = vrot.lane.b32.xlu0 %v559, 127
    %v565 = vpop.permute.xlu0 %564
    %566 = vrot.lane.b32.xlu0 %v560, 127
    %v567 = vpop.permute.xlu0 %566
    %568 = vrot.lane.b32.xlu0 %v561, 127
    %v569 = vpop.permute.xlu0 %568
    %570 = vrot.lane.b32.xlu0 %v562, 127
    %v571 = vpop.permute.xlu0 %570
    %572 = vrot.lane.b32.xlu0 %v563, 127
    %v573 = vpop.permute.xlu0 %572
    %vm574 = vcmask 1039360
    %v575 = vsel %vm574, %v565, %v567
    %v576 = vsel %vm574, %v567, %v569
    %v577 = vsel %vm574, %v569, %v571
    %v578 = vsel %vm574, %v571, %v573
    %588 = vrot.lane.b32.xlu0 %v316, 126
    %v589 = vpop.permute.xlu0 %588
    %590 = vrot.lane.b32.xlu0 %v317, 126
    %v591 = vpop.permute.xlu0 %590
    %592 = vrot.lane.b32.xlu0 %v318, 126
    %v593 = vpop.permute.xlu0 %592
    %594 = vrot.lane.b32.xlu0 %v319, 126
    %v595 = vpop.permute.xlu0 %594
    %596 = vrot.lane.b32.xlu0 %v320, 126
    %v597 = vpop.permute.xlu0 %596
    %vm598 = vcmask 1031168
    %v599 = vsel %vm598, %v589, %v591
    %v600 = vsel %vm598, %v591, %v593
    %v601 = vsel %vm598, %v593, %v595
    %v602 = vsel %vm598, %v595, %v597
    %v612 = vrot.slane %v355, 4
    %v613 = vrot.slane %v356, 4
    %v614 = vrot.slane %v357, 4
    %v615 = vrot.slane %v358, 4
    %v616 = vrot.slane %v359, 4
    %617 = vrot.lane.b32.xlu0 %v612, 112
    %v618 = vpop.permute.xlu0 %617
    %619 = vrot.lane.b32.xlu0 %v613, 112
    %v620 = vpop.permute.xlu0 %619
    %621 = vrot.lane.b32.xlu0 %v614, 112
    %v622 = vpop.permute.xlu0 %621
    %623 = vrot.lane.b32.xlu0 %v615, 112
    %v624 = vpop.permute.xlu0 %623
    %625 = vrot.lane.b32.xlu0 %v616, 112
    %v626 = vpop.permute.xlu0 %625
    %vm627 = vcmask 916480
    %v628 = vsel %vm627, %v618, %v620
    %v629 = vsel %vm627, %v620, %v622
    %v630 = vsel %vm627, %v622, %v624
    %v631 = vsel %vm627, %v624, %v626
    %641 = vrot.lane.b32.xlu0 %v393, 111
    %v642 = vpop.permute.xlu0 %641
    %643 = vrot.lane.b32.xlu0 %v394, 111
    %v644 = vpop.permute.xlu0 %643
    %645 = vrot.lane.b32.xlu0 %v395, 111
    %v646 = vpop.permute.xlu0 %645
    %647 = vrot.lane.b32.xlu0 %v396, 111
    %v648 = vpop.permute.xlu0 %647
    %649 = vrot.lane.b32.xlu0 %v397, 111
    %v650 = vpop.permute.xlu0 %649
    %vm651 = vcmask 908288
    %v652 = vsel %vm651, %v642, %v644
    %v653 = vsel %vm651, %v644, %v646
    %v654 = vsel %vm651, %v646, %v648
    %v655 = vsel %vm651, %v648, %v650
    %v665 = vrot.slane %v432, 4
    %v666 = vrot.slane %v433, 4
    %v667 = vrot.slane %v434, 4
    %v668 = vrot.slane %v435, 4
    %v669 = vrot.slane %v436, 4
    %670 = vrot.lane.b32.xlu0 %v665, 110
    %v671 = vpop.permute.xlu0 %670
    %672 = vrot.lane.b32.xlu0 %v666, 110
    %v673 = vpop.permute.xlu0 %672
    %674 = vrot.lane.b32.xlu0 %v667, 110
    %v675 = vpop.permute.xlu0 %674
    %676 = vrot.lane.b32.xlu0 %v668, 110
    %v677 = vpop.permute.xlu0 %676
    %678 = vrot.lane.b32.xlu0 %v669, 110
    %v679 = vpop.permute.xlu0 %678
    %vm680 = vcmask 900096
    %v681 = vsel %vm680, %v671, %v673
    %v682 = vsel %vm680, %v673, %v675
    %v683 = vsel %vm680, %v675, %v677
    %v684 = vsel %vm680, %v677, %v679
    %694 = vrot.lane.b32.xlu0 %v471, 96
    %v695 = vpop.permute.xlu0 %694
    %696 = vrot.lane.b32.xlu0 %v472, 96
    %v697 = vpop.permute.xlu0 %696
    %698 = vrot.lane.b32.xlu0 %v473, 96
    %v699 = vpop.permute.xlu0 %698
    %700 = vrot.lane.b32.xlu0 %v474, 96
    %v701 = vpop.permute.xlu0 %700
    %702 = vrot.lane.b32.xlu0 %v475, 96
    %v703 = vpop.permute.xlu0 %702
    %vm704 = vcmask 785408
    %v705 = vsel %vm704, %v695, %v697
    %v706 = vsel %vm704, %v697, %v699
    %v707 = vsel %vm704, %v699, %v701
    %v708 = vsel %vm704, %v701, %v703
    %v718 = vrot.slane %v510, 4
    %v719 = vrot.slane %v511, 4
    %v720 = vrot.slane %v512, 4
    %v721 = vrot.slane %v513, 4
    %v722 = vrot.slane %v514, 4
    %723 = vrot.lane.b32.xlu0 %v718, 95
    %v724 = vpop.permute.xlu0 %723
    %725 = vrot.lane.b32.xlu0 %v719, 95
    %v726 = vpop.permute.xlu0 %725
    %727 = vrot.lane.b32.xlu0 %v720, 95
    %v728 = vpop.permute.xlu0 %727
    %729 = vrot.lane.b32.xlu0 %v721, 95
    %v730 = vpop.permute.xlu0 %729
    %731 = vrot.lane.b32.xlu0 %v722, 95
    %v732 = vpop.permute.xlu0 %731
    %vm733 = vcmask 777216
    %v734 = vsel %vm733, %v724, %v726
    %v735 = vsel %vm733, %v726, %v728
    %v736 = vsel %vm733, %v728, %v730
    %v737 = vsel %vm733, %v730, %v732
    %747 = vrot.lane.b32.xlu0 %v549, 94
    %v748 = vpop.permute.xlu0 %747
    %749 = vrot.lane.b32.xlu0 %v550, 94
    %v750 = vpop.permute.xlu0 %749
    %751 = vrot.lane.b32.xlu0 %v551, 94
    %v752 = vpop.permute.xlu0 %751
    %753 = vrot.lane.b32.xlu0 %v552, 94
    %v754 = vpop.permute.xlu0 %753
    %755 = vrot.lane.b32.xlu0 %v553, 94
    %v756 = vpop.permute.xlu0 %755
    %vm757 = vcmask 769024
    %v758 = vsel %vm757, %v748, %v750
    %v759 = vsel %vm757, %v750, %v752
    %v760 = vsel %vm757, %v752, %v754
    %v761 = vsel %vm757, %v754, %v756
    %vm762 = vcmask 1043456
    %v763 = vsel %vm762, %v239, %v575
    %v764 = vsel %vm762, %v240, %v576
    %v765 = vsel %vm762, %v241, %v577
    %v766 = vsel %vm762, %v242, %v578
    %v767 = vsel %vm762, %v599, %v628
    %v768 = vsel %vm762, %v600, %v629
    %v769 = vsel %vm762, %v601, %v630
    %v770 = vsel %vm762, %v602, %v631
    %v771 = vsel %vm762, %v652, %v681
    %v772 = vsel %vm762, %v653, %v682
    %v773 = vsel %vm762, %v654, %v683
    %v774 = vsel %vm762, %v655, %v684
    %v775 = vsel %vm762, %v705, %v734
    %v776 = vsel %vm762, %v706, %v735
    %v777 = vsel %vm762, %v707, %v736
    %v778 = vsel %vm762, %v708, %v737
    %v779 = vld [vmem:[#allocation3] sm:$0x3]
    %vm780 = vcmask 293888
    %v782 = vsel %vm780, %v779, 0
    %v784 = vsel %vm762, %v758, 0
    %v786 = vsel %vm762, %v759, 0
    %v788 = vsel %vm762, %v760, 0
    %v790 = vsel %vm762, %v761, 0
    %792 = vmatprep.subr.mxu0 %v764
    %793 = vmatpush1.msra.mxu0 %v763
    %794 = vmatprep.subr.mxu0 %v768
    %795 = vmatpush1.msra.mxu0 %v767
    %796 = vmatprep.subr.mxu0 %v772
    %797 = vmatpush1.msra.mxu0 %v771
    %798 = vmatprep.subr.mxu0 %v776
    %799 = vmatpush1.msra.mxu0 %v775
    %800 = vmatprep.subr.mxu0 %v786
    %801 = vmatpush1.msra.mxu0 %v784
    %802 = vmatprep.subr.mxu0 0.0
    %803 = vmatpush1.msra.mxu0 0.0
    %804 = vmatprep.subr.mxu0 0.0
    %805 = vmatpush1.msra.mxu0 0.0
    %806 = vmatprep.subr.mxu0 0.0
    %807 = vmatpush1.msra.mxu0 0.0
    %808 = vmatprep.subr.mxu0 0.0
    %809 = vmatpush1.msra.mxu0 0.0
    %810 = vmatprep.subr.mxu0 0.0
    %811 = vmatpush1.msra.mxu0 0.0
    %812 = vmatprep.subr.mxu0 0.0
    %813 = vmatpush1.msra.mxu0 0.0
    %814 = vmatprep.subr.mxu0 0.0
    %815 = vmatpush1.msra.mxu0 0.0
    %816 = vmatprep.subr.mxu0 0.0
    %817 = vmatpush1.msra.mxu0 0.0
    %818 = vmatprep.subr.mxu0 0.0
    %819 = vmatpush1.msra.mxu0 0.0
    %820 = vmatprep.subr.mxu0 0.0
    %821 = vmatpush1.msra.mxu0 0.0
    %822 = vmatprep.subr.mxu0 0.0
    %823 = vmatpush1.msra.mxu0 0.0
    %824 = vmatprep.subr.mxu0 0.0
    %825 = vmatpush1.msra.mxu0 0.0
    %826 = vmatprep.subr.mxu0 0.0
    %827 = vmatpush1.msra.mxu0 0.0
    %828 = vmatprep.subr.mxu0 0.0
    %829 = vmatpush1.msra.mxu0 0.0
    %830 = vmatprep.subr.mxu0 0.0
    %831 = vmatpush1.msra.mxu0 0.0
    %832 = vmatprep.subr.mxu0 0.0
    %833 = vmatpush1.msra.mxu0 0.0
    %834 = vmatprep.subr.mxu0 0.0
    %835 = vmatpush1.msra.mxu0 0.0
    %836 = vmatprep.subr.mxu0 0.0
    %837 = vmatpush1.msra.mxu0 0.0
    %838 = vmatprep.subr.mxu0 0.0
    %839 = vmatpush1.msra.mxu0 0.0
    %840 = vmatprep.subr.mxu0 0.0
    %841 = vmatpush1.msra.mxu0 0.0
    %842 = vmatprep.subr.mxu0 0.0
    %843 = vmatpush1.msra.mxu0 0.0
    %844 = vmatprep.subr.mxu0 0.0
    %845 = vmatpush1.msra.mxu0 0.0
    %846 = vmatprep.subr.mxu0 0.0
    %847 = vmatpush1.msra.mxu0 0.0
    %848 = vmatprep.subr.mxu0 0.0
    %849 = vmatpush1.msra.mxu0 0.0
    %850 = vmatprep.subr.mxu0 0.0
    %851 = vmatpush1.msra.mxu0 0.0
    %852 = vmatprep.subr.mxu0 0.0
    %853 = vmatpush1.msra.mxu0 0.0
    %854 = vmatprep.subr.mxu0 0.0
    %855 = vmatpush1.msra.mxu0 0.0
    %856 = vmatprep.mubr.f32.mxu0 0.0
    %857 = vmatmul.mubr.f32.gmra.mrb[0].mxu0 %v782
    %v858 = vpop.f32.mrb[0].mxu0
    %v859 = vadd.f32 0.0, %v858
    %v860 = vpop.f32.mrb[0].mxu0
    %v861 = vadd.f32 0.0, %v860
    %862 = vdwg.mxu0
    %863 = vmatprep.subr.mxu0 %v766
    %864 = vmatpush1.msra.mxu0 %v765
    %865 = vmatprep.subr.mxu0 %v770
    %866 = vmatpush1.msra.mxu0 %v769
    %867 = vmatprep.subr.mxu0 %v774
    %868 = vmatpush1.msra.mxu0 %v773
    %869 = vmatprep.subr.mxu0 %v778
    %870 = vmatpush1.msra.mxu0 %v777
    %871 = vmatprep.subr.mxu0 %v790
    %872 = vmatpush1.msra.mxu0 %v788
    %873 = vmatprep.subr.mxu0 0.0
    %874 = vmatpush1.msra.mxu0 0.0
    %875 = vmatprep.subr.mxu0 0.0
    %876 = vmatpush1.msra.mxu0 0.0
    %877 = vmatprep.subr.mxu0 0.0
    %878 = vmatpush1.msra.mxu0 0.0
    %879 = vmatprep.subr.mxu0 0.0
    %880 = vmatpush1.msra.mxu0 0.0
    %881 = vmatprep.subr.mxu0 0.0
    %882 = vmatpush1.msra.mxu0 0.0
    %883 = vmatprep.subr.mxu0 0.0
    %884 = vmatpush1.msra.mxu0 0.0
    %885 = vmatprep.subr.mxu0 0.0
    %886 = vmatpush1.msra.mxu0 0.0
    %887 = vmatprep.subr.mxu0 0.0
    %888 = vmatpush1.msra.mxu0 0.0
    %889 = vmatprep.subr.mxu0 0.0
    %890 = vmatpush1.msra.mxu0 0.0
    %891 = vmatprep.subr.mxu0 0.0
    %892 = vmatpush1.msra.mxu0 0.0
    %893 = vmatprep.subr.mxu0 0.0
    %894 = vmatpush1.msra.mxu0 0.0
    %895 = vmatprep.subr.mxu0 0.0
    %896 = vmatpush1.msra.mxu0 0.0
    %897 = vmatprep.subr.mxu0 0.0
    %898 = vmatpush1.msra.mxu0 0.0
    %899 = vmatprep.subr.mxu0 0.0
    %900 = vmatpush1.msra.mxu0 0.0
    %901 = vmatprep.subr.mxu0 0.0
    %902 = vmatpush1.msra.mxu0 0.0
    %903 = vmatprep.subr.mxu0 0.0
    %904 = vmatpush1.msra.mxu0 0.0
    %905 = vmatprep.subr.mxu0 0.0
    %906 = vmatpush1.msra.mxu0 0.0
    %907 = vmatprep.subr.mxu0 0.0
    %908 = vmatpush1.msra.mxu0 0.0
    %909 = vmatprep.subr.mxu0 0.0
    %910 = vmatpush1.msra.mxu0 0.0
    %911 = vmatprep.subr.mxu0 0.0
    %912 = vmatpush1.msra.mxu0 0.0
    %913 = vmatprep.subr.mxu0 0.0
    %914 = vmatpush1.msra.mxu0 0.0
    %915 = vmatprep.subr.mxu0 0.0
    %916 = vmatpush1.msra.mxu0 0.0
    %917 = vmatprep.subr.mxu0 0.0
    %918 = vmatpush1.msra.mxu0 0.0
    %919 = vmatprep.subr.mxu0 0.0
    %920 = vmatpush1.msra.mxu0 0.0
    %921 = vmatprep.subr.mxu0 0.0
    %922 = vmatpush1.msra.mxu0 0.0
    %923 = vmatprep.subr.mxu0 0.0
    %924 = vmatpush1.msra.mxu0 0.0
    %925 = vmatprep.subr.mxu0 0.0
    %926 = vmatpush1.msra.mxu0 0.0
    %927 = vmatprep.mubr.f32.mxu0 0.0
    %928 = vmatmul.mubr.f32.gmra.mrb[0].mxu0 %v782
    %v929 = vpop.f32.mrb[0].mxu0
    %v930 = vadd.f32 0.0, %v929
    %v931 = vpop.f32.mrb[0].mxu0
    %v932 = vadd.f32 0.0, %v931
    %933 = vdwg.mxu0
    %vm934 = vcmask 1041408
    %v935 = vsel %vm934, %v859, 0.0
    %v936 = vsel %vm934, %v861, 0.0
    %v937 = vadd.f32 %v935, %v936
    %v938 = vsel %vm934, %v930, 0.0
    %v939 = vadd.f32 %v937, %v938
    %v940 = vsel %vm934, %v932, 0.0
    %v941 = vadd.f32 %v939, %v940
    %942 = vadd.xlane.f32.xlu0 %v941
    %v943 = vpop.xlane.xlu0 %942
    %v944 = vrcp.pop 512.0
    %v945 = vmul.f32 %v943, %v944
    %v946 = vsub.f32 %v859, %v945
    %v947 = vsub.f32 %v861, %v945
    %v948 = vsub.f32 %v930, %v945
    %v949 = vsub.f32 %v932, %v945
    %v950 = vmul.f32 %v946, %v946
    %v951 = vmul.f32 %v947, %v947
    %v952 = vmul.f32 %v948, %v948
    %v953 = vmul.f32 %v949, %v949
    %v954 = vsel %vm934, %v950, 0.0
    %v955 = vsel %vm934, %v951, 0.0
    %v956 = vadd.f32 %v954, %v955
    %v957 = vsel %vm934, %v952, 0.0
    %v958 = vadd.f32 %v956, %v957
    %v959 = vsel %vm934, %v953, 0.0
    %v960 = vadd.f32 %v958, %v959
    %961 = vadd.xlane.f32.xlu0 %v960
    %v962 = vpop.xlane.xlu0 %961
    %v963 = vmul.f32 %v962, %v944
    %v964 = vadd.f32 %v963, 1e-05
    %v965 = vrsqrt.pop %v964
    %v966 = vmul.f32 %v946, %v965
    %v967 = vmul.f32 %v947, %v965
    %v968 = vmul.f32 %v948, %v965
    %v969 = vmul.f32 %v949, %v965
    %v970 = vmax.f32 %v966, 0.0
    %v971 = vmax.f32 %v967, 0.0
    %v972 = vmax.f32 %v968, 0.0
    %v973 = vmax.f32 %v969, 0.0
    %978 = vrot.lane.b32.xlu0 %v970, 17
    %v979 = vpop.permute.xlu0 %978
    %980 = vrot.lane.b32.xlu0 %v971, 17
    %v981 = vpop.permute.xlu0 %980
    %982 = vrot.lane.b32.xlu0 %v972, 17
    %v983 = vpop.permute.xlu0 %982
    %984 = vrot.lane.b32.xlu0 %v973, 17
    %v985 = vpop.permute.xlu0 %984
    %v986 = vsel %vm198, %v979, %v981
    %v987 = vsel %vm198, %v981, %v983
    %v988 = vsel %vm198, %v983, %v985
    %v994 = vsel %vm198, 0.0, %v979
    %v995 = vsel %vm198, %v985, 0.0
    %998 = vrot.lane.b32.xlu0 %v994, 127
    %v999 = vpop.permute.xlu0 %998
    %1000 = vrot.lane.b32.xlu0 %v986, 127
    %v1001 = vpop.permute.xlu0 %1000
    %1002 = vrot.lane.b32.xlu0 %v987, 127
    %v1003 = vpop.permute.xlu0 %1002
    %1004 = vrot.lane.b32.xlu0 %v988, 127
    %v1005 = vpop.permute.xlu0 %1004
    %1006 = vrot.lane.b32.xlu0 %v995, 127
    %v1007 = vpop.permute.xlu0 %1006
    %v1008 = vsel %vm574, %v999, %v1001
    %v1009 = vsel %vm574, %v1001, %v1003
    %v1010 = vsel %vm574, %v1003, %v1005
    %v1011 = vsel %vm574, %v1005, %v1007
    %v1017 = vmax.f32 %v994, %v1008
    %v1018 = vmax.f32 %v986, %v1009
    %v1019 = vmax.f32 %v987, %v1010
    %v1020 = vmax.f32 %v988, %v1011
    %v1021 = vmax.f32 %v995, %v1007
    %1027 = vrot.lane.b32.xlu0 %v1017, 112
    %v1028 = vpop.permute.xlu0 %1027
    %1029 = vrot.lane.b32.xlu0 %v1018, 112
    %v1030 = vpop.permute.xlu0 %1029
    %1031 = vrot.lane.b32.xlu0 %v1019, 112
    %v1032 = vpop.permute.xlu0 %1031
    %1033 = vrot.lane.b32.xlu0 %v1020, 112
    %v1034 = vpop.permute.xlu0 %1033
    %1035 = vrot.lane.b32.xlu0 %v1021, 112
    %v1036 = vpop.permute.xlu0 %1035
    %v1037 = vsel %vm627, %v1028, %v1030
    %v1038 = vsel %vm627, %v1030, %v1032
    %v1039 = vsel %vm627, %v1032, %v1034
    %v1040 = vsel %vm627, %v1034, %v1036
    %v1046 = vmax.f32 %v1017, %v1037
    %v1047 = vmax.f32 %v1018, %v1038
    %v1048 = vmax.f32 %v1019, %v1039
    %v1049 = vmax.f32 %v1020, %v1040
    %v1050 = vmax.f32 %v1021, %v1036
    %v1051 = vld [vmem:[%s25] sm:$0xff]
    %v1052 = vld [vmem:[%s25 + $0x8] sm:$0xff]
    %v1053 = vld [vmem:[%s25 + $0x10] sm:$0xff]
    %v1054 = vld [vmem:[%s25 + $0x18] sm:$0xff]
    %v1055 = vld [vmem:[%s25 + $0x20] sm:$0xff]
    %v1056 = vld [vmem:[%s25 + $0x28] sm:$0xff]
    %v1057 = vld [vmem:[%s25 + $0x30] sm:$0xff]
    %v1058 = vld [vmem:[%s25 + $0x38] sm:$0xff]
    %v1059 = vld [vmem:[%s25 + $0x40] sm:$0xff]
    %v1060 = vld [vmem:[%s25 + $0x48] sm:$0xff]
    %v1061 = vld [vmem:[%s25 + $0x50] sm:$0xff]
    %v1062 = vld [vmem:[%s25 + $0x58] sm:$0xff]
    %v1063 = vld [vmem:[%s25 + $0x60] sm:$0xff]
    %v1064 = vld [vmem:[%s25 + $0x68] sm:$0xff]
    %v1065 = vld [vmem:[%s25 + $0x70] sm:$0xff]
    %v1066 = vld [vmem:[%s25 + $0x78] sm:$0xff]
    %v1067 = vld [vmem:[%s25 + $0x80] sm:$0xff]
    %v1068 = vld [vmem:[%s25 + $0x88] sm:$0xff]
    %v1069 = vld [vmem:[%s25 + $0x90] sm:$0xff]
    %v1070 = vld [vmem:[%s25 + $0x98] sm:$0xff]
    %v1071 = vld [vmem:[%s25 + $0xa0] sm:$0xff]
    %v1072 = vld [vmem:[%s25 + $0xa8] sm:$0xff]
    %v1073 = vld [vmem:[%s25 + $0xb0] sm:$0xff]
    %v1074 = vld [vmem:[%s25 + $0xb8] sm:$0xff]
    %v1075 = vld [vmem:[%s25 + $0xc0] sm:$0xff]
    %v1076 = vld [vmem:[%s25 + $0xc8] sm:$0xff]
    %v1077 = vld [vmem:[%s25 + $0xd0] sm:$0xff]
    %v1078 = vld [vmem:[%s25 + $0xd8] sm:$0xff]
    %v1079 = vld [vmem:[%s25 + $0xe0] sm:$0xff]
    %v1080 = vld [vmem:[%s25 + $0xe8] sm:$0xff]
    %v1081 = vld [vmem:[%s25 + $0xf0] sm:$0xff]
    %v1082 = vld [vmem:[%s25 + $0xf8] sm:$0xff]
    %v1083 = vld [vmem:[%s25 + $0x100] sm:$0xff]
    %v1084 = vld [vmem:[%s25 + $0x108] sm:$0xff]
    %v1085 = vld [vmem:[%s25 + $0x110] sm:$0xff]
    %v1086 = vld [vmem:[%s25 + $0x118] sm:$0xff]
    %v1087 = vld [vmem:[%s25 + $0x120] sm:$0xff]
    %v1088 = vld [vmem:[%s25 + $0x128] sm:$0xff]
    %v1089 = vld [vmem:[%s25 + $0x130] sm:$0xff]
    %v1090 = vld [vmem:[%s25 + $0x138] sm:$0xff]
    %v1091 = vld [vmem:[%s25 + $0x140] sm:$0xff]
    %v1092 = vld [vmem:[%s25 + $0x148] sm:$0xff]
    %v1093 = vld [vmem:[%s25 + $0x150] sm:$0xff]
    %v1094 = vld [vmem:[%s25 + $0x158] sm:$0xff]
    %v1095 = vld [vmem:[%s25 + $0x160] sm:$0xff]
    %v1096 = vld [vmem:[%s25 + $0x168] sm:$0xff]
    %v1097 = vld [vmem:[%s25 + $0x170] sm:$0xff]
    %v1098 = vld [vmem:[%s25 + $0x178] sm:$0xff]
    %v1099 = vld [vmem:[%s25 + $0x180] sm:$0xff]
    %v1100 = vld [vmem:[%s25 + $0x188] sm:$0xff]
    %v1101 = vld [vmem:[%s25 + $0x190] sm:$0xff]
    %v1102 = vld [vmem:[%s25 + $0x198] sm:$0xff]
    %v1103 = vld [vmem:[%s25 + $0x1a0] sm:$0xff]
    %v1104 = vld [vmem:[%s25 + $0x1a8] sm:$0xff]
    %v1105 = vld [vmem:[%s25 + $0x1b0] sm:$0xff]
    %v1106 = vld [vmem:[%s25 + $0x1b8] sm:$0xff]
    %v1107 = vld [vmem:[%s25 + $0x1c0] sm:$0xff]
    %v1108 = vld [vmem:[%s25 + $0x1c8] sm:$0xff]
    %v1109 = vld [vmem:[%s25 + $0x1d0] sm:$0xff]
    %v1110 = vld [vmem:[%s25 + $0x1d8] sm:$0xff]
    %v1111 = vld [vmem:[%s25 + $0x1e0] sm:$0xff]
    %v1112 = vld [vmem:[%s25 + $0x1e8] sm:$0xff]
    %v1113 = vld [vmem:[%s25 + $0x1f0] sm:$0xff]
    %v1114 = vld [vmem:[%s25 + $0x1f8] sm:$0xff]
    %1120 = vrot.lane.b32.xlu0 %v1046, 111
    %v1121 = vpop.permute.xlu0 %1120
    %1122 = vrot.lane.b32.xlu0 %v1047, 111
    %v1123 = vpop.permute.xlu0 %1122
    %1124 = vrot.lane.b32.xlu0 %v1048, 111
    %v1125 = vpop.permute.xlu0 %1124
    %1126 = vrot.lane.b32.xlu0 %v1049, 111
    %v1127 = vpop.permute.xlu0 %1126
    %1128 = vrot.lane.b32.xlu0 %v1050, 111
    %v1129 = vpop.permute.xlu0 %1128
    %v1130 = vsel %vm651, %v1121, %v1123
    %v1131 = vsel %vm651, %v1123, %v1125
    %v1132 = vsel %vm651, %v1125, %v1127
    %v1133 = vsel %vm651, %v1127, %v1129
    %1138 = vmatprep.subr.mxu0 0.0
    %1139 = vmatpush1.msra.mxu0 %v1051
    %1140 = vmatprep.subr.mxu0 0.0
    %1141 = vmatpush1.msra.mxu0 %v1052
    %1142 = vmatprep.subr.mxu0 0.0
    %1143 = vmatpush1.msra.mxu0 %v1053
    %1144 = vmatprep.subr.mxu0 0.0
    %1145 = vmatpush1.msra.mxu0 %v1054
    %1146 = vmatprep.subr.mxu0 0.0
    %1147 = vmatpush1.msra.mxu0 %v1055
    %1148 = vmatprep.subr.mxu0 0.0
    %1149 = vmatpush1.msra.mxu0 %v1056
    %1150 = vmatprep.subr.mxu0 0.0
    %1151 = vmatpush1.msra.mxu0 %v1057
    %1152 = vmatprep.subr.mxu0 0.0
    %1153 = vmatpush1.msra.mxu0 %v1058
    %1154 = vmatprep.subr.mxu0 0.0
    %1155 = vmatpush1.msra.mxu0 %v1059
    %1156 = vmatprep.subr.mxu0 0.0
    %1157 = vmatpush1.msra.mxu0 %v1060
    %1158 = vmatprep.subr.mxu0 0.0
    %1159 = vmatpush1.msra.mxu0 %v1061
    %1160 = vmatprep.subr.mxu0 0.0
    %1161 = vmatpush1.msra.mxu0 %v1062
    %1162 = vmatprep.subr.mxu0 0.0
    %1163 = vmatpush1.msra.mxu0 %v1063
    %1164 = vmatprep.subr.mxu0 0.0
    %1165 = vmatpush1.msra.mxu0 %v1064
    %1166 = vmatprep.subr.mxu0 0.0
    %1167 = vmatpush1.msra.mxu0 %v1065
    %1168 = vmatprep.subr.mxu0 0.0
    %1169 = vmatpush1.msra.mxu0 %v1066
    %1170 = vmatprep.subr.mxu0 0.0
    %1171 = vmatpush1.msra.mxu0 %v1067
    %1172 = vmatprep.subr.mxu0 0.0
    %1173 = vmatpush1.msra.mxu0 %v1068
    %1174 = vmatprep.subr.mxu0 0.0
    %1175 = vmatpush1.msra.mxu0 %v1069
    %1176 = vmatprep.subr.mxu0 0.0
    %1177 = vmatpush1.msra.mxu0 %v1070
    %1178 = vmatprep.subr.mxu0 0.0
    %1179 = vmatpush1.msra.mxu0 %v1071
    %1180 = vmatprep.subr.mxu0 0.0
    %1181 = vmatpush1.msra.mxu0 %v1072
    %1182 = vmatprep.subr.mxu0 0.0
    %1183 = vmatpush1.msra.mxu0 %v1073
    %1184 = vmatprep.subr.mxu0 0.0
    %1185 = vmatpush1.msra.mxu0 %v1074
    %1186 = vmatprep.subr.mxu0 0.0
    %1187 = vmatpush1.msra.mxu0 %v1075
    %1188 = vmatprep.subr.mxu0 0.0
    %1189 = vmatpush1.msra.mxu0 %v1076
    %1190 = vmatprep.subr.mxu0 0.0
    %1191 = vmatpush1.msra.mxu0 %v1077
    %1192 = vmatprep.subr.mxu0 0.0
    %1193 = vmatpush1.msra.mxu0 %v1078
    %1194 = vmatprep.subr.mxu0 0.0
    %1195 = vmatpush1.msra.mxu0 %v1079
    %1196 = vmatprep.subr.mxu0 0.0
    %1197 = vmatpush1.msra.mxu0 %v1080
    %1198 = vmatprep.subr.mxu0 0.0
    %1199 = vmatpush1.msra.mxu0 %v1081
    %1200 = vmatprep.subr.mxu0 0.0
    %1201 = vmatpush1.msra.mxu0 %v1082
    %1202 = vmatprep.mubr.f32.mxu0 %v1131
    %1203 = vmatmul.mubr.f32.gmra.mrb[0].mxu0 %v1130
    %v1204 = vpop.f32.mrb[0].mxu0
    %v1205 = vadd.f32 0.0, %v1204
    %v1206 = vpop.f32.mrb[0].mxu0
    %1207 = vdwg.mxu0
    %1208 = vmatprep.subr.mxu0 0.0
    %1209 = vmatpush1.msra.mxu0 %v1083
    %1210 = vmatprep.subr.mxu0 0.0
    %1211 = vmatpush1.msra.mxu0 %v1084
    %1212 = vmatprep.subr.mxu0 0.0
    %1213 = vmatpush1.msra.mxu0 %v1085
    %1214 = vmatprep.subr.mxu0 0.0
    %1215 = vmatpush1.msra.mxu0 %v1086
    %1216 = vmatprep.subr.mxu0 0.0
    %1217 = vmatpush1.msra.mxu0 %v1087
    %1218 = vmatprep.subr.mxu0 0.0
    %1219 = vmatpush1.msra.mxu0 %v1088
    %1220 = vmatprep.subr.mxu0 0.0
    %1221 = vmatpush1.msra.mxu0 %v1089
    %1222 = vmatprep.subr.mxu0 0.0
    %1223 = vmatpush1.msra.mxu0 %v1090
    %1224 = vmatprep.subr.mxu0 0.0
    %1225 = vmatpush1.msra.mxu0 %v1091
    %1226 = vmatprep.subr.mxu0 0.0
    %1227 = vmatpush1.msra.mxu0 %v1092
    %1228 = vmatprep.subr.mxu0 0.0
    %1229 = vmatpush1.msra.mxu0 %v1093
    %1230 = vmatprep.subr.mxu0 0.0
    %1231 = vmatpush1.msra.mxu0 %v1094
    %1232 = vmatprep.subr.mxu0 0.0
    %1233 = vmatpush1.msra.mxu0 %v1095
    %1234 = vmatprep.subr.mxu0 0.0
    %1235 = vmatpush1.msra.mxu0 %v1096
    %1236 = vmatprep.subr.mxu0 0.0
    %1237 = vmatpush1.msra.mxu0 %v1097
    %1238 = vmatprep.subr.mxu0 0.0
    %1239 = vmatpush1.msra.mxu0 %v1098
    %1240 = vmatprep.subr.mxu0 0.0
    %1241 = vmatpush1.msra.mxu0 %v1099
    %1242 = vmatprep.subr.mxu0 0.0
    %1243 = vmatpush1.msra.mxu0 %v1100
    %1244 = vmatprep.subr.mxu0 0.0
    %1245 = vmatpush1.msra.mxu0 %v1101
    %1246 = vmatprep.subr.mxu0 0.0
    %1247 = vmatpush1.msra.mxu0 %v1102
    %1248 = vmatprep.subr.mxu0 0.0
    %1249 = vmatpush1.msra.mxu0 %v1103
    %1250 = vmatprep.subr.mxu0 0.0
    %1251 = vmatpush1.msra.mxu0 %v1104
    %1252 = vmatprep.subr.mxu0 0.0
    %1253 = vmatpush1.msra.mxu0 %v1105
    %1254 = vmatprep.subr.mxu0 0.0
    %1255 = vmatpush1.msra.mxu0 %v1106
    %1256 = vmatprep.subr.mxu0 0.0
    %1257 = vmatpush1.msra.mxu0 %v1107
    %1258 = vmatprep.subr.mxu0 0.0
    %1259 = vmatpush1.msra.mxu0 %v1108
    %1260 = vmatprep.subr.mxu0 0.0
    %1261 = vmatpush1.msra.mxu0 %v1109
    %1262 = vmatprep.subr.mxu0 0.0
    %1263 = vmatpush1.msra.mxu0 %v1110
    %1264 = vmatprep.subr.mxu0 0.0
    %1265 = vmatpush1.msra.mxu0 %v1111
    %1266 = vmatprep.subr.mxu0 0.0
    %1267 = vmatpush1.msra.mxu0 %v1112
    %1268 = vmatprep.subr.mxu0 0.0
    %1269 = vmatpush1.msra.mxu0 %v1113
    %1270 = vmatprep.subr.mxu0 0.0
    %1271 = vmatpush1.msra.mxu0 %v1114
    %1272 = vmatprep.mubr.f32.mxu0 %v1133
    %1273 = vmatmul.mubr.f32.gmra.mrb[0].mxu0 %v1132
    %v1274 = vpop.f32.mrb[0].mxu0
    %v1275 = vadd.f32 %v1205, %v1274
    %v1276 = vpop.f32.mrb[0].mxu0
    %1277 = vdwg.mxu0
    %1279 = vrot.lane.b32.xlu0 %v1275, 9
    %v1280 = vpop.permute.xlu0 %1279
    %vm1282 = vcmask 72704
    %v1283 = vsel %vm1282, 0.0, %v1280
    %v1284 = vsel %vm1282, %v1280, 0.0
    %v1285 = vld [vmem:[%s5] sm:$0x1]
    %v1286 = vld [vmem:[%s5 + $0x1] sm:$0x1]
    %v1287 = vld [vmem:[%s5 + $0x2] sm:$0x1]
    %v1288 = vld [vmem:[%s5 + $0x3] sm:$0x1]
    %v1289 = vld [vmem:[%s5 + $0x4] sm:$0x1]
    %v1290 = vld [vmem:[%s5 + $0x5] sm:$0x1]
    %v1291 = vld [vmem:[%s5 + $0x6] sm:$0x1]
    %v1292 = vld [vmem:[%s5 + $0x7] sm:$0x1]
    %v1293 = vld [vmem:[%s5 + $0x8] sm:$0x1]
    %v1295 = vlaneseq
    %v1296 = vshrl.u32 %v1295, 7
    %v1297 = vsub.s32 0, %v1296
    %v1298 = vrot.slane %v1285, %v1297
    %v1300 = vmul.f32 %v1283, %v1298
    %v1302 = vlaneseq
    %v1303 = vshrl.u32 %v1302, 7
    %v1304 = vsub.s32 0, %v1303
    %v1305 = vrot.slane %v1286, %v1304
    %1306 = vrot.lane.b32.xlu0 %v1305, 1
    %v1307 = vpop.permute.xlu0 %1306
    %v1309 = vmul.f32 %v1283, %v1307
    %v1310 = vmul.f32 %v1284, %v1307
    %v1312 = vlaneseq
    %v1313 = vshrl.u32 %v1312, 7
    %v1314 = vsub.s32 0, %v1313
    %v1315 = vrot.slane %v1287, %v1314
    %1316 = vrot.lane.b32.xlu0 %v1315, 2
    %v1317 = vpop.permute.xlu0 %1316
    %v1319 = vmul.f32 %v1283, %v1317
    %v1320 = vmul.f32 %v1284, %v1317
    %v1322 = vlaneseq
    %v1323 = vshrl.u32 %v1322, 7
    %v1324 = vsub.s32 0, %v1323
    %v1325 = vrot.slane %v1288, %v1324
    %1326 = vrot.lane.b32.xlu0 %v1325, 8
    %v1327 = vpop.permute.xlu0 %1326
    %v1329 = vmul.f32 %v1283, %v1327
    %v1330 = vmul.f32 %v1284, %v1327
    %v1332 = vlaneseq
    %v1333 = vshrl.u32 %v1332, 7
    %v1334 = vsub.s32 0, %v1333
    %v1335 = vrot.slane %v1289, %v1334
    %1336 = vrot.lane.b32.xlu0 %v1335, 9
    %v1337 = vpop.permute.xlu0 %1336
    %v1339 = vmul.f32 %v1283, %v1337
    %v1340 = vmul.f32 %v1284, %v1337
    %v1342 = vlaneseq
    %v1343 = vshrl.u32 %v1342, 7
    %v1344 = vsub.s32 0, %v1343
    %v1345 = vrot.slane %v1290, %v1344
    %1346 = vrot.lane.b32.xlu0 %v1345, 10
    %v1347 = vpop.permute.xlu0 %1346
    %v1349 = vmul.f32 %v1283, %v1347
    %v1350 = vmul.f32 %v1284, %v1347
    %v1352 = vlaneseq
    %v1353 = vshrl.u32 %v1352, 7
    %v1354 = vsub.s32 0, %v1353
    %v1355 = vrot.slane %v1291, %v1354
    %1356 = vrot.lane.b32.xlu0 %v1355, 16
    %v1357 = vpop.permute.xlu0 %1356
    %v1359 = vmul.f32 %v1283, %v1357
    %v1360 = vmul.f32 %v1284, %v1357
    %v1362 = vlaneseq
    %v1363 = vshrl.u32 %v1362, 7
    %v1364 = vsub.s32 0, %v1363
    %v1365 = vrot.slane %v1292, %v1364
    %1366 = vrot.lane.b32.xlu0 %v1365, 17
    %v1367 = vpop.permute.xlu0 %1366
    %v1369 = vmul.f32 %v1283, %v1367
    %v1370 = vmul.f32 %v1284, %v1367
    %v1372 = vlaneseq
    %v1373 = vshrl.u32 %v1372, 7
    %v1374 = vsub.s32 0, %v1373
    %v1375 = vrot.slane %v1293, %v1374
    %1376 = vrot.lane.b32.xlu0 %v1375, 18
    %v1377 = vpop.permute.xlu0 %1376
    %v1379 = vmul.f32 %v1283, %v1377
    %v1380 = vmul.f32 %v1284, %v1377
    %v1383 = vrot.slane %v1309, 6
    %v1384 = vrot.slane %v1310, 6
    %1385 = vrot.lane.b32.xlu0 %v1383, 127
    %v1386 = vpop.permute.xlu0 %1385
    %1387 = vrot.lane.b32.xlu0 %v1384, 127
    %v1388 = vpop.permute.xlu0 %1387
    %v1389 = vsel %vm574, %v1386, %v1388
    %v1393 = vrot.slane %v1319, 4
    %v1394 = vrot.slane %v1320, 4
    %1395 = vrot.lane.b32.xlu0 %v1393, 126
    %v1396 = vpop.permute.xlu0 %1395
    %1397 = vrot.lane.b32.xlu0 %v1394, 126
    %v1398 = vpop.permute.xlu0 %1397
    %v1399 = vsel %vm598, %v1396, %v1398
    %v1403 = vrot.slane %v1329, 2
    %v1404 = vrot.slane %v1330, 2
    %1405 = vrot.lane.b32.xlu0 %v1403, 120
    %v1406 = vpop.permute.xlu0 %1405
    %1407 = vrot.lane.b32.xlu0 %v1404, 120
    %v1408 = vpop.permute.xlu0 %1407
    %vm1409 = vcmask 982016
    %v1410 = vsel %vm1409, %v1406, %v1408
    %1414 = vrot.lane.b32.xlu0 %v1339, 119
    %v1415 = vpop.permute.xlu0 %1414
    %1416 = vrot.lane.b32.xlu0 %v1340, 119
    %v1417 = vpop.permute.xlu0 %1416
    %vm1418 = vcmask 973824
    %v1419 = vsel %vm1418, %v1415, %v1417
    %v1423 = vrot.slane %v1349, 6
    %v1424 = vrot.slane %v1350, 6
    %1425 = vrot.lane.b32.xlu0 %v1423, 118
    %v1426 = vpop.permute.xlu0 %1425
    %1427 = vrot.lane.b32.xlu0 %v1424, 118
    %v1428 = vpop.permute.xlu0 %1427
    %vm1429 = vcmask 965632
    %v1430 = vsel %vm1429, %v1426, %v1428
    %v1434 = vrot.slane %v1359, 4
    %v1435 = vrot.slane %v1360, 4
    %1436 = vrot.lane.b32.xlu0 %v1434, 112
    %v1437 = vpop.permute.xlu0 %1436
    %1438 = vrot.lane.b32.xlu0 %v1435, 112
    %v1439 = vpop.permute.xlu0 %1438
    %v1440 = vsel %vm627, %v1437, %v1439
    %v1444 = vrot.slane %v1369, 2
    %v1445 = vrot.slane %v1370, 2
    %1446 = vrot.lane.b32.xlu0 %v1444, 111
    %v1447 = vpop.permute.xlu0 %1446
    %1448 = vrot.lane.b32.xlu0 %v1445, 111
    %v1449 = vpop.permute.xlu0 %1448
    %v1450 = vsel %vm651, %v1447, %v1449
    %1454 = vrot.lane.b32.xlu0 %v1379, 110
    %v1455 = vpop.permute.xlu0 %1454
    %1456 = vrot.lane.b32.xlu0 %v1380, 110
    %v1457 = vpop.permute.xlu0 %1456
    %v1458 = vsel %vm680, %v1455, %v1457
    %v1459 = vsel %vm934, %v1300, %v1389
    %v1460 = vsel %vm762, %v1459, %v1399
    %vm1461 = vcmask 1045504
    %v1462 = vsel %vm1461, %v1460, %v1410
    %v1463 = vsel %vm934, %v1419, %v1430
    %v1464 = vsel %vm762, %v1463, %v1440
    %v1465 = vsel %vm1461, %v1464, %v1450
    %v1466 = vld [vmem:[%s19] sm:$0xf]
    %v1468 = vsel %vm423, %v1466, 0
    %v1470 = vsel %vm934, %v1458, 0
    %1472 = vmatprep.subr.mxu0 0.0
    %1473 = vmatpush1.msra.mxu0 %v1462
    %1474 = vmatprep.subr.mxu0 0.0
    %1475 = vmatpush1.msra.mxu0 %v1465
    %1476 = vmatprep.subr.mxu0 0.0
    %1477 = vmatpush1.msra.mxu0 %v1470
    %1478 = vmatprep.subr.mxu0 0.0
    %1479 = vmatpush1.msra.mxu0 0.0
    %1480 = vmatprep.subr.mxu0 0.0
    %1481 = vmatpush1.msra.mxu0 0.0
    %1482 = vmatprep.subr.mxu0 0.0
    %1483 = vmatpush1.msra.mxu0 0.0
    %1484 = vmatprep.subr.mxu0 0.0
    %1485 = vmatpush1.msra.mxu0 0.0
    %1486 = vmatprep.subr.mxu0 0.0
    %1487 = vmatpush1.msra.mxu0 0.0
    %1488 = vmatprep.subr.mxu0 0.0
    %1489 = vmatpush1.msra.mxu0 0.0
    %1490 = vmatprep.subr.mxu0 0.0
    %1491 = vmatpush1.msra.mxu0 0.0
    %1492 = vmatprep.subr.mxu0 0.0
    %1493 = vmatpush1.msra.mxu0 0.0
    %1494 = vmatprep.subr.mxu0 0.0
    %1495 = vmatpush1.msra.mxu0 0.0
    %1496 = vmatprep.subr.mxu0 0.0
    %1497 = vmatpush1.msra.mxu0 0.0
    %1498 = vmatprep.subr.mxu0 0.0
    %1499 = vmatpush1.msra.mxu0 0.0
    %1500 = vmatprep.subr.mxu0 0.0
    %1501 = vmatpush1.msra.mxu0 0.0
    %1502 = vmatprep.subr.mxu0 0.0
    %1503 = vmatpush1.msra.mxu0 0.0
    %1504 = vmatprep.subr.mxu0 0.0
    %1505 = vmatpush1.msra.mxu0 0.0
    %1506 = vmatprep.subr.mxu0 0.0
    %1507 = vmatpush1.msra.mxu0 0.0
    %1508 = vmatprep.subr.mxu0 0.0
    %1509 = vmatpush1.msra.mxu0 0.0
    %1510 = vmatprep.subr.mxu0 0.0
    %1511 = vmatpush1.msra.mxu0 0.0
    %1512 = vmatprep.subr.mxu0 0.0
    %1513 = vmatpush1.msra.mxu0 0.0
    %1514 = vmatprep.subr.mxu0 0.0
    %1515 = vmatpush1.msra.mxu0 0.0
    %1516 = vmatprep.subr.mxu0 0.0
    %1517 = vmatpush1.msra.mxu0 0.0
    %1518 = vmatprep.subr.mxu0 0.0
    %1519 = vmatpush1.msra.mxu0 0.0
    %1520 = vmatprep.subr.mxu0 0.0
    %1521 = vmatpush1.msra.mxu0 0.0
    %1522 = vmatprep.subr.mxu0 0.0
    %1523 = vmatpush1.msra.mxu0 0.0
    %1524 = vmatprep.subr.mxu0 0.0
    %1525 = vmatpush1.msra.mxu0 0.0
    %1526 = vmatprep.subr.mxu0 0.0
    %1527 = vmatpush1.msra.mxu0 0.0
    %1528 = vmatprep.subr.mxu0 0.0
    %1529 = vmatpush1.msra.mxu0 0.0
    %1530 = vmatprep.subr.mxu0 0.0
    %1531 = vmatpush1.msra.mxu0 0.0
    %1532 = vmatprep.subr.mxu0 0.0
    %1533 = vmatpush1.msra.mxu0 0.0
    %1534 = vmatprep.subr.mxu0 0.0
    %1535 = vmatpush1.msra.mxu0 0.0
    %1536 = vmatprep.mubr.f32.mxu0 0.0
    %1537 = vmatmul.mubr.f32.gmra.mrb[0].mxu0 %v1468
    %v1538 = vpop.f32.mrb[0].mxu0
    %v1539 = vadd.f32 0.0, %v1538
    %v1540 = vpop.f32.mrb[0].mxu0
    %1541 = vdwg.mxu0
    %v1542 = vsel %vm762, %v1539, 0.0
    %1543 = vadd.xlane.f32.xlu0 %v1542
    %v1544 = vpop.xlane.xlu0 %1543
    %v1545 = vrcp.pop 128.0
    %v1546 = vmul.f32 %v1544, %v1545
    %v1547 = vsub.f32 %v1539, %v1546
    %v1548 = vmul.f32 %v1547, %v1547
    %v1549 = vsel %vm762, %v1548, 0.0
    %1550 = vadd.xlane.f32.xlu0 %v1549
    %v1551 = vpop.xlane.xlu0 %1550
    %v1552 = vmul.f32 %v1551, %v1545
    %v1553 = vadd.f32 %v1552, 1e-05
    %v1554 = vrsqrt.pop %v1553
    %v1555 = vmul.f32 %v1547, %v1554
    %v1556 = vmax.f32 %v1555, 0.0
    %1558 = vrot.lane.b32.xlu0 %v1556, 9
    %v1559 = vpop.permute.xlu0 %1558
    %v1561 = vsel %vm1282, 0.0, %v1559
    %v1562 = vsel %vm1282, %v1559, 0.0
    %1565 = vrot.lane.b32.xlu0 %v1561, 127
    %v1566 = vpop.permute.xlu0 %1565
    %1567 = vrot.lane.b32.xlu0 %v1562, 127
    %v1568 = vpop.permute.xlu0 %1567
    %v1569 = vsel %vm574, %v1566, %v1568
    %v1572 = vmax.f32 %v1561, %v1569
    %v1573 = vmax.f32 %v1562, %v1568
    %1576 = vrot.lane.b32.xlu0 %v1572, 120
    %v1577 = vpop.permute.xlu0 %1576
    %1578 = vrot.lane.b32.xlu0 %v1573, 120
    %v1579 = vpop.permute.xlu0 %1578
    %v1580 = vsel %vm1409, %v1577, %v1579
    %v1583 = vmax.f32 %v1572, %v1580
    %v1584 = vmax.f32 %v1573, %v1579
    %v1585 = vld [vmem:[%s27] sm:$0xff]
    %v1586 = vld [vmem:[%s27 + $0x8] sm:$0xff]
    %v1587 = vld [vmem:[%s27 + $0x10] sm:$0xff]
    %v1588 = vld [vmem:[%s27 + $0x18] sm:$0xff]
    %v1589 = vld [vmem:[%s27 + $0x20] sm:$0xff]
    %v1590 = vld [vmem:[%s27 + $0x28] sm:$0xff]
    %v1591 = vld [vmem:[%s27 + $0x30] sm:$0xff]
    %v1592 = vld [vmem:[%s27 + $0x38] sm:$0xff]
    %v1593 = vld [vmem:[%s27 + $0x40] sm:$0xff]
    %v1594 = vld [vmem:[%s27 + $0x48] sm:$0xff]
    %v1595 = vld [vmem:[%s27 + $0x50] sm:$0xff]
    %v1596 = vld [vmem:[%s27 + $0x58] sm:$0xff]
    %v1597 = vld [vmem:[%s27 + $0x60] sm:$0xff]
    %v1598 = vld [vmem:[%s27 + $0x68] sm:$0xff]
    %v1599 = vld [vmem:[%s27 + $0x70] sm:$0xff]
    %v1600 = vld [vmem:[%s27 + $0x78] sm:$0xff]
    %1603 = vrot.lane.b32.xlu0 %v1583, 119
    %v1604 = vpop.permute.xlu0 %1603
    %1605 = vrot.lane.b32.xlu0 %v1584, 119
    %v1606 = vpop.permute.xlu0 %1605
    %v1607 = vsel %vm1418, %v1604, %v1606
    %1609 = vmatprep.subr.mxu0 0.0
    %1610 = vmatpush1.msra.mxu0 %v1585
    %1611 = vmatprep.subr.mxu0 0.0
    %1612 = vmatpush1.msra.mxu0 %v1586
    %1613 = vmatprep.subr.mxu0 0.0
    %1614 = vmatpush1.msra.mxu0 %v1587
    %1615 = vmatprep.subr.mxu0 0.0
    %1616 = vmatpush1.msra.mxu0 %v1588
    %1617 = vmatprep.subr.mxu0 0.0
    %1618 = vmatpush1.msra.mxu0 %v1589
    %1619 = vmatprep.subr.mxu0 0.0
    %1620 = vmatpush1.msra.mxu0 %v1590
    %1621 = vmatprep.subr.mxu0 0.0
    %1622 = vmatpush1.msra.mxu0 %v1591
    %1623 = vmatprep.subr.mxu0 0.0
    %1624 = vmatpush1.msra.mxu0 %v1592
    %1625 = vmatprep.subr.mxu0 0.0
    %1626 = vmatpush1.msra.mxu0 %v1593
    %1627 = vmatprep.subr.mxu0 0.0
    %1628 = vmatpush1.msra.mxu0 %v1594
    %1629 = vmatprep.subr.mxu0 0.0
    %1630 = vmatpush1.msra.mxu0 %v1595
    %1631 = vmatprep.subr.mxu0 0.0
    %1632 = vmatpush1.msra.mxu0 %v1596
    %1633 = vmatprep.subr.mxu0 0.0
    %1634 = vmatpush1.msra.mxu0 %v1597
    %1635 = vmatprep.subr.mxu0 0.0
    %1636 = vmatpush1.msra.mxu0 %v1598
    %1637 = vmatprep.subr.mxu0 0.0
    %1638 = vmatpush1.msra.mxu0 %v1599
    %1639 = vmatprep.subr.mxu0 0.0
    %1640 = vmatpush1.msra.mxu0 %v1600
    %1641 = vmatprep.subr.mxu0 0.0
    %1642 = vmatpush1.msra.mxu0 0.0
    %1643 = vmatprep.subr.mxu0 0.0
    %1644 = vmatpush1.msra.mxu0 0.0
    %1645 = vmatprep.subr.mxu0 0.0
    %1646 = vmatpush1.msra.mxu0 0.0
    %1647 = vmatprep.subr.mxu0 0.0
    %1648 = vmatpush1.msra.mxu0 0.0
    %1649 = vmatprep.subr.mxu0 0.0
    %1650 = vmatpush1.msra.mxu0 0.0
    %1651 = vmatprep.subr.mxu0 0.0
    %1652 = vmatpush1.msra.mxu0 0.0
    %1653 = vmatprep.subr.mxu0 0.0
    %1654 = vmatpush1.msra.mxu0 0.0
    %1655 = vmatprep.subr.mxu0 0.0
    %1656 = vmatpush1.msra.mxu0 0.0
    %1657 = vmatprep.subr.mxu0 0.0
    %1658 = vmatpush1.msra.mxu0 0.0
    %1659 = vmatprep.subr.mxu0 0.0
    %1660 = vmatpush1.msra.mxu0 0.0
    %1661 = vmatprep.subr.mxu0 0.0
    %1662 = vmatpush1.msra.mxu0 0.0
    %1663 = vmatprep.subr.mxu0 0.0
    %1664 = vmatpush1.msra.mxu0 0.0
    %1665 = vmatprep.subr.mxu0 0.0
    %1666 = vmatpush1.msra.mxu0 0.0
    %1667 = vmatprep.subr.mxu0 0.0
    %1668 = vmatpush1.msra.mxu0 0.0
    %1669 = vmatprep.subr.mxu0 0.0
    %1670 = vmatpush1.msra.mxu0 0.0
    %1671 = vmatprep.subr.mxu0 0.0
    %1672 = vmatpush1.msra.mxu0 0.0
    %1673 = vmatprep.mubr.f32.mxu0 0.0
    %1674 = vmatmul.mubr.f32.gmra.mrb[0].mxu0 %v1607
    %v1675 = vpop.f32.mrb[0].mxu0
    %v1676 = vadd.f32 0.0, %v1675
    %v1677 = vpop.f32.mrb[0].mxu0
    %1678 = vdwg.mxu0
    %1680 = vrot.lane.b32.xlu0 %v1676, 5
    %v1681 = vpop.permute.xlu0 %1680
    %vm1683 = vcmask 39936
    %v1684 = vsel %vm1683, 0.0, %v1681
    %vm1685 = vcmask 302080
    %v1686 = vsel %vm1685, %v1684, 0.0
    %v1687 = vld [vmem:[%s7] sm:$0x1]
    %v1688 = vld [vmem:[%s7 + $0x1] sm:$0x1]
    %v1689 = vld [vmem:[%s7 + $0x2] sm:$0x1]
    %v1690 = vld [vmem:[%s7 + $0x3] sm:$0x1]
    %v1691 = vld [vmem:[%s7 + $0x4] sm:$0x1]
    %v1692 = vld [vmem:[%s7 + $0x5] sm:$0x1]
    %v1693 = vld [vmem:[%s7 + $0x6] sm:$0x1]
    %v1694 = vld [vmem:[%s7 + $0x7] sm:$0x1]
    %v1695 = vld [vmem:[%s7 + $0x8] sm:$0x1]
    %v1697 = vlaneseq
    %v1698 = vshrl.u32 %v1697, 7
    %v1699 = vsub.s32 0, %v1698
    %v1700 = vrot.slane %v1687, %v1699
    %v1702 = vmul.f32 %v1686, %v1700
    %v1704 = vlaneseq
    %v1705 = vshrl.u32 %v1704, 7
    %v1706 = vsub.s32 0, %v1705
    %v1707 = vrot.slane %v1688, %v1706
    %1708 = vrot.lane.b32.xlu0 %v1707, 1
    %v1709 = vpop.permute.xlu0 %1708
    %v1711 = vmul.f32 %v1686, %v1709
    %v1713 = vlaneseq
    %v1714 = vshrl.u32 %v1713, 7
    %v1715 = vsub.s32 0, %v1714
    %v1716 = vrot.slane %v1689, %v1715
    %1717 = vrot.lane.b32.xlu0 %v1716, 2
    %v1718 = vpop.permute.xlu0 %1717
    %v1720 = vmul.f32 %v1686, %v1718
    %v1722 = vlaneseq
    %v1723 = vshrl.u32 %v1722, 7
    %v1724 = vsub.s32 0, %v1723
    %v1725 = vrot.slane %v1690, %v1724
    %1726 = vrot.lane.b32.xlu0 %v1725, 4
    %v1727 = vpop.permute.xlu0 %1726
    %v1729 = vmul.f32 %v1686, %v1727
    %v1731 = vlaneseq
    %v1732 = vshrl.u32 %v1731, 7
    %v1733 = vsub.s32 0, %v1732
    %v1734 = vrot.slane %v1691, %v1733
    %1735 = vrot.lane.b32.xlu0 %v1734, 5
    %v1736 = vpop.permute.xlu0 %1735
    %v1738 = vmul.f32 %v1686, %v1736
    %v1740 = vlaneseq
    %v1741 = vshrl.u32 %v1740, 7
    %v1742 = vsub.s32 0, %v1741
    %v1743 = vrot.slane %v1692, %v1742
    %1744 = vrot.lane.b32.xlu0 %v1743, 6
    %v1745 = vpop.permute.xlu0 %1744
    %v1747 = vmul.f32 %v1686, %v1745
    %v1749 = vlaneseq
    %v1750 = vshrl.u32 %v1749, 7
    %v1751 = vsub.s32 0, %v1750
    %v1752 = vrot.slane %v1693, %v1751
    %1753 = vrot.lane.b32.xlu0 %v1752, 8
    %v1754 = vpop.permute.xlu0 %1753
    %v1756 = vmul.f32 %v1686, %v1754
    %v1758 = vlaneseq
    %v1759 = vshrl.u32 %v1758, 7
    %v1760 = vsub.s32 0, %v1759
    %v1761 = vrot.slane %v1694, %v1760
    %1762 = vrot.lane.b32.xlu0 %v1761, 9
    %v1763 = vpop.permute.xlu0 %1762
    %v1765 = vmul.f32 %v1686, %v1763
    %v1767 = vlaneseq
    %v1768 = vshrl.u32 %v1767, 7
    %v1769 = vsub.s32 0, %v1768
    %v1770 = vrot.slane %v1695, %v1769
    %1771 = vrot.lane.b32.xlu0 %v1770, 10
    %v1772 = vpop.permute.xlu0 %1771
    %v1774 = vmul.f32 %v1686, %v1772
    %v1776 = vrot.slane %v1711, 4
    %1777 = vrot.lane.b32.xlu0 %v1776, 127
    %v1778 = vpop.permute.xlu0 %1777
    %1781 = vrot.lane.b32.xlu0 %v1720, 126
    %v1782 = vpop.permute.xlu0 %1781
    %v1785 = vrot.slane %v1729, 4
    %1786 = vrot.lane.b32.xlu0 %v1785, 124
    %v1787 = vpop.permute.xlu0 %1786
    %1790 = vrot.lane.b32.xlu0 %v1738, 123
    %v1791 = vpop.permute.xlu0 %1790
    %v1794 = vrot.slane %v1747, 4
    %1795 = vrot.lane.b32.xlu0 %v1794, 122
    %v1796 = vpop.permute.xlu0 %1795
    %1799 = vrot.lane.b32.xlu0 %v1756, 120
    %v1800 = vpop.permute.xlu0 %1799
    %v1803 = vrot.slane %v1765, 4
    %1804 = vrot.lane.b32.xlu0 %v1803, 119
    %v1805 = vpop.permute.xlu0 %1804
    %1808 = vrot.lane.b32.xlu0 %v1774, 118
    %v1809 = vpop.permute.xlu0 %1808
    %v1810 = vsel %vm762, %v1702, %v1778
    %v1811 = vsel %vm762, %v1782, %v1787
    %v1812 = vsel %vm762, %v1791, %v1796
    %v1813 = vsel %vm762, %v1800, %v1805
    %v1814 = vld [vmem:[%s21] sm:$0xff]
    %v1816 = vsel %vm780, %v1814, 0
    %v1818 = vsel %vm762, %v1809, 0
    %1820 = vmatprep.subr.mxu0 0.0
    %1821 = vmatpush1.msra.mxu0 %v1810
    %1822 = vmatprep.subr.mxu0 0.0
    %1823 = vmatpush1.msra.mxu0 %v1811
    %1824 = vmatprep.subr.mxu0 0.0
    %1825 = vmatpush1.msra.mxu0 %v1812
    %1826 = vmatprep.subr.mxu0 0.0
    %1827 = vmatpush1.msra.mxu0 %v1813
    %1828 = vmatprep.subr.mxu0 0.0
    %1829 = vmatpush1.msra.mxu0 %v1818
    %1830 = vmatprep.subr.mxu0 0.0
    %1831 = vmatpush1.msra.mxu0 0.0
    %1832 = vmatprep.subr.mxu0 0.0
    %1833 = vmatpush1.msra.mxu0 0.0
    %1834 = vmatprep.subr.mxu0 0.0
    %1835 = vmatpush1.msra.mxu0 0.0
    %1836 = vmatprep.subr.mxu0 0.0
    %1837 = vmatpush1.msra.mxu0 0.0
    %1838 = vmatprep.subr.mxu0 0.0
    %1839 = vmatpush1.msra.mxu0 0.0
    %1840 = vmatprep.subr.mxu0 0.0
    %1841 = vmatpush1.msra.mxu0 0.0
    %1842 = vmatprep.subr.mxu0 0.0
    %1843 = vmatpush1.msra.mxu0 0.0
    %1844 = vmatprep.subr.mxu0 0.0
    %1845 = vmatpush1.msra.mxu0 0.0
    %1846 = vmatprep.subr.mxu0 0.0
    %1847 = vmatpush1.msra.mxu0 0.0
    %1848 = vmatprep.subr.mxu0 0.0
    %1849 = vmatpush1.msra.mxu0 0.0
    %1850 = vmatprep.subr.mxu0 0.0
    %1851 = vmatpush1.msra.mxu0 0.0
    %1852 = vmatprep.subr.mxu0 0.0
    %1853 = vmatpush1.msra.mxu0 0.0
    %1854 = vmatprep.subr.mxu0 0.0
    %1855 = vmatpush1.msra.mxu0 0.0
    %1856 = vmatprep.subr.mxu0 0.0
    %1857 = vmatpush1.msra.mxu0 0.0
    %1858 = vmatprep.subr.mxu0 0.0
    %1859 = vmatpush1.msra.mxu0 0.0
    %1860 = vmatprep.subr.mxu0 0.0
    %1861 = vmatpush1.msra.mxu0 0.0
    %1862 = vmatprep.subr.mxu0 0.0
    %1863 = vmatpush1.msra.mxu0 0.0
    %1864 = vmatprep.subr.mxu0 0.0
    %1865 = vmatpush1.msra.mxu0 0.0
    %1866 = vmatprep.subr.mxu0 0.0
    %1867 = vmatpush1.msra.mxu0 0.0
    %1868 = vmatprep.subr.mxu0 0.0
    %1869 = vmatpush1.msra.mxu0 0.0
    %1870 = vmatprep.subr.mxu0 0.0
    %1871 = vmatpush1.msra.mxu0 0.0
    %1872 = vmatprep.subr.mxu0 0.0
    %1873 = vmatpush1.msra.mxu0 0.0
    %1874 = vmatprep.subr.mxu0 0.0
    %1875 = vmatpush1.msra.mxu0 0.0
    %1876 = vmatprep.subr.mxu0 0.0
    %1877 = vmatpush1.msra.mxu0 0.0
    %1878 = vmatprep.subr.mxu0 0.0
    %1879 = vmatpush1.msra.mxu0 0.0
    %1880 = vmatprep.subr.mxu0 0.0
    %1881 = vmatpush1.msra.mxu0 0.0
    %1882 = vmatprep.subr.mxu0 0.0
    %1883 = vmatpush1.msra.mxu0 0.0
    %1884 = vmatprep.mubr.f32.mxu0 0.0
    %1885 = vmatmul.mubr.f32.gmra.mrb[0].mxu0 %v1816
    %v1886 = vpop.f32.mrb[0].mxu0
    %v1887 = vadd.f32 0.0, %v1886
    %v1888 = vpop.f32.mrb[0].mxu0
    %1889 = vdwg.mxu0
    %v1890 = vsel %vm462, %v1887, 0.0
    %1891 = vadd.xlane.f32.xlu0 %v1890
    %v1892 = vpop.xlane.xlu0 %1891
    %v1893 = vrcp.pop 32.0
    %v1894 = vmul.f32 %v1892, %v1893
    %v1895 = vsub.f32 %v1887, %v1894
    %v1896 = vmul.f32 %v1895, %v1895
    %v1897 = vsel %vm462, %v1896, 0.0
    %1898 = vadd.xlane.f32.xlu0 %v1897
    %v1899 = vpop.xlane.xlu0 %1898
    %v1900 = vmul.f32 %v1899, %v1893
    %v1901 = vadd.f32 %v1900, 1e-05
    %v1902 = vrsqrt.pop %v1901
    %v1903 = vmul.f32 %v1895, %v1902
    %v1904 = vmax.f32 %v1903, 0.0
    %1906 = vrot.lane.b32.xlu0 %v1904, 5
    %v1907 = vpop.permute.xlu0 %1906
    %v1909 = vsel %vm1683, 0.0, %v1907
    %v1910 = vsel %vm1685, %v1909, 0.0
    %1912 = vrot.lane.b32.xlu0 %v1910, 127
    %v1913 = vpop.permute.xlu0 %1912
    %v1915 = vmax.f32 %v1910, %v1913
    %1917 = vrot.lane.b32.xlu0 %v1915, 124
    %v1918 = vpop.permute.xlu0 %1917
    %v1920 = vmax.f32 %v1915, %v1918
    %v1921 = vld [vmem:[%s29] sm:$0xff]
    %v1922 = vld [vmem:[%s29 + $0x8] sm:$0xff]
    %v1923 = vld [vmem:[%s29 + $0x10] sm:$0xff]
    %v1924 = vld [vmem:[%s29 + $0x18] sm:$0xff]
    %1926 = vrot.lane.b32.xlu0 %v1920, 123
    %v1927 = vpop.permute.xlu0 %1926
    %v1928 = vsel %vm462, %v1927, 0
    %1930 = vmatprep.subr.mxu0 0.0
    %1931 = vmatpush1.msra.mxu0 %v1921
    %1932 = vmatprep.subr.mxu0 0.0
    %1933 = vmatpush1.msra.mxu0 %v1922
    %1934 = vmatprep.subr.mxu0 0.0
    %1935 = vmatpush1.msra.mxu0 %v1923
    %1936 = vmatprep.subr.mxu0 0.0
    %1937 = vmatpush1.msra.mxu0 %v1924
    %1938 = vmatprep.subr.mxu0 0.0
    %1939 = vmatpush1.msra.mxu0 0.0
    %1940 = vmatprep.subr.mxu0 0.0
    %1941 = vmatpush1.msra.mxu0 0.0
    %1942 = vmatprep.subr.mxu0 0.0
    %1943 = vmatpush1.msra.mxu0 0.0
    %1944 = vmatprep.subr.mxu0 0.0
    %1945 = vmatpush1.msra.mxu0 0.0
    %1946 = vmatprep.subr.mxu0 0.0
    %1947 = vmatpush1.msra.mxu0 0.0
    %1948 = vmatprep.subr.mxu0 0.0
    %1949 = vmatpush1.msra.mxu0 0.0
    %1950 = vmatprep.subr.mxu0 0.0
    %1951 = vmatpush1.msra.mxu0 0.0
    %1952 = vmatprep.subr.mxu0 0.0
    %1953 = vmatpush1.msra.mxu0 0.0
    %1954 = vmatprep.subr.mxu0 0.0
    %1955 = vmatpush1.msra.mxu0 0.0
    %1956 = vmatprep.subr.mxu0 0.0
    %1957 = vmatpush1.msra.mxu0 0.0
    %1958 = vmatprep.subr.mxu0 0.0
    %1959 = vmatpush1.msra.mxu0 0.0
    %1960 = vmatprep.subr.mxu0 0.0
    %1961 = vmatpush1.msra.mxu0 0.0
    %1962 = vmatprep.subr.mxu0 0.0
    %1963 = vmatpush1.msra.mxu0 0.0
    %1964 = vmatprep.subr.mxu0 0.0
    %1965 = vmatpush1.msra.mxu0 0.0
    %1966 = vmatprep.subr.mxu0 0.0
    %1967 = vmatpush1.msra.mxu0 0.0
    %1968 = vmatprep.subr.mxu0 0.0
    %1969 = vmatpush1.msra.mxu0 0.0
    %1970 = vmatprep.subr.mxu0 0.0
    %1971 = vmatpush1.msra.mxu0 0.0
    %1972 = vmatprep.subr.mxu0 0.0
    %1973 = vmatpush1.msra.mxu0 0.0
    %1974 = vmatprep.subr.mxu0 0.0
    %1975 = vmatpush1.msra.mxu0 0.0
    %1976 = vmatprep.subr.mxu0 0.0
    %1977 = vmatpush1.msra.mxu0 0.0
    %1978 = vmatprep.subr.mxu0 0.0
    %1979 = vmatpush1.msra.mxu0 0.0
    %1980 = vmatprep.subr.mxu0 0.0
    %1981 = vmatpush1.msra.mxu0 0.0
    %1982 = vmatprep.subr.mxu0 0.0
    %1983 = vmatpush1.msra.mxu0 0.0
    %1984 = vmatprep.subr.mxu0 0.0
    %1985 = vmatpush1.msra.mxu0 0.0
    %1986 = vmatprep.subr.mxu0 0.0
    %1987 = vmatpush1.msra.mxu0 0.0
    %1988 = vmatprep.subr.mxu0 0.0
    %1989 = vmatpush1.msra.mxu0 0.0
    %1990 = vmatprep.subr.mxu0 0.0
    %1991 = vmatpush1.msra.mxu0 0.0
    %1992 = vmatprep.subr.mxu0 0.0
    %1993 = vmatpush1.msra.mxu0 0.0
    %1994 = vmatprep.mubr.f32.mxu0 0.0
    %1995 = vmatmul.mubr.f32.gmra.mrb[0].mxu0 %v1928
    %v1996 = vpop.f32.mrb[0].mxu0
    %v1997 = vadd.f32 0.0, %v1996
    %v1998 = vpop.f32.mrb[0].mxu0
    %1999 = vdwg.mxu0
    %2001 = vrot.lane.b32.xlu0 %v1997, 3
    %v2002 = vpop.permute.xlu0 %2001
    %vm2004 = vcmask 23552
    %v2005 = vsel %vm2004, 0.0, %v2002
    %vm2006 = vcmask 89088
    %v2007 = vsel %vm2006, %v2005, 0.0
    %v2008 = vld [vmem:[%s9] sm:$0x1]
    %v2009 = vld [vmem:[%s9 + $0x1] sm:$0x1]
    %v2010 = vld [vmem:[%s9 + $0x2] sm:$0x1]
    %v2011 = vld [vmem:[%s9 + $0x3] sm:$0x1]
    %v2012 = vld [vmem:[%s9 + $0x4] sm:$0x1]
    %v2013 = vld [vmem:[%s9 + $0x5] sm:$0x1]
    %v2014 = vld [vmem:[%s9 + $0x6] sm:$0x1]
    %v2015 = vld [vmem:[%s9 + $0x7] sm:$0x1]
    %v2016 = vld [vmem:[%s9 + $0x8] sm:$0x1]
    %v2018 = vlaneseq
    %v2019 = vshrl.u32 %v2018, 7
    %v2020 = vsub.s32 0, %v2019
    %v2021 = vrot.slane %v2008, %v2020
    %v2023 = vmul.f32 %v2007, %v2021
    %v2025 = vlaneseq
    %v2026 = vshrl.u32 %v2025, 7
    %v2027 = vsub.s32 0, %v2026
    %v2028 = vrot.slane %v2009, %v2027
    %2029 = vrot.lane.b32.xlu0 %v2028, 1
    %v2030 = vpop.permute.xlu0 %2029
    %v2032 = vmul.f32 %v2007, %v2030
    %v2034 = vlaneseq
    %v2035 = vshrl.u32 %v2034, 7
    %v2036 = vsub.s32 0, %v2035
    %v2037 = vrot.slane %v2010, %v2036
    %2038 = vrot.lane.b32.xlu0 %v2037, 2
    %v2039 = vpop.permute.xlu0 %2038
    %v2041 = vmul.f32 %v2007, %v2039
    %v2043 = vlaneseq
    %v2044 = vshrl.u32 %v2043, 7
    %v2045 = vsub.s32 0, %v2044
    %v2046 = vrot.slane %v2011, %v2045
    %2047 = vrot.lane.b32.xlu0 %v2046, 2
    %v2048 = vpop.permute.xlu0 %2047
    %v2050 = vmul.f32 %v2007, %v2048
    %v2052 = vlaneseq
    %v2053 = vshrl.u32 %v2052, 7
    %v2054 = vsub.s32 0, %v2053
    %v2055 = vrot.slane %v2012, %v2054
    %2056 = vrot.lane.b32.xlu0 %v2055, 3
    %v2057 = vpop.permute.xlu0 %2056
    %v2059 = vmul.f32 %v2007, %v2057
    %v2061 = vlaneseq
    %v2062 = vshrl.u32 %v2061, 7
    %v2063 = vsub.s32 0, %v2062
    %v2064 = vrot.slane %v2013, %v2063
    %2065 = vrot.lane.b32.xlu0 %v2064, 4
    %v2066 = vpop.permute.xlu0 %2065
    %v2068 = vmul.f32 %v2007, %v2066
    %v2070 = vlaneseq
    %v2071 = vshrl.u32 %v2070, 7
    %v2072 = vsub.s32 0, %v2071
    %v2073 = vrot.slane %v2014, %v2072
    %2074 = vrot.lane.b32.xlu0 %v2073, 4
    %v2075 = vpop.permute.xlu0 %2074
    %v2077 = vmul.f32 %v2007, %v2075
    %v2079 = vlaneseq
    %v2080 = vshrl.u32 %v2079, 7
    %v2081 = vsub.s32 0, %v2080
    %v2082 = vrot.slane %v2015, %v2081
    %2083 = vrot.lane.b32.xlu0 %v2082, 5
    %v2084 = vpop.permute.xlu0 %2083
    %v2086 = vmul.f32 %v2007, %v2084
    %v2088 = vlaneseq
    %v2089 = vshrl.u32 %v2088, 7
    %v2090 = vsub.s32 0, %v2089
    %v2091 = vrot.slane %v2016, %v2090
    %2092 = vrot.lane.b32.xlu0 %v2091, 6
    %v2093 = vpop.permute.xlu0 %2092
    %v2095 = vmul.f32 %v2007, %v2093
    %2097 = vrot.lane.b32.xlu0 %v2032, 127
    %v2098 = vpop.permute.xlu0 %2097
    %2101 = vrot.lane.b32.xlu0 %v2041, 126
    %v2102 = vpop.permute.xlu0 %2101
    %2105 = vrot.lane.b32.xlu0 %v2050, 126
    %v2106 = vpop.permute.xlu0 %2105
    %2109 = vrot.lane.b32.xlu0 %v2059, 125
    %v2110 = vpop.permute.xlu0 %2109
    %2113 = vrot.lane.b32.xlu0 %v2068, 124
    %v2114 = vpop.permute.xlu0 %2113
    %2117 = vrot.lane.b32.xlu0 %v2077, 124
    %v2118 = vpop.permute.xlu0 %2117
    %2121 = vrot.lane.b32.xlu0 %v2086, 123
    %v2122 = vpop.permute.xlu0 %2121
    %2125 = vrot.lane.b32.xlu0 %v2095, 122
    %v2126 = vpop.permute.xlu0 %2125
    %v2128 = vld [vmem:[%s23] sm:$0xff]
    %v2129 = vld [vmem:[%s23 + $0x8] sm:$0xff]
    %vm2130 = vcmask 588800
    %v2132 = vsel %vm2130, %v2128, 0
    %v2135 = vsel %vm2130, %v2129, 0
    %2137 = vmatprep.subr.mxu0 0.0
    %2138 = vmatpush1.msra.mxu0 %v2023
    %2139 = vmatprep.subr.mxu0 0.0
    %2140 = vmatpush1.msra.mxu0 %v2098
    %2141 = vmatprep.subr.mxu0 0.0
    %2142 = vmatpush1.msra.mxu0 %v2102
    %2143 = vmatprep.subr.mxu0 0.0
    %2144 = vmatpush1.msra.mxu0 %v2106
    %2145 = vmatprep.subr.mxu0 0.0
    %2146 = vmatpush1.msra.mxu0 %v2110
    %2147 = vmatprep.subr.mxu0 0.0
    %2148 = vmatpush1.msra.mxu0 %v2114
    %2149 = vmatprep.subr.mxu0 0.0
    %2150 = vmatpush1.msra.mxu0 %v2118
    %2151 = vmatprep.subr.mxu0 0.0
    %2152 = vmatpush1.msra.mxu0 %v2122
    %2153 = vmatprep.subr.mxu0 0.0
    %2154 = vmatpush1.msra.mxu0 %v2126
    %2155 = vmatprep.subr.mxu0 0.0
    %2156 = vmatpush1.msra.mxu0 0.0
    %2157 = vmatprep.subr.mxu0 0.0
    %2158 = vmatpush1.msra.mxu0 0.0
    %2159 = vmatprep.subr.mxu0 0.0
    %2160 = vmatpush1.msra.mxu0 0.0
    %2161 = vmatprep.subr.mxu0 0.0
    %2162 = vmatpush1.msra.mxu0 0.0
    %2163 = vmatprep.subr.mxu0 0.0
    %2164 = vmatpush1.msra.mxu0 0.0
    %2165 = vmatprep.subr.mxu0 0.0
    %2166 = vmatpush1.msra.mxu0 0.0
    %2167 = vmatprep.subr.mxu0 0.0
    %2168 = vmatpush1.msra.mxu0 0.0
    %2169 = vmatprep.subr.mxu0 0.0
    %2170 = vmatpush1.msra.mxu0 0.0
    %2171 = vmatprep.subr.mxu0 0.0
    %2172 = vmatpush1.msra.mxu0 0.0
    %2173 = vmatprep.subr.mxu0 0.0
    %2174 = vmatpush1.msra.mxu0 0.0
    %2175 = vmatprep.subr.mxu0 0.0
    %2176 = vmatpush1.msra.mxu0 0.0
    %2177 = vmatprep.subr.mxu0 0.0
    %2178 = vmatpush1.msra.mxu0 0.0
    %2179 = vmatprep.subr.mxu0 0.0
    %2180 = vmatpush1.msra.mxu0 0.0
    %2181 = vmatprep.subr.mxu0 0.0
    %2182 = vmatpush1.msra.mxu0 0.0
    %2183 = vmatprep.subr.mxu0 0.0
    %2184 = vmatpush1.msra.mxu0 0.0
    %2185 = vmatprep.subr.mxu0 0.0
    %2186 = vmatpush1.msra.mxu0 0.0
    %2187 = vmatprep.subr.mxu0 0.0
    %2188 = vmatpush1.msra.mxu0 0.0
    %2189 = vmatprep.subr.mxu0 0.0
    %2190 = vmatpush1.msra.mxu0 0.0
    %2191 = vmatprep.subr.mxu0 0.0
    %2192 = vmatpush1.msra.mxu0 0.0
    %2193 = vmatprep.subr.mxu0 0.0
    %2194 = vmatpush1.msra.mxu0 0.0
    %2195 = vmatprep.subr.mxu0 0.0
    %2196 = vmatpush1.msra.mxu0 0.0
    %2197 = vmatprep.subr.mxu0 0.0
    %2198 = vmatpush1.msra.mxu0 0.0
    %2199 = vmatprep.subr.mxu0 0.0
    %2200 = vmatpush1.msra.mxu0 0.0
    %2201 = vmatprep.mubr.f32.mxu0 0.0
    %2202 = vmatmul.mubr.f32.gmra.mrb[0].mxu0 %v2132
    %v2203 = vpop.f32.mrb[0].mxu0
    %v2204 = vadd.f32 0.0, %v2203
    %v2205 = vpop.f32.mrb[0].mxu0
    %2206 = vmatprep.mubr.f32.mxu0 0.0
    %2207 = vmatmul.mubr.f32.gmra.mrb[0].mxu0 %v2135
    %v2208 = vpop.f32.mrb[0].mxu0
    %v2209 = vadd.f32 0.0, %v2208
    %v2210 = vpop.f32.mrb[0].mxu0
    %2211 = vdwg.mxu0
    %vm2212 = vcmask 64512
    %v2213 = vsel %vm2212, %v2204, 0.0
    %2214 = vadd.xlane.f32.xlu0 %v2213
    %v2215 = vpop.xlane.xlu0 %2214
    %v2216 = vsel %vm2212, %v2209, 0.0
    %2217 = vadd.xlane.f32.xlu0 %v2216
    %v2218 = vpop.xlane.xlu0 %2217
    %v2219 = vrcp.pop 8.0
    %v2220 = vmul.f32 %v2215, %v2219
    %v2221 = vmul.f32 %v2218, %v2219
    %v2222 = vsub.f32 %v2204, %v2220
    %v2223 = vsub.f32 %v2209, %v2221
    %v2224 = vmul.f32 %v2222, %v2222
    %v2225 = vmul.f32 %v2223, %v2223
    %v2226 = vsel %vm2212, %v2224, 0.0
    %2227 = vadd.xlane.f32.xlu0 %v2226
    %v2228 = vpop.xlane.xlu0 %2227
    %v2229 = vsel %vm2212, %v2225, 0.0
    %2230 = vadd.xlane.f32.xlu0 %v2229
    %v2231 = vpop.xlane.xlu0 %2230
    %v2232 = vmul.f32 %v2228, %v2219
    %v2233 = vmul.f32 %v2231, %v2219
    %v2234 = vadd.f32 %v2232, 1e-05
    %v2235 = vadd.f32 %v2233, 1e-05
    %v2236 = vrsqrt.pop %v2234
    %v2237 = vrsqrt.pop %v2235
    %v2238 = vmul.f32 %v2222, %v2236
    %v2239 = vmul.f32 %v2223, %v2237
    %v2240 = vmax.f32 %v2238, 0.0
    %v2241 = vmax.f32 %v2239, 0.0
    %2244 = vrot.lane.b32.xlu0 %v2240, 6
    %v2245 = vpop.permute.xlu0 %2244
    %2246 = vrot.lane.b32.xlu0 %v2241, 6
    %v2247 = vpop.permute.xlu0 %2246
    %vm2250 = vcmask 48128
    %v2251 = vsel %vm2250, 0.0, %v2245
    %v2252 = vsel %vm2250, 0.0, %v2247
    %vm2253 = vcmask 113664
    %v2254 = vsel %vm2253, %v2251, 0.0
    %v2255 = vsel %vm2253, %v2252, 0.0
    %v2256 = vld [vmem:[%s11] sm:$0x1]
    %v2257 = vld [vmem:[%s11 + $0x1] sm:$0x1]
    %v2258 = vld [vmem:[%s11 + $0x2] sm:$0x1]
    %v2259 = vld [vmem:[%s11 + $0x3] sm:$0x1]
    %v2260 = vld [vmem:[%s11 + $0x4] sm:$0x1]
    %v2261 = vld [vmem:[%s11 + $0x5] sm:$0x1]
    %v2262 = vld [vmem:[%s11 + $0x6] sm:$0x1]
    %v2263 = vld [vmem:[%s11 + $0x7] sm:$0x1]
    %v2264 = vld [vmem:[%s11 + $0x8] sm:$0x1]
    %v2265 = vld [vmem:[%s11 + $0x9] sm:$0x1]
    %v2266 = vld [vmem:[%s11 + $0xa] sm:$0x1]
    %v2267 = vld [vmem:[%s11 + $0xb] sm:$0x1]
    %v2268 = vld [vmem:[%s11 + $0xc] sm:$0x1]
    %v2269 = vld [vmem:[%s11 + $0xd] sm:$0x1]
    %v2270 = vld [vmem:[%s11 + $0xe] sm:$0x1]
    %v2271 = vld [vmem:[%s11 + $0xf] sm:$0x1]
    %v2273 = vlaneseq
    %v2274 = vshrl.u32 %v2273, 7
    %v2275 = vsub.s32 0, %v2274
    %v2276 = vrot.slane %v2256, %v2275
    %2277 = vrot.lane.b32.xlu0 %v2276, 3
    %v2278 = vpop.permute.xlu0 %2277
    %v2280 = vmul.f32 %v2254, %v2278
    %v2281 = vmul.f32 %v2255, %v2278
    %v2282 = vmul.f32 %v2280, %v2280
    %v2283 = vmul.f32 %v2281, %v2281
    %v2284 = vadd.f32 %v2282, 0.0
    %v2285 = vadd.f32 %v2283, 0.0
    %v2287 = vlaneseq
    %v2288 = vshrl.u32 %v2287, 7
    %v2289 = vsub.s32 0, %v2288
    %v2290 = vrot.slane %v2257, %v2289
    %2291 = vrot.lane.b32.xlu0 %v2290, 4
    %v2292 = vpop.permute.xlu0 %2291
    %v2294 = vmul.f32 %v2254, %v2292
    %v2295 = vmul.f32 %v2255, %v2292
    %v2296 = vmul.f32 %v2294, %v2294
    %v2297 = vmul.f32 %v2295, %v2295
    %2300 = vrot.lane.b32.xlu0 %v2296, 127
    %v2301 = vpop.permute.xlu0 %2300
    %2302 = vrot.lane.b32.xlu0 %v2297, 127
    %v2303 = vpop.permute.xlu0 %2302
    %v2306 = vadd.f32 %v2284, %v2301
    %v2307 = vadd.f32 %v2285, %v2303
    %v2309 = vlaneseq
    %v2310 = vshrl.u32 %v2309, 7
    %v2311 = vsub.s32 0, %v2310
    %v2312 = vrot.slane %v2258, %v2311
    %2313 = vrot.lane.b32.xlu0 %v2312, 5
    %v2314 = vpop.permute.xlu0 %2313
    %v2316 = vmul.f32 %v2254, %v2314
    %v2317 = vmul.f32 %v2255, %v2314
    %v2318 = vmul.f32 %v2316, %v2316
    %v2319 = vmul.f32 %v2317, %v2317
    %2322 = vrot.lane.b32.xlu0 %v2318, 126
    %v2323 = vpop.permute.xlu0 %2322
    %2324 = vrot.lane.b32.xlu0 %v2319, 126
    %v2325 = vpop.permute.xlu0 %2324
    %v2328 = vadd.f32 %v2306, %v2323
    %v2329 = vadd.f32 %v2307, %v2325
    %v2331 = vlaneseq
    %v2332 = vshrl.u32 %v2331, 7
    %v2333 = vsub.s32 0, %v2332
    %v2334 = vrot.slane %v2259, %v2333
    %2335 = vrot.lane.b32.xlu0 %v2334, 6
    %v2336 = vpop.permute.xlu0 %2335
    %v2338 = vmul.f32 %v2254, %v2336
    %v2339 = vmul.f32 %v2255, %v2336
    %v2340 = vmul.f32 %v2338, %v2338
    %v2341 = vmul.f32 %v2339, %v2339
    %2344 = vrot.lane.b32.xlu0 %v2340, 125
    %v2345 = vpop.permute.xlu0 %2344
    %2346 = vrot.lane.b32.xlu0 %v2341, 125
    %v2347 = vpop.permute.xlu0 %2346
    %v2350 = vadd.f32 %v2328, %v2345
    %v2351 = vadd.f32 %v2329, %v2347
    %v2353 = vlaneseq
    %v2354 = vshrl.u32 %v2353, 7
    %v2355 = vsub.s32 0, %v2354
    %v2356 = vrot.slane %v2260, %v2355
    %2357 = vrot.lane.b32.xlu0 %v2356, 5
    %v2358 = vpop.permute.xlu0 %2357
    %v2360 = vmul.f32 %v2254, %v2358
    %v2361 = vmul.f32 %v2255, %v2358
    %v2362 = vmul.f32 %v2360, %v2360
    %v2363 = vmul.f32 %v2361, %v2361
    %2366 = vrot.lane.b32.xlu0 %v2362, 126
    %v2367 = vpop.permute.xlu0 %2366
    %2368 = vrot.lane.b32.xlu0 %v2363, 126
    %v2369 = vpop.permute.xlu0 %2368
    %v2372 = vadd.f32 %v2350, %v2367
    %v2373 = vadd.f32 %v2351, %v2369
    %v2375 = vlaneseq
    %v2376 = vshrl.u32 %v2375, 7
    %v2377 = vsub.s32 0, %v2376
    %v2378 = vrot.slane %v2261, %v2377
    %2379 = vrot.lane.b32.xlu0 %v2378, 6
    %v2380 = vpop.permute.xlu0 %2379
    %v2382 = vmul.f32 %v2254, %v2380
    %v2383 = vmul.f32 %v2255, %v2380
    %v2384 = vmul.f32 %v2382, %v2382
    %v2385 = vmul.f32 %v2383, %v2383
    %2388 = vrot.lane.b32.xlu0 %v2384, 125
    %v2389 = vpop.permute.xlu0 %2388
    %2390 = vrot.lane.b32.xlu0 %v2385, 125
    %v2391 = vpop.permute.xlu0 %2390
    %v2394 = vadd.f32 %v2372, %v2389
    %v2395 = vadd.f32 %v2373, %v2391
    %v2397 = vlaneseq
    %v2398 = vshrl.u32 %v2397, 7
    %v2399 = vsub.s32 0, %v2398
    %v2400 = vrot.slane %v2262, %v2399
    %2401 = vrot.lane.b32.xlu0 %v2400, 7
    %v2402 = vpop.permute.xlu0 %2401
    %v2404 = vmul.f32 %v2254, %v2402
    %v2405 = vmul.f32 %v2255, %v2402
    %v2406 = vmul.f32 %v2404, %v2404
    %v2407 = vmul.f32 %v2405, %v2405
    %2410 = vrot.lane.b32.xlu0 %v2406, 124
    %v2411 = vpop.permute.xlu0 %2410
    %2412 = vrot.lane.b32.xlu0 %v2407, 124
    %v2413 = vpop.permute.xlu0 %2412
    %v2416 = vadd.f32 %v2394, %v2411
    %v2417 = vadd.f32 %v2395, %v2413
    %v2419 = vlaneseq
    %v2420 = vshrl.u32 %v2419, 7
    %v2421 = vsub.s32 0, %v2420
    %v2422 = vrot.slane %v2263, %v2421
    %2423 = vrot.lane.b32.xlu0 %v2422, 8
    %v2424 = vpop.permute.xlu0 %2423
    %v2426 = vmul.f32 %v2254, %v2424
    %v2427 = vmul.f32 %v2255, %v2424
    %v2428 = vmul.f32 %v2426, %v2426
    %v2429 = vmul.f32 %v2427, %v2427
    %2432 = vrot.lane.b32.xlu0 %v2428, 123
    %v2433 = vpop.permute.xlu0 %2432
    %2434 = vrot.lane.b32.xlu0 %v2429, 123
    %v2435 = vpop.permute.xlu0 %2434
    %v2438 = vadd.f32 %v2416, %v2433
    %v2439 = vadd.f32 %v2417, %v2435
    %v2441 = vlaneseq
    %v2442 = vshrl.u32 %v2441, 7
    %v2443 = vsub.s32 0, %v2442
    %v2444 = vrot.slane %v2264, %v2443
    %2445 = vrot.lane.b32.xlu0 %v2444, 7
    %v2446 = vpop.permute.xlu0 %2445
    %v2448 = vmul.f32 %v2254, %v2446
    %v2449 = vmul.f32 %v2255, %v2446
    %v2450 = vmul.f32 %v2448, %v2448
    %v2451 = vmul.f32 %v2449, %v2449
    %2454 = vrot.lane.b32.xlu0 %v2450, 124
    %v2455 = vpop.permute.xlu0 %2454
    %2456 = vrot.lane.b32.xlu0 %v2451, 124
    %v2457 = vpop.permute.xlu0 %2456
    %v2460 = vadd.f32 %v2438, %v2455
    %v2461 = vadd.f32 %v2439, %v2457
    %v2463 = vlaneseq
    %v2464 = vshrl.u32 %v2463, 7
    %v2465 = vsub.s32 0, %v2464
    %v2466 = vrot.slane %v2265, %v2465
    %2467 = vrot.lane.b32.xlu0 %v2466, 8
    %v2468 = vpop.permute.xlu0 %2467
    %v2470 = vmul.f32 %v2254, %v2468
    %v2471 = vmul.f32 %v2255, %v2468
    %v2472 = vmul.f32 %v2470, %v2470
    %v2473 = vmul.f32 %v2471, %v2471
    %2476 = vrot.lane.b32.xlu0 %v2472, 123
    %v2477 = vpop.permute.xlu0 %2476
    %2478 = vrot.lane.b32.xlu0 %v2473, 123
    %v2479 = vpop.permute.xlu0 %2478
    %v2482 = vadd.f32 %v2460, %v2477
    %v2483 = vadd.f32 %v2461, %v2479
    %v2485 = vlaneseq
    %v2486 = vshrl.u32 %v2485, 7
    %v2487 = vsub.s32 0, %v2486
    %v2488 = vrot.slane %v2266, %v2487
    %2489 = vrot.lane.b32.xlu0 %v2488, 9
    %v2490 = vpop.permute.xlu0 %2489
    %v2492 = vmul.f32 %v2254, %v2490
    %v2493 = vmul.f32 %v2255, %v2490
    %v2494 = vmul.f32 %v2492, %v2492
    %v2495 = vmul.f32 %v2493, %v2493
    %2498 = vrot.lane.b32.xlu0 %v2494, 122
    %v2499 = vpop.permute.xlu0 %2498
    %2500 = vrot.lane.b32.xlu0 %v2495, 122
    %v2501 = vpop.permute.xlu0 %2500
    %v2504 = vadd.f32 %v2482, %v2499
    %v2505 = vadd.f32 %v2483, %v2501
    %v2507 = vlaneseq
    %v2508 = vshrl.u32 %v2507, 7
    %v2509 = vsub.s32 0, %v2508
    %v2510 = vrot.slane %v2267, %v2509
    %2511 = vrot.lane.b32.xlu0 %v2510, 10
    %v2512 = vpop.permute.xlu0 %2511
    %v2514 = vmul.f32 %v2254, %v2512
    %v2515 = vmul.f32 %v2255, %v2512
    %v2516 = vmul.f32 %v2514, %v2514
    %v2517 = vmul.f32 %v2515, %v2515
    %2520 = vrot.lane.b32.xlu0 %v2516, 121
    %v2521 = vpop.permute.xlu0 %2520
    %2522 = vrot.lane.b32.xlu0 %v2517, 121
    %v2523 = vpop.permute.xlu0 %2522
    %v2526 = vadd.f32 %v2504, %v2521
    %v2527 = vadd.f32 %v2505, %v2523
    %v2529 = vlaneseq
    %v2530 = vshrl.u32 %v2529, 7
    %v2531 = vsub.s32 0, %v2530
    %v2532 = vrot.slane %v2268, %v2531
    %2533 = vrot.lane.b32.xlu0 %v2532, 9
    %v2534 = vpop.permute.xlu0 %2533
    %v2536 = vmul.f32 %v2254, %v2534
    %v2537 = vmul.f32 %v2255, %v2534
    %v2538 = vmul.f32 %v2536, %v2536
    %v2539 = vmul.f32 %v2537, %v2537
    %2542 = vrot.lane.b32.xlu0 %v2538, 122
    %v2543 = vpop.permute.xlu0 %2542
    %2544 = vrot.lane.b32.xlu0 %v2539, 122
    %v2545 = vpop.permute.xlu0 %2544
    %v2548 = vadd.f32 %v2526, %v2543
    %v2549 = vadd.f32 %v2527, %v2545
    %v2551 = vlaneseq
    %v2552 = vshrl.u32 %v2551, 7
    %v2553 = vsub.s32 0, %v2552
    %v2554 = vrot.slane %v2269, %v2553
    %2555 = vrot.lane.b32.xlu0 %v2554, 10
    %v2556 = vpop.permute.xlu0 %2555
    %v2558 = vmul.f32 %v2254, %v2556
    %v2559 = vmul.f32 %v2255, %v2556
    %v2560 = vmul.f32 %v2558, %v2558
    %v2561 = vmul.f32 %v2559, %v2559
    %2564 = vrot.lane.b32.xlu0 %v2560, 121
    %v2565 = vpop.permute.xlu0 %2564
    %2566 = vrot.lane.b32.xlu0 %v2561, 121
    %v2567 = vpop.permute.xlu0 %2566
    %v2570 = vadd.f32 %v2548, %v2565
    %v2571 = vadd.f32 %v2549, %v2567
    %v2573 = vlaneseq
    %v2574 = vshrl.u32 %v2573, 7
    %v2575 = vsub.s32 0, %v2574
    %v2576 = vrot.slane %v2270, %v2575
    %2577 = vrot.lane.b32.xlu0 %v2576, 11
    %v2578 = vpop.permute.xlu0 %2577
    %v2580 = vmul.f32 %v2254, %v2578
    %v2581 = vmul.f32 %v2255, %v2578
    %v2582 = vmul.f32 %v2580, %v2580
    %v2583 = vmul.f32 %v2581, %v2581
    %2586 = vrot.lane.b32.xlu0 %v2582, 120
    %v2587 = vpop.permute.xlu0 %2586
    %2588 = vrot.lane.b32.xlu0 %v2583, 120
    %v2589 = vpop.permute.xlu0 %2588
    %v2592 = vadd.f32 %v2570, %v2587
    %v2593 = vadd.f32 %v2571, %v2589
    %v2595 = vlaneseq
    %v2596 = vshrl.u32 %v2595, 7
    %v2597 = vsub.s32 0, %v2596
    %v2598 = vrot.slane %v2271, %v2597
    %2599 = vrot.lane.b32.xlu0 %v2598, 12
    %v2600 = vpop.permute.xlu0 %2599
    %v2602 = vmul.f32 %v2254, %v2600
    %v2603 = vmul.f32 %v2255, %v2600
    %v2604 = vmul.f32 %v2602, %v2602
    %v2605 = vmul.f32 %v2603, %v2603
    %2608 = vrot.lane.b32.xlu0 %v2604, 119
    %v2609 = vpop.permute.xlu0 %2608
    %2610 = vrot.lane.b32.xlu0 %v2605, 119
    %v2611 = vpop.permute.xlu0 %2610
    %v2614 = vadd.f32 %v2592, %v2609
    %v2615 = vadd.f32 %v2593, %v2611
    %2618 = vrot.lane.b32.xlu0 %v2280, 125
    %v2619 = vpop.permute.xlu0 %2618
    %2620 = vrot.lane.b32.xlu0 %v2281, 125
    %v2621 = vpop.permute.xlu0 %2620
    %2626 = vrot.lane.b32.xlu0 %v2294, 4
    %v2627 = vpop.permute.xlu0 %2626
    %2628 = vrot.lane.b32.xlu0 %v2295, 4
    %v2629 = vpop.permute.xlu0 %2628
    %2634 = vrot.lane.b32.xlu0 %v2316, 11
    %v2635 = vpop.permute.xlu0 %2634
    %2636 = vrot.lane.b32.xlu0 %v2317, 11
    %v2637 = vpop.permute.xlu0 %2636
    %2642 = vrot.lane.b32.xlu0 %v2338, 18
    %v2643 = vpop.permute.xlu0 %2642
    %2644 = vrot.lane.b32.xlu0 %v2339, 18
    %v2645 = vpop.permute.xlu0 %2644
    %2650 = vrot.lane.b32.xlu0 %v2360, 27
    %v2651 = vpop.permute.xlu0 %2650
    %2652 = vrot.lane.b32.xlu0 %v2361, 27
    %v2653 = vpop.permute.xlu0 %2652
    %2658 = vrot.lane.b32.xlu0 %v2382, 34
    %v2659 = vpop.permute.xlu0 %2658
    %2660 = vrot.lane.b32.xlu0 %v2383, 34
    %v2661 = vpop.permute.xlu0 %2660
    %2666 = vrot.lane.b32.xlu0 %v2404, 41
    %v2667 = vpop.permute.xlu0 %2666
    %2668 = vrot.lane.b32.xlu0 %v2405, 41
    %v2669 = vpop.permute.xlu0 %2668
    %2674 = vrot.lane.b32.xlu0 %v2426, 48
    %v2675 = vpop.permute.xlu0 %2674
    %2676 = vrot.lane.b32.xlu0 %v2427, 48
    %v2677 = vpop.permute.xlu0 %2676
    %2682 = vrot.lane.b32.xlu0 %v2448, 57
    %v2683 = vpop.permute.xlu0 %2682
    %2684 = vrot.lane.b32.xlu0 %v2449, 57
    %v2685 = vpop.permute.xlu0 %2684
    %2690 = vrot.lane.b32.xlu0 %v2470, 64
    %v2691 = vpop.permute.xlu0 %2690
    %2692 = vrot.lane.b32.xlu0 %v2471, 64
    %v2693 = vpop.permute.xlu0 %2692
    %2698 = vrot.lane.b32.xlu0 %v2492, 71
    %v2699 = vpop.permute.xlu0 %2698
    %2700 = vrot.lane.b32.xlu0 %v2493, 71
    %v2701 = vpop.permute.xlu0 %2700
    %2706 = vrot.lane.b32.xlu0 %v2514, 78
    %v2707 = vpop.permute.xlu0 %2706
    %2708 = vrot.lane.b32.xlu0 %v2515, 78
    %v2709 = vpop.permute.xlu0 %2708
    %2714 = vrot.lane.b32.xlu0 %v2536, 87
    %v2715 = vpop.permute.xlu0 %2714
    %2716 = vrot.lane.b32.xlu0 %v2537, 87
    %v2717 = vpop.permute.xlu0 %2716
    %2722 = vrot.lane.b32.xlu0 %v2558, 94
    %v2723 = vpop.permute.xlu0 %2722
    %2724 = vrot.lane.b32.xlu0 %v2559, 94
    %v2725 = vpop.permute.xlu0 %2724
    %2730 = vrot.lane.b32.xlu0 %v2580, 101
    %v2731 = vpop.permute.xlu0 %2730
    %2732 = vrot.lane.b32.xlu0 %v2581, 101
    %v2733 = vpop.permute.xlu0 %2732
    %2738 = vrot.lane.b32.xlu0 %v2602, 108
    %v2739 = vpop.permute.xlu0 %2738
    %2740 = vrot.lane.b32.xlu0 %v2603, 108
    %v2741 = vpop.permute.xlu0 %2740
    %v2744 = vsel %vm2212, %v2619, %v2627
    %v2745 = vsel %vm2212, %v2621, %v2629
    %v2746 = vsel %vm346, %v2744, %v2635
    %v2747 = vsel %vm346, %v2745, %v2637
    %vm2748 = vcmask 195584
    %v2749 = vsel %vm2748, %v2746, %v2643
    %v2750 = vsel %vm2748, %v2747, %v2645
    %v2751 = vsel %vm462, %v2749, %v2651
    %v2752 = vsel %vm462, %v2750, %v2653
    %vm2753 = vcmask 326656
    %v2754 = vsel %vm2753, %v2751, %v2659
    %v2755 = vsel %vm2753, %v2752, %v2661
    %vm2756 = vcmask 392192
    %v2757 = vsel %vm2756, %v2754, %v2667
    %v2758 = vsel %vm2756, %v2755, %v2669
    %vm2759 = vcmask 457728
    %v2760 = vsel %vm2759, %v2757, %v2675
    %v2761 = vsel %vm2759, %v2758, %v2677
    %vm2762 = vcmask 523264
    %v2763 = vsel %vm2762, %v2760, %v2683
    %v2764 = vsel %vm2762, %v2761, %v2685
    %v2765 = vsel %vm2130, %v2763, %v2691
    %v2766 = vsel %vm2130, %v2764, %v2693
    %vm2767 = vcmask 654336
    %v2768 = vsel %vm2767, %v2765, %v2699
    %v2769 = vsel %vm2767, %v2766, %v2701
    %vm2770 = vcmask 719872
    %v2771 = vsel %vm2770, %v2768, %v2707
    %v2772 = vsel %vm2770, %v2769, %v2709
    %v2773 = vsel %vm704, %v2771, %v2715
    %v2774 = vsel %vm704, %v2772, %v2717
    %vm2775 = vcmask 850944
    %v2776 = vsel %vm2775, %v2773, %v2723
    %v2777 = vsel %vm2775, %v2774, %v2725
    %v2778 = vsel %vm627, %v2776, %v2731
    %v2779 = vsel %vm627, %v2777, %v2733
    %v2780 = vsel %vm1409, %v2778, %v2739
    %v2781 = vsel %vm1409, %v2779, %v2741
    %v2782 = vld [vmem:[%s13] sm:$0xff]
    %v2783 = vld [vmem:[%s13 + $0x8] sm:$0xff]
    %v2784 = vld [vmem:[%s13 + $0x10] sm:$0xff]
    %v2785 = vld [vmem:[%s13 + $0x18] sm:$0xff]
    %v2786 = vld [vmem:[%s13 + $0x20] sm:$0xff]
    %v2787 = vld [vmem:[%s13 + $0x28] sm:$0xff]
    %v2788 = vld [vmem:[%s13 + $0x30] sm:$0xff]
    %v2789 = vld [vmem:[%s13 + $0x38] sm:$0xff]
    %v2790 = vld [vmem:[%s13 + $0x40] sm:$0xff]
    %v2791 = vld [vmem:[%s13 + $0x48] sm:$0xff]
    %v2792 = vld [vmem:[%s13 + $0x50] sm:$0xff]
    %v2793 = vld [vmem:[%s13 + $0x58] sm:$0xff]
    %v2794 = vld [vmem:[%s13 + $0x60] sm:$0xff]
    %v2795 = vld [vmem:[%s13 + $0x68] sm:$0xff]
    %v2796 = vld [vmem:[%s13 + $0x70] sm:$0xff]
    %v2797 = vld [vmem:[%s13 + $0x78] sm:$0xff]
    %2798 = vmatprep.subr.mxu0 0.0
    %2799 = vmatpush1.msra.mxu0 %v2782
    %2800 = vmatprep.subr.mxu0 0.0
    %2801 = vmatpush1.msra.mxu0 %v2783
    %2802 = vmatprep.subr.mxu0 0.0
    %2803 = vmatpush1.msra.mxu0 %v2784
    %2804 = vmatprep.subr.mxu0 0.0
    %2805 = vmatpush1.msra.mxu0 %v2785
    %2806 = vmatprep.subr.mxu0 0.0
    %2807 = vmatpush1.msra.mxu0 %v2786
    %2808 = vmatprep.subr.mxu0 0.0
    %2809 = vmatpush1.msra.mxu0 %v2787
    %2810 = vmatprep.subr.mxu0 0.0
    %2811 = vmatpush1.msra.mxu0 %v2788
    %2812 = vmatprep.subr.mxu0 0.0
    %2813 = vmatpush1.msra.mxu0 %v2789
    %2814 = vmatprep.subr.mxu0 0.0
    %2815 = vmatpush1.msra.mxu0 %v2790
    %2816 = vmatprep.subr.mxu0 0.0
    %2817 = vmatpush1.msra.mxu0 %v2791
    %2818 = vmatprep.subr.mxu0 0.0
    %2819 = vmatpush1.msra.mxu0 %v2792
    %2820 = vmatprep.subr.mxu0 0.0
    %2821 = vmatpush1.msra.mxu0 %v2793
    %2822 = vmatprep.subr.mxu0 0.0
    %2823 = vmatpush1.msra.mxu0 %v2794
    %2824 = vmatprep.subr.mxu0 0.0
    %2825 = vmatpush1.msra.mxu0 %v2795
    %2826 = vmatprep.subr.mxu0 0.0
    %2827 = vmatpush1.msra.mxu0 %v2796
    %2828 = vmatprep.subr.mxu0 0.0
    %2829 = vmatpush1.msra.mxu0 %v2797
    %2830 = vmatprep.subr.mxu0 0.0
    %2831 = vmatpush1.msra.mxu0 0.0
    %2832 = vmatprep.subr.mxu0 0.0
    %2833 = vmatpush1.msra.mxu0 0.0
    %2834 = vmatprep.subr.mxu0 0.0
    %2835 = vmatpush1.msra.mxu0 0.0
    %2836 = vmatprep.subr.mxu0 0.0
    %2837 = vmatpush1.msra.mxu0 0.0
    %2838 = vmatprep.subr.mxu0 0.0
    %2839 = vmatpush1.msra.mxu0 0.0
    %2840 = vmatprep.subr.mxu0 0.0
    %2841 = vmatpush1.msra.mxu0 0.0
    %2842 = vmatprep.subr.mxu0 0.0
    %2843 = vmatpush1.msra.mxu0 0.0
    %2844 = vmatprep.subr.mxu0 0.0
    %2845 = vmatpush1.msra.mxu0 0.0
    %2846 = vmatprep.subr.mxu0 0.0
    %2847 = vmatpush1.msra.mxu0 0.0
    %2848 = vmatprep.subr.mxu0 0.0
    %2849 = vmatpush1.msra.mxu0 0.0
    %2850 = vmatprep.subr.mxu0 0.0
    %2851 = vmatpush1.msra.mxu0 0.0
    %2852 = vmatprep.subr.mxu0 0.0
    %2853 = vmatpush1.msra.mxu0 0.0
    %2854 = vmatprep.subr.mxu0 0.0
    %2855 = vmatpush1.msra.mxu0 0.0
    %2856 = vmatprep.subr.mxu0 0.0
    %2857 = vmatpush1.msra.mxu0 0.0
    %2858 = vmatprep.subr.mxu0 0.0
    %2859 = vmatpush1.msra.mxu0 0.0
    %2860 = vmatprep.subr.mxu0 0.0
    %2861 = vmatpush1.msra.mxu0 0.0
    %2862 = vmatprep.mubr.f32.mxu0 0.0
    %2863 = vmatmul.mubr.f32.gmra.mrb[0].mxu0 %v2780
    %v2864 = vpop.f32.mrb[0].mxu0
    %v2865 = vadd.f32 0.0, %v2864
    %v2866 = vpop.f32.mrb[0].mxu0
    %2867 = vmatprep.mubr.f32.mxu0 0.0
    %2868 = vmatmul.mubr.f32.gmra.mrb[0].mxu0 %v2781
    %v2869 = vpop.f32.mrb[0].mxu0
    %v2870 = vadd.f32 0.0, %v2869
    %v2871 = vpop.f32.mrb[0].mxu0
    %2872 = vdwg.mxu0
    %v2873 = vmul.f32 %v2865, %v2865
    %v2874 = vmul.f32 %v2870, %v2870
    %v2875 = vld [vmem:[%s15] sm:$0xff]
    %v2876 = vld [vmem:[%s15 + $0x8] sm:$0xff]
    %v2877 = vld [vmem:[%s15 + $0x10] sm:$0xff]
    %v2878 = vld [vmem:[%s15 + $0x18] sm:$0xff]
    %v2879 = vld [vmem:[%s15 + $0x20] sm:$0xff]
    %v2880 = vld [vmem:[%s15 + $0x28] sm:$0xff]
    %v2881 = vld [vmem:[%s15 + $0x30] sm:$0xff]
    %v2882 = vld [vmem:[%s15 + $0x38] sm:$0xff]
    %v2883 = vld [vmem:[%s15 + $0x40] sm:$0xff]
    %v2884 = vld [vmem:[%s15 + $0x48] sm:$0xff]
    %v2885 = vld [vmem:[%s15 + $0x50] sm:$0xff]
    %v2886 = vld [vmem:[%s15 + $0x58] sm:$0xff]
    %v2887 = vld [vmem:[%s15 + $0x60] sm:$0xff]
    %v2888 = vld [vmem:[%s15 + $0x68] sm:$0xff]
    %v2889 = vld [vmem:[%s15 + $0x70] sm:$0xff]
    %v2890 = vld [vmem:[%s15 + $0x78] sm:$0xff]
    %2891 = vmatprep.subr.mxu0 0.0
    %2892 = vmatpush1.msra.mxu0 %v2875
    %2893 = vmatprep.subr.mxu0 0.0
    %2894 = vmatpush1.msra.mxu0 %v2876
    %2895 = vmatprep.subr.mxu0 0.0
    %2896 = vmatpush1.msra.mxu0 %v2877
    %2897 = vmatprep.subr.mxu0 0.0
    %2898 = vmatpush1.msra.mxu0 %v2878
    %2899 = vmatprep.subr.mxu0 0.0
    %2900 = vmatpush1.msra.mxu0 %v2879
    %2901 = vmatprep.subr.mxu0 0.0
    %2902 = vmatpush1.msra.mxu0 %v2880
    %2903 = vmatprep.subr.mxu0 0.0
    %2904 = vmatpush1.msra.mxu0 %v2881
    %2905 = vmatprep.subr.mxu0 0.0
    %2906 = vmatpush1.msra.mxu0 %v2882
    %2907 = vmatprep.subr.mxu0 0.0
    %2908 = vmatpush1.msra.mxu0 %v2883
    %2909 = vmatprep.subr.mxu0 0.0
    %2910 = vmatpush1.msra.mxu0 %v2884
    %2911 = vmatprep.subr.mxu0 0.0
    %2912 = vmatpush1.msra.mxu0 %v2885
    %2913 = vmatprep.subr.mxu0 0.0
    %2914 = vmatpush1.msra.mxu0 %v2886
    %2915 = vmatprep.subr.mxu0 0.0
    %2916 = vmatpush1.msra.mxu0 %v2887
    %2917 = vmatprep.subr.mxu0 0.0
    %2918 = vmatpush1.msra.mxu0 %v2888
    %2919 = vmatprep.subr.mxu0 0.0
    %2920 = vmatpush1.msra.mxu0 %v2889
    %2921 = vmatprep.subr.mxu0 0.0
    %2922 = vmatpush1.msra.mxu0 %v2890
    %2923 = vmatprep.subr.mxu0 0.0
    %2924 = vmatpush1.msra.mxu0 0.0
    %2925 = vmatprep.subr.mxu0 0.0
    %2926 = vmatpush1.msra.mxu0 0.0
    %2927 = vmatprep.subr.mxu0 0.0
    %2928 = vmatpush1.msra.mxu0 0.0
    %2929 = vmatprep.subr.mxu0 0.0
    %2930 = vmatpush1.msra.mxu0 0.0
    %2931 = vmatprep.subr.mxu0 0.0
    %2932 = vmatpush1.msra.mxu0 0.0
    %2933 = vmatprep.subr.mxu0 0.0
    %2934 = vmatpush1.msra.mxu0 0.0
    %2935 = vmatprep.subr.mxu0 0.0
    %2936 = vmatpush1.msra.mxu0 0.0
    %2937 = vmatprep.subr.mxu0 0.0
    %2938 = vmatpush1.msra.mxu0 0.0
    %2939 = vmatprep.subr.mxu0 0.0
    %2940 = vmatpush1.msra.mxu0 0.0
    %2941 = vmatprep.subr.mxu0 0.0
    %2942 = vmatpush1.msra.mxu0 0.0
    %2943 = vmatprep.subr.mxu0 0.0
    %2944 = vmatpush1.msra.mxu0 0.0
    %2945 = vmatprep.subr.mxu0 0.0
    %2946 = vmatpush1.msra.mxu0 0.0
    %2947 = vmatprep.subr.mxu0 0.0
    %2948 = vmatpush1.msra.mxu0 0.0
    %2949 = vmatprep.subr.mxu0 0.0
    %2950 = vmatpush1.msra.mxu0 0.0
    %2951 = vmatprep.subr.mxu0 0.0
    %2952 = vmatpush1.msra.mxu0 0.0
    %2953 = vmatprep.subr.mxu0 0.0
    %2954 = vmatpush1.msra.mxu0 0.0
    %2955 = vmatprep.mubr.f32.mxu0 0.0
    %2956 = vmatmul.mubr.f32.gmra.mrb[0].mxu0 %v2873
    %v2957 = vpop.f32.mrb[0].mxu0
    %v2958 = vadd.f32 0.0, %v2957
    %v2959 = vpop.f32.mrb[0].mxu0
    %2960 = vmatprep.mubr.f32.mxu0 0.0
    %2961 = vmatmul.mubr.f32.gmra.mrb[0].mxu0 %v2874
    %v2962 = vpop.f32.mrb[0].mxu0
    %v2963 = vadd.f32 0.0, %v2962
    %v2964 = vpop.f32.mrb[0].mxu0
    %2965 = vdwg.mxu0
    %vm2966 = vcmp.gt.f32.partialorder %v2614, 0.0
    %vm2967 = vcmp.gt.f32.partialorder %v2615, 0.0
    %v2968 = vrcp.pop %v2614
    %v2969 = vmul.f32 1.0, %v2968
    %v2970 = vrcp.pop %v2615
    %v2971 = vmul.f32 1.0, %v2970
    %v2972 = vsel %vm2966, %v2969, 0.0
    %v2973 = vsel %vm2967, %v2971, 0.0
    %2976 = vrot.lane.b32.xlu0 %v2972, 125
    %v2977 = vpop.permute.xlu0 %2976
    %2978 = vrot.lane.b32.xlu0 %v2973, 125
    %v2979 = vpop.permute.xlu0 %2978
    %v2982 = vmul.f32 %v2958, %v2977
    %v2983 = vmul.f32 %v2963, %v2979
    %v2984 = vadd.f32 %v2982, 1.0
    %v2985 = vadd.f32 %v2983, 1.0
    %v2986 = vmul.f32 %v2984, 0.5
    %v2987 = vmul.f32 %v2985, 0.5
    %v2988 = vsel %vm2212, %v2986, 0.0
    %2989 = vadd.xlane.f32.xlu0 %v2988
    %v2990 = vpop.xlane.xlu0 %2989
    %v2991 = vsel %vm2212, %v2987, 0.0
    %2992 = vadd.xlane.f32.xlu0 %v2991
    %v2993 = vpop.xlane.xlu0 %2992
    %v2994 = vmul.f32 %v2990, %v2219
    %v2995 = vmul.f32 %v2993, %v2219
    %v2996 = vsub.f32 %v2986, %v2994
    %v2997 = vsub.f32 %v2987, %v2995
    %v2998 = vmul.f32 %v2996, %v2996
    %v2999 = vmul.f32 %v2997, %v2997
    %v3000 = vsel %vm2212, %v2998, 0.0
    %3001 = vadd.xlane.f32.xlu0 %v3000
    %v3002 = vpop.xlane.xlu0 %3001
    %v3003 = vsel %vm2212, %v2999, 0.0
    %3004 = vadd.xlane.f32.xlu0 %v3003
    %v3005 = vpop.xlane.xlu0 %3004
    %v3006 = vmul.f32 %v3002, %v2219
    %v3007 = vmul.f32 %v3005, %v2219
    %v3008 = vadd.f32 %v3006, 1e-05
    %v3009 = vadd.f32 %v3007, 1e-05
    %v3010 = vrsqrt.pop %v3008
    %v3011 = vrsqrt.pop %v3009
    %v3012 = vmul.f32 %v2996, %v3010
    %v3013 = vmul.f32 %v2997, %v3011
    %v3014 = vmax.f32 %v3012, 0.0
    %v3015 = vmax.f32 %v3013, 0.0
    %v3016 = vld [vmem:[%s35] sm:$0xff]
    %v3018 = vsel %vm2212, %v3014, 0
    %v3021 = vsel %vm2212, %v3015, 0
    %3023 = vmatprep.subr.mxu0 0.0
    %3024 = vmatpush1.msra.mxu0 %v3016
    %3025 = vmatprep.subr.mxu0 0.0
    %3026 = vmatpush1.msra.mxu0 0.0
    %3027 = vmatprep.subr.mxu0 0.0
    %3028 = vmatpush1.msra.mxu0 0.0
    %3029 = vmatprep.subr.mxu0 0.0
    %3030 = vmatpush1.msra.mxu0 0.0
    %3031 = vmatprep.subr.mxu0 0.0
    %3032 = vmatpush1.msra.mxu0 0.0
    %3033 = vmatprep.subr.mxu0 0.0
    %3034 = vmatpush1.msra.mxu0 0.0
    %3035 = vmatprep.subr.mxu0 0.0
    %3036 = vmatpush1.msra.mxu0 0.0
    %3037 = vmatprep.subr.mxu0 0.0
    %3038 = vmatpush1.msra.mxu0 0.0
    %3039 = vmatprep.subr.mxu0 0.0
    %3040 = vmatpush1.msra.mxu0 0.0
    %3041 = vmatprep.subr.mxu0 0.0
    %3042 = vmatpush1.msra.mxu0 0.0
    %3043 = vmatprep.subr.mxu0 0.0
    %3044 = vmatpush1.msra.mxu0 0.0
    %3045 = vmatprep.subr.mxu0 0.0
    %3046 = vmatpush1.msra.mxu0 0.0
    %3047 = vmatprep.subr.mxu0 0.0
    %3048 = vmatpush1.msra.mxu0 0.0
    %3049 = vmatprep.subr.mxu0 0.0
    %3050 = vmatpush1.msra.mxu0 0.0
    %3051 = vmatprep.subr.mxu0 0.0
    %3052 = vmatpush1.msra.mxu0 0.0
    %3053 = vmatprep.subr.mxu0 0.0
    %3054 = vmatpush1.msra.mxu0 0.0
    %3055 = vmatprep.subr.mxu0 0.0
    %3056 = vmatpush1.msra.mxu0 0.0
    %3057 = vmatprep.subr.mxu0 0.0
    %3058 = vmatpush1.msra.mxu0 0.0
    %3059 = vmatprep.subr.mxu0 0.0
    %3060 = vmatpush1.msra.mxu0 0.0
    %3061 = vmatprep.subr.mxu0 0.0
    %3062 = vmatpush1.msra.mxu0 0.0
    %3063 = vmatprep.subr.mxu0 0.0
    %3064 = vmatpush1.msra.mxu0 0.0
    %3065 = vmatprep.subr.mxu0 0.0
    %3066 = vmatpush1.msra.mxu0 0.0
    %3067 = vmatprep.subr.mxu0 0.0
    %3068 = vmatpush1.msra.mxu0 0.0
    %3069 = vmatprep.subr.mxu0 0.0
    %3070 = vmatpush1.msra.mxu0 0.0
    %3071 = vmatprep.subr.mxu0 0.0
    %3072 = vmatpush1.msra.mxu0 0.0
    %3073 = vmatprep.subr.mxu0 0.0
    %3074 = vmatpush1.msra.mxu0 0.0
    %3075 = vmatprep.subr.mxu0 0.0
    %3076 = vmatpush1.msra.mxu0 0.0
    %3077 = vmatprep.subr.mxu0 0.0
    %3078 = vmatpush1.msra.mxu0 0.0
    %3079 = vmatprep.subr.mxu0 0.0
    %3080 = vmatpush1.msra.mxu0 0.0
    %3081 = vmatprep.subr.mxu0 0.0
    %3082 = vmatpush1.msra.mxu0 0.0
    %3083 = vmatprep.subr.mxu0 0.0
    %3084 = vmatpush1.msra.mxu0 0.0
    %3085 = vmatprep.subr.mxu0 0.0
    %3086 = vmatpush1.msra.mxu0 0.0
    %3087 = vmatprep.mubr.f32.mxu0 0.0
    %3088 = vmatmul.mubr.f32.gmra.mrb[0].mxu0 %v3018
    %v3089 = vpop.f32.mrb[0].mxu0
    %v3090 = vadd.f32 0.0, %v3089
    %v3091 = vpop.f32.mrb[0].mxu0
    %3092 = vmatprep.mubr.f32.mxu0 0.0
    %3093 = vmatmul.mubr.f32.gmra.mrb[0].mxu0 %v3021
    %v3094 = vpop.f32.mrb[0].mxu0
    %v3095 = vadd.f32 0.0, %v3094
    %v3096 = vpop.f32.mrb[0].mxu0
    %3097 = vdwg.mxu0
    %3100 = vrot.lane.b32.xlu0 %v3090, 5
    %v3101 = vpop.permute.xlu0 %3100
    %3102 = vrot.lane.b32.xlu0 %v3095, 5
    %v3103 = vpop.permute.xlu0 %3102
    %v3106 = vsel %vm1683, 0.0, %v3101
    %v3107 = vsel %vm1683, 0.0, %v3103
    %v3108 = vsel %vm1685, %v3106, 0.0
    %v3109 = vsel %vm1685, %v3107, 0.0
    %3112 = vrot.lane.b32.xlu0 %v3108, 1
    %v3113 = vpop.permute.xlu0 %3112
    %3114 = vrot.lane.b32.xlu0 %v3109, 1
    %v3115 = vpop.permute.xlu0 %3114
    %3116 = vrot.lane.b32.xlu0 %v3108, 4
    %v3117 = vpop.permute.xlu0 %3116
    %3118 = vrot.lane.b32.xlu0 %v3109, 4
    %v3119 = vpop.permute.xlu0 %3118
    %3120 = vrot.lane.b32.xlu0 %v3108, 5
    %v3121 = vpop.permute.xlu0 %3120
    %3122 = vrot.lane.b32.xlu0 %v3109, 5
    %v3123 = vpop.permute.xlu0 %3122
    %v3124 = vld [vmem:[%s31] sm:$0xff]
    %v3125 = vld [vmem:[%s33] sm:$0xff]
    %3127 = vset.pattern.permute.xlu0 0
    %3128 = vperm.xlu0 %3127, %v3125
    %v3129 = vpop.permute.xlu0 %3128
    %3131 = vrot.lane.b32.xlu0 %v3108, 123
    %v3132 = vpop.permute.xlu0 %3131
    %3133 = vrot.lane.b32.xlu0 %v3109, 123
    %v3134 = vpop.permute.xlu0 %3133
    %3135 = vrot.lane.b32.xlu0 %v3113, 123
    %v3136 = vpop.permute.xlu0 %3135
    %3137 = vrot.lane.b32.xlu0 %v3115, 123
    %v3138 = vpop.permute.xlu0 %3137
    %3139 = vrot.lane.b32.xlu0 %v3117, 123
    %v3140 = vpop.permute.xlu0 %3139
    %3141 = vrot.lane.b32.xlu0 %v3119, 123
    %v3142 = vpop.permute.xlu0 %3141
    %3143 = vrot.lane.b32.xlu0 %v3121, 123
    %v3144 = vpop.permute.xlu0 %3143
    %3145 = vrot.lane.b32.xlu0 %v3123, 123
    %v3146 = vpop.permute.xlu0 %3145
    %v3156 = vsel %vm2762, %v3124, 0
    %3158 = vmatprep.subr.mxu0 0.0
    %3159 = vmatpush1.msra.mxu0 %v3132
    %3160 = vmatprep.subr.mxu0 0.0
    %3161 = vmatpush1.msra.mxu0 %v3134
    %3162 = vmatprep.subr.mxu0 0.0
    %3163 = vmatpush1.msra.mxu0 %v3136
    %3164 = vmatprep.subr.mxu0 0.0
    %3165 = vmatpush1.msra.mxu0 %v3138
    %3166 = vmatprep.subr.mxu0 0.0
    %3167 = vmatpush1.msra.mxu0 %v3140
    %3168 = vmatprep.subr.mxu0 0.0
    %3169 = vmatpush1.msra.mxu0 %v3142
    %3170 = vmatprep.subr.mxu0 0.0
    %3171 = vmatpush1.msra.mxu0 %v3144
    %3172 = vmatprep.subr.mxu0 0.0
    %3173 = vmatpush1.msra.mxu0 %v3146
    %3174 = vmatprep.subr.mxu0 0.0
    %3175 = vmatpush1.msra.mxu0 0.0
    %3176 = vmatprep.subr.mxu0 0.0
    %3177 = vmatpush1.msra.mxu0 0.0
    %3178 = vmatprep.subr.mxu0 0.0
    %3179 = vmatpush1.msra.mxu0 0.0
    %3180 = vmatprep.subr.mxu0 0.0
    %3181 = vmatpush1.msra.mxu0 0.0
    %3182 = vmatprep.subr.mxu0 0.0
    %3183 = vmatpush1.msra.mxu0 0.0
    %3184 = vmatprep.subr.mxu0 0.0
    %3185 = vmatpush1.msra.mxu0 0.0
    %3186 = vmatprep.subr.mxu0 0.0
    %3187 = vmatpush1.msra.mxu0 0.0
    %3188 = vmatprep.subr.mxu0 0.0
    %3189 = vmatpush1.msra.mxu0 0.0
    %3190 = vmatprep.subr.mxu0 0.0
    %3191 = vmatpush1.msra.mxu0 0.0
    %3192 = vmatprep.subr.mxu0 0.0
    %3193 = vmatpush1.msra.mxu0 0.0
    %3194 = vmatprep.subr.mxu0 0.0
    %3195 = vmatpush1.msra.mxu0 0.0
    %3196 = vmatprep.subr.mxu0 0.0
    %3197 = vmatpush1.msra.mxu0 0.0
    %3198 = vmatprep.subr.mxu0 0.0
    %3199 = vmatpush1.msra.mxu0 0.0
    %3200 = vmatprep.subr.mxu0 0.0
    %3201 = vmatpush1.msra.mxu0 0.0
    %3202 = vmatprep.subr.mxu0 0.0
    %3203 = vmatpush1.msra.mxu0 0.0
    %3204 = vmatprep.subr.mxu0 0.0
    %3205 = vmatpush1.msra.mxu0 0.0
    %3206 = vmatprep.subr.mxu0 0.0
    %3207 = vmatpush1.msra.mxu0 0.0
    %3208 = vmatprep.subr.mxu0 0.0
    %3209 = vmatpush1.msra.mxu0 0.0
    %3210 = vmatprep.subr.mxu0 0.0
    %3211 = vmatpush1.msra.mxu0 0.0
    %3212 = vmatprep.subr.mxu0 0.0
    %3213 = vmatpush1.msra.mxu0 0.0
    %3214 = vmatprep.subr.mxu0 0.0
    %3215 = vmatpush1.msra.mxu0 0.0
    %3216 = vmatprep.subr.mxu0 0.0
    %3217 = vmatpush1.msra.mxu0 0.0
    %3218 = vmatprep.subr.mxu0 0.0
    %3219 = vmatpush1.msra.mxu0 0.0
    %3220 = vmatprep.subr.mxu0 0.0
    %3221 = vmatpush1.msra.mxu0 0.0
    %3222 = vmatprep.mubr.f32.mxu0 0.0
    %3223 = vmatmul.mubr.f32.gmra.mrb[0].mxu0 %v3156
    %v3224 = vpop.f32.mrb[0].mxu0
    %v3225 = vadd.f32 %v3129, %v3224
    %v3226 = vpop.f32.mrb[0].mxu0
    %3227 = vdwg.mxu0
    %3229 = vrot.lane.b32.xlu0 %v3225, 5
    %v3230 = vpop.permute.xlu0 %3229
    %v3232 = vsel %vm1683, 0.0, %v3230
    %v3233 = vsel %vm1685, %v3232, 0.0
    %v3234 = vmul.f32 %v3233, %v1700
    %v3235 = vmul.f32 %v1910, %v1700
    %v3236 = vmul.f32 %v3233, %v1709
    %v3237 = vmul.f32 %v1910, %v1709
    %v3238 = vmul.f32 %v3233, %v1718
    %v3239 = vmul.f32 %v1910, %v1718
    %v3240 = vmul.f32 %v3233, %v1727
    %v3241 = vmul.f32 %v1910, %v1727
    %v3242 = vmul.f32 %v3233, %v1736
    %v3243 = vmul.f32 %v1910, %v1736
    %v3244 = vmul.f32 %v3233, %v1745
    %v3245 = vmul.f32 %v1910, %v1745
    %v3246 = vmul.f32 %v3233, %v1754
    %v3247 = vmul.f32 %v1910, %v1754
    %v3248 = vmul.f32 %v3233, %v1763
    %v3249 = vmul.f32 %v1910, %v1763
    %v3250 = vmul.f32 %v3233, %v1772
    %v3251 = vmul.f32 %v1910, %v1772
    %3253 = vrot.lane.b32.xlu0 %v3236, 127
    %v3254 = vpop.permute.xlu0 %3253
    %3257 = vrot.lane.b32.xlu0 %v3237, 127
    %v3258 = vpop.permute.xlu0 %3257
    %3261 = vrot.lane.b32.xlu0 %v3238, 126
    %v3262 = vpop.permute.xlu0 %3261
    %3265 = vrot.lane.b32.xlu0 %v3239, 126
    %v3266 = vpop.permute.xlu0 %3265
    %3269 = vrot.lane.b32.xlu0 %v3240, 124
    %v3270 = vpop.permute.xlu0 %3269
    %3273 = vrot.lane.b32.xlu0 %v3241, 124
    %v3274 = vpop.permute.xlu0 %3273
    %3277 = vrot.lane.b32.xlu0 %v3242, 123
    %v3278 = vpop.permute.xlu0 %3277
    %3281 = vrot.lane.b32.xlu0 %v3243, 123
    %v3282 = vpop.permute.xlu0 %3281
    %3285 = vrot.lane.b32.xlu0 %v3244, 122
    %v3286 = vpop.permute.xlu0 %3285
    %3289 = vrot.lane.b32.xlu0 %v3245, 122
    %v3290 = vpop.permute.xlu0 %3289
    %3293 = vrot.lane.b32.xlu0 %v3246, 120
    %v3294 = vpop.permute.xlu0 %3293
    %3297 = vrot.lane.b32.xlu0 %v3247, 120
    %v3298 = vpop.permute.xlu0 %3297
    %3301 = vrot.lane.b32.xlu0 %v3248, 119
    %v3302 = vpop.permute.xlu0 %3301
    %3305 = vrot.lane.b32.xlu0 %v3249, 119
    %v3306 = vpop.permute.xlu0 %3305
    %3310 = vrot.lane.b32.xlu0 %v3250, 118
    %v3311 = vpop.permute.xlu0 %3310
    %3312 = vrot.lane.b32.xlu0 %v3251, 118
    %v3313 = vpop.permute.xlu0 %3312
    %v3316 = vld [vmem:[%s37] sm:$0xff]
    %v3317 = vld [vmem:[%s37 + $0x8] sm:$0xff]
    %v3319 = vsel %vm346, %v3317, 0
    %3321 = vmatprep.subr.mxu0 0.0
    %3322 = vmatpush1.msra.mxu0 %v3234
    %3323 = vmatprep.subr.mxu0 0.0
    %3324 = vmatpush1.msra.mxu0 %v3235
    %3325 = vmatprep.subr.mxu0 0.0
    %3326 = vmatpush1.msra.mxu0 %v3254
    %3327 = vmatprep.subr.mxu0 0.0
    %3328 = vmatpush1.msra.mxu0 %v3258
    %3329 = vmatprep.subr.mxu0 0.0
    %3330 = vmatpush1.msra.mxu0 %v3262
    %3331 = vmatprep.subr.mxu0 0.0
    %3332 = vmatpush1.msra.mxu0 %v3266
    %3333 = vmatprep.subr.mxu0 0.0
    %3334 = vmatpush1.msra.mxu0 %v3270
    %3335 = vmatprep.subr.mxu0 0.0
    %3336 = vmatpush1.msra.mxu0 %v3274
    %3337 = vmatprep.subr.mxu0 0.0
    %3338 = vmatpush1.msra.mxu0 %v3278
    %3339 = vmatprep.subr.mxu0 0.0
    %3340 = vmatpush1.msra.mxu0 %v3282
    %3341 = vmatprep.subr.mxu0 0.0
    %3342 = vmatpush1.msra.mxu0 %v3286
    %3343 = vmatprep.subr.mxu0 0.0
    %3344 = vmatpush1.msra.mxu0 %v3290
    %3345 = vmatprep.subr.mxu0 0.0
    %3346 = vmatpush1.msra.mxu0 %v3294
    %3347 = vmatprep.subr.mxu0 0.0
    %3348 = vmatpush1.msra.mxu0 %v3298
    %3349 = vmatprep.subr.mxu0 0.0
    %3350 = vmatpush1.msra.mxu0 %v3302
    %3351 = vmatprep.subr.mxu0 0.0
    %3352 = vmatpush1.msra.mxu0 %v3306
    %3353 = vmatprep.subr.mxu0 0.0
    %3354 = vmatpush1.msra.mxu0 %v3311
    %3355 = vmatprep.subr.mxu0 0.0
    %3356 = vmatpush1.msra.mxu0 %v3313
    %3357 = vmatprep.subr.mxu0 0.0
    %3358 = vmatpush1.msra.mxu0 0.0
    %3359 = vmatprep.subr.mxu0 0.0
    %3360 = vmatpush1.msra.mxu0 0.0
    %3361 = vmatprep.subr.mxu0 0.0
    %3362 = vmatpush1.msra.mxu0 0.0
    %3363 = vmatprep.subr.mxu0 0.0
    %3364 = vmatpush1.msra.mxu0 0.0
    %3365 = vmatprep.subr.mxu0 0.0
    %3366 = vmatpush1.msra.mxu0 0.0
    %3367 = vmatprep.subr.mxu0 0.0
    %3368 = vmatpush1.msra.mxu0 0.0
    %3369 = vmatprep.subr.mxu0 0.0
    %3370 = vmatpush1.msra.mxu0 0.0
    %3371 = vmatprep.subr.mxu0 0.0
    %3372 = vmatpush1.msra.mxu0 0.0
    %3373 = vmatprep.subr.mxu0 0.0
    %3374 = vmatpush1.msra.mxu0 0.0
    %3375 = vmatprep.subr.mxu0 0.0
    %3376 = vmatpush1.msra.mxu0 0.0
    %3377 = vmatprep.subr.mxu0 0.0
    %3378 = vmatpush1.msra.mxu0 0.0
    %3379 = vmatprep.subr.mxu0 0.0
    %3380 = vmatpush1.msra.mxu0 0.0
    %3381 = vmatprep.subr.mxu0 0.0
    %3382 = vmatpush1.msra.mxu0 0.0
    %3383 = vmatprep.subr.mxu0 0.0
    %3384 = vmatpush1.msra.mxu0 0.0
    %3385 = vmatprep.mubr.f32.mxu0 %v3319
    %3386 = vmatmul.mubr.f32.gmra.mrb[0].mxu0 %v3316
    %v3387 = vpop.f32.mrb[0].mxu0
    %v3388 = vadd.f32 0.0, %v3387
    %v3389 = vpop.f32.mrb[0].mxu0
    %3390 = vdwg.mxu0
    %v3391 = vsel %vm462, %v3388, 0.0
    %3392 = vadd.xlane.f32.xlu0 %v3391
    %v3393 = vpop.xlane.xlu0 %3392
    %v3394 = vmul.f32 %v3393, %v1893
    %v3395 = vsub.f32 %v3388, %v3394
    %v3396 = vmul.f32 %v3395, %v3395
    %v3397 = vsel %vm462, %v3396, 0.0
    %3398 = vadd.xlane.f32.xlu0 %v3397
    %v3399 = vpop.xlane.xlu0 %3398
    %v3400 = vmul.f32 %v3399, %v1893
    %v3401 = vadd.f32 %v3400, 1e-05
    %v3402 = vrsqrt.pop %v3401
    %v3403 = vmul.f32 %v3395, %v3402
    %v3404 = vmax.f32 %v3403, 0.0
    %v3405 = vld [vmem:[%s43] sm:$0xff]
    %v3406 = vld [vmem:[%s43 + $0x8] sm:$0xff]
    %v3407 = vld [vmem:[%s43 + $0x10] sm:$0xff]
    %v3408 = vld [vmem:[%s43 + $0x18] sm:$0xff]
    %v3410 = vsel %vm462, %v3404, 0
    %3412 = vmatprep.subr.mxu0 0.0
    %3413 = vmatpush1.msra.mxu0 %v3405
    %3414 = vmatprep.subr.mxu0 0.0
    %3415 = vmatpush1.msra.mxu0 %v3406
    %3416 = vmatprep.subr.mxu0 0.0
    %3417 = vmatpush1.msra.mxu0 %v3407
    %3418 = vmatprep.subr.mxu0 0.0
    %3419 = vmatpush1.msra.mxu0 %v3408
    %3420 = vmatprep.subr.mxu0 0.0
    %3421 = vmatpush1.msra.mxu0 0.0
    %3422 = vmatprep.subr.mxu0 0.0
    %3423 = vmatpush1.msra.mxu0 0.0
    %3424 = vmatprep.subr.mxu0 0.0
    %3425 = vmatpush1.msra.mxu0 0.0
    %3426 = vmatprep.subr.mxu0 0.0
    %3427 = vmatpush1.msra.mxu0 0.0
    %3428 = vmatprep.subr.mxu0 0.0
    %3429 = vmatpush1.msra.mxu0 0.0
    %3430 = vmatprep.subr.mxu0 0.0
    %3431 = vmatpush1.msra.mxu0 0.0
    %3432 = vmatprep.subr.mxu0 0.0
    %3433 = vmatpush1.msra.mxu0 0.0
    %3434 = vmatprep.subr.mxu0 0.0
    %3435 = vmatpush1.msra.mxu0 0.0
    %3436 = vmatprep.subr.mxu0 0.0
    %3437 = vmatpush1.msra.mxu0 0.0
    %3438 = vmatprep.subr.mxu0 0.0
    %3439 = vmatpush1.msra.mxu0 0.0
    %3440 = vmatprep.subr.mxu0 0.0
    %3441 = vmatpush1.msra.mxu0 0.0
    %3442 = vmatprep.subr.mxu0 0.0
    %3443 = vmatpush1.msra.mxu0 0.0
    %3444 = vmatprep.subr.mxu0 0.0
    %3445 = vmatpush1.msra.mxu0 0.0
    %3446 = vmatprep.subr.mxu0 0.0
    %3447 = vmatpush1.msra.mxu0 0.0
    %3448 = vmatprep.subr.mxu0 0.0
    %3449 = vmatpush1.msra.mxu0 0.0
    %3450 = vmatprep.subr.mxu0 0.0
    %3451 = vmatpush1.msra.mxu0 0.0
    %3452 = vmatprep.subr.mxu0 0.0
    %3453 = vmatpush1.msra.mxu0 0.0
    %3454 = vmatprep.subr.mxu0 0.0
    %3455 = vmatpush1.msra.mxu0 0.0
    %3456 = vmatprep.subr.mxu0 0.0
    %3457 = vmatpush1.msra.mxu0 0.0
    %3458 = vmatprep.subr.mxu0 0.0
    %3459 = vmatpush1.msra.mxu0 0.0
    %3460 = vmatprep.subr.mxu0 0.0
    %3461 = vmatpush1.msra.mxu0 0.0
    %3462 = vmatprep.subr.mxu0 0.0
    %3463 = vmatpush1.msra.mxu0 0.0
    %3464 = vmatprep.subr.mxu0 0.0
    %3465 = vmatpush1.msra.mxu0 0.0
    %3466 = vmatprep.subr.mxu0 0.0
    %3467 = vmatpush1.msra.mxu0 0.0
    %3468 = vmatprep.subr.mxu0 0.0
    %3469 = vmatpush1.msra.mxu0 0.0
    %3470 = vmatprep.subr.mxu0 0.0
    %3471 = vmatpush1.msra.mxu0 0.0
    %3472 = vmatprep.subr.mxu0 0.0
    %3473 = vmatpush1.msra.mxu0 0.0
    %3474 = vmatprep.subr.mxu0 0.0
    %3475 = vmatpush1.msra.mxu0 0.0
    %3476 = vmatprep.mubr.f32.mxu0 0.0
    %3477 = vmatmul.mubr.f32.gmra.mrb[0].mxu0 %v3410
    %v3478 = vpop.f32.mrb[0].mxu0
    %v3479 = vadd.f32 0.0, %v3478
    %v3480 = vpop.f32.mrb[0].mxu0
    %3481 = vdwg.mxu0
    %3483 = vrot.lane.b32.xlu0 %v3479, 9
    %v3484 = vpop.permute.xlu0 %3483
    %v3486 = vsel %vm1282, 0.0, %v3484
    %v3487 = vsel %vm1282, %v3484, 0.0
    %3490 = vrot.lane.b32.xlu0 %v3486, 1
    %v3491 = vpop.permute.xlu0 %3490
    %3492 = vrot.lane.b32.xlu0 %v3487, 1
    %v3493 = vpop.permute.xlu0 %3492
    %v3494 = vsel %vm268, %v3491, %v3493
    %3495 = vrot.lane.b32.xlu0 %v3486, 8
    %v3496 = vpop.permute.xlu0 %3495
    %3497 = vrot.lane.b32.xlu0 %v3487, 8
    %v3498 = vpop.permute.xlu0 %3497
    %v3499 = vsel %vm2212, %v3496, %v3498
    %3500 = vrot.lane.b32.xlu0 %v3486, 9
    %v3501 = vpop.permute.xlu0 %3500
    %v3502 = vld [vmem:[%s39] sm:$0xf]
    %v3503 = vld [vmem:[%s41] sm:$0xf]
    %3505 = vset.pattern.permute.xlu0 0
    %3506 = vperm.xlu0 %3505, %v3503
    %v3507 = vpop.permute.xlu0 %3506
    %3509 = vrot.lane.b32.xlu0 %v3486, 119
    %v3510 = vpop.permute.xlu0 %3509
    %3511 = vrot.lane.b32.xlu0 %v3487, 119
    %v3512 = vpop.permute.xlu0 %3511
    %3513 = vrot.lane.b32.xlu0 %v3491, 119
    %v3514 = vpop.permute.xlu0 %3513
    %3515 = vrot.lane.b32.xlu0 %v3494, 119
    %v3516 = vpop.permute.xlu0 %3515
    %3517 = vrot.lane.b32.xlu0 %v3496, 119
    %v3518 = vpop.permute.xlu0 %3517
    %3519 = vrot.lane.b32.xlu0 %v3499, 119
    %v3520 = vpop.permute.xlu0 %3519
    %3521 = vrot.lane.b32.xlu0 %v3501, 119
    %v3522 = vpop.permute.xlu0 %3521
    %v3523 = vsel %vm1418, %v3510, %v3512
    %v3524 = vsel %vm1418, %v3514, %v3516
    %v3525 = vsel %vm1418, %v3518, %v3520
    %v3531 = vsel %vm462, %v3502, 0
    %3533 = vmatprep.subr.mxu0 0.0
    %3534 = vmatpush1.msra.mxu0 %v3523
    %3535 = vmatprep.subr.mxu0 0.0
    %3536 = vmatpush1.msra.mxu0 %v3524
    %3537 = vmatprep.subr.mxu0 0.0
    %3538 = vmatpush1.msra.mxu0 %v3525
    %3539 = vmatprep.subr.mxu0 0.0
    %3540 = vmatpush1.msra.mxu0 %v3522
    %3541 = vmatprep.subr.mxu0 0.0
    %3542 = vmatpush1.msra.mxu0 0.0
    %3543 = vmatprep.subr.mxu0 0.0
    %3544 = vmatpush1.msra.mxu0 0.0
    %3545 = vmatprep.subr.mxu0 0.0
    %3546 = vmatpush1.msra.mxu0 0.0
    %3547 = vmatprep.subr.mxu0 0.0
    %3548 = vmatpush1.msra.mxu0 0.0
    %3549 = vmatprep.subr.mxu0 0.0
    %3550 = vmatpush1.msra.mxu0 0.0
    %3551 = vmatprep.subr.mxu0 0.0
    %3552 = vmatpush1.msra.mxu0 0.0
    %3553 = vmatprep.subr.mxu0 0.0
    %3554 = vmatpush1.msra.mxu0 0.0
    %3555 = vmatprep.subr.mxu0 0.0
    %3556 = vmatpush1.msra.mxu0 0.0
    %3557 = vmatprep.subr.mxu0 0.0
    %3558 = vmatpush1.msra.mxu0 0.0
    %3559 = vmatprep.subr.mxu0 0.0
    %3560 = vmatpush1.msra.mxu0 0.0
    %3561 = vmatprep.subr.mxu0 0.0
    %3562 = vmatpush1.msra.mxu0 0.0
    %3563 = vmatprep.subr.mxu0 0.0
    %3564 = vmatpush1.msra.mxu0 0.0
    %3565 = vmatprep.subr.mxu0 0.0
    %3566 = vmatpush1.msra.mxu0 0.0
    %3567 = vmatprep.subr.mxu0 0.0
    %3568 = vmatpush1.msra.mxu0 0.0
    %3569 = vmatprep.subr.mxu0 0.0
    %3570 = vmatpush1.msra.mxu0 0.0
    %3571 = vmatprep.subr.mxu0 0.0
    %3572 = vmatpush1.msra.mxu0 0.0
    %3573 = vmatprep.subr.mxu0 0.0
    %3574 = vmatpush1.msra.mxu0 0.0
    %3575 = vmatprep.subr.mxu0 0.0
    %3576 = vmatpush1.msra.mxu0 0.0
    %3577 = vmatprep.subr.mxu0 0.0
    %3578 = vmatpush1.msra.mxu0 0.0
    %3579 = vmatprep.subr.mxu0 0.0
    %3580 = vmatpush1.msra.mxu0 0.0
    %3581 = vmatprep.subr.mxu0 0.0
    %3582 = vmatpush1.msra.mxu0 0.0
    %3583 = vmatprep.subr.mxu0 0.0
    %3584 = vmatpush1.msra.mxu0 0.0
    %3585 = vmatprep.subr.mxu0 0.0
    %3586 = vmatpush1.msra.mxu0 0.0
    %3587 = vmatprep.subr.mxu0 0.0
    %3588 = vmatpush1.msra.mxu0 0.0
    %3589 = vmatprep.subr.mxu0 0.0
    %3590 = vmatpush1.msra.mxu0 0.0
    %3591 = vmatprep.subr.mxu0 0.0
    %3592 = vmatpush1.msra.mxu0 0.0
    %3593 = vmatprep.subr.mxu0 0.0
    %3594 = vmatpush1.msra.mxu0 0.0
    %3595 = vmatprep.subr.mxu0 0.0
    %3596 = vmatpush1.msra.mxu0 0.0
    %3597 = vmatprep.mubr.f32.mxu0 0.0
    %3598 = vmatmul.mubr.f32.gmra.mrb[0].mxu0 %v3531
    %v3599 = vpop.f32.mrb[0].mxu0
    %v3600 = vadd.f32 %v3507, %v3599
    %v3601 = vpop.f32.mrb[0].mxu0
    %3602 = vdwg.mxu0
    %3604 = vrot.lane.b32.xlu0 %v3600, 9
    %v3605 = vpop.permute.xlu0 %3604
    %v3607 = vsel %vm1282, 0.0, %v3605
    %v3608 = vsel %vm1282, %v3605, 0.0
    %v3609 = vmul.f32 %v3607, %v1298
    %v3610 = vmul.f32 %v1561, %v1298
    %v3611 = vmul.f32 %v3607, %v1307
    %v3612 = vmul.f32 %v3608, %v1307
    %v3613 = vmul.f32 %v1561, %v1307
    %v3614 = vmul.f32 %v1562, %v1307
    %v3615 = vmul.f32 %v3607, %v1317
    %v3616 = vmul.f32 %v3608, %v1317
    %v3617 = vmul.f32 %v1561, %v1317
    %v3618 = vmul.f32 %v1562, %v1317
    %v3619 = vmul.f32 %v3607, %v1327
    %v3620 = vmul.f32 %v3608, %v1327
    %v3621 = vmul.f32 %v1561, %v1327
    %v3622 = vmul.f32 %v1562, %v1327
    %v3623 = vmul.f32 %v3607, %v1337
    %v3624 = vmul.f32 %v3608, %v1337
    %v3625 = vmul.f32 %v1561, %v1337
    %v3626 = vmul.f32 %v1562, %v1337
    %v3627 = vmul.f32 %v3607, %v1347
    %v3628 = vmul.f32 %v3608, %v1347
    %v3629 = vmul.f32 %v1561, %v1347
    %v3630 = vmul.f32 %v1562, %v1347
    %v3631 = vmul.f32 %v3607, %v1357
    %v3632 = vmul.f32 %v3608, %v1357
    %v3633 = vmul.f32 %v1561, %v1357
    %v3634 = vmul.f32 %v1562, %v1357
    %v3635 = vmul.f32 %v3607, %v1367
    %v3636 = vmul.f32 %v3608, %v1367
    %v3637 = vmul.f32 %v1561, %v1367
    %v3638 = vmul.f32 %v1562, %v1367
    %v3639 = vmul.f32 %v3607, %v1377
    %v3640 = vmul.f32 %v3608, %v1377
    %v3641 = vmul.f32 %v1561, %v1377
    %v3642 = vmul.f32 %v1562, %v1377
    %v3644 = vrot.slane %v3610, 4
    %3648 = vrot.lane.b32.xlu0 %v3611, 127
    %v3649 = vpop.permute.xlu0 %3648
    %3650 = vrot.lane.b32.xlu0 %v3612, 127
    %v3651 = vpop.permute.xlu0 %3650
    %v3652 = vsel %vm574, %v3649, %v3651
    %v3656 = vrot.slane %v3613, 4
    %v3657 = vrot.slane %v3614, 4
    %3658 = vrot.lane.b32.xlu0 %v3656, 127
    %v3659 = vpop.permute.xlu0 %3658
    %3660 = vrot.lane.b32.xlu0 %v3657, 127
    %v3661 = vpop.permute.xlu0 %3660
    %v3662 = vsel %vm574, %v3659, %v3661
    %3666 = vrot.lane.b32.xlu0 %v3615, 126
    %v3667 = vpop.permute.xlu0 %3666
    %3668 = vrot.lane.b32.xlu0 %v3616, 126
    %v3669 = vpop.permute.xlu0 %3668
    %v3670 = vsel %vm598, %v3667, %v3669
    %v3674 = vrot.slane %v3617, 4
    %v3675 = vrot.slane %v3618, 4
    %3676 = vrot.lane.b32.xlu0 %v3674, 126
    %v3677 = vpop.permute.xlu0 %3676
    %3678 = vrot.lane.b32.xlu0 %v3675, 126
    %v3679 = vpop.permute.xlu0 %3678
    %v3680 = vsel %vm598, %v3677, %v3679
    %3684 = vrot.lane.b32.xlu0 %v3619, 120
    %v3685 = vpop.permute.xlu0 %3684
    %3686 = vrot.lane.b32.xlu0 %v3620, 120
    %v3687 = vpop.permute.xlu0 %3686
    %v3688 = vsel %vm1409, %v3685, %v3687
    %v3692 = vrot.slane %v3621, 4
    %v3693 = vrot.slane %v3622, 4
    %3694 = vrot.lane.b32.xlu0 %v3692, 120
    %v3695 = vpop.permute.xlu0 %3694
    %3696 = vrot.lane.b32.xlu0 %v3693, 120
    %v3697 = vpop.permute.xlu0 %3696
    %v3698 = vsel %vm1409, %v3695, %v3697
    %3702 = vrot.lane.b32.xlu0 %v3623, 119
    %v3703 = vpop.permute.xlu0 %3702
    %3704 = vrot.lane.b32.xlu0 %v3624, 119
    %v3705 = vpop.permute.xlu0 %3704
    %v3706 = vsel %vm1418, %v3703, %v3705
    %v3710 = vrot.slane %v3625, 4
    %v3711 = vrot.slane %v3626, 4
    %3712 = vrot.lane.b32.xlu0 %v3710, 119
    %v3713 = vpop.permute.xlu0 %3712
    %3714 = vrot.lane.b32.xlu0 %v3711, 119
    %v3715 = vpop.permute.xlu0 %3714
    %v3716 = vsel %vm1418, %v3713, %v3715
    %3720 = vrot.lane.b32.xlu0 %v3627, 118
    %v3721 = vpop.permute.xlu0 %3720
    %3722 = vrot.lane.b32.xlu0 %v3628, 118
    %v3723 = vpop.permute.xlu0 %3722
    %v3724 = vsel %vm1429, %v3721, %v3723
    %v3728 = vrot.slane %v3629, 4
    %v3729 = vrot.slane %v3630, 4
    %3730 = vrot.lane.b32.xlu0 %v3728, 118
    %v3731 = vpop.permute.xlu0 %3730
    %3732 = vrot.lane.b32.xlu0 %v3729, 118
    %v3733 = vpop.permute.xlu0 %3732
    %v3734 = vsel %vm1429, %v3731, %v3733
    %3738 = vrot.lane.b32.xlu0 %v3631, 112
    %v3739 = vpop.permute.xlu0 %3738
    %3740 = vrot.lane.b32.xlu0 %v3632, 112
    %v3741 = vpop.permute.xlu0 %3740
    %v3742 = vsel %vm627, %v3739, %v3741
    %v3746 = vrot.slane %v3633, 4
    %v3747 = vrot.slane %v3634, 4
    %3748 = vrot.lane.b32.xlu0 %v3746, 112
    %v3749 = vpop.permute.xlu0 %3748
    %3750 = vrot.lane.b32.xlu0 %v3747, 112
    %v3751 = vpop.permute.xlu0 %3750
    %v3752 = vsel %vm627, %v3749, %v3751
    %3756 = vrot.lane.b32.xlu0 %v3635, 111
    %v3757 = vpop.permute.xlu0 %3756
    %3758 = vrot.lane.b32.xlu0 %v3636, 111
    %v3759 = vpop.permute.xlu0 %3758
    %v3760 = vsel %vm651, %v3757, %v3759
    %v3764 = vrot.slane %v3637, 4
    %v3765 = vrot.slane %v3638, 4
    %3766 = vrot.lane.b32.xlu0 %v3764, 111
    %v3767 = vpop.permute.xlu0 %3766
    %3768 = vrot.lane.b32.xlu0 %v3765, 111
    %v3769 = vpop.permute.xlu0 %3768
    %v3770 = vsel %vm651, %v3767, %v3769
    %v3772 = vsel %vm762, %v3609, %v3644
    %v3773 = vsel %vm762, %v3652, %v3662
    %v3774 = vsel %vm762, %v3670, %v3680
    %v3775 = vsel %vm762, %v3688, %v3698
    %v3776 = vsel %vm762, %v3706, %v3716
    %v3777 = vsel %vm762, %v3724, %v3734
    %v3778 = vsel %vm762, %v3742, %v3752
    %v3779 = vsel %vm762, %v3760, %v3770
    %v3782 = vrot.slane %v3641, 4
    %v3783 = vrot.slane %v3642, 4
    %v3786 = vsel %vm762, %v3639, %v3782
    %v3787 = vsel %vm762, %v3640, %v3783
    %3790 = vrot.lane.b32.xlu0 %v3786, 110
    %v3791 = vpop.permute.xlu0 %3790
    %3792 = vrot.lane.b32.xlu0 %v3787, 110
    %v3793 = vpop.permute.xlu0 %3792
    %v3794 = vsel %vm680, %v3791, %v3793
    %v3796 = vld [vmem:[%s45] sm:$0xf]
    %v3798 = vsel %vm2130, %v3796, 0
    %3800 = vmatprep.subr.mxu0 0.0
    %3801 = vmatpush1.msra.mxu0 %v3772
    %3802 = vmatprep.subr.mxu0 0.0
    %3803 = vmatpush1.msra.mxu0 %v3773
    %3804 = vmatprep.subr.mxu0 0.0
    %3805 = vmatpush1.msra.mxu0 %v3774
    %3806 = vmatprep.subr.mxu0 0.0
    %3807 = vmatpush1.msra.mxu0 %v3775
    %3808 = vmatprep.subr.mxu0 0.0
    %3809 = vmatpush1.msra.mxu0 %v3776
    %3810 = vmatprep.subr.mxu0 0.0
    %3811 = vmatpush1.msra.mxu0 %v3777
    %3812 = vmatprep.subr.mxu0 0.0
    %3813 = vmatpush1.msra.mxu0 %v3778
    %3814 = vmatprep.subr.mxu0 0.0
    %3815 = vmatpush1.msra.mxu0 %v3779
    %3816 = vmatprep.subr.mxu0 0.0
    %3817 = vmatpush1.msra.mxu0 %v3794
    %3818 = vmatprep.subr.mxu0 0.0
    %3819 = vmatpush1.msra.mxu0 0.0
    %3820 = vmatprep.subr.mxu0 0.0
    %3821 = vmatpush1.msra.mxu0 0.0
    %3822 = vmatprep.subr.mxu0 0.0
    %3823 = vmatpush1.msra.mxu0 0.0
    %3824 = vmatprep.subr.mxu0 0.0
    %3825 = vmatpush1.msra.mxu0 0.0
    %3826 = vmatprep.subr.mxu0 0.0
    %3827 = vmatpush1.msra.mxu0 0.0
    %3828 = vmatprep.subr.mxu0 0.0
    %3829 = vmatpush1.msra.mxu0 0.0
    %3830 = vmatprep.subr.mxu0 0.0
    %3831 = vmatpush1.msra.mxu0 0.0
    %3832 = vmatprep.subr.mxu0 0.0
    %3833 = vmatpush1.msra.mxu0 0.0
    %3834 = vmatprep.subr.mxu0 0.0
    %3835 = vmatpush1.msra.mxu0 0.0
    %3836 = vmatprep.subr.mxu0 0.0
    %3837 = vmatpush1.msra.mxu0 0.0
    %3838 = vmatprep.subr.mxu0 0.0
    %3839 = vmatpush1.msra.mxu0 0.0
    %3840 = vmatprep.subr.mxu0 0.0
    %3841 = vmatpush1.msra.mxu0 0.0
    %3842 = vmatprep.subr.mxu0 0.0
    %3843 = vmatpush1.msra.mxu0 0.0
    %3844 = vmatprep.subr.mxu0 0.0
    %3845 = vmatpush1.msra.mxu0 0.0
    %3846 = vmatprep.subr.mxu0 0.0
    %3847 = vmatpush1.msra.mxu0 0.0
    %3848 = vmatprep.subr.mxu0 0.0
    %3849 = vmatpush1.msra.mxu0 0.0
    %3850 = vmatprep.subr.mxu0 0.0
    %3851 = vmatpush1.msra.mxu0 0.0
    %3852 = vmatprep.subr.mxu0 0.0
    %3853 = vmatpush1.msra.mxu0 0.0
    %3854 = vmatprep.subr.mxu0 0.0
    %3855 = vmatpush1.msra.mxu0 0.0
    %3856 = vmatprep.subr.mxu0 0.0
    %3857 = vmatpush1.msra.mxu0 0.0
    %3858 = vmatprep.subr.mxu0 0.0
    %3859 = vmatpush1.msra.mxu0 0.0
    %3860 = vmatprep.subr.mxu0 0.0
    %3861 = vmatpush1.msra.mxu0 0.0
    %3862 = vmatprep.subr.mxu0 0.0
    %3863 = vmatpush1.msra.mxu0 0.0
    %3864 = vmatprep.mubr.f32.mxu0 0.0
    %3865 = vmatmul.mubr.f32.gmra.mrb[0].mxu0 %v3798
    %v3866 = vpop.f32.mrb[0].mxu0
    %v3867 = vadd.f32 0.0, %v3866
    %v3868 = vpop.f32.mrb[0].mxu0
    %3869 = vdwg.mxu0
    %v3870 = vsel %vm762, %v3867, 0.0
    %3871 = vadd.xlane.f32.xlu0 %v3870
    %v3872 = vpop.xlane.xlu0 %3871
    %v3873 = vmul.f32 %v3872, %v1545
    %v3874 = vsub.f32 %v3867, %v3873
    %v3875 = vmul.f32 %v3874, %v3874
    %v3876 = vsel %vm762, %v3875, 0.0
    %3877 = vadd.xlane.f32.xlu0 %v3876
    %v3878 = vpop.xlane.xlu0 %3877
    %v3879 = vmul.f32 %v3878, %v1545
    %v3880 = vadd.f32 %v3879, 1e-05
    %v3881 = vrsqrt.pop %v3880
    %v3882 = vmul.f32 %v3874, %v3881
    %v3883 = vmax.f32 %v3882, 0.0
    %v3884 = vld [vmem:[#allocation7] sm:$0xff]
    %v3885 = vld [vmem:[#allocation7 + $0x8] sm:$0xff]
    %v3886 = vld [vmem:[#allocation7 + $0x10] sm:$0xff]
    %v3887 = vld [vmem:[#allocation7 + $0x18] sm:$0xff]
    %v3888 = vld [vmem:[#allocation7 + $0x20] sm:$0xff]
    %v3889 = vld [vmem:[#allocation7 + $0x28] sm:$0xff]
    %v3890 = vld [vmem:[#allocation7 + $0x30] sm:$0xff]
    %v3891 = vld [vmem:[#allocation7 + $0x38] sm:$0xff]
    %v3892 = vld [vmem:[#allocation7 + $0x40] sm:$0xff]
    %v3893 = vld [vmem:[#allocation7 + $0x48] sm:$0xff]
    %v3894 = vld [vmem:[#allocation7 + $0x50] sm:$0xff]
    %v3895 = vld [vmem:[#allocation7 + $0x58] sm:$0xff]
    %v3896 = vld [vmem:[#allocation7 + $0x60] sm:$0xff]
    %v3897 = vld [vmem:[#allocation7 + $0x68] sm:$0xff]
    %v3898 = vld [vmem:[#allocation7 + $0x70] sm:$0xff]
    %v3899 = vld [vmem:[#allocation7 + $0x78] sm:$0xff]
    %v3900 = vld [vmem:[#allocation7 + $0x80] sm:$0xff]
    %v3901 = vld [vmem:[#allocation7 + $0x88] sm:$0xff]
    %v3902 = vld [vmem:[#allocation7 + $0x90] sm:$0xff]
    %v3903 = vld [vmem:[#allocation7 + $0x98] sm:$0xff]
    %v3904 = vld [vmem:[#allocation7 + $0xa0] sm:$0xff]
    %v3905 = vld [vmem:[#allocation7 + $0xa8] sm:$0xff]
    %v3906 = vld [vmem:[#allocation7 + $0xb0] sm:$0xff]
    %v3907 = vld [vmem:[#allocation7 + $0xb8] sm:$0xff]
    %v3908 = vld [vmem:[#allocation7 + $0xc0] sm:$0xff]
    %v3909 = vld [vmem:[#allocation7 + $0xc8] sm:$0xff]
    %v3910 = vld [vmem:[#allocation7 + $0xd0] sm:$0xff]
    %v3911 = vld [vmem:[#allocation7 + $0xd8] sm:$0xff]
    %v3912 = vld [vmem:[#allocation7 + $0xe0] sm:$0xff]
    %v3913 = vld [vmem:[#allocation7 + $0xe8] sm:$0xff]
    %v3914 = vld [vmem:[#allocation7 + $0xf0] sm:$0xff]
    %v3915 = vld [vmem:[#allocation7 + $0xf8] sm:$0xff]
    %v3916 = vld [vmem:[#allocation7 + $0x100] sm:$0xff]
    %v3917 = vld [vmem:[#allocation7 + $0x108] sm:$0xff]
    %v3918 = vld [vmem:[#allocation7 + $0x110] sm:$0xff]
    %v3919 = vld [vmem:[#allocation7 + $0x118] sm:$0xff]
    %v3920 = vld [vmem:[#allocation7 + $0x120] sm:$0xff]
    %v3921 = vld [vmem:[#allocation7 + $0x128] sm:$0xff]
    %v3922 = vld [vmem:[#allocation7 + $0x130] sm:$0xff]
    %v3923 = vld [vmem:[#allocation7 + $0x138] sm:$0xff]
    %v3924 = vld [vmem:[#allocation7 + $0x140] sm:$0xff]
    %v3925 = vld [vmem:[#allocation7 + $0x148] sm:$0xff]
    %v3926 = vld [vmem:[#allocation7 + $0x150] sm:$0xff]
    %v3927 = vld [vmem:[#allocation7 + $0x158] sm:$0xff]
    %v3928 = vld [vmem:[#allocation7 + $0x160] sm:$0xff]
    %v3929 = vld [vmem:[#allocation7 + $0x168] sm:$0xff]
    %v3930 = vld [vmem:[#allocation7 + $0x170] sm:$0xff]
    %v3931 = vld [vmem:[#allocation7 + $0x178] sm:$0xff]
    %v3932 = vld [vmem:[#allocation7 + $0x180] sm:$0xff]
    %v3933 = vld [vmem:[#allocation7 + $0x188] sm:$0xff]
    %v3934 = vld [vmem:[#allocation7 + $0x190] sm:$0xff]
    %v3935 = vld [vmem:[#allocation7 + $0x198] sm:$0xff]
    %v3936 = vld [vmem:[#allocation7 + $0x1a0] sm:$0xff]
    %v3937 = vld [vmem:[#allocation7 + $0x1a8] sm:$0xff]
    %v3938 = vld [vmem:[#allocation7 + $0x1b0] sm:$0xff]
    %v3939 = vld [vmem:[#allocation7 + $0x1b8] sm:$0xff]
    %v3940 = vld [vmem:[#allocation7 + $0x1c0] sm:$0xff]
    %v3941 = vld [vmem:[#allocation7 + $0x1c8] sm:$0xff]
    %v3942 = vld [vmem:[#allocation7 + $0x1d0] sm:$0xff]
    %v3943 = vld [vmem:[#allocation7 + $0x1d8] sm:$0xff]
    %v3944 = vld [vmem:[#allocation7 + $0x1e0] sm:$0xff]
    %v3945 = vld [vmem:[#allocation7 + $0x1e8] sm:$0xff]
    %v3946 = vld [vmem:[#allocation7 + $0x1f0] sm:$0xff]
    %v3947 = vld [vmem:[#allocation7 + $0x1f8] sm:$0xff]
    %3948 = vmatprep.subr.mxu0 %v3885
    %3949 = vmatpush1.msra.mxu0 %v3884
    %3950 = vmatprep.subr.mxu0 %v3889
    %3951 = vmatpush1.msra.mxu0 %v3888
    %3952 = vmatprep.subr.mxu0 %v3893
    %3953 = vmatpush1.msra.mxu0 %v3892
    %3954 = vmatprep.subr.mxu0 %v3897
    %3955 = vmatpush1.msra.mxu0 %v3896
    %3956 = vmatprep.subr.mxu0 %v3901
    %3957 = vmatpush1.msra.mxu0 %v3900
    %3958 = vmatprep.subr.mxu0 %v3905
    %3959 = vmatpush1.msra.mxu0 %v3904
    %3960 = vmatprep.subr.mxu0 %v3909
    %3961 = vmatpush1.msra.mxu0 %v3908
    %3962 = vmatprep.subr.mxu0 %v3913
    %3963 = vmatpush1.msra.mxu0 %v3912
    %3964 = vmatprep.subr.mxu0 %v3917
    %3965 = vmatpush1.msra.mxu0 %v3916
    %3966 = vmatprep.subr.mxu0 %v3921
    %3967 = vmatpush1.msra.mxu0 %v3920
    %3968 = vmatprep.subr.mxu0 %v3925
    %3969 = vmatpush1.msra.mxu0 %v3924
    %3970 = vmatprep.subr.mxu0 %v3929
    %3971 = vmatpush1.msra.mxu0 %v3928
    %3972 = vmatprep.subr.mxu0 %v3933
    %3973 = vmatpush1.msra.mxu0 %v3932
    %3974 = vmatprep.subr.mxu0 %v3937
    %3975 = vmatpush1.msra.mxu0 %v3936
    %3976 = vmatprep.subr.mxu0 %v3941
    %3977 = vmatpush1.msra.mxu0 %v3940
    %3978 = vmatprep.subr.mxu0 %v3945
    %3979 = vmatpush1.msra.mxu0 %v3944
    %3980 = vmatprep.subr.mxu0 0.0
    %3981 = vmatpush1.msra.mxu0 0.0
    %3982 = vmatprep.subr.mxu0 0.0
    %3983 = vmatpush1.msra.mxu0 0.0
    %3984 = vmatprep.subr.mxu0 0.0
    %3985 = vmatpush1.msra.mxu0 0.0
    %3986 = vmatprep.subr.mxu0 0.0
    %3987 = vmatpush1.msra.mxu0 0.0
    %3988 = vmatprep.subr.mxu0 0.0
    %3989 = vmatpush1.msra.mxu0 0.0
    %3990 = vmatprep.subr.mxu0 0.0
    %3991 = vmatpush1.msra.mxu0 0.0
    %3992 = vmatprep.subr.mxu0 0.0
    %3993 = vmatpush1.msra.mxu0 0.0
    %3994 = vmatprep.subr.mxu0 0.0
    %3995 = vmatpush1.msra.mxu0 0.0
    %3996 = vmatprep.subr.mxu0 0.0
    %3997 = vmatpush1.msra.mxu0 0.0
    %3998 = vmatprep.subr.mxu0 0.0
    %3999 = vmatpush1.msra.mxu0 0.0
    %4000 = vmatprep.subr.mxu0 0.0
    %4001 = vmatpush1.msra.mxu0 0.0
    %4002 = vmatprep.subr.mxu0 0.0
    %4003 = vmatpush1.msra.mxu0 0.0
    %4004 = vmatprep.subr.mxu0 0.0
    %4005 = vmatpush1.msra.mxu0 0.0
    %4006 = vmatprep.subr.mxu0 0.0
    %4007 = vmatpush1.msra.mxu0 0.0
    %4008 = vmatprep.subr.mxu0 0.0
    %4009 = vmatpush1.msra.mxu0 0.0
    %4010 = vmatprep.subr.mxu0 0.0
    %4011 = vmatpush1.msra.mxu0 0.0
    %4012 = vmatprep.mubr.f32.mxu0 0.0
    %4013 = vmatmul.mubr.f32.gmra.mrb[0].mxu0 %v3883
    %v4014 = vpop.f32.mrb[0].mxu0
    %v4015 = vadd.f32 0.0, %v4014
    %v4016 = vpop.f32.mrb[0].mxu0
    %v4017 = vadd.f32 0.0, %v4016
    %4018 = vdwg.mxu0
    %4019 = vmatprep.subr.mxu0 %v3887
    %4020 = vmatpush1.msra.mxu0 %v3886
    %4021 = vmatprep.subr.mxu0 %v3891
    %4022 = vmatpush1.msra.mxu0 %v3890
    %4023 = vmatprep.subr.mxu0 %v3895
    %4024 = vmatpush1.msra.mxu0 %v3894
    %4025 = vmatprep.subr.mxu0 %v3899
    %4026 = vmatpush1.msra.mxu0 %v3898
    %4027 = vmatprep.subr.mxu0 %v3903
    %4028 = vmatpush1.msra.mxu0 %v3902
    %4029 = vmatprep.subr.mxu0 %v3907
    %4030 = vmatpush1.msra.mxu0 %v3906
    %4031 = vmatprep.subr.mxu0 %v3911
    %4032 = vmatpush1.msra.mxu0 %v3910
    %4033 = vmatprep.subr.mxu0 %v3915
    %4034 = vmatpush1.msra.mxu0 %v3914
    %4035 = vmatprep.subr.mxu0 %v3919
    %4036 = vmatpush1.msra.mxu0 %v3918
    %4037 = vmatprep.subr.mxu0 %v3923
    %4038 = vmatpush1.msra.mxu0 %v3922
    %4039 = vmatprep.subr.mxu0 %v3927
    %4040 = vmatpush1.msra.mxu0 %v3926
    %4041 = vmatprep.subr.mxu0 %v3931
    %4042 = vmatpush1.msra.mxu0 %v3930
    %4043 = vmatprep.subr.mxu0 %v3935
    %4044 = vmatpush1.msra.mxu0 %v3934
    %4045 = vmatprep.subr.mxu0 %v3939
    %4046 = vmatpush1.msra.mxu0 %v3938
    %4047 = vmatprep.subr.mxu0 %v3943
    %4048 = vmatpush1.msra.mxu0 %v3942
    %4049 = vmatprep.subr.mxu0 %v3947
    %4050 = vmatpush1.msra.mxu0 %v3946
    %4051 = vmatprep.subr.mxu0 0.0
    %4052 = vmatpush1.msra.mxu0 0.0
    %4053 = vmatprep.subr.mxu0 0.0
    %4054 = vmatpush1.msra.mxu0 0.0
    %4055 = vmatprep.subr.mxu0 0.0
    %4056 = vmatpush1.msra.mxu0 0.0
    %4057 = vmatprep.subr.mxu0 0.0
    %4058 = vmatpush1.msra.mxu0 0.0
    %4059 = vmatprep.subr.mxu0 0.0
    %4060 = vmatpush1.msra.mxu0 0.0
    %4061 = vmatprep.subr.mxu0 0.0
    %4062 = vmatpush1.msra.mxu0 0.0
    %4063 = vmatprep.subr.mxu0 0.0
    %4064 = vmatpush1.msra.mxu0 0.0
    %4065 = vmatprep.subr.mxu0 0.0
    %4066 = vmatpush1.msra.mxu0 0.0
    %4067 = vmatprep.subr.mxu0 0.0
    %4068 = vmatpush1.msra.mxu0 0.0
    %4069 = vmatprep.subr.mxu0 0.0
    %4070 = vmatpush1.msra.mxu0 0.0
    %4071 = vmatprep.subr.mxu0 0.0
    %4072 = vmatpush1.msra.mxu0 0.0
    %4073 = vmatprep.subr.mxu0 0.0
    %4074 = vmatpush1.msra.mxu0 0.0
    %4075 = vmatprep.subr.mxu0 0.0
    %4076 = vmatpush1.msra.mxu0 0.0
    %4077 = vmatprep.subr.mxu0 0.0
    %4078 = vmatpush1.msra.mxu0 0.0
    %4079 = vmatprep.subr.mxu0 0.0
    %4080 = vmatpush1.msra.mxu0 0.0
    %4081 = vmatprep.subr.mxu0 0.0
    %4082 = vmatpush1.msra.mxu0 0.0
    %4083 = vmatprep.mubr.f32.mxu0 0.0
    %4084 = vmatmul.mubr.f32.gmra.mrb[0].mxu0 %v3883
    %v4085 = vpop.f32.mrb[0].mxu0
    %v4086 = vadd.f32 0.0, %v4085
    %v4087 = vpop.f32.mrb[0].mxu0
    %v4088 = vadd.f32 0.0, %v4087
    %4089 = vdwg.mxu0
    %4094 = vrot.lane.b32.xlu0 %v4015, 17
    %v4095 = vpop.permute.xlu0 %4094
    %4096 = vrot.lane.b32.xlu0 %v4017, 17
    %v4097 = vpop.permute.xlu0 %4096
    %4098 = vrot.lane.b32.xlu0 %v4086, 17
    %v4099 = vpop.permute.xlu0 %4098
    %4100 = vrot.lane.b32.xlu0 %v4088, 17
    %v4101 = vpop.permute.xlu0 %4100
    %v4102 = vsel %vm198, %v4095, %v4097
    %v4103 = vsel %vm198, %v4097, %v4099
    %v4104 = vsel %vm198, %v4099, %v4101
    %v4110 = vsel %vm198, 0.0, %v4095
    %v4111 = vsel %vm198, %v4101, 0.0
    %v4114 = vrot.slane %v4110, 4
    %v4115 = vrot.slane %v4102, 4
    %v4116 = vrot.slane %v4103, 4
    %v4117 = vrot.slane %v4104, 4
    %v4118 = vrot.slane %v4111, 4
    %4119 = vrot.lane.b32.xlu0 %v4114, 1
    %v4120 = vpop.permute.xlu0 %4119
    %4121 = vrot.lane.b32.xlu0 %v4115, 1
    %v4122 = vpop.permute.xlu0 %4121
    %4123 = vrot.lane.b32.xlu0 %v4116, 1
    %v4124 = vpop.permute.xlu0 %4123
    %4125 = vrot.lane.b32.xlu0 %v4117, 1
    %v4126 = vpop.permute.xlu0 %4125
    %4127 = vrot.lane.b32.xlu0 %v4118, 1
    %v4128 = vpop.permute.xlu0 %4127
    %v4129 = vsel %vm268, %v4120, %v4122
    %v4130 = vsel %vm268, %v4122, %v4124
    %v4131 = vsel %vm268, %v4124, %v4126
    %v4132 = vsel %vm268, %v4126, %v4128
    %4138 = vrot.lane.b32.xlu0 %v4110, 16
    %v4139 = vpop.permute.xlu0 %4138
    %4140 = vrot.lane.b32.xlu0 %v4102, 16
    %v4141 = vpop.permute.xlu0 %4140
    %4142 = vrot.lane.b32.xlu0 %v4103, 16
    %v4143 = vpop.permute.xlu0 %4142
    %4144 = vrot.lane.b32.xlu0 %v4104, 16
    %v4145 = vpop.permute.xlu0 %4144
    %4146 = vrot.lane.b32.xlu0 %v4111, 16
    %v4147 = vpop.permute.xlu0 %4146
    %v4148 = vsel %vm346, %v4139, %v4141
    %v4149 = vsel %vm346, %v4141, %v4143
    %v4150 = vsel %vm346, %v4143, %v4145
    %v4151 = vsel %vm346, %v4145, %v4147
    %4157 = vrot.lane.b32.xlu0 %v4114, 17
    %v4158 = vpop.permute.xlu0 %4157
    %4159 = vrot.lane.b32.xlu0 %v4115, 17
    %v4160 = vpop.permute.xlu0 %4159
    %4161 = vrot.lane.b32.xlu0 %v4116, 17
    %v4162 = vpop.permute.xlu0 %4161
    %4163 = vrot.lane.b32.xlu0 %v4117, 17
    %v4164 = vpop.permute.xlu0 %4163
    %v4165 = vsel %vm198, %v4158, %v4160
    %v4166 = vsel %vm198, %v4160, %v4162
    %v4167 = vsel %vm198, %v4162, %v4164
    %v4173 = vsel %vm762, %v4110, %v4120
    %v4174 = vsel %vm762, %v4102, %v4129
    %v4175 = vsel %vm762, %v4103, %v4130
    %v4176 = vsel %vm762, %v4104, %v4131
    %v4177 = vsel %vm762, %v4111, %v4132
    %v4178 = vsel %vm762, %v4139, %v4158
    %v4179 = vsel %vm762, %v4148, %v4165
    %v4180 = vsel %vm762, %v4149, %v4166
    %v4181 = vsel %vm762, %v4150, %v4167
    %v4182 = vsel %vm762, %v4151, %v4164
    %v4183 = vld [vmem:[#allocation5] sm:$0x3]
    %v4184 = vld [vmem:[%s49] sm:$0x3]
    %4186 = vset.pattern.permute.xlu0 0
    %4187 = vperm.xlu0 %4186, %v4184
    %v4188 = vpop.permute.xlu0 %4187
    %4200 = vrot.lane.b32.xlu0 %v4173, 111
    %v4201 = vpop.permute.xlu0 %4200
    %4202 = vrot.lane.b32.xlu0 %v4174, 111
    %v4203 = vpop.permute.xlu0 %4202
    %4204 = vrot.lane.b32.xlu0 %v4175, 111
    %v4205 = vpop.permute.xlu0 %4204
    %4206 = vrot.lane.b32.xlu0 %v4176, 111
    %v4207 = vpop.permute.xlu0 %4206
    %4208 = vrot.lane.b32.xlu0 %v4177, 111
    %v4209 = vpop.permute.xlu0 %4208
    %4210 = vrot.lane.b32.xlu0 %v4178, 111
    %v4211 = vpop.permute.xlu0 %4210
    %4212 = vrot.lane.b32.xlu0 %v4179, 111
    %v4213 = vpop.permute.xlu0 %4212
    %4214 = vrot.lane.b32.xlu0 %v4180, 111
    %v4215 = vpop.permute.xlu0 %4214
    %4216 = vrot.lane.b32.xlu0 %v4181, 111
    %v4217 = vpop.permute.xlu0 %4216
    %4218 = vrot.lane.b32.xlu0 %v4182, 111
    %v4219 = vpop.permute.xlu0 %4218
    %v4220 = vsel %vm651, %v4201, %v4203
    %v4221 = vsel %vm651, %v4203, %v4205
    %v4222 = vsel %vm651, %v4205, %v4207
    %v4223 = vsel %vm651, %v4207, %v4209
    %v4224 = vsel %vm651, %v4211, %v4213
    %v4225 = vsel %vm651, %v4213, %v4215
    %v4226 = vsel %vm651, %v4215, %v4217
    %v4227 = vsel %vm651, %v4217, %v4219
    %v4237 = vsel %vm346, %v4183, 0
    %4239 = vmatprep.subr.mxu0 %v4221
    %4240 = vmatpush1.msra.mxu0 %v4220
    %4241 = vmatprep.subr.mxu0 %v4225
    %4242 = vmatpush1.msra.mxu0 %v4224
    %4243 = vmatprep.subr.mxu0 0.0
    %4244 = vmatpush1.msra.mxu0 0.0
    %4245 = vmatprep.subr.mxu0 0.0
    %4246 = vmatpush1.msra.mxu0 0.0
    %4247 = vmatprep.subr.mxu0 0.0
    %4248 = vmatpush1.msra.mxu0 0.0
    %4249 = vmatprep.subr.mxu0 0.0
    %4250 = vmatpush1.msra.mxu0 0.0
    %4251 = vmatprep.subr.mxu0 0.0
    %4252 = vmatpush1.msra.mxu0 0.0
    %4253 = vmatprep.subr.mxu0 0.0
    %4254 = vmatpush1.msra.mxu0 0.0
    %4255 = vmatprep.subr.mxu0 0.0
    %4256 = vmatpush1.msra.mxu0 0.0
    %4257 = vmatprep.subr.mxu0 0.0
    %4258 = vmatpush1.msra.mxu0 0.0
    %4259 = vmatprep.subr.mxu0 0.0
    %4260 = vmatpush1.msra.mxu0 0.0
    %4261 = vmatprep.subr.mxu0 0.0
    %4262 = vmatpush1.msra.mxu0 0.0
    %4263 = vmatprep.subr.mxu0 0.0
    %4264 = vmatpush1.msra.mxu0 0.0
    %4265 = vmatprep.subr.mxu0 0.0
    %4266 = vmatpush1.msra.mxu0 0.0
    %4267 = vmatprep.subr.mxu0 0.0
    %4268 = vmatpush1.msra.mxu0 0.0
    %4269 = vmatprep.subr.mxu0 0.0
    %4270 = vmatpush1.msra.mxu0 0.0
    %4271 = vmatprep.subr.mxu0 0.0
    %4272 = vmatpush1.msra.mxu0 0.0
    %4273 = vmatprep.subr.mxu0 0.0
    %4274 = vmatpush1.msra.mxu0 0.0
    %4275 = vmatprep.subr.mxu0 0.0
    %4276 = vmatpush1.msra.mxu0 0.0
    %4277 = vmatprep.subr.mxu0 0.0
    %4278 = vmatpush1.msra.mxu0 0.0
    %4279 = vmatprep.subr.mxu0 0.0
    %4280 = vmatpush1.msra.mxu0 0.0
    %4281 = vmatprep.subr.mxu0 0.0
    %4282 = vmatpush1.msra.mxu0 0.0
    %4283 = vmatprep.subr.mxu0 0.0
    %4284 = vmatpush1.msra.mxu0 0.0
    %4285 = vmatprep.subr.mxu0 0.0
    %4286 = vmatpush1.msra.mxu0 0.0
    %4287 = vmatprep.subr.mxu0 0.0
    %4288 = vmatpush1.msra.mxu0 0.0
    %4289 = vmatprep.subr.mxu0 0.0
    %4290 = vmatpush1.msra.mxu0 0.0
    %4291 = vmatprep.subr.mxu0 0.0
    %4292 = vmatpush1.msra.mxu0 0.0
    %4293 = vmatprep.subr.mxu0 0.0
    %4294 = vmatpush1.msra.mxu0 0.0
    %4295 = vmatprep.subr.mxu0 0.0
    %4296 = vmatpush1.msra.mxu0 0.0
    %4297 = vmatprep.subr.mxu0 0.0
    %4298 = vmatpush1.msra.mxu0 0.0
    %4299 = vmatprep.subr.mxu0 0.0
    %4300 = vmatpush1.msra.mxu0 0.0
    %4301 = vmatprep.subr.mxu0 0.0
    %4302 = vmatpush1.msra.mxu0 0.0
    %4303 = vmatprep.mubr.f32.mxu0 0.0
    %4304 = vmatmul.mubr.f32.gmra.mrb[0].mxu0 %v4237
    %v4305 = vpop.f32.mrb[0].mxu0
    %v4306 = vadd.f32 %v4188, %v4305
    %v4307 = vpop.f32.mrb[0].mxu0
    %v4308 = vadd.f32 %v4188, %v4307
    %4309 = vdwg.mxu0
    %4310 = vmatprep.subr.mxu0 %v4223
    %4311 = vmatpush1.msra.mxu0 %v4222
    %4312 = vmatprep.subr.mxu0 %v4227
    %4313 = vmatpush1.msra.mxu0 %v4226
    %4314 = vmatprep.subr.mxu0 0.0
    %4315 = vmatpush1.msra.mxu0 0.0
    %4316 = vmatprep.subr.mxu0 0.0
    %4317 = vmatpush1.msra.mxu0 0.0
    %4318 = vmatprep.subr.mxu0 0.0
    %4319 = vmatpush1.msra.mxu0 0.0
    %4320 = vmatprep.subr.mxu0 0.0
    %4321 = vmatpush1.msra.mxu0 0.0
    %4322 = vmatprep.subr.mxu0 0.0
    %4323 = vmatpush1.msra.mxu0 0.0
    %4324 = vmatprep.subr.mxu0 0.0
    %4325 = vmatpush1.msra.mxu0 0.0
    %4326 = vmatprep.subr.mxu0 0.0
    %4327 = vmatpush1.msra.mxu0 0.0
    %4328 = vmatprep.subr.mxu0 0.0
    %4329 = vmatpush1.msra.mxu0 0.0
    %4330 = vmatprep.subr.mxu0 0.0
    %4331 = vmatpush1.msra.mxu0 0.0
    %4332 = vmatprep.subr.mxu0 0.0
    %4333 = vmatpush1.msra.mxu0 0.0
    %4334 = vmatprep.subr.mxu0 0.0
    %4335 = vmatpush1.msra.mxu0 0.0
    %4336 = vmatprep.subr.mxu0 0.0
    %4337 = vmatpush1.msra.mxu0 0.0
    %4338 = vmatprep.subr.mxu0 0.0
    %4339 = vmatpush1.msra.mxu0 0.0
    %4340 = vmatprep.subr.mxu0 0.0
    %4341 = vmatpush1.msra.mxu0 0.0
    %4342 = vmatprep.subr.mxu0 0.0
    %4343 = vmatpush1.msra.mxu0 0.0
    %4344 = vmatprep.subr.mxu0 0.0
    %4345 = vmatpush1.msra.mxu0 0.0
    %4346 = vmatprep.subr.mxu0 0.0
    %4347 = vmatpush1.msra.mxu0 0.0
    %4348 = vmatprep.subr.mxu0 0.0
    %4349 = vmatpush1.msra.mxu0 0.0
    %4350 = vmatprep.subr.mxu0 0.0
    %4351 = vmatpush1.msra.mxu0 0.0
    %4352 = vmatprep.subr.mxu0 0.0
    %4353 = vmatpush1.msra.mxu0 0.0
    %4354 = vmatprep.subr.mxu0 0.0
    %4355 = vmatpush1.msra.mxu0 0.0
    %4356 = vmatprep.subr.mxu0 0.0
    %4357 = vmatpush1.msra.mxu0 0.0
    %4358 = vmatprep.subr.mxu0 0.0
    %4359 = vmatpush1.msra.mxu0 0.0
    %4360 = vmatprep.subr.mxu0 0.0
    %4361 = vmatpush1.msra.mxu0 0.0
    %4362 = vmatprep.subr.mxu0 0.0
    %4363 = vmatpush1.msra.mxu0 0.0
    %4364 = vmatprep.subr.mxu0 0.0
    %4365 = vmatpush1.msra.mxu0 0.0
    %4366 = vmatprep.subr.mxu0 0.0
    %4367 = vmatpush1.msra.mxu0 0.0
    %4368 = vmatprep.subr.mxu0 0.0
    %4369 = vmatpush1.msra.mxu0 0.0
    %4370 = vmatprep.subr.mxu0 0.0
    %4371 = vmatpush1.msra.mxu0 0.0
    %4372 = vmatprep.subr.mxu0 0.0
    %4373 = vmatpush1.msra.mxu0 0.0
    %4374 = vmatprep.mubr.f32.mxu0 0.0
    %4375 = vmatmul.mubr.f32.gmra.mrb[0].mxu0 %v4237
    %v4376 = vpop.f32.mrb[0].mxu0
    %v4377 = vadd.f32 %v4188, %v4376
    %v4378 = vpop.f32.mrb[0].mxu0
    %v4379 = vadd.f32 %v4188, %v4378
    %4380 = vdwg.mxu0
    %4385 = vrot.lane.b32.xlu0 %v4306, 17
    %v4386 = vpop.permute.xlu0 %4385
    %4387 = vrot.lane.b32.xlu0 %v4308, 17
    %v4388 = vpop.permute.xlu0 %4387
    %4389 = vrot.lane.b32.xlu0 %v4377, 17
    %v4390 = vpop.permute.xlu0 %4389
    %4391 = vrot.lane.b32.xlu0 %v4379, 17
    %v4392 = vpop.permute.xlu0 %4391
    %v4393 = vsel %vm198, %v4386, %v4388
    %v4394 = vsel %vm198, %v4388, %v4390
    %v4395 = vsel %vm198, %v4390, %v4392
    %v4401 = vsel %vm198, 0.0, %v4386
    %v4402 = vsel %vm198, %v4392, 0.0
    %v4403 = vmul.f32 %v4401, %v222
    %v4404 = vmul.f32 %v4393, %v226
    %v4405 = vmul.f32 %v4394, %v230
    %v4406 = vmul.f32 %v4395, %v234
    %v4407 = vmul.f32 %v994, %v222
    %v4408 = vmul.f32 %v986, %v226
    %v4409 = vmul.f32 %v987, %v230
    %v4410 = vmul.f32 %v988, %v234
    %v4411 = vmul.f32 %v4401, %v261
    %v4412 = vmul.f32 %v4393, %v269
    %v4413 = vmul.f32 %v4394, %v270
    %v4414 = vmul.f32 %v4395, %v271
    %v4415 = vmul.f32 %v4402, %v267
    %v4416 = vmul.f32 %v994, %v261
    %v4417 = vmul.f32 %v986, %v269
    %v4418 = vmul.f32 %v987, %v270
    %v4419 = vmul.f32 %v988, %v271
    %v4420 = vmul.f32 %v995, %v267
    %v4421 = vmul.f32 %v4401, %v300
    %v4422 = vmul.f32 %v4393, %v308
    %v4423 = vmul.f32 %v4394, %v309
    %v4424 = vmul.f32 %v4395, %v310
    %v4425 = vmul.f32 %v4402, %v306
    %v4426 = vmul.f32 %v994, %v300
    %v4427 = vmul.f32 %v986, %v308
    %v4428 = vmul.f32 %v987, %v309
    %v4429 = vmul.f32 %v988, %v310
    %v4430 = vmul.f32 %v995, %v306
    %v4431 = vmul.f32 %v4401, %v339
    %v4432 = vmul.f32 %v4393, %v347
    %v4433 = vmul.f32 %v4394, %v348
    %v4434 = vmul.f32 %v4395, %v349
    %v4435 = vmul.f32 %v4402, %v345
    %v4436 = vmul.f32 %v994, %v339
    %v4437 = vmul.f32 %v986, %v347
    %v4438 = vmul.f32 %v987, %v348
    %v4439 = vmul.f32 %v988, %v349
    %v4440 = vmul.f32 %v995, %v345
    %v4441 = vmul.f32 %v4401, %v378
    %v4442 = vmul.f32 %v4393, %v385
    %v4443 = vmul.f32 %v4394, %v386
    %v4444 = vmul.f32 %v4395, %v387
    %v4445 = vmul.f32 %v4402, %v384
    %v4446 = vmul.f32 %v994, %v378
    %v4447 = vmul.f32 %v986, %v385
    %v4448 = vmul.f32 %v987, %v386
    %v4449 = vmul.f32 %v988, %v387
    %v4450 = vmul.f32 %v995, %v384
    %v4451 = vmul.f32 %v4401, %v416
    %v4452 = vmul.f32 %v4393, %v424
    %v4453 = vmul.f32 %v4394, %v425
    %v4454 = vmul.f32 %v4395, %v426
    %v4455 = vmul.f32 %v4402, %v422
    %v4456 = vmul.f32 %v994, %v416
    %v4457 = vmul.f32 %v986, %v424
    %v4458 = vmul.f32 %v987, %v425
    %v4459 = vmul.f32 %v988, %v426
    %v4460 = vmul.f32 %v995, %v422
    %v4461 = vmul.f32 %v4401, %v455
    %v4462 = vmul.f32 %v4393, %v463
    %v4463 = vmul.f32 %v4394, %v464
    %v4464 = vmul.f32 %v4395, %v465
    %v4465 = vmul.f32 %v4402, %v461
    %v4466 = vmul.f32 %v994, %v455
    %v4467 = vmul.f32 %v986, %v463
    %v4468 = vmul.f32 %v987, %v464
    %v4469 = vmul.f32 %v988, %v465
    %v4470 = vmul.f32 %v995, %v461
    %v4471 = vmul.f32 %v4401, %v494
    %v4472 = vmul.f32 %v4393, %v502
    %v4473 = vmul.f32 %v4394, %v503
    %v4474 = vmul.f32 %v4395, %v504
    %v4475 = vmul.f32 %v4402, %v500
    %v4476 = vmul.f32 %v994, %v494
    %v4477 = vmul.f32 %v986, %v502
    %v4478 = vmul.f32 %v987, %v503
    %v4479 = vmul.f32 %v988, %v504
    %v4480 = vmul.f32 %v995, %v500
    %v4481 = vmul.f32 %v4401, %v533
    %v4482 = vmul.f32 %v4393, %v541
    %v4483 = vmul.f32 %v4394, %v542
    %v4484 = vmul.f32 %v4395, %v543
    %v4485 = vmul.f32 %v4402, %v539
    %v4486 = vmul.f32 %v994, %v533
    %v4487 = vmul.f32 %v986, %v541
    %v4488 = vmul.f32 %v987, %v542
    %v4489 = vmul.f32 %v988, %v543
    %v4490 = vmul.f32 %v995, %v539
    %v4495 = vrot.slane %v4407, 6
    %v4496 = vrot.slane %v4408, 6
    %v4497 = vrot.slane %v4409, 6
    %v4498 = vrot.slane %v4410, 6
    %v4508 = vrot.slane %v4411, 4
    %v4509 = vrot.slane %v4412, 4
    %v4510 = vrot.slane %v4413, 4
    %v4511 = vrot.slane %v4414, 4
    %v4512 = vrot.slane %v4415, 4
    %4513 = vrot.lane.b32.xlu0 %v4508, 127
    %v4514 = vpop.permute.xlu0 %4513
    %4515 = vrot.lane.b32.xlu0 %v4509, 127
    %v4516 = vpop.permute.xlu0 %4515
    %4517 = vrot.lane.b32.xlu0 %v4510, 127
    %v4518 = vpop.permute.xlu0 %4517
    %4519 = vrot.lane.b32.xlu0 %v4511, 127
    %v4520 = vpop.permute.xlu0 %4519
    %4521 = vrot.lane.b32.xlu0 %v4512, 127
    %v4522 = vpop.permute.xlu0 %4521
    %v4523 = vsel %vm574, %v4514, %v4516
    %v4524 = vsel %vm574, %v4516, %v4518
    %v4525 = vsel %vm574, %v4518, %v4520
    %v4526 = vsel %vm574, %v4520, %v4522
    %v4536 = vrot.slane %v4416, 2
    %v4537 = vrot.slane %v4417, 2
    %v4538 = vrot.slane %v4418, 2
    %v4539 = vrot.slane %v4419, 2
    %v4540 = vrot.slane %v4420, 2
    %4541 = vrot.lane.b32.xlu0 %v4536, 127
    %v4542 = vpop.permute.xlu0 %4541
    %4543 = vrot.lane.b32.xlu0 %v4537, 127
    %v4544 = vpop.permute.xlu0 %4543
    %4545 = vrot.lane.b32.xlu0 %v4538, 127
    %v4546 = vpop.permute.xlu0 %4545
    %4547 = vrot.lane.b32.xlu0 %v4539, 127
    %v4548 = vpop.permute.xlu0 %4547
    %4549 = vrot.lane.b32.xlu0 %v4540, 127
    %v4550 = vpop.permute.xlu0 %4549
    %v4551 = vsel %vm574, %v4542, %v4544
    %v4552 = vsel %vm574, %v4544, %v4546
    %v4553 = vsel %vm574, %v4546, %v4548
    %v4554 = vsel %vm574, %v4548, %v4550
    %4564 = vrot.lane.b32.xlu0 %v4421, 126
    %v4565 = vpop.permute.xlu0 %4564
    %4566 = vrot.lane.b32.xlu0 %v4422, 126
    %v4567 = vpop.permute.xlu0 %4566
    %4568 = vrot.lane.b32.xlu0 %v4423, 126
    %v4569 = vpop.permute.xlu0 %4568
    %4570 = vrot.lane.b32.xlu0 %v4424, 126
    %v4571 = vpop.permute.xlu0 %4570
    %4572 = vrot.lane.b32.xlu0 %v4425, 126
    %v4573 = vpop.permute.xlu0 %4572
    %v4574 = vsel %vm598, %v4565, %v4567
    %v4575 = vsel %vm598, %v4567, %v4569
    %v4576 = vsel %vm598, %v4569, %v4571
    %v4577 = vsel %vm598, %v4571, %v4573
    %v4587 = vrot.slane %v4426, 6
    %v4588 = vrot.slane %v4427, 6
    %v4589 = vrot.slane %v4428, 6
    %v4590 = vrot.slane %v4429, 6
    %v4591 = vrot.slane %v4430, 6
    %4592 = vrot.lane.b32.xlu0 %v4587, 126
    %v4593 = vpop.permute.xlu0 %4592
    %4594 = vrot.lane.b32.xlu0 %v4588, 126
    %v4595 = vpop.permute.xlu0 %4594
    %4596 = vrot.lane.b32.xlu0 %v4589, 126
    %v4597 = vpop.permute.xlu0 %4596
    %4598 = vrot.lane.b32.xlu0 %v4590, 126
    %v4599 = vpop.permute.xlu0 %4598
    %4600 = vrot.lane.b32.xlu0 %v4591, 126
    %v4601 = vpop.permute.xlu0 %4600
    %v4602 = vsel %vm598, %v4593, %v4595
    %v4603 = vsel %vm598, %v4595, %v4597
    %v4604 = vsel %vm598, %v4597, %v4599
    %v4605 = vsel %vm598, %v4599, %v4601
    %v4615 = vrot.slane %v4431, 4
    %v4616 = vrot.slane %v4432, 4
    %v4617 = vrot.slane %v4433, 4
    %v4618 = vrot.slane %v4434, 4
    %v4619 = vrot.slane %v4435, 4
    %4620 = vrot.lane.b32.xlu0 %v4615, 112
    %v4621 = vpop.permute.xlu0 %4620
    %4622 = vrot.lane.b32.xlu0 %v4616, 112
    %v4623 = vpop.permute.xlu0 %4622
    %4624 = vrot.lane.b32.xlu0 %v4617, 112
    %v4625 = vpop.permute.xlu0 %4624
    %4626 = vrot.lane.b32.xlu0 %v4618, 112
    %v4627 = vpop.permute.xlu0 %4626
    %4628 = vrot.lane.b32.xlu0 %v4619, 112
    %v4629 = vpop.permute.xlu0 %4628
    %v4630 = vsel %vm627, %v4621, %v4623
    %v4631 = vsel %vm627, %v4623, %v4625
    %v4632 = vsel %vm627, %v4625, %v4627
    %v4633 = vsel %vm627, %v4627, %v4629
    %v4643 = vrot.slane %v4436, 2
    %v4644 = vrot.slane %v4437, 2
    %v4645 = vrot.slane %v4438, 2
    %v4646 = vrot.slane %v4439, 2
    %v4647 = vrot.slane %v4440, 2
    %4648 = vrot.lane.b32.xlu0 %v4643, 112
    %v4649 = vpop.permute.xlu0 %4648
    %4650 = vrot.lane.b32.xlu0 %v4644, 112
    %v4651 = vpop.permute.xlu0 %4650
    %4652 = vrot.lane.b32.xlu0 %v4645, 112
    %v4653 = vpop.permute.xlu0 %4652
    %4654 = vrot.lane.b32.xlu0 %v4646, 112
    %v4655 = vpop.permute.xlu0 %4654
    %4656 = vrot.lane.b32.xlu0 %v4647, 112
    %v4657 = vpop.permute.xlu0 %4656
    %v4658 = vsel %vm627, %v4649, %v4651
    %v4659 = vsel %vm627, %v4651, %v4653
    %v4660 = vsel %vm627, %v4653, %v4655
    %v4661 = vsel %vm627, %v4655, %v4657
    %4671 = vrot.lane.b32.xlu0 %v4441, 111
    %v4672 = vpop.permute.xlu0 %4671
    %4673 = vrot.lane.b32.xlu0 %v4442, 111
    %v4674 = vpop.permute.xlu0 %4673
    %4675 = vrot.lane.b32.xlu0 %v4443, 111
    %v4676 = vpop.permute.xlu0 %4675
    %4677 = vrot.lane.b32.xlu0 %v4444, 111
    %v4678 = vpop.permute.xlu0 %4677
    %4679 = vrot.lane.b32.xlu0 %v4445, 111
    %v4680 = vpop.permute.xlu0 %4679
    %v4681 = vsel %vm651, %v4672, %v4674
    %v4682 = vsel %vm651, %v4674, %v4676
    %v4683 = vsel %vm651, %v4676, %v4678
    %v4684 = vsel %vm651, %v4678, %v4680
    %v4694 = vrot.slane %v4446, 6
    %v4695 = vrot.slane %v4447, 6
    %v4696 = vrot.slane %v4448, 6
    %v4697 = vrot.slane %v4449, 6
    %v4698 = vrot.slane %v4450, 6
    %4699 = vrot.lane.b32.xlu0 %v4694, 111
    %v4700 = vpop.permute.xlu0 %4699
    %4701 = vrot.lane.b32.xlu0 %v4695, 111
    %v4702 = vpop.permute.xlu0 %4701
    %4703 = vrot.lane.b32.xlu0 %v4696, 111
    %v4704 = vpop.permute.xlu0 %4703
    %4705 = vrot.lane.b32.xlu0 %v4697, 111
    %v4706 = vpop.permute.xlu0 %4705
    %4707 = vrot.lane.b32.xlu0 %v4698, 111
    %v4708 = vpop.permute.xlu0 %4707
    %v4709 = vsel %vm651, %v4700, %v4702
    %v4710 = vsel %vm651, %v4702, %v4704
    %v4711 = vsel %vm651, %v4704, %v4706
    %v4712 = vsel %vm651, %v4706, %v4708
    %v4722 = vrot.slane %v4451, 4
    %v4723 = vrot.slane %v4452, 4
    %v4724 = vrot.slane %v4453, 4
    %v4725 = vrot.slane %v4454, 4
    %v4726 = vrot.slane %v4455, 4
    %4727 = vrot.lane.b32.xlu0 %v4722, 110
    %v4728 = vpop.permute.xlu0 %4727
    %4729 = vrot.lane.b32.xlu0 %v4723, 110
    %v4730 = vpop.permute.xlu0 %4729
    %4731 = vrot.lane.b32.xlu0 %v4724, 110
    %v4732 = vpop.permute.xlu0 %4731
    %4733 = vrot.lane.b32.xlu0 %v4725, 110
    %v4734 = vpop.permute.xlu0 %4733
    %4735 = vrot.lane.b32.xlu0 %v4726, 110
    %v4736 = vpop.permute.xlu0 %4735
    %v4737 = vsel %vm680, %v4728, %v4730
    %v4738 = vsel %vm680, %v4730, %v4732
    %v4739 = vsel %vm680, %v4732, %v4734
    %v4740 = vsel %vm680, %v4734, %v4736
    %v4750 = vrot.slane %v4456, 2
    %v4751 = vrot.slane %v4457, 2
    %v4752 = vrot.slane %v4458, 2
    %v4753 = vrot.slane %v4459, 2
    %v4754 = vrot.slane %v4460, 2
    %4755 = vrot.lane.b32.xlu0 %v4750, 110
    %v4756 = vpop.permute.xlu0 %4755
    %4757 = vrot.lane.b32.xlu0 %v4751, 110
    %v4758 = vpop.permute.xlu0 %4757
    %4759 = vrot.lane.b32.xlu0 %v4752, 110
    %v4760 = vpop.permute.xlu0 %4759
    %4761 = vrot.lane.b32.xlu0 %v4753, 110
    %v4762 = vpop.permute.xlu0 %4761
    %4763 = vrot.lane.b32.xlu0 %v4754, 110
    %v4764 = vpop.permute.xlu0 %4763
    %v4765 = vsel %vm680, %v4756, %v4758
    %v4766 = vsel %vm680, %v4758, %v4760
    %v4767 = vsel %vm680, %v4760, %v4762
    %v4768 = vsel %vm680, %v4762, %v4764
    %4778 = vrot.lane.b32.xlu0 %v4461, 96
    %v4779 = vpop.permute.xlu0 %4778
    %4780 = vrot.lane.b32.xlu0 %v4462, 96
    %v4781 = vpop.permute.xlu0 %4780
    %4782 = vrot.lane.b32.xlu0 %v4463, 96
    %v4783 = vpop.permute.xlu0 %4782
    %4784 = vrot.lane.b32.xlu0 %v4464, 96
    %v4785 = vpop.permute.xlu0 %4784
    %4786 = vrot.lane.b32.xlu0 %v4465, 96
    %v4787 = vpop.permute.xlu0 %4786
    %v4788 = vsel %vm704, %v4779, %v4781
    %v4789 = vsel %vm704, %v4781, %v4783
    %v4790 = vsel %vm704, %v4783, %v4785
    %v4791 = vsel %vm704, %v4785, %v4787
    %v4801 = vrot.slane %v4466, 6
    %v4802 = vrot.slane %v4467, 6
    %v4803 = vrot.slane %v4468, 6
    %v4804 = vrot.slane %v4469, 6
    %v4805 = vrot.slane %v4470, 6
    %4806 = vrot.lane.b32.xlu0 %v4801, 96
    %v4807 = vpop.permute.xlu0 %4806
    %4808 = vrot.lane.b32.xlu0 %v4802, 96
    %v4809 = vpop.permute.xlu0 %4808
    %4810 = vrot.lane.b32.xlu0 %v4803, 96
    %v4811 = vpop.permute.xlu0 %4810
    %4812 = vrot.lane.b32.xlu0 %v4804, 96
    %v4813 = vpop.permute.xlu0 %4812
    %4814 = vrot.lane.b32.xlu0 %v4805, 96
    %v4815 = vpop.permute.xlu0 %4814
    %v4816 = vsel %vm704, %v4807, %v4809
    %v4817 = vsel %vm704, %v4809, %v4811
    %v4818 = vsel %vm704, %v4811, %v4813
    %v4819 = vsel %vm704, %v4813, %v4815
    %v4829 = vrot.slane %v4471, 4
    %v4830 = vrot.slane %v4472, 4
    %v4831 = vrot.slane %v4473, 4
    %v4832 = vrot.slane %v4474, 4
    %v4833 = vrot.slane %v4475, 4
    %4834 = vrot.lane.b32.xlu0 %v4829, 95
    %v4835 = vpop.permute.xlu0 %4834
    %4836 = vrot.lane.b32.xlu0 %v4830, 95
    %v4837 = vpop.permute.xlu0 %4836
    %4838 = vrot.lane.b32.xlu0 %v4831, 95
    %v4839 = vpop.permute.xlu0 %4838
    %4840 = vrot.lane.b32.xlu0 %v4832, 95
    %v4841 = vpop.permute.xlu0 %4840
    %4842 = vrot.lane.b32.xlu0 %v4833, 95
    %v4843 = vpop.permute.xlu0 %4842
    %v4844 = vsel %vm733, %v4835, %v4837
    %v4845 = vsel %vm733, %v4837, %v4839
    %v4846 = vsel %vm733, %v4839, %v4841
    %v4847 = vsel %vm733, %v4841, %v4843
    %v4857 = vrot.slane %v4476, 2
    %v4858 = vrot.slane %v4477, 2
    %v4859 = vrot.slane %v4478, 2
    %v4860 = vrot.slane %v4479, 2
    %v4861 = vrot.slane %v4480, 2
    %4862 = vrot.lane.b32.xlu0 %v4857, 95
    %v4863 = vpop.permute.xlu0 %4862
    %4864 = vrot.lane.b32.xlu0 %v4858, 95
    %v4865 = vpop.permute.xlu0 %4864
    %4866 = vrot.lane.b32.xlu0 %v4859, 95
    %v4867 = vpop.permute.xlu0 %4866
    %4868 = vrot.lane.b32.xlu0 %v4860, 95
    %v4869 = vpop.permute.xlu0 %4868
    %4870 = vrot.lane.b32.xlu0 %v4861, 95
    %v4871 = vpop.permute.xlu0 %4870
    %v4872 = vsel %vm733, %v4863, %v4865
    %v4873 = vsel %vm733, %v4865, %v4867
    %v4874 = vsel %vm733, %v4867, %v4869
    %v4875 = vsel %vm733, %v4869, %v4871
    %v4880 = vsel %vm934, %v4403, %v4495
    %v4881 = vsel %vm934, %v4404, %v4496
    %v4882 = vsel %vm934, %v4405, %v4497
    %v4883 = vsel %vm934, %v4406, %v4498
    %v4884 = vsel %vm762, %v4880, %v4523
    %v4885 = vsel %vm762, %v4881, %v4524
    %v4886 = vsel %vm762, %v4882, %v4525
    %v4887 = vsel %vm762, %v4883, %v4526
    %v4888 = vsel %vm1461, %v4884, %v4551
    %v4889 = vsel %vm1461, %v4885, %v4552
    %v4890 = vsel %vm1461, %v4886, %v4553
    %v4891 = vsel %vm1461, %v4887, %v4554
    %v4892 = vsel %vm934, %v4574, %v4602
    %v4893 = vsel %vm934, %v4575, %v4603
    %v4894 = vsel %vm934, %v4576, %v4604
    %v4895 = vsel %vm934, %v4577, %v4605
    %v4896 = vsel %vm762, %v4892, %v4630
    %v4897 = vsel %vm762, %v4893, %v4631
    %v4898 = vsel %vm762, %v4894, %v4632
    %v4899 = vsel %vm762, %v4895, %v4633
    %v4900 = vsel %vm1461, %v4896, %v4658
    %v4901 = vsel %vm1461, %v4897, %v4659
    %v4902 = vsel %vm1461, %v4898, %v4660
    %v4903 = vsel %vm1461, %v4899, %v4661
    %v4904 = vsel %vm934, %v4681, %v4709
    %v4905 = vsel %vm934, %v4682, %v4710
    %v4906 = vsel %vm934, %v4683, %v4711
    %v4907 = vsel %vm934, %v4684, %v4712
    %v4908 = vsel %vm762, %v4904, %v4737
    %v4909 = vsel %vm762, %v4905, %v4738
    %v4910 = vsel %vm762, %v4906, %v4739
    %v4911 = vsel %vm762, %v4907, %v4740
    %v4912 = vsel %vm1461, %v4908, %v4765
    %v4913 = vsel %vm1461, %v4909, %v4766
    %v4914 = vsel %vm1461, %v4910, %v4767
    %v4915 = vsel %vm1461, %v4911, %v4768
    %v4916 = vsel %vm934, %v4788, %v4816
    %v4917 = vsel %vm934, %v4789, %v4817
    %v4918 = vsel %vm934, %v4790, %v4818
    %v4919 = vsel %vm934, %v4791, %v4819
    %v4920 = vsel %vm762, %v4916, %v4844
    %v4921 = vsel %vm762, %v4917, %v4845
    %v4922 = vsel %vm762, %v4918, %v4846
    %v4923 = vsel %vm762, %v4919, %v4847
    %v4924 = vsel %vm1461, %v4920, %v4872
    %v4925 = vsel %vm1461, %v4921, %v4873
    %v4926 = vsel %vm1461, %v4922, %v4874
    %v4927 = vsel %vm1461, %v4923, %v4875
    %v4933 = vrot.slane %v4486, 6
    %v4934 = vrot.slane %v4487, 6
    %v4935 = vrot.slane %v4488, 6
    %v4936 = vrot.slane %v4489, 6
    %v4937 = vrot.slane %v4490, 6
    %v4943 = vsel %vm934, %v4481, %v4933
    %v4944 = vsel %vm934, %v4482, %v4934
    %v4945 = vsel %vm934, %v4483, %v4935
    %v4946 = vsel %vm934, %v4484, %v4936
    %v4947 = vsel %vm934, %v4485, %v4937
    %4953 = vrot.lane.b32.xlu0 %v4943, 94
    %v4954 = vpop.permute.xlu0 %4953
    %4955 = vrot.lane.b32.xlu0 %v4944, 94
    %v4956 = vpop.permute.xlu0 %4955
    %4957 = vrot.lane.b32.xlu0 %v4945, 94
    %v4958 = vpop.permute.xlu0 %4957
    %4959 = vrot.lane.b32.xlu0 %v4946, 94
    %v4960 = vpop.permute.xlu0 %4959
    %4961 = vrot.lane.b32.xlu0 %v4947, 94
    %v4962 = vpop.permute.xlu0 %4961
    %v4963 = vsel %vm757, %v4954, %v4956
    %v4964 = vsel %vm757, %v4956, %v4958
    %v4965 = vsel %vm757, %v4958, %v4960
    %v4966 = vsel %vm757, %v4960, %v4962
    %v4967 = vld [vmem:[#allocation8] sm:$0x3]
    %v4969 = vsel %vm780, %v4967, 0
    %v4971 = vsel %vm762, %v4963, 0
    %v4973 = vsel %vm762, %v4964, 0
    %v4975 = vsel %vm762, %v4965, 0
    %v4977 = vsel %vm762, %v4966, 0
    %4979 = vmatprep.subr.mxu0 %v4889
    %4980 = vmatpush1.msra.mxu0 %v4888
    %4981 = vmatprep.subr.mxu0 %v4901
    %4982 = vmatpush1.msra.mxu0 %v4900
    %4983 = vmatprep.subr.mxu0 %v4913
    %4984 = vmatpush1.msra.mxu0 %v4912
    %4985 = vmatprep.subr.mxu0 %v4925
    %4986 = vmatpush1.msra.mxu0 %v4924
    %4987 = vmatprep.subr.mxu0 %v4973
    %4988 = vmatpush1.msra.mxu0 %v4971
    %4989 = vmatprep.subr.mxu0 0.0
    %4990 = vmatpush1.msra.mxu0 0.0
    %4991 = vmatprep.subr.mxu0 0.0
    %4992 = vmatpush1.msra.mxu0 0.0
    %4993 = vmatprep.subr.mxu0 0.0
    %4994 = vmatpush1.msra.mxu0 0.0
    %4995 = vmatprep.subr.mxu0 0.0
    %4996 = vmatpush1.msra.mxu0 0.0
    %4997 = vmatprep.subr.mxu0 0.0
    %4998 = vmatpush1.msra.mxu0 0.0
    %4999 = vmatprep.subr.mxu0 0.0
    %5000 = vmatpush1.msra.mxu0 0.0
    %5001 = vmatprep.subr.mxu0 0.0
    %5002 = vmatpush1.msra.mxu0 0.0
    %5003 = vmatprep.subr.mxu0 0.0
    %5004 = vmatpush1.msra.mxu0 0.0
    %5005 = vmatprep.subr.mxu0 0.0
    %5006 = vmatpush1.msra.mxu0 0.0
    %5007 = vmatprep.subr.mxu0 0.0
    %5008 = vmatpush1.msra.mxu0 0.0
    %5009 = vmatprep.subr.mxu0 0.0
    %5010 = vmatpush1.msra.mxu0 0.0
    %5011 = vmatprep.subr.mxu0 0.0
    %5012 = vmatpush1.msra.mxu0 0.0
    %5013 = vmatprep.subr.mxu0 0.0
    %5014 = vmatpush1.msra.mxu0 0.0
    %5015 = vmatprep.subr.mxu0 0.0
    %5016 = vmatpush1.msra.mxu0 0.0
    %5017 = vmatprep.subr.mxu0 0.0
    %5018 = vmatpush1.msra.mxu0 0.0
    %5019 = vmatprep.subr.mxu0 0.0
    %5020 = vmatpush1.msra.mxu0 0.0
    %5021 = vmatprep.subr.mxu0 0.0
    %5022 = vmatpush1.msra.mxu0 0.0
    %5023 = vmatprep.subr.mxu0 0.0
    %5024 = vmatpush1.msra.mxu0 0.0
    %5025 = vmatprep.subr.mxu0 0.0
    %5026 = vmatpush1.msra.mxu0 0.0
    %5027 = vmatprep.subr.mxu0 0.0
    %5028 = vmatpush1.msra.mxu0 0.0
    %5029 = vmatprep.subr.mxu0 0.0
    %5030 = vmatpush1.msra.mxu0 0.0
    %5031 = vmatprep.subr.mxu0 0.0
    %5032 = vmatpush1.msra.mxu0 0.0
    %5033 = vmatprep.subr.mxu0 0.0
    %5034 = vmatpush1.msra.mxu0 0.0
    %5035 = vmatprep.subr.mxu0 0.0
    %5036 = vmatpush1.msra.mxu0 0.0
    %5037 = vmatprep.subr.mxu0 0.0
    %5038 = vmatpush1.msra.mxu0 0.0
    %5039 = vmatprep.subr.mxu0 0.0
    %5040 = vmatpush1.msra.mxu0 0.0
    %5041 = vmatprep.subr.mxu0 0.0
    %5042 = vmatpush1.msra.mxu0 0.0
    %5043 = vmatprep.mubr.f32.mxu0 0.0
    %5044 = vmatmul.mubr.f32.gmra.mrb[0].mxu0 %v4969
    %v5045 = vpop.f32.mrb[0].mxu0
    %v5046 = vadd.f32 0.0, %v5045
    %v5047 = vpop.f32.mrb[0].mxu0
    %v5048 = vadd.f32 0.0, %v5047
    %5049 = vdwg.mxu0
    %5050 = vmatprep.subr.mxu0 %v4891
    %5051 = vmatpush1.msra.mxu0 %v4890
    %5052 = vmatprep.subr.mxu0 %v4903
    %5053 = vmatpush1.msra.mxu0 %v4902
    %5054 = vmatprep.subr.mxu0 %v4915
    %5055 = vmatpush1.msra.mxu0 %v4914
    %5056 = vmatprep.subr.mxu0 %v4927
    %5057 = vmatpush1.msra.mxu0 %v4926
    %5058 = vmatprep.subr.mxu0 %v4977
    %5059 = vmatpush1.msra.mxu0 %v4975
    %5060 = vmatprep.subr.mxu0 0.0
    %5061 = vmatpush1.msra.mxu0 0.0
    %5062 = vmatprep.subr.mxu0 0.0
    %5063 = vmatpush1.msra.mxu0 0.0
    %5064 = vmatprep.subr.mxu0 0.0
    %5065 = vmatpush1.msra.mxu0 0.0
    %5066 = vmatprep.subr.mxu0 0.0
    %5067 = vmatpush1.msra.mxu0 0.0
    %5068 = vmatprep.subr.mxu0 0.0
    %5069 = vmatpush1.msra.mxu0 0.0
    %5070 = vmatprep.subr.mxu0 0.0
    %5071 = vmatpush1.msra.mxu0 0.0
    %5072 = vmatprep.subr.mxu0 0.0
    %5073 = vmatpush1.msra.mxu0 0.0
    %5074 = vmatprep.subr.mxu0 0.0
    %5075 = vmatpush1.msra.mxu0 0.0
    %5076 = vmatprep.subr.mxu0 0.0
    %5077 = vmatpush1.msra.mxu0 0.0
    %5078 = vmatprep.subr.mxu0 0.0
    %5079 = vmatpush1.msra.mxu0 0.0
    %5080 = vmatprep.subr.mxu0 0.0
    %5081 = vmatpush1.msra.mxu0 0.0
    %5082 = vmatprep.subr.mxu0 0.0
    %5083 = vmatpush1.msra.mxu0 0.0
    %5084 = vmatprep.subr.mxu0 0.0
    %5085 = vmatpush1.msra.mxu0 0.0
    %5086 = vmatprep.subr.mxu0 0.0
    %5087 = vmatpush1.msra.mxu0 0.0
    %5088 = vmatprep.subr.mxu0 0.0
    %5089 = vmatpush1.msra.mxu0 0.0
    %5090 = vmatprep.subr.mxu0 0.0
    %5091 = vmatpush1.msra.mxu0 0.0
    %5092 = vmatprep.subr.mxu0 0.0
    %5093 = vmatpush1.msra.mxu0 0.0
    %5094 = vmatprep.subr.mxu0 0.0
    %5095 = vmatpush1.msra.mxu0 0.0
    %5096 = vmatprep.subr.mxu0 0.0
    %5097 = vmatpush1.msra.mxu0 0.0
    %5098 = vmatprep.subr.mxu0 0.0
    %5099 = vmatpush1.msra.mxu0 0.0
    %5100 = vmatprep.subr.mxu0 0.0
    %5101 = vmatpush1.msra.mxu0 0.0
    %5102 = vmatprep.subr.mxu0 0.0
    %5103 = vmatpush1.msra.mxu0 0.0
    %5104 = vmatprep.subr.mxu0 0.0
    %5105 = vmatpush1.msra.mxu0 0.0
    %5106 = vmatprep.subr.mxu0 0.0
    %5107 = vmatpush1.msra.mxu0 0.0
    %5108 = vmatprep.subr.mxu0 0.0
    %5109 = vmatpush1.msra.mxu0 0.0
    %5110 = vmatprep.subr.mxu0 0.0
    %5111 = vmatpush1.msra.mxu0 0.0
    %5112 = vmatprep.subr.mxu0 0.0
    %5113 = vmatpush1.msra.mxu0 0.0
    %5114 = vmatprep.mubr.f32.mxu0 0.0
    %5115 = vmatmul.mubr.f32.gmra.mrb[0].mxu0 %v4969
    %v5116 = vpop.f32.mrb[0].mxu0
    %v5117 = vadd.f32 0.0, %v5116
    %v5118 = vpop.f32.mrb[0].mxu0
    %v5119 = vadd.f32 0.0, %v5118
    %5120 = vdwg.mxu0
    %v5121 = vsel %vm934, %v5046, 0.0
    %v5122 = vsel %vm934, %v5048, 0.0
    %v5123 = vadd.f32 %v5121, %v5122
    %v5124 = vsel %vm934, %v5117, 0.0
    %v5125 = vadd.f32 %v5123, %v5124
    %v5126 = vsel %vm934, %v5119, 0.0
    %v5127 = vadd.f32 %v5125, %v5126
    %5128 = vadd.xlane.f32.xlu0 %v5127
    %v5129 = vpop.xlane.xlu0 %5128
    %v5130 = vmul.f32 %v5129, %v944
    %v5131 = vsub.f32 %v5046, %v5130
    %v5132 = vsub.f32 %v5048, %v5130
    %v5133 = vsub.f32 %v5117, %v5130
    %v5134 = vsub.f32 %v5119, %v5130
    %v5135 = vmul.f32 %v5131, %v5131
    %v5136 = vmul.f32 %v5132, %v5132
    %v5137 = vmul.f32 %v5133, %v5133
    %v5138 = vmul.f32 %v5134, %v5134
    %v5139 = vsel %vm934, %v5135, 0.0
    %v5140 = vsel %vm934, %v5136, 0.0
    %v5141 = vadd.f32 %v5139, %v5140
    %v5142 = vsel %vm934, %v5137, 0.0
    %v5143 = vadd.f32 %v5141, %v5142
    %v5144 = vsel %vm934, %v5138, 0.0
    %v5145 = vadd.f32 %v5143, %v5144
    %5146 = vadd.xlane.f32.xlu0 %v5145
    %v5147 = vpop.xlane.xlu0 %5146
    %v5148 = vmul.f32 %v5147, %v944
    %v5149 = vadd.f32 %v5148, 1e-05
    %v5150 = vrsqrt.pop %v5149
    %v5151 = vmul.f32 %v5131, %v5150
    %v5152 = vmul.f32 %v5132, %v5150
    %v5153 = vmul.f32 %v5133, %v5150
    %v5154 = vmul.f32 %v5134, %v5150
    %v5155 = vmax.f32 %v5151, 0.0
    %v5156 = vmax.f32 %v5152, 0.0
    %v5157 = vmax.f32 %v5153, 0.0
    %v5158 = vmax.f32 %v5154, 0.0
    %v5159 = vld [vmem:[#allocation10] sm:$0x1]
    %v5160 = vld [vmem:[#allocation2] sm:$0x1]
    %5162 = vset.pattern.permute.xlu0 0
    %5163 = vperm.xlu0 %5162, %v5160
    %v5164 = vpop.permute.xlu0 %5163
    %v5166 = vlaneseq
    %v5167 = vshrl.u32 %v5166, 7
    %v5168 = vsub.s32 0, %v5167
    %v5169 = vrot.slane %v5164, %v5168
    %v5171 = vsel %vm307, %v5159, 0
    %v5174 = vsel %vm934, %v5155, 0
    %v5177 = vsel %vm934, %v5156, 0
    %v5180 = vsel %vm934, %v5157, 0
    %v5183 = vsel %vm934, %v5158, 0
    %5185 = vmatprep.subr.mxu0 %v5177
    %5186 = vmatpush1.msra.mxu0 %v5174
    %5187 = vmatprep.subr.mxu0 0.0
    %5188 = vmatpush1.msra.mxu0 0.0
    %5189 = vmatprep.subr.mxu0 0.0
    %5190 = vmatpush1.msra.mxu0 0.0
    %5191 = vmatprep.subr.mxu0 0.0
    %5192 = vmatpush1.msra.mxu0 0.0
    %5193 = vmatprep.subr.mxu0 0.0
    %5194 = vmatpush1.msra.mxu0 0.0
    %5195 = vmatprep.subr.mxu0 0.0
    %5196 = vmatpush1.msra.mxu0 0.0
    %5197 = vmatprep.subr.mxu0 0.0
    %5198 = vmatpush1.msra.mxu0 0.0
    %5199 = vmatprep.subr.mxu0 0.0
    %5200 = vmatpush1.msra.mxu0 0.0
    %5201 = vmatprep.subr.mxu0 0.0
    %5202 = vmatpush1.msra.mxu0 0.0
    %5203 = vmatprep.subr.mxu0 0.0
    %5204 = vmatpush1.msra.mxu0 0.0
    %5205 = vmatprep.subr.mxu0 0.0
    %5206 = vmatpush1.msra.mxu0 0.0
    %5207 = vmatprep.subr.mxu0 0.0
    %5208 = vmatpush1.msra.mxu0 0.0
    %5209 = vmatprep.subr.mxu0 0.0
    %5210 = vmatpush1.msra.mxu0 0.0
    %5211 = vmatprep.subr.mxu0 0.0
    %5212 = vmatpush1.msra.mxu0 0.0
    %5213 = vmatprep.subr.mxu0 0.0
    %5214 = vmatpush1.msra.mxu0 0.0
    %5215 = vmatprep.subr.mxu0 0.0
    %5216 = vmatpush1.msra.mxu0 0.0
    %5217 = vmatprep.subr.mxu0 0.0
    %5218 = vmatpush1.msra.mxu0 0.0
    %5219 = vmatprep.subr.mxu0 0.0
    %5220 = vmatpush1.msra.mxu0 0.0
    %5221 = vmatprep.subr.mxu0 0.0
    %5222 = vmatpush1.msra.mxu0 0.0
    %5223 = vmatprep.subr.mxu0 0.0
    %5224 = vmatpush1.msra.mxu0 0.0
    %5225 = vmatprep.subr.mxu0 0.0
    %5226 = vmatpush1.msra.mxu0 0.0
    %5227 = vmatprep.subr.mxu0 0.0
    %5228 = vmatpush1.msra.mxu0 0.0
    %5229 = vmatprep.subr.mxu0 0.0
    %5230 = vmatpush1.msra.mxu0 0.0
    %5231 = vmatprep.subr.mxu0 0.0
    %5232 = vmatpush1.msra.mxu0 0.0
    %5233 = vmatprep.subr.mxu0 0.0
    %5234 = vmatpush1.msra.mxu0 0.0
    %5235 = vmatprep.subr.mxu0 0.0
    %5236 = vmatpush1.msra.mxu0 0.0
    %5237 = vmatprep.subr.mxu0 0.0
    %5238 = vmatpush1.msra.mxu0 0.0
    %5239 = vmatprep.subr.mxu0 0.0
    %5240 = vmatpush1.msra.mxu0 0.0
    %5241 = vmatprep.subr.mxu0 0.0
    %5242 = vmatpush1.msra.mxu0 0.0
    %5243 = vmatprep.subr.mxu0 0.0
    %5244 = vmatpush1.msra.mxu0 0.0
    %5245 = vmatprep.subr.mxu0 0.0
    %5246 = vmatpush1.msra.mxu0 0.0
    %5247 = vmatprep.subr.mxu0 0.0
    %5248 = vmatpush1.msra.mxu0 0.0
    %5249 = vmatprep.mubr.f32.mxu0 0.0
    %5250 = vmatmul.mubr.f32.gmra.mrb[0].mxu0 %v5171
    %v5251 = vpop.f32.mrb[0].mxu0
    %v5252 = vadd.f32 %v5169, %v5251
    %v5253 = vpop.f32.mrb[0].mxu0
    %v5254 = vadd.f32 %v5169, %v5253
    %5255 = vdwg.mxu0
    %5256 = vmatprep.subr.mxu0 %v5183
    %5257 = vmatpush1.msra.mxu0 %v5180
    %5258 = vmatprep.subr.mxu0 0.0
    %5259 = vmatpush1.msra.mxu0 0.0
    %5260 = vmatprep.subr.mxu0 0.0
    %5261 = vmatpush1.msra.mxu0 0.0
    %5262 = vmatprep.subr.mxu0 0.0
    %5263 = vmatpush1.msra.mxu0 0.0
    %5264 = vmatprep.subr.mxu0 0.0
    %5265 = vmatpush1.msra.mxu0 0.0
    %5266 = vmatprep.subr.mxu0 0.0
    %5267 = vmatpush1.msra.mxu0 0.0
    %5268 = vmatprep.subr.mxu0 0.0
    %5269 = vmatpush1.msra.mxu0 0.0
    %5270 = vmatprep.subr.mxu0 0.0
    %5271 = vmatpush1.msra.mxu0 0.0
    %5272 = vmatprep.subr.mxu0 0.0
    %5273 = vmatpush1.msra.mxu0 0.0
    %5274 = vmatprep.subr.mxu0 0.0
    %5275 = vmatpush1.msra.mxu0 0.0
    %5276 = vmatprep.subr.mxu0 0.0
    %5277 = vmatpush1.msra.mxu0 0.0
    %5278 = vmatprep.subr.mxu0 0.0
    %5279 = vmatpush1.msra.mxu0 0.0
    %5280 = vmatprep.subr.mxu0 0.0
    %5281 = vmatpush1.msra.mxu0 0.0
    %5282 = vmatprep.subr.mxu0 0.0
    %5283 = vmatpush1.msra.mxu0 0.0
    %5284 = vmatprep.subr.mxu0 0.0
    %5285 = vmatpush1.msra.mxu0 0.0
    %5286 = vmatprep.subr.mxu0 0.0
    %5287 = vmatpush1.msra.mxu0 0.0
    %5288 = vmatprep.subr.mxu0 0.0
    %5289 = vmatpush1.msra.mxu0 0.0
    %5290 = vmatprep.subr.mxu0 0.0
    %5291 = vmatpush1.msra.mxu0 0.0
    %5292 = vmatprep.subr.mxu0 0.0
    %5293 = vmatpush1.msra.mxu0 0.0
    %5294 = vmatprep.subr.mxu0 0.0
    %5295 = vmatpush1.msra.mxu0 0.0
    %5296 = vmatprep.subr.mxu0 0.0
    %5297 = vmatpush1.msra.mxu0 0.0
    %5298 = vmatprep.subr.mxu0 0.0
    %5299 = vmatpush1.msra.mxu0 0.0
    %5300 = vmatprep.subr.mxu0 0.0
    %5301 = vmatpush1.msra.mxu0 0.0
    %5302 = vmatprep.subr.mxu0 0.0
    %5303 = vmatpush1.msra.mxu0 0.0
    %5304 = vmatprep.subr.mxu0 0.0
    %5305 = vmatpush1.msra.mxu0 0.0
    %5306 = vmatprep.subr.mxu0 0.0
    %5307 = vmatpush1.msra.mxu0 0.0
    %5308 = vmatprep.subr.mxu0 0.0
    %5309 = vmatpush1.msra.mxu0 0.0
    %5310 = vmatprep.subr.mxu0 0.0
    %5311 = vmatpush1.msra.mxu0 0.0
    %5312 = vmatprep.subr.mxu0 0.0
    %5313 = vmatpush1.msra.mxu0 0.0
    %5314 = vmatprep.subr.mxu0 0.0
    %5315 = vmatpush1.msra.mxu0 0.0
    %5316 = vmatprep.subr.mxu0 0.0
    %5317 = vmatpush1.msra.mxu0 0.0
    %5318 = vmatprep.subr.mxu0 0.0
    %5319 = vmatpush1.msra.mxu0 0.0
    %5320 = vmatprep.mubr.f32.mxu0 0.0
    %5321 = vmatmul.mubr.f32.gmra.mrb[0].mxu0 %v5171
    %v5322 = vpop.f32.mrb[0].mxu0
    %v5323 = vadd.f32 %v5169, %v5322
    %v5324 = vpop.f32.mrb[0].mxu0
    %v5325 = vadd.f32 %v5169, %v5324
    %5326 = vdwg.mxu0
    %v5327 = vsub.f32 0.0, %v5252
    %v5328 = vsub.f32 0.0, %v5254
    %v5329 = vsub.f32 0.0, %v5323
    %v5330 = vsub.f32 0.0, %v5325
    %v5331 = vmul.f32 %v5327, 1.442695
    %v5332 = vpow.pop %v5331
    %v5333 = vmul.f32 %v5328, 1.442695
    %v5334 = vpow.pop %v5333
    %v5335 = vmul.f32 %v5329, 1.442695
    %v5336 = vpow.pop %v5335
    %v5337 = vmul.f32 %v5330, 1.442695
    %v5338 = vpow.pop %v5337
    %v5339 = vadd.f32 %v5332, 1.0
    %v5340 = vadd.f32 %v5334, 1.0
    %v5341 = vadd.f32 %v5336, 1.0
    %v5342 = vadd.f32 %v5338, 1.0
    %v5343 = vrcp.pop %v5339
    %v5344 = vmul.f32 1.0, %v5343
    %v5345 = vrcp.pop %v5340
    %v5346 = vmul.f32 1.0, %v5345
    %v5347 = vrcp.pop %v5341
    %v5348 = vmul.f32 1.0, %v5347
    %v5349 = vrcp.pop %v5342
    %v5350 = vmul.f32 1.0, %v5349
    %v5355 = vcombine.low %v5344, %v5346
    %v5356 = vcombine.low %v5348, %v5350
    %v5358 = vunpack.c.l.s4 1966171168
    %v5359 = vunpack.c.0.s8 %v5358
    %v5360 = vlaneseq
    %v5361 = vshrl.u32 %v5360, 7
    %v5362 = vsub.s32 %v5359, %v5361
    %v5363 = vrot.slane %v5355, %v5362
    %v5365 = vunpack.c.l.s4 1966171168
    %v5366 = vunpack.c.0.s8 %v5365
    %v5367 = vlaneseq
    %v5368 = vshrl.u32 %v5367, 7
    %v5369 = vsub.s32 %v5366, %v5368
    %v5370 = vrot.slane %v5356, %v5369
    %v5371 = vcombine.low %v5363, %v5370
    %v5373 = vunpack.c.l.s4 1966171168
    %v5374 = vunpack.c.0.s8 %v5373
    %v5375 = vlaneseq
    %v5376 = vshrl.u32 %v5375, 7
    %v5377 = vsub.s32 %v5374, %v5376
    %v5378 = vrot.slane %v5371, %v5377
    %v5380 = vlaneseq
    %vm5381 = vcmp.ge.s32.totalorder %v5380, 0
    %vm5382 = vcmp.lt.s32.totalorder %v5380, 512
    %vm5383 = vmand %vm5381, %vm5382
    %5384 = vst.msk [vmem:[%s59] sm:$0xf] %vm5383, %v5378
    // Predicated region
    $region138: #{unet_forward.1} parent=1 // pred_check
      _
    $region139: #{unet_forward.1} parent=1 // pred_check_branch
      %5386 = sbr.rel (0) target = $region141
    $region140: #{unet_forward.1} parent=1 // pred_region
      _
    $region141: #{unet_forward.1} parent=1 // pred_fallthru
      _
    // Predicated region
    $region142: #{unet_forward.1} parent=1 // pred_check
      _
    $region143: #{unet_forward.1} parent=1 // pred_check_branch
      %5388 = sbr.rel (0) target = $region145
    $region144: #{unet_forward.1} parent=1 // pred_region
      _
    $region145: #{unet_forward.1} parent=1 // pred_fallthru
      _
    %5389 = vsyncpa [#allocation4], 1
    %5390 = vsyncpa [#allocation6], 1
    %5391 = vsyncpa [#allocation9], 1

</llo_original>
